<compile_context>
chip_gen: v7x
topology: tpu7x:2x2x1
jax: 0.10.0
libtpu: 0.0.40
codegen_flags: <defaults>
</compile_context>

<pallas_src>
import functools

import jax
import jax.numpy as jnp
import numpy as np
from jax import lax
from jax.experimental import pallas as pl
from jax.experimental.pallas import tpu as pltpu

EPS = 1e-5


def _round_up(x, m):
    return ((x + m - 1) // m) * m


# ---------------------------------------------------------------------------
# Kernel A: conv3x3 (stride 1, pad 1) as 9 shifted-view matmuls + BN partials
# ---------------------------------------------------------------------------
def _conv1_kernel(x_ref, w_ref, y_ref, st_ref, *, H, W, Cin, Cp):
    # x_ref : (1, H+2, W+2, Cin) bf16   spatially padded input image
    # w_ref : (3, 3, Cin, Cp)    bf16   conv1 weights [kh, kw, cin, cout_pad]
    # y_ref : (1, H+1, W+1, Cp)  f32    raw conv output + zero halo row/col
    # st_ref: (1, 2, Cp)         f32    per-image [sum, sum_of_squares]
    acc = jnp.zeros((H * W, Cp), jnp.float32)
    for kh in range(3):
        for kw in range(3):
            xs = x_ref[0, kh:kh + H, kw:kw + W, :].reshape(H * W, Cin)
            acc = acc + jnp.dot(xs, w_ref[kh, kw],
                                preferred_element_type=jnp.float32)
    y_ref[...] = jnp.zeros_like(y_ref)            # zero the +1 halo row/col
    y_ref[0, :H, :W, :] = acc.reshape(H, W, Cp)
    st_ref[0, 0:1, :] = jnp.sum(acc, axis=0, keepdims=True)
    st_ref[0, 1:2, :] = jnp.sum(acc * acc, axis=0, keepdims=True)


def _conv1_call(xp, w1_p, B, H, W, Cin, Cp):
    kernel = functools.partial(_conv1_kernel, H=H, W=W, Cin=Cin, Cp=Cp)
    return pl.pallas_call(
        kernel,
        grid=(B,),
        in_specs=[
            pl.BlockSpec((1, H + 2, W + 2, Cin), lambda b: (b, 0, 0, 0)),
            pl.BlockSpec((3, 3, Cin, Cp), lambda b: (0, 0, 0, 0)),
        ],
        out_specs=(
            pl.BlockSpec((1, H + 1, W + 1, Cp), lambda b: (b, 0, 0, 0)),
            pl.BlockSpec((1, 2, Cp), lambda b: (b, 0, 0)),
        ),
        out_shape=(
            jax.ShapeDtypeStruct((B, H + 1, W + 1, Cp), jnp.float32),
            jax.ShapeDtypeStruct((B, 2, Cp), jnp.float32),
        ),
        compiler_params=pltpu.CompilerParams(dimension_semantics=("parallel",)),
    )(xp, w1_p)


# ---------------------------------------------------------------------------
# Kernel B: fused BN1+ReLU + ConvTranspose2d(k3,s2,p1,op1) via 4-phase
# decomposition (one small matmul group per output parity) + BN2 partials.
#
# out[2m+pi, 2n+pj, co] = sum over phase taps of x[m+dh, n+dw, ci] * W[ci,co,kh,kw]
#   parity 0 taps: (dh=0, kh=1);   parity 1 taps: (dh=1, kh=0), (dh=0, kh=2)
# ---------------------------------------------------------------------------
_PHASE_TAPS = (((0, 1),), ((1, 0), (0, 2)))   # parity -> ((offset, kernel tap), ...)


def _convT_kernel(y1_ref, sc_ref, sh_ref, w_ref, y2_ref, st_ref, xbn_ref,
                  *, H, W, Cp):
    # y1_ref : (1, H+1, W+1, Cp) f32   raw conv1 output (zero halo at bottom/right)
    # sc_ref : (1, Cp) f32             folded BN1 scale  (gamma * rstd)
    # sh_ref : (1, Cp) f32             folded BN1 shift  (beta - mean * scale)
    # w_ref  : (3, 3, Cp, Cp) bf16     convT weights [kh, kw, cin, cout]
    # y2_ref : (1, 4, H*W, Cp) f32     raw phase outputs, phase index = 2*pi + pj
    # st_ref : (1, 2, Cp) f32          per-image [sum, sum_of_squares]
    # xbn_ref: (H+1, W+1, Cp) bf16     VMEM scratch: BN1+ReLU'd activation
    act = jnp.maximum(y1_ref[0] * sc_ref[...] + sh_ref[...], 0.0)
    row = lax.broadcasted_iota(jnp.int32, (H + 1, W + 1, 1), 0)
    col = lax.broadcasted_iota(jnp.int32, (H + 1, W + 1, 1), 1)
    act = jnp.where((row < H) & (col < W), act, 0.0)   # halo must stay exactly 0
    xbn_ref[...] = act.astype(jnp.bfloat16)

    s1 = jnp.zeros((1, Cp), jnp.float32)
    s2 = jnp.zeros((1, Cp), jnp.float32)
    for pi in range(2):
        for pj in range(2):
            acc = jnp.zeros((H * W, Cp), jnp.float32)
            for dh, kh in _PHASE_TAPS[pi]:
                for dw, kw in _PHASE_TAPS[pj]:
                    xs = xbn_ref[dh:dh + H, dw:dw + W, :].reshape(H * W, Cp)
                    acc = acc + jnp.dot(xs, w_ref[kh, kw],
                                        preferred_element_type=jnp.float32)
            y2_ref[0, 2 * pi + pj] = acc
            s1 = s1 + jnp.sum(acc, axis=0, keepdims=True)
            s2 = s2 + jnp.sum(acc * acc, axis=0, keepdims=True)
    st_ref[0, 0:1, :] = s1
    st_ref[0, 1:2, :] = s2


def _convT_call(y1p, scale1, shift1, wT_p, B, H, W, Cp):
    kernel = functools.partial(_convT_kernel, H=H, W=W, Cp=Cp)
    return pl.pallas_call(
        kernel,
        grid=(B,),
        in_specs=[
            pl.BlockSpec((1, H + 1, W + 1, Cp), lambda b: (b, 0, 0, 0)),
            pl.BlockSpec((1, Cp), lambda b: (0, 0)),
            pl.BlockSpec((1, Cp), lambda b: (0, 0)),
            pl.BlockSpec((3, 3, Cp, Cp), lambda b: (0, 0, 0, 0)),
        ],
        out_specs=(
            pl.BlockSpec((1, 4, H * W, Cp), lambda b: (b, 0, 0, 0)),
            pl.BlockSpec((1, 2, Cp), lambda b: (b, 0, 0)),
        ),
        out_shape=(
            jax.ShapeDtypeStruct((B, 4, H * W, Cp), jnp.float32),
            jax.ShapeDtypeStruct((B, 2, Cp), jnp.float32),
        ),
        scratch_shapes=[pltpu.VMEM((H + 1, W + 1, Cp), jnp.bfloat16)],
        compiler_params=pltpu.CompilerParams(dimension_semantics=("parallel",)),
    )(y1p, scale1, shift1, wT_p)


# ---------------------------------------------------------------------------
# Kernel C: BN2 apply (second pass of the two-pass BN), tiled, lane-dense N
# ---------------------------------------------------------------------------
def _bn_apply_kernel(y_ref, sc_ref, sh_ref, o_ref):
    o_ref[...] = y_ref[...] * sc_ref[...] + sh_ref[...]


def _bn_apply_call(y_flat, scale, shift, n_tiles, rows, Cp):
    return pl.pallas_call(
        _bn_apply_kernel,
        grid=(n_tiles,),
        in_specs=[
            pl.BlockSpec((1, rows, Cp), lambda i: (i, 0, 0)),
            pl.BlockSpec((1, Cp), lambda i: (0, 0)),
            pl.BlockSpec((1, Cp), lambda i: (0, 0)),
        ],
        out_specs=pl.BlockSpec((1, rows, Cp), lambda i: (i, 0, 0)),
        out_shape=jax.ShapeDtypeStruct((n_tiles, rows, Cp), jnp.float32),
        compiler_params=pltpu.CompilerParams(dimension_semantics=("parallel",)),
    )(y_flat, scale, shift)


# ---------------------------------------------------------------------------
# JAX glue
# ---------------------------------------------------------------------------
def _fold_bn(stats, count, gamma_p, beta_p):
    # stats: (tiles, 2, Cp) partial [sum, sum_sq]  ->  folded scale/shift (fp32)
    s = jnp.sum(stats, axis=0)
    mean = s[0] / count
    var = jnp.maximum(s[1] / count - mean * mean, 0.0)   # biased var (PyTorch BN)
    rstd = lax.rsqrt(var + EPS)
    scale = gamma_p * rstd
    shift = beta_p - mean * scale
    return scale.reshape(1, -1), shift.reshape(1, -1)


def relation_module_forward(x_nchw, params):
    x = jnp.transpose(x_nchw, (0, 2, 3, 1))            # NCHW -> NHWC
    B, H, W, Cin = x.shape
    w1 = params["w1"]                                  # (Cout, Cin, 3, 3)
    wT = params["wT"]                                  # (Cout, Cout, 3, 3)
    Cout = w1.shape[0]
    Cp = _round_up(Cout, 128)                          # lane-dense channel pad

    # ----- static weight/param plumbing (layout only, done once per call) -----
    w1_hwio = jnp.transpose(w1, (2, 3, 1, 0))          # [kh, kw, cin, cout]
    w1_p = jnp.pad(w1_hwio, ((0, 0), (0, 0), (0, 0), (0, Cp - Cout))
                   ).astype(jnp.bfloat16)
    wT_k = jnp.transpose(wT, (2, 3, 0, 1))             # [kh, kw, cin, cout]
    wT_p = jnp.pad(wT_k, ((0, 0), (0, 0), (0, Cp - Cout), (0, Cp - Cout))
                   ).astype(jnp.bfloat16)
    g1 = jnp.pad(params["gamma1"].reshape(-1), (0, Cp - Cout))
    b1 = jnp.pad(params["beta1"].reshape(-1), (0, Cp - Cout))
    g2 = jnp.pad(params["gamma2"].reshape(-1), (0, Cp - Cout))
    b2 = jnp.pad(params["beta2"].reshape(-1), (0, Cp - Cout))

    # ----- stage 1: conv3x3(p1) with per-image BN partial stats -----
    xp = jnp.pad(x, ((0, 0), (1, 1), (1, 1), (0, 0))).astype(jnp.bfloat16)
    y1p, st1 = _conv1_call(xp, w1_p, B, H, W, Cin, Cp)
    scale1, shift1 = _fold_bn(st1, B * H * W, g1, b1)

    # ----- stage 2: BN1+ReLU fused into the 4-phase transposed conv -----
    y2p, st2 = _convT_call(y1p, scale1, shift1, wT_p, B, H, W, Cp)
    scale2, shift2 = _fold_bn(st2, B * 4 * H * W, g2, b2)

    # ----- stage 3: BN2 apply (tiled, lane-dense) -----
    y2f = _bn_apply_call(y2p.reshape(B * 4, H * W, Cp), scale2, shift2,
                         B * 4, H * W, Cp)

    # ----- phase interleave + channel slice (pure layout, done in XLA) -----
    y2f = y2f.reshape(B, 2, 2, H, W, Cp)               # (B, pi, pj, H, W, C)
    out = jnp.transpose(y2f, (0, 3, 1, 4, 2, 5)).reshape(B, 2 * H, 2 * W, Cp)
    out = out[..., :Cout]
    return jnp.transpose(out, (0, 3, 1, 2))            # back to NCHW


# ---------------------------------------------------------------------------
# Pure-JAX reference (fp32, highest precision) for the correctness check
# ---------------------------------------------------------------------------
def _bn_ref(y, gamma, beta):
    mean = jnp.mean(y, axis=(0, 1, 2), keepdims=True)
    var = jnp.mean(jnp.square(y - mean), axis=(0, 1, 2), keepdims=True)
    return (y - mean) * lax.rsqrt(var + EPS) * gamma.reshape(1, 1, 1, -1) \
        + beta.reshape(1, 1, 1, -1)


def reference_forward(x_nchw, params):
    x = jnp.transpose(x_nchw, (0, 2, 3, 1))
    w1 = jnp.transpose(params["w1"], (2, 3, 1, 0))        # HWIO
    y = lax.conv_general_dilated(x, w1, (1, 1), ((1, 1), (1, 1)),
                                 dimension_numbers=('NHWC', 'HWIO', 'NHWC'),
                                 precision=lax.Precision.HIGHEST)
    y = jnp.maximum(_bn_ref(y, params["gamma1"], params["beta1"]), 0.0)
    w_eq = jnp.transpose(params["wT"][:, :, ::-1, ::-1], (1, 0, 2, 3))
    w_eq = jnp.transpose(w_eq, (2, 3, 1, 0))              # HWIO
    y = lax.conv_general_dilated(y, w_eq, (1, 1), ((1, 2), (1, 2)),
                                 lhs_dilation=(2, 2),
                                 dimension_numbers=('NHWC', 'HWIO', 'NHWC'),
                                 precision=lax.Precision.HIGHEST)
    y = _bn_ref(y, params["gamma2"], params["beta2"])
    return jnp.transpose(y, (0, 3, 1, 2))


# ---------------------------------------------------------------------------
if __name__ == "__main__":
    B, Cin, H, W = 2, 4, 16, 16
    Cout = 16   # out_planes (module default is 256; kept small for the test)

    key = jax.random.PRNGKey(0)
    k_x, k_w1, k_wT = jax.random.split(key, 3)

    x = jax.random.normal(k_x, (B, Cin, H, W), dtype=jnp.float32)
    params = {
        # Conv2d weight: (out, in, kh, kw); bias=False in conv_block
        "w1": jax.random.normal(k_w1, (Cout, Cin, 3, 3), jnp.float32) * 0.1,
        # ConvTranspose2d weight: (in, out, kh, kw); bias=False
        "wT": jax.random.normal(k_wT, (Cout, Cout, 3, 3), jnp.float32) * 0.1,
        # BatchNorm affine params at PyTorch init: gamma=1, beta=0
        "gamma1": jnp.ones((Cout,), jnp.float32),
        "beta1": jnp.zeros((Cout,), jnp.float32),
        "gamma2": jnp.ones((Cout,), jnp.float32),
        "beta2": jnp.zeros((Cout,), jnp.float32),
    }

    fwd = jax.jit(relation_module_forward)
    out = jax.block_until_ready(fwd(x, params))
    assert out.shape == (B, Cout, 2 * H, 2 * W), out.shape

    ref = jax.block_until_ready(reference_forward(x, params))
    # bf16 MXU operands (fp32 accumulation / fp32 BN stats) vs. the fp32 XLA
    # reference: expected deviation is O(1e-2) on BN-normalized outputs.
    np.testing.assert_allclose(np.asarray(out), np.asarray(ref),
                               rtol=2e-2, atol=2.5e-2)

    print("KERNEL_OK")
</pallas_src>

<mosaic_0001>
module attributes {stable_mosaic.version = 11 : i64} {
  func.func @_conv1_kernel(%arg0: i32, %arg1: memref<1x18x18x4xbf16, #tpu.memory_space<vmem>>, %arg2: memref<3x3x4x128xbf16, #tpu.memory_space<vmem>>, %arg3: memref<1x17x17x128xf32, #tpu.memory_space<vmem>>, %arg4: memref<1x2x128xf32, #tpu.memory_space<vmem>>) attributes {dimension_semantics = [#tpu.dimension_semantics<parallel>], iteration_bounds = array<i64: 2>, scalar_prefetch = 0 : i64, scratch_operands = 0 : i64, tpu.core_type = #tpu.core_type<tc>, window_params = [{transform_indices = @transform_0, window_bounds = array<i64: 1, 18, 18, 4>}, {pipeline_mode = #tpu.pipeline_mode<synchronous>, transform_indices = @transform_1, window_bounds = array<i64: 3, 3, 4, 128>}, {transform_indices = @transform_2, window_bounds = array<i64: 1, 17, 17, 128>}, {transform_indices = @transform_3, window_bounds = array<i64: 1, 2, 128>}]} {
    %cst = arith.constant 0.000000e+00 : f32
    %0 = vector.broadcast %cst : f32 to vector<256x128xf32>
    %c0 = arith.constant 0 : index
    %c0_0 = arith.constant 0 : index
    %c0_1 = arith.constant 0 : index
    %c0_2 = arith.constant 0 : index
    %1 = vector.load %arg1[%c0, %c0_0, %c0_1, %c0_2] : memref<1x18x18x4xbf16, #tpu.memory_space<vmem>>, vector<1x16x16x4xbf16>
    %2 = vector.shape_cast %1 : vector<1x16x16x4xbf16> to vector<16x16x4xbf16>
    %3 = vector.shape_cast %2 : vector<16x16x4xbf16> to vector<256x4xbf16>
    %c0_3 = arith.constant 0 : index
    %c0_4 = arith.constant 0 : index
    %c0_5 = arith.constant 0 : index
    %c0_6 = arith.constant 0 : index
    %4 = vector.load %arg2[%c0_3, %c0_4, %c0_5, %c0_6] : memref<3x3x4x128xbf16, #tpu.memory_space<vmem>>, vector<1x1x4x128xbf16>
    %5 = vector.shape_cast %4 : vector<1x1x4x128xbf16> to vector<4x128xbf16>
    %cst_7 = arith.constant dense<0.000000e+00> : vector<256x128xf32>
    %6 = tpu.matmul %3, %5, %cst_7 {dimension_numbers = #tpu.dot_dimension_numbers<[1], [0], [0], [1], [0, 0, 1, 1], [], []>} : vector<256x4xbf16>, vector<4x128xbf16>, vector<256x128xf32> -> vector<256x128xf32>
    %7 = arith.addf %0, %6 : vector<256x128xf32>
    %c0_8 = arith.constant 0 : index
    %c0_9 = arith.constant 0 : index
    %c1 = arith.constant 1 : index
    %c0_10 = arith.constant 0 : index
    %8 = vector.load %arg1[%c0_8, %c0_9, %c1, %c0_10] : memref<1x18x18x4xbf16, #tpu.memory_space<vmem>>, vector<1x16x16x4xbf16>
    %9 = vector.shape_cast %8 : vector<1x16x16x4xbf16> to vector<16x16x4xbf16>
    %10 = vector.shape_cast %9 : vector<16x16x4xbf16> to vector<256x4xbf16>
    %c0_11 = arith.constant 0 : index
    %c1_12 = arith.constant 1 : index
    %c0_13 = arith.constant 0 : index
    %c0_14 = arith.constant 0 : index
    %11 = vector.load %arg2[%c0_11, %c1_12, %c0_13, %c0_14] : memref<3x3x4x128xbf16, #tpu.memory_space<vmem>>, vector<1x1x4x128xbf16>
    %12 = vector.shape_cast %11 : vector<1x1x4x128xbf16> to vector<4x128xbf16>
    %cst_15 = arith.constant dense<0.000000e+00> : vector<256x128xf32>
    %13 = tpu.matmul %10, %12, %cst_15 {dimension_numbers = #tpu.dot_dimension_numbers<[1], [0], [0], [1], [0, 0, 1, 1], [], []>} : vector<256x4xbf16>, vector<4x128xbf16>, vector<256x128xf32> -> vector<256x128xf32>
    %14 = arith.addf %7, %13 : vector<256x128xf32>
    %c0_16 = arith.constant 0 : index
    %c0_17 = arith.constant 0 : index
    %c2 = arith.constant 2 : index
    %c0_18 = arith.constant 0 : index
    %15 = vector.load %arg1[%c0_16, %c0_17, %c2, %c0_18] : memref<1x18x18x4xbf16, #tpu.memory_space<vmem>>, vector<1x16x16x4xbf16>
    %16 = vector.shape_cast %15 : vector<1x16x16x4xbf16> to vector<16x16x4xbf16>
    %17 = vector.shape_cast %16 : vector<16x16x4xbf16> to vector<256x4xbf16>
    %c0_19 = arith.constant 0 : index
    %c2_20 = arith.constant 2 : index
    %c0_21 = arith.constant 0 : index
    %c0_22 = arith.constant 0 : index
    %18 = vector.load %arg2[%c0_19, %c2_20, %c0_21, %c0_22] : memref<3x3x4x128xbf16, #tpu.memory_space<vmem>>, vector<1x1x4x128xbf16>
    %19 = vector.shape_cast %18 : vector<1x1x4x128xbf16> to vector<4x128xbf16>
    %cst_23 = arith.constant dense<0.000000e+00> : vector<256x128xf32>
    %20 = tpu.matmul %17, %19, %cst_23 {dimension_numbers = #tpu.dot_dimension_numbers<[1], [0], [0], [1], [0, 0, 1, 1], [], []>} : vector<256x4xbf16>, vector<4x128xbf16>, vector<256x128xf32> -> vector<256x128xf32>
    %21 = arith.addf %14, %20 : vector<256x128xf32>
    %c0_24 = arith.constant 0 : index
    %c1_25 = arith.constant 1 : index
    %c0_26 = arith.constant 0 : index
    %c0_27 = arith.constant 0 : index
    %22 = vector.load %arg1[%c0_24, %c1_25, %c0_26, %c0_27] : memref<1x18x18x4xbf16, #tpu.memory_space<vmem>>, vector<1x16x16x4xbf16>
    %23 = vector.shape_cast %22 : vector<1x16x16x4xbf16> to vector<16x16x4xbf16>
    %24 = vector.shape_cast %23 : vector<16x16x4xbf16> to vector<256x4xbf16>
    %c1_28 = arith.constant 1 : index
    %c0_29 = arith.constant 0 : index
    %c0_30 = arith.constant 0 : index
    %c0_31 = arith.constant 0 : index
    %25 = vector.load %arg2[%c1_28, %c0_29, %c0_30, %c0_31] : memref<3x3x4x128xbf16, #tpu.memory_space<vmem>>, vector<1x1x4x128xbf16>
    %26 = vector.shape_cast %25 : vector<1x1x4x128xbf16> to vector<4x128xbf16>
    %cst_32 = arith.constant dense<0.000000e+00> : vector<256x128xf32>
    %27 = tpu.matmul %24, %26, %cst_32 {dimension_numbers = #tpu.dot_dimension_numbers<[1], [0], [0], [1], [0, 0, 1, 1], [], []>} : vector<256x4xbf16>, vector<4x128xbf16>, vector<256x128xf32> -> vector<256x128xf32>
    %28 = arith.addf %21, %27 : vector<256x128xf32>
    %c0_33 = arith.constant 0 : index
    %c1_34 = arith.constant 1 : index
    %c1_35 = arith.constant 1 : index
    %c0_36 = arith.constant 0 : index
    %29 = vector.load %arg1[%c0_33, %c1_34, %c1_35, %c0_36] : memref<1x18x18x4xbf16, #tpu.memory_space<vmem>>, vector<1x16x16x4xbf16>
    %30 = vector.shape_cast %29 : vector<1x16x16x4xbf16> to vector<16x16x4xbf16>
    %31 = vector.shape_cast %30 : vector<16x16x4xbf16> to vector<256x4xbf16>
    %c1_37 = arith.constant 1 : index
    %c1_38 = arith.constant 1 : index
    %c0_39 = arith.constant 0 : index
    %c0_40 = arith.constant 0 : index
    %32 = vector.load %arg2[%c1_37, %c1_38, %c0_39, %c0_40] : memref<3x3x4x128xbf16, #tpu.memory_space<vmem>>, vector<1x1x4x128xbf16>
    %33 = vector.shape_cast %32 : vector<1x1x4x128xbf16> to vector<4x128xbf16>
    %cst_41 = arith.constant dense<0.000000e+00> : vector<256x128xf32>
    %34 = tpu.matmul %31, %33, %cst_41 {dimension_numbers = #tpu.dot_dimension_numbers<[1], [0], [0], [1], [0, 0, 1, 1], [], []>} : vector<256x4xbf16>, vector<4x128xbf16>, vector<256x128xf32> -> vector<256x128xf32>
    %35 = arith.addf %28, %34 : vector<256x128xf32>
    %c0_42 = arith.constant 0 : index
    %c1_43 = arith.constant 1 : index
    %c2_44 = arith.constant 2 : index
    %c0_45 = arith.constant 0 : index
    %36 = vector.load %arg1[%c0_42, %c1_43, %c2_44, %c0_45] : memref<1x18x18x4xbf16, #tpu.memory_space<vmem>>, vector<1x16x16x4xbf16>
    %37 = vector.shape_cast %36 : vector<1x16x16x4xbf16> to vector<16x16x4xbf16>
    %38 = vector.shape_cast %37 : vector<16x16x4xbf16> to vector<256x4xbf16>
    %c1_46 = arith.constant 1 : index
    %c2_47 = arith.constant 2 : index
    %c0_48 = arith.constant 0 : index
    %c0_49 = arith.constant 0 : index
    %39 = vector.load %arg2[%c1_46, %c2_47, %c0_48, %c0_49] : memref<3x3x4x128xbf16, #tpu.memory_space<vmem>>, vector<1x1x4x128xbf16>
    %40 = vector.shape_cast %39 : vector<1x1x4x128xbf16> to vector<4x128xbf16>
    %cst_50 = arith.constant dense<0.000000e+00> : vector<256x128xf32>
    %41 = tpu.matmul %38, %40, %cst_50 {dimension_numbers = #tpu.dot_dimension_numbers<[1], [0], [0], [1], [0, 0, 1, 1], [], []>} : vector<256x4xbf16>, vector<4x128xbf16>, vector<256x128xf32> -> vector<256x128xf32>
    %42 = arith.addf %35, %41 : vector<256x128xf32>
    %c0_51 = arith.constant 0 : index
    %c2_52 = arith.constant 2 : index
    %c0_53 = arith.constant 0 : index
    %c0_54 = arith.constant 0 : index
    %43 = vector.load %arg1[%c0_51, %c2_52, %c0_53, %c0_54] : memref<1x18x18x4xbf16, #tpu.memory_space<vmem>>, vector<1x16x16x4xbf16>
    %44 = vector.shape_cast %43 : vector<1x16x16x4xbf16> to vector<16x16x4xbf16>
    %45 = vector.shape_cast %44 : vector<16x16x4xbf16> to vector<256x4xbf16>
    %c2_55 = arith.constant 2 : index
    %c0_56 = arith.constant 0 : index
    %c0_57 = arith.constant 0 : index
    %c0_58 = arith.constant 0 : index
    %46 = vector.load %arg2[%c2_55, %c0_56, %c0_57, %c0_58] : memref<3x3x4x128xbf16, #tpu.memory_space<vmem>>, vector<1x1x4x128xbf16>
    %47 = vector.shape_cast %46 : vector<1x1x4x128xbf16> to vector<4x128xbf16>
    %cst_59 = arith.constant dense<0.000000e+00> : vector<256x128xf32>
    %48 = tpu.matmul %45, %47, %cst_59 {dimension_numbers = #tpu.dot_dimension_numbers<[1], [0], [0], [1], [0, 0, 1, 1], [], []>} : vector<256x4xbf16>, vector<4x128xbf16>, vector<256x128xf32> -> vector<256x128xf32>
    %49 = arith.addf %42, %48 : vector<256x128xf32>
    %c0_60 = arith.constant 0 : index
    %c2_61 = arith.constant 2 : index
    %c1_62 = arith.constant 1 : index
    %c0_63 = arith.constant 0 : index
    %50 = vector.load %arg1[%c0_60, %c2_61, %c1_62, %c0_63] : memref<1x18x18x4xbf16, #tpu.memory_space<vmem>>, vector<1x16x16x4xbf16>
    %51 = vector.shape_cast %50 : vector<1x16x16x4xbf16> to vector<16x16x4xbf16>
    %52 = vector.shape_cast %51 : vector<16x16x4xbf16> to vector<256x4xbf16>
    %c2_64 = arith.constant 2 : index
    %c1_65 = arith.constant 1 : index
    %c0_66 = arith.constant 0 : index
    %c0_67 = arith.constant 0 : index
    %53 = vector.load %arg2[%c2_64, %c1_65, %c0_66, %c0_67] : memref<3x3x4x128xbf16, #tpu.memory_space<vmem>>, vector<1x1x4x128xbf16>
    %54 = vector.shape_cast %53 : vector<1x1x4x128xbf16> to vector<4x128xbf16>
    %cst_68 = arith.constant dense<0.000000e+00> : vector<256x128xf32>
    %55 = tpu.matmul %52, %54, %cst_68 {dimension_numbers = #tpu.dot_dimension_numbers<[1], [0], [0], [1], [0, 0, 1, 1], [], []>} : vector<256x4xbf16>, vector<4x128xbf16>, vector<256x128xf32> -> vector<256x128xf32>
    %56 = arith.addf %49, %55 : vector<256x128xf32>
    %c0_69 = arith.constant 0 : index
    %c2_70 = arith.constant 2 : index
    %c2_71 = arith.constant 2 : index
    %c0_72 = arith.constant 0 : index
    %57 = vector.load %arg1[%c0_69, %c2_70, %c2_71, %c0_72] : memref<1x18x18x4xbf16, #tpu.memory_space<vmem>>, vector<1x16x16x4xbf16>
    %58 = vector.shape_cast %57 : vector<1x16x16x4xbf16> to vector<16x16x4xbf16>
    %59 = vector.shape_cast %58 : vector<16x16x4xbf16> to vector<256x4xbf16>
    %c2_73 = arith.constant 2 : index
    %c2_74 = arith.constant 2 : index
    %c0_75 = arith.constant 0 : index
    %c0_76 = arith.constant 0 : index
    %60 = vector.load %arg2[%c2_73, %c2_74, %c0_75, %c0_76] : memref<3x3x4x128xbf16, #tpu.memory_space<vmem>>, vector<1x1x4x128xbf16>
    %61 = vector.shape_cast %60 : vector<1x1x4x128xbf16> to vector<4x128xbf16>
    %cst_77 = arith.constant dense<0.000000e+00> : vector<256x128xf32>
    %62 = tpu.matmul %59, %61, %cst_77 {dimension_numbers = #tpu.dot_dimension_numbers<[1], [0], [0], [1], [0, 0, 1, 1], [], []>} : vector<256x4xbf16>, vector<4x128xbf16>, vector<256x128xf32> -> vector<256x128xf32>
    %63 = arith.addf %56, %62 : vector<256x128xf32>
    %cst_78 = arith.constant 0.000000e+00 : f32
    %64 = vector.broadcast %cst_78 : f32 to vector<1x17x17x128xf32>
    %c0_79 = arith.constant 0 : index
    %c0_80 = arith.constant 0 : index
    %c0_81 = arith.constant 0 : index
    %c0_82 = arith.constant 0 : index
    %65 = vector.load %arg3[%c0_79, %c0_80, %c0_81, %c0_82] : memref<1x17x17x128xf32, #tpu.memory_space<vmem>>, vector<1x17x17x128xf32>
    tpu.vector_store %arg3[%c0_79, %c0_80, %c0_81, %c0_82], %64 {strides = array<i32>} : memref<1x17x17x128xf32, #tpu.memory_space<vmem>>, vector<1x17x17x128xf32>,
    %66 = vector.shape_cast %63 : vector<256x128xf32> to vector<16x16x128xf32>
    %c0_83 = arith.constant 0 : index
    %c0_84 = arith.constant 0 : index
    %c0_85 = arith.constant 0 : index
    %c0_86 = arith.constant 0 : index
    %67 = vector.load %arg3[%c0_83, %c0_84, %c0_85, %c0_86] : memref<1x17x17x128xf32, #tpu.memory_space<vmem>>, vector<1x16x16x128xf32>
    %68 = vector.shape_cast %67 : vector<1x16x16x128xf32> to vector<16x16x128xf32>
    %69 = vector.shape_cast %66 : vector<16x16x128xf32> to vector<1x16x16x128xf32>
    tpu.vector_store %arg3[%c0_83, %c0_84, %c0_85, %c0_86], %69 {strides = array<i32>} : memref<1x17x17x128xf32, #tpu.memory_space<vmem>>, vector<1x16x16x128xf32>,
    %cst_87 = arith.constant dense<0.000000e+00> : vector<128xf32>
    %70 = vector.multi_reduction <add>, %63, %cst_87 [0] : vector<256x128xf32> to vector<128xf32>
    %71 = vector.shape_cast %70 : vector<128xf32> to vector<1x128xf32>
    %c0_88 = arith.constant 0 : index
    %c0_89 = arith.constant 0 : index
    %c0_90 = arith.constant 0 : index
    %72 = vector.load %arg4[%c0_88, %c0_89, %c0_90] : memref<1x2x128xf32, #tpu.memory_space<vmem>>, vector<1x1x128xf32>
    %73 = vector.shape_cast %72 : vector<1x1x128xf32> to vector<1x128xf32>
    %74 = vector.shape_cast %71 : vector<1x128xf32> to vector<1x1x128xf32>
    tpu.vector_store %arg4[%c0_88, %c0_89, %c0_90], %74 {strides = array<i32>} : memref<1x2x128xf32, #tpu.memory_space<vmem>>, vector<1x1x128xf32>,
    %75 = arith.mulf %63, %63 : vector<256x128xf32>
    %cst_91 = arith.constant dense<0.000000e+00> : vector<128xf32>
    %76 = vector.multi_reduction <add>, %75, %cst_91 [0] : vector<256x128xf32> to vector<128xf32>
    %77 = vector.shape_cast %76 : vector<128xf32> to vector<1x128xf32>
    %c0_92 = arith.constant 0 : index
    %c1_93 = arith.constant 1 : index
    %c0_94 = arith.constant 0 : index
    %78 = vector.load %arg4[%c0_92, %c1_93, %c0_94] : memref<1x2x128xf32, #tpu.memory_space<vmem>>, vector<1x1x128xf32>
    %79 = vector.shape_cast %78 : vector<1x1x128xf32> to vector<1x128xf32>
    %80 = vector.shape_cast %77 : vector<1x128xf32> to vector<1x1x128xf32>
    tpu.vector_store %arg4[%c0_92, %c1_93, %c0_94], %80 {strides = array<i32>} : memref<1x2x128xf32, #tpu.memory_space<vmem>>, vector<1x1x128xf32>,
    return
  }
  func.func @transform_0(%arg0: i32) -> (i32, i32, i32, i32) {
    %c0_i32 = arith.constant 0 : i32
    %c0_i32_0 = arith.constant 0 : i32
    %c0_i32_1 = arith.constant 0 : i32
    %c0_i32_2 = arith.constant 0 : i32
    return %arg0, %c0_i32, %c0_i32_0, %c0_i32_1 : i32, i32, i32, i32
  }
  func.func @transform_1(%arg0: i32) -> (i32, i32, i32, i32) {
    %c0_i32 = arith.constant 0 : i32
    %c0_i32_0 = arith.constant 0 : i32
    %c0_i32_1 = arith.constant 0 : i32
    %c0_i32_2 = arith.constant 0 : i32
    %c0_i32_3 = arith.constant 0 : i32
    return %c0_i32, %c0_i32_0, %c0_i32_1, %c0_i32_2 : i32, i32, i32, i32
  }
  func.func @transform_2(%arg0: i32) -> (i32, i32, i32, i32) {
    %c0_i32 = arith.constant 0 : i32
    %c0_i32_0 = arith.constant 0 : i32
    %c0_i32_1 = arith.constant 0 : i32
    %c0_i32_2 = arith.constant 0 : i32
    return %arg0, %c0_i32, %c0_i32_0, %c0_i32_1 : i32, i32, i32, i32
  }
  func.func @transform_3(%arg0: i32) -> (i32, i32, i32) {
    %c0_i32 = arith.constant 0 : i32
    %c0_i32_0 = arith.constant 0 : i32
    %c0_i32_1 = arith.constant 0 : i32
    return %arg0, %c0_i32, %c0_i32_0 : i32, i32, i32
  }
}

module attributes {stable_mosaic.version = 11 : i64} {
  func.func @_convT_kernel(%arg0: i32, %arg1: memref<1x17x17x128xf32, #tpu.memory_space<vmem>>, %arg2: memref<1x128xf32, #tpu.memory_space<vmem>>, %arg3: memref<1x128xf32, #tpu.memory_space<vmem>>, %arg4: memref<3x3x128x128xbf16, #tpu.memory_space<vmem>>, %arg5: memref<1x4x256x128xf32, #tpu.memory_space<vmem>>, %arg6: memref<1x2x128xf32, #tpu.memory_space<vmem>>, %arg7: memref<17x17x128xbf16, #tpu.memory_space<vmem>>) attributes {dimension_semantics = [#tpu.dimension_semantics<parallel>], iteration_bounds = array<i64: 2>, scalar_prefetch = 0 : i64, scratch_operands = 1 : i64, tpu.core_type = #tpu.core_type<tc>, window_params = [{transform_indices = @transform_0, window_bounds = array<i64: 1, 17, 17, 128>}, {pipeline_mode = #tpu.pipeline_mode<synchronous>, transform_indices = @transform_1, window_bounds = array<i64: 1, 128>}, {pipeline_mode = #tpu.pipeline_mode<synchronous>, transform_indices = @transform_2, window_bounds = array<i64: 1, 128>}, {pipeline_mode = #tpu.pipeline_mode<synchronous>, transform_indices = @transform_3, window_bounds = array<i64: 3, 3, 128, 128>}, {transform_indices = @transform_4, window_bounds = array<i64: 1, 4, 256, 128>}, {transform_indices = @transform_5, window_bounds = array<i64: 1, 2, 128>}]} {
    %c0 = arith.constant 0 : index
    %c0_0 = arith.constant 0 : index
    %c0_1 = arith.constant 0 : index
    %c0_2 = arith.constant 0 : index
    %0 = vector.load %arg1[%c0, %c0_0, %c0_1, %c0_2] : memref<1x17x17x128xf32, #tpu.memory_space<vmem>>, vector<1x17x17x128xf32>
    %1 = vector.shape_cast %0 : vector<1x17x17x128xf32> to vector<17x17x128xf32>
    %c0_3 = arith.constant 0 : index
    %c0_4 = arith.constant 0 : index
    %2 = vector.load %arg2[%c0_3, %c0_4] : memref<1x128xf32, #tpu.memory_space<vmem>>, vector<1x128xf32>
    %3 = vector.shape_cast %2 : vector<1x128xf32> to vector<1x1x128xf32>
    %4 = vector.broadcast %3 : vector<1x1x128xf32> to vector<17x17x128xf32>
    %5 = arith.mulf %1, %4 : vector<17x17x128xf32>
    %c0_5 = arith.constant 0 : index
    %c0_6 = arith.constant 0 : index
    %6 = vector.load %arg3[%c0_5, %c0_6] : memref<1x128xf32, #tpu.memory_space<vmem>>, vector<1x128xf32>
    %7 = vector.shape_cast %6 : vector<1x128xf32> to vector<1x1x128xf32>
    %8 = vector.broadcast %7 : vector<1x1x128xf32> to vector<17x17x128xf32>
    %9 = arith.addf %5, %8 : vector<17x17x128xf32>
    %cst = arith.constant 0.000000e+00 : f32
    %10 = vector.broadcast %cst : f32 to vector<17x17x128xf32>
    %11 = arith.maximumf %9, %10 : vector<17x17x128xf32>
    %12 = tpu.iota {dimensions = array<i32: 0>} : vector<17x17x1xi32>
    %13 = tpu.iota {dimensions = array<i32: 1>} : vector<17x17x1xi32>
    %c16_i32 = arith.constant 16 : i32
    %14 = vector.broadcast %c16_i32 : i32 to vector<17x17x1xi32>
    %15 = arith.cmpi slt, %12, %14 : vector<17x17x1xi32>
    %c16_i32_7 = arith.constant 16 : i32
    %16 = vector.broadcast %c16_i32_7 : i32 to vector<17x17x1xi32>
    %17 = arith.cmpi slt, %13, %16 : vector<17x17x1xi32>
    %18 = arith.andi %15, %17 : vector<17x17x1xi1>
    %cst_8 = arith.constant 0.000000e+00 : f32
    %19 = vector.shape_cast %18 : vector<17x17x1xi1> to vector<17x17x1xi1>
    %20 = vector.broadcast %19 : vector<17x17x1xi1> to vector<17x17x128xi1>
    %21 = vector.broadcast %cst_8 : f32 to vector<17x17x128xf32>
    %22 = arith.select %20, %11, %21 : vector<17x17x128xi1>, vector<17x17x128xf32>
    %23 = arith.truncf %22 : vector<17x17x128xf32> to vector<17x17x128xbf16>
    %c0_9 = arith.constant 0 : index
    %c0_10 = arith.constant 0 : index
    %c0_11 = arith.constant 0 : index
    %24 = vector.load %arg7[%c0_9, %c0_10, %c0_11] : memref<17x17x128xbf16, #tpu.memory_space<vmem>>, vector<17x17x128xbf16>
    tpu.vector_store %arg7[%c0_9, %c0_10, %c0_11], %23 {strides = array<i32>} : memref<17x17x128xbf16, #tpu.memory_space<vmem>>, vector<17x17x128xbf16>,
    %cst_12 = arith.constant 0.000000e+00 : f32
    %25 = vector.broadcast %cst_12 : f32 to vector<1x128xf32>
    %cst_13 = arith.constant 0.000000e+00 : f32
    %26 = vector.broadcast %cst_13 : f32 to vector<1x128xf32>
    %cst_14 = arith.constant 0.000000e+00 : f32
    %27 = vector.broadcast %cst_14 : f32 to vector<256x128xf32>
    %c0_15 = arith.constant 0 : index
    %c0_16 = arith.constant 0 : index
    %c0_17 = arith.constant 0 : index
    %28 = vector.load %arg7[%c0_15, %c0_16, %c0_17] : memref<17x17x128xbf16, #tpu.memory_space<vmem>>, vector<16x16x128xbf16>
    %29 = vector.shape_cast %28 : vector<16x16x128xbf16> to vector<256x128xbf16>
    %c1 = arith.constant 1 : index
    %c1_18 = arith.constant 1 : index
    %c0_19 = arith.constant 0 : index
    %c0_20 = arith.constant 0 : index
    %30 = vector.load %arg4[%c1, %c1_18, %c0_19, %c0_20] : memref<3x3x128x128xbf16, #tpu.memory_space<vmem>>, vector<1x1x128x128xbf16>
    %31 = vector.shape_cast %30 : vector<1x1x128x128xbf16> to vector<128x128xbf16>
    %cst_21 = arith.constant dense<0.000000e+00> : vector<256x128xf32>
    %32 = tpu.matmul %29, %31, %cst_21 {dimension_numbers = #tpu.dot_dimension_numbers<[1], [0], [0], [1], [0, 0, 1, 1], [], []>} : vector<256x128xbf16>, vector<128x128xbf16>, vector<256x128xf32> -> vector<256x128xf32>
    %33 = arith.addf %27, %32 : vector<256x128xf32>
    %c0_22 = arith.constant 0 : index
    %c0_23 = arith.constant 0 : index
    %c0_24 = arith.constant 0 : index
    %c0_25 = arith.constant 0 : index
    %34 = vector.load %arg5[%c0_22, %c0_23, %c0_24, %c0_25] : memref<1x4x256x128xf32, #tpu.memory_space<vmem>>, vector<1x1x256x128xf32>
    %35 = vector.shape_cast %34 : vector<1x1x256x128xf32> to vector<256x128xf32>
    %36 = vector.shape_cast %33 : vector<256x128xf32> to vector<1x1x256x128xf32>
    tpu.vector_store %arg5[%c0_22, %c0_23, %c0_24, %c0_25], %36 {strides = array<i32>} : memref<1x4x256x128xf32, #tpu.memory_space<vmem>>, vector<1x1x256x128xf32>,
    %cst_26 = arith.constant dense<0.000000e+00> : vector<128xf32>
    %37 = vector.multi_reduction <add>, %33, %cst_26 [0] : vector<256x128xf32> to vector<128xf32>
    %38 = vector.shape_cast %37 : vector<128xf32> to vector<1x128xf32>
    %39 = arith.addf %25, %38 : vector<1x128xf32>
    %40 = arith.mulf %33, %33 : vector<256x128xf32>
    %cst_27 = arith.constant dense<0.000000e+00> : vector<128xf32>
    %41 = vector.multi_reduction <add>, %40, %cst_27 [0] : vector<256x128xf32> to vector<128xf32>
    %42 = vector.shape_cast %41 : vector<128xf32> to vector<1x128xf32>
    %43 = arith.addf %26, %42 : vector<1x128xf32>
    %cst_28 = arith.constant 0.000000e+00 : f32
    %44 = vector.broadcast %cst_28 : f32 to vector<256x128xf32>
    %c0_29 = arith.constant 0 : index
    %c1_30 = arith.constant 1 : index
    %c0_31 = arith.constant 0 : index
    %45 = vector.load %arg7[%c0_29, %c1_30, %c0_31] : memref<17x17x128xbf16, #tpu.memory_space<vmem>>, vector<16x16x128xbf16>
    %46 = vector.shape_cast %45 : vector<16x16x128xbf16> to vector<256x128xbf16>
    %c1_32 = arith.constant 1 : index
    %c0_33 = arith.constant 0 : index
    %c0_34 = arith.constant 0 : index
    %c0_35 = arith.constant 0 : index
    %47 = vector.load %arg4[%c1_32, %c0_33, %c0_34, %c0_35] : memref<3x3x128x128xbf16, #tpu.memory_space<vmem>>, vector<1x1x128x128xbf16>
    %48 = vector.shape_cast %47 : vector<1x1x128x128xbf16> to vector<128x128xbf16>
    %cst_36 = arith.constant dense<0.000000e+00> : vector<256x128xf32>
    %49 = tpu.matmul %46, %48, %cst_36 {dimension_numbers = #tpu.dot_dimension_numbers<[1], [0], [0], [1], [0, 0, 1, 1], [], []>} : vector<256x128xbf16>, vector<128x128xbf16>, vector<256x128xf32> -> vector<256x128xf32>
    %50 = arith.addf %44, %49 : vector<256x128xf32>
    %c0_37 = arith.constant 0 : index
    %c0_38 = arith.constant 0 : index
    %c0_39 = arith.constant 0 : index
    %51 = vector.load %arg7[%c0_37, %c0_38, %c0_39] : memref<17x17x128xbf16, #tpu.memory_space<vmem>>, vector<16x16x128xbf16>
    %52 = vector.shape_cast %51 : vector<16x16x128xbf16> to vector<256x128xbf16>
    %c1_40 = arith.constant 1 : index
    %c2 = arith.constant 2 : index
    %c0_41 = arith.constant 0 : index
    %c0_42 = arith.constant 0 : index
    %53 = vector.load %arg4[%c1_40, %c2, %c0_41, %c0_42] : memref<3x3x128x128xbf16, #tpu.memory_space<vmem>>, vector<1x1x128x128xbf16>
    %54 = vector.shape_cast %53 : vector<1x1x128x128xbf16> to vector<128x128xbf16>
    %cst_43 = arith.constant dense<0.000000e+00> : vector<256x128xf32>
    %55 = tpu.matmul %52, %54, %cst_43 {dimension_numbers = #tpu.dot_dimension_numbers<[1], [0], [0], [1], [0, 0, 1, 1], [], []>} : vector<256x128xbf16>, vector<128x128xbf16>, vector<256x128xf32> -> vector<256x128xf32>
    %56 = arith.addf %50, %55 : vector<256x128xf32>
    %c0_44 = arith.constant 0 : index
    %c1_45 = arith.constant 1 : index
    %c0_46 = arith.constant 0 : index
    %c0_47 = arith.constant 0 : index
    %57 = vector.load %arg5[%c0_44, %c1_45, %c0_46, %c0_47] : memref<1x4x256x128xf32, #tpu.memory_space<vmem>>, vector<1x1x256x128xf32>
    %58 = vector.shape_cast %57 : vector<1x1x256x128xf32> to vector<256x128xf32>
    %59 = vector.shape_cast %56 : vector<256x128xf32> to vector<1x1x256x128xf32>
    tpu.vector_store %arg5[%c0_44, %c1_45, %c0_46, %c0_47], %59 {strides = array<i32>} : memref<1x4x256x128xf32, #tpu.memory_space<vmem>>, vector<1x1x256x128xf32>,
    %cst_48 = arith.constant dense<0.000000e+00> : vector<128xf32>
    %60 = vector.multi_reduction <add>, %56, %cst_48 [0] : vector<256x128xf32> to vector<128xf32>
    %61 = vector.shape_cast %60 : vector<128xf32> to vector<1x128xf32>
    %62 = arith.addf %39, %61 : vector<1x128xf32>
    %63 = arith.mulf %56, %56 : vector<256x128xf32>
    %cst_49 = arith.constant dense<0.000000e+00> : vector<128xf32>
    %64 = vector.multi_reduction <add>, %63, %cst_49 [0] : vector<256x128xf32> to vector<128xf32>
    %65 = vector.shape_cast %64 : vector<128xf32> to vector<1x128xf32>
    %66 = arith.addf %43, %65 : vector<1x128xf32>
    %cst_50 = arith.constant 0.000000e+00 : f32
    %67 = vector.broadcast %cst_50 : f32 to vector<256x128xf32>
    %c1_51 = arith.constant 1 : index
    %c0_52 = arith.constant 0 : index
    %c0_53 = arith.constant 0 : index
    %68 = vector.load %arg7[%c1_51, %c0_52, %c0_53] : memref<17x17x128xbf16, #tpu.memory_space<vmem>>, vector<16x16x128xbf16>
    %69 = vector.shape_cast %68 : vector<16x16x128xbf16> to vector<256x128xbf16>
    %c0_54 = arith.constant 0 : index
    %c1_55 = arith.constant 1 : index
    %c0_56 = arith.constant 0 : index
    %c0_57 = arith.constant 0 : index
    %70 = vector.load %arg4[%c0_54, %c1_55, %c0_56, %c0_57] : memref<3x3x128x128xbf16, #tpu.memory_space<vmem>>, vector<1x1x128x128xbf16>
    %71 = vector.shape_cast %70 : vector<1x1x128x128xbf16> to vector<128x128xbf16>
    %cst_58 = arith.constant dense<0.000000e+00> : vector<256x128xf32>
    %72 = tpu.matmul %69, %71, %cst_58 {dimension_numbers = #tpu.dot_dimension_numbers<[1], [0], [0], [1], [0, 0, 1, 1], [], []>} : vector<256x128xbf16>, vector<128x128xbf16>, vector<256x128xf32> -> vector<256x128xf32>
    %73 = arith.addf %67, %72 : vector<256x128xf32>
    %c0_59 = arith.constant 0 : index
    %c0_60 = arith.constant 0 : index
    %c0_61 = arith.constant 0 : index
    %74 = vector.load %arg7[%c0_59, %c0_60, %c0_61] : memref<17x17x128xbf16, #tpu.memory_space<vmem>>, vector<16x16x128xbf16>
    %75 = vector.shape_cast %74 : vector<16x16x128xbf16> to vector<256x128xbf16>
    %c2_62 = arith.constant 2 : index
    %c1_63 = arith.constant 1 : index
    %c0_64 = arith.constant 0 : index
    %c0_65 = arith.constant 0 : index
    %76 = vector.load %arg4[%c2_62, %c1_63, %c0_64, %c0_65] : memref<3x3x128x128xbf16, #tpu.memory_space<vmem>>, vector<1x1x128x128xbf16>
    %77 = vector.shape_cast %76 : vector<1x1x128x128xbf16> to vector<128x128xbf16>
    %cst_66 = arith.constant dense<0.000000e+00> : vector<256x128xf32>
    %78 = tpu.matmul %75, %77, %cst_66 {dimension_numbers = #tpu.dot_dimension_numbers<[1], [0], [0], [1], [0, 0, 1, 1], [], []>} : vector<256x128xbf16>, vector<128x128xbf16>, vector<256x128xf32> -> vector<256x128xf32>
    %79 = arith.addf %73, %78 : vector<256x128xf32>
    %c0_67 = arith.constant 0 : index
    %c2_68 = arith.constant 2 : index
    %c0_69 = arith.constant 0 : index
    %c0_70 = arith.constant 0 : index
    %80 = vector.load %arg5[%c0_67, %c2_68, %c0_69, %c0_70] : memref<1x4x256x128xf32, #tpu.memory_space<vmem>>, vector<1x1x256x128xf32>
    %81 = vector.shape_cast %80 : vector<1x1x256x128xf32> to vector<256x128xf32>
    %82 = vector.shape_cast %79 : vector<256x128xf32> to vector<1x1x256x128xf32>
    tpu.vector_store %arg5[%c0_67, %c2_68, %c0_69, %c0_70], %82 {strides = array<i32>} : memref<1x4x256x128xf32, #tpu.memory_space<vmem>>, vector<1x1x256x128xf32>,
    %cst_71 = arith.constant dense<0.000000e+00> : vector<128xf32>
    %83 = vector.multi_reduction <add>, %79, %cst_71 [0] : vector<256x128xf32> to vector<128xf32>
    %84 = vector.shape_cast %83 : vector<128xf32> to vector<1x128xf32>
    %85 = arith.addf %62, %84 : vector<1x128xf32>
    %86 = arith.mulf %79, %79 : vector<256x128xf32>
    %cst_72 = arith.constant dense<0.000000e+00> : vector<128xf32>
    %87 = vector.multi_reduction <add>, %86, %cst_72 [0] : vector<256x128xf32> to vector<128xf32>
    %88 = vector.shape_cast %87 : vector<128xf32> to vector<1x128xf32>
    %89 = arith.addf %66, %88 : vector<1x128xf32>
    %cst_73 = arith.constant 0.000000e+00 : f32
    %90 = vector.broadcast %cst_73 : f32 to vector<256x128xf32>
    %c1_74 = arith.constant 1 : index
    %c1_75 = arith.constant 1 : index
    %c0_76 = arith.constant 0 : index
    %91 = vector.load %arg7[%c1_74, %c1_75, %c0_76] : memref<17x17x128xbf16, #tpu.memory_space<vmem>>, vector<16x16x128xbf16>
    %92 = vector.shape_cast %91 : vector<16x16x128xbf16> to vector<256x128xbf16>
    %c0_77 = arith.constant 0 : index
    %c0_78 = arith.constant 0 : index
    %c0_79 = arith.constant 0 : index
    %c0_80 = arith.constant 0 : index
    %93 = vector.load %arg4[%c0_77, %c0_78, %c0_79, %c0_80] : memref<3x3x128x128xbf16, #tpu.memory_space<vmem>>, vector<1x1x128x128xbf16>
    %94 = vector.shape_cast %93 : vector<1x1x128x128xbf16> to vector<128x128xbf16>
    %cst_81 = arith.constant dense<0.000000e+00> : vector<256x128xf32>
    %95 = tpu.matmul %92, %94, %cst_81 {dimension_numbers = #tpu.dot_dimension_numbers<[1], [0], [0], [1], [0, 0, 1, 1], [], []>} : vector<256x128xbf16>, vector<128x128xbf16>, vector<256x128xf32> -> vector<256x128xf32>
    %96 = arith.addf %90, %95 : vector<256x128xf32>
    %c1_82 = arith.constant 1 : index
    %c0_83 = arith.constant 0 : index
    %c0_84 = arith.constant 0 : index
    %97 = vector.load %arg7[%c1_82, %c0_83, %c0_84] : memref<17x17x128xbf16, #tpu.memory_space<vmem>>, vector<16x16x128xbf16>
    %98 = vector.shape_cast %97 : vector<16x16x128xbf16> to vector<256x128xbf16>
    %c0_85 = arith.constant 0 : index
    %c2_86 = arith.constant 2 : index
    %c0_87 = arith.constant 0 : index
    %c0_88 = arith.constant 0 : index
    %99 = vector.load %arg4[%c0_85, %c2_86, %c0_87, %c0_88] : memref<3x3x128x128xbf16, #tpu.memory_space<vmem>>, vector<1x1x128x128xbf16>
    %100 = vector.shape_cast %99 : vector<1x1x128x128xbf16> to vector<128x128xbf16>
    %cst_89 = arith.constant dense<0.000000e+00> : vector<256x128xf32>
    %101 = tpu.matmul %98, %100, %cst_89 {dimension_numbers = #tpu.dot_dimension_numbers<[1], [0], [0], [1], [0, 0, 1, 1], [], []>} : vector<256x128xbf16>, vector<128x128xbf16>, vector<256x128xf32> -> vector<256x128xf32>
    %102 = arith.addf %96, %101 : vector<256x128xf32>
    %c0_90 = arith.constant 0 : index
    %c1_91 = arith.constant 1 : index
    %c0_92 = arith.constant 0 : index
    %103 = vector.load %arg7[%c0_90, %c1_91, %c0_92] : memref<17x17x128xbf16, #tpu.memory_space<vmem>>, vector<16x16x128xbf16>
    %104 = vector.shape_cast %103 : vector<16x16x128xbf16> to vector<256x128xbf16>
    %c2_93 = arith.constant 2 : index
    %c0_94 = arith.constant 0 : index
    %c0_95 = arith.constant 0 : index
    %c0_96 = arith.constant 0 : index
    %105 = vector.load %arg4[%c2_93, %c0_94, %c0_95, %c0_96] : memref<3x3x128x128xbf16, #tpu.memory_space<vmem>>, vector<1x1x128x128xbf16>
    %106 = vector.shape_cast %105 : vector<1x1x128x128xbf16> to vector<128x128xbf16>
    %cst_97 = arith.constant dense<0.000000e+00> : vector<256x128xf32>
    %107 = tpu.matmul %104, %106, %cst_97 {dimension_numbers = #tpu.dot_dimension_numbers<[1], [0], [0], [1], [0, 0, 1, 1], [], []>} : vector<256x128xbf16>, vector<128x128xbf16>, vector<256x128xf32> -> vector<256x128xf32>
    %108 = arith.addf %102, %107 : vector<256x128xf32>
    %c0_98 = arith.constant 0 : index
    %c0_99 = arith.constant 0 : index
    %c0_100 = arith.constant 0 : index
    %109 = vector.load %arg7[%c0_98, %c0_99, %c0_100] : memref<17x17x128xbf16, #tpu.memory_space<vmem>>, vector<16x16x128xbf16>
    %110 = vector.shape_cast %109 : vector<16x16x128xbf16> to vector<256x128xbf16>
    %c2_101 = arith.constant 2 : index
    %c2_102 = arith.constant 2 : index
    %c0_103 = arith.constant 0 : index
    %c0_104 = arith.constant 0 : index
    %111 = vector.load %arg4[%c2_101, %c2_102, %c0_103, %c0_104] : memref<3x3x128x128xbf16, #tpu.memory_space<vmem>>, vector<1x1x128x128xbf16>
    %112 = vector.shape_cast %111 : vector<1x1x128x128xbf16> to vector<128x128xbf16>
    %cst_105 = arith.constant dense<0.000000e+00> : vector<256x128xf32>
    %113 = tpu.matmul %110, %112, %cst_105 {dimension_numbers = #tpu.dot_dimension_numbers<[1], [0], [0], [1], [0, 0, 1, 1], [], []>} : vector<256x128xbf16>, vector<128x128xbf16>, vector<256x128xf32> -> vector<256x128xf32>
    %114 = arith.addf %108, %113 : vector<256x128xf32>
    %c0_106 = arith.constant 0 : index
    %c3 = arith.constant 3 : index
    %c0_107 = arith.constant 0 : index
    %c0_108 = arith.constant 0 : index
    %115 = vector.load %arg5[%c0_106, %c3, %c0_107, %c0_108] : memref<1x4x256x128xf32, #tpu.memory_space<vmem>>, vector<1x1x256x128xf32>
    %116 = vector.shape_cast %115 : vector<1x1x256x128xf32> to vector<256x128xf32>
    %117 = vector.shape_cast %114 : vector<256x128xf32> to vector<1x1x256x128xf32>
    tpu.vector_store %arg5[%c0_106, %c3, %c0_107, %c0_108], %117 {strides = array<i32>} : memref<1x4x256x128xf32, #tpu.memory_space<vmem>>, vector<1x1x256x128xf32>,
    %cst_109 = arith.constant dense<0.000000e+00> : vector<128xf32>
    %118 = vector.multi_reduction <add>, %114, %cst_109 [0] : vector<256x128xf32> to vector<128xf32>
    %119 = vector.shape_cast %118 : vector<128xf32> to vector<1x128xf32>
    %120 = arith.addf %85, %119 : vector<1x128xf32>
    %121 = arith.mulf %114, %114 : vector<256x128xf32>
    %cst_110 = arith.constant dense<0.000000e+00> : vector<128xf32>
    %122 = vector.multi_reduction <add>, %121, %cst_110 [0] : vector<256x128xf32> to vector<128xf32>
    %123 = vector.shape_cast %122 : vector<128xf32> to vector<1x128xf32>
    %124 = arith.addf %89, %123 : vector<1x128xf32>
    %c0_111 = arith.constant 0 : index
    %c0_112 = arith.constant 0 : index
    %c0_113 = arith.constant 0 : index
    %125 = vector.load %arg6[%c0_111, %c0_112, %c0_113] : memref<1x2x128xf32, #tpu.memory_space<vmem>>, vector<1x1x128xf32>
    %126 = vector.shape_cast %125 : vector<1x1x128xf32> to vector<1x128xf32>
    %127 = vector.shape_cast %120 : vector<1x128xf32> to vector<1x1x128xf32>
    tpu.vector_store %arg6[%c0_111, %c0_112, %c0_113], %127 {strides = array<i32>} : memref<1x2x128xf32, #tpu.memory_space<vmem>>, vector<1x1x128xf32>,
    %c0_114 = arith.constant 0 : index
    %c1_115 = arith.constant 1 : index
    %c0_116 = arith.constant 0 : index
    %128 = vector.load %arg6[%c0_114, %c1_115, %c0_116] : memref<1x2x128xf32, #tpu.memory_space<vmem>>, vector<1x1x128xf32>
    %129 = vector.shape_cast %128 : vector<1x1x128xf32> to vector<1x128xf32>
    %130 = vector.shape_cast %124 : vector<1x128xf32> to vector<1x1x128xf32>
    tpu.vector_store %arg6[%c0_114, %c1_115, %c0_116], %130 {strides = array<i32>} : memref<1x2x128xf32, #tpu.memory_space<vmem>>, vector<1x1x128xf32>,
    return
  }
  func.func @transform_0(%arg0: i32) -> (i32, i32, i32, i32) {
    %c0_i32 = arith.constant 0 : i32
    %c0_i32_0 = arith.constant 0 : i32
    %c0_i32_1 = arith.constant 0 : i32
    %c0_i32_2 = arith.constant 0 : i32
    return %arg0, %c0_i32, %c0_i32_0, %c0_i32_1 : i32, i32, i32, i32
  }
  func.func @transform_1(%arg0: i32) -> (i32, i32) {
    %c0_i32 = arith.constant 0 : i32
    %c0_i32_0 = arith.constant 0 : i32
    %c0_i32_1 = arith.constant 0 : i32
    return %c0_i32, %c0_i32_0 : i32, i32
  }
  func.func @transform_2(%arg0: i32) -> (i32, i32) {
    %c0_i32 = arith.constant 0 : i32
    %c0_i32_0 = arith.constant 0 : i32
    %c0_i32_1 = arith.constant 0 : i32
    return %c0_i32, %c0_i32_0 : i32, i32
  }
  func.func @transform_3(%arg0: i32) -> (i32, i32, i32, i32) {
    %c0_i32 = arith.constant 0 : i32
    %c0_i32_0 = arith.constant 0 : i32
    %c0_i32_1 = arith.constant 0 : i32
    %c0_i32_2 = arith.constant 0 : i32
    %c0_i32_3 = arith.constant 0 : i32
    return %c0_i32, %c0_i32_0, %c0_i32_1, %c0_i32_2 : i32, i32, i32, i32
  }
  func.func @transform_4(%arg0: i32) -> (i32, i32, i32, i32) {
    %c0_i32 = arith.constant 0 : i32
    %c0_i32_0 = arith.constant 0 : i32
    %c0_i32_1 = arith.constant 0 : i32
    %c0_i32_2 = arith.constant 0 : i32
    return %arg0, %c0_i32, %c0_i32_0, %c0_i32_1 : i32, i32, i32, i32
  }
  func.func @transform_5(%arg0: i32) -> (i32, i32, i32) {
    %c0_i32 = arith.constant 0 : i32
    %c0_i32_0 = arith.constant 0 : i32
    %c0_i32_1 = arith.constant 0 : i32
    return %arg0, %c0_i32, %c0_i32_0 : i32, i32, i32
  }
}

module attributes {stable_mosaic.version = 11 : i64} {
  func.func @_bn_apply_kernel(%arg0: i32, %arg1: memref<1x256x128xf32, #tpu.memory_space<vmem>>, %arg2: memref<1x128xf32, #tpu.memory_space<vmem>>, %arg3: memref<1x128xf32, #tpu.memory_space<vmem>>, %arg4: memref<1x256x128xf32, #tpu.memory_space<vmem>>) attributes {dimension_semantics = [#tpu.dimension_semantics<parallel>], iteration_bounds = array<i64: 8>, scalar_prefetch = 0 : i64, scratch_operands = 0 : i64, tpu.core_type = #tpu.core_type<tc>, window_params = [{transform_indices = @transform_0, window_bounds = array<i64: 1, 256, 128>}, {pipeline_mode = #tpu.pipeline_mode<synchronous>, transform_indices = @transform_1, window_bounds = array<i64: 1, 128>}, {pipeline_mode = #tpu.pipeline_mode<synchronous>, transform_indices = @transform_2, window_bounds = array<i64: 1, 128>}, {transform_indices = @transform_3, window_bounds = array<i64: 1, 256, 128>}]} {
    %c0 = arith.constant 0 : index
    %c0_0 = arith.constant 0 : index
    %c0_1 = arith.constant 0 : index
    %0 = vector.load %arg1[%c0, %c0_0, %c0_1] : memref<1x256x128xf32, #tpu.memory_space<vmem>>, vector<1x256x128xf32>
    %c0_2 = arith.constant 0 : index
    %c0_3 = arith.constant 0 : index
    %1 = vector.load %arg2[%c0_2, %c0_3] : memref<1x128xf32, #tpu.memory_space<vmem>>, vector<1x128xf32>
    %2 = vector.shape_cast %1 : vector<1x128xf32> to vector<1x1x128xf32>
    %3 = vector.broadcast %2 : vector<1x1x128xf32> to vector<1x256x128xf32>
    %4 = arith.mulf %0, %3 : vector<1x256x128xf32>
    %c0_4 = arith.constant 0 : index
    %c0_5 = arith.constant 0 : index
    %5 = vector.load %arg3[%c0_4, %c0_5] : memref<1x128xf32, #tpu.memory_space<vmem>>, vector<1x128xf32>
    %6 = vector.shape_cast %5 : vector<1x128xf32> to vector<1x1x128xf32>
    %7 = vector.broadcast %6 : vector<1x1x128xf32> to vector<1x256x128xf32>
    %8 = arith.addf %4, %7 : vector<1x256x128xf32>
    %c0_6 = arith.constant 0 : index
    %c0_7 = arith.constant 0 : index
    %c0_8 = arith.constant 0 : index
    %9 = vector.load %arg4[%c0_6, %c0_7, %c0_8] : memref<1x256x128xf32, #tpu.memory_space<vmem>>, vector<1x256x128xf32>
    tpu.vector_store %arg4[%c0_6, %c0_7, %c0_8], %8 {strides = array<i32>} : memref<1x256x128xf32, #tpu.memory_space<vmem>>, vector<1x256x128xf32>,
    return
  }
  func.func @transform_0(%arg0: i32) -> (i32, i32, i32) {
    %c0_i32 = arith.constant 0 : i32
    %c0_i32_0 = arith.constant 0 : i32
    %c0_i32_1 = arith.constant 0 : i32
    return %arg0, %c0_i32, %c0_i32_0 : i32, i32, i32
  }
  func.func @transform_1(%arg0: i32) -> (i32, i32) {
    %c0_i32 = arith.constant 0 : i32
    %c0_i32_0 = arith.constant 0 : i32
    %c0_i32_1 = arith.constant 0 : i32
    return %c0_i32, %c0_i32_0 : i32, i32
  }
  func.func @transform_2(%arg0: i32) -> (i32, i32) {
    %c0_i32 = arith.constant 0 : i32
    %c0_i32_0 = arith.constant 0 : i32
    %c0_i32_1 = arith.constant 0 : i32
    return %c0_i32, %c0_i32_0 : i32, i32
  }
  func.func @transform_3(%arg0: i32) -> (i32, i32, i32) {
    %c0_i32 = arith.constant 0 : i32
    %c0_i32_0 = arith.constant 0 : i32
    %c0_i32_1 = arith.constant 0 : i32
    return %arg0, %c0_i32, %c0_i32_0 : i32, i32, i32
  }
}

</mosaic_0001>

<llo_original>
// kernel: relation_module_forward.5
$region0: #{relation_module_forward.5}
  #allocation0 [shape = 'u32[]', space=smem, size = 0x4, offset = 0x4, fixed_abs, tag = 'smem constant byte address 0x4 - core index']
  #allocation1 [shape = 'u32[144,128]{1,0:T(1,128)}', space=vmem, size = 0x12000, scoped, tag = 'internal scratch']
  %s0 = inlined_call_operand.vmem [shape: f32[8,256,128], index: 0, kind: input, shape index: {}]
  %s1 = inlined_call_operand.vmem [shape: f32[1,128], index: 1, kind: input, shape index: {}]
  %s2 = inlined_call_operand.vmem [shape: f32[1,128], index: 2, kind: input, shape index: {}]
  %s3 = inlined_call_operand.vmem [shape: f32[8,256,128], index: 3, kind: output, shape index: {}]
  %s4 = sld [smem:[#allocation0]]
  $region45: #{relation_module_forward.5} parent=0
    _
  %s6 = ssub.s32 1, %s4
  %s7 = scalar_select 0, %s6, %s4
  loop: start=0, step=1, limit=10
  $region2: #{relation_module_forward.5} parent=0 // loop_pre_header
    _
  $region3: #{relation_module_forward.5} parent=0 // loop_header
    %s9 = sphi 0, %s13
    %p10 = scmp.ge.s32.totalorder %s9, 10
    %s19 = sphi 0, %s21
    %s22 = sphi 0, %s19
    %s23 = sphi 0, %s22
    %s39 = sphi 0, %s23
    %s43 = sphi 0, %s43
    %s45 = sphi 0, %s43
    %s46 = sphi 0, %s45
    %s60 = sphi 0, %s46
    %s64 = sphi 0, %s64
    %s66 = sphi 0, %s64
    %s67 = sphi 0, %s66
    %s81 = sphi 0, %s67
    %s87 = sphi 0, %s89
    %s90 = sphi 0, %s87
    %s91 = sphi 0, %s90
    %s107 = sphi 0, %s91
  $region4: #{relation_module_forward.5} parent=0 // loop_header_branch
    %12 = sbr.rel (%p10) target = $region8
  $region5: #{relation_module_forward.5} parent=0 // loop_body
    %s14 = ssub.s32 %s9, 1
    %s15 = ssub.s32 %s9, 2
    %s16 = sadd.s32 %s9, 1
    %s17 = ssub.s32 %s9, %s16
    %p18 = scmp.eq.s32.totalorder %s17, 0
    %s20 = sadd.s32 %s19, 1
    %s21 = scalar_select %p18, %s19, %s20
    %p24 = pneg %p18
    %p25 = scmp.eq.s32.totalorder %s9, 7
    %p26 = por %p24, %p25
    %p27 = scmp.ne.s32.totalorder %s19, %s22
    %p28 = scmp.eq.s32.totalorder %s9, 0
    %p29 = por %p27, %p28
    %p30 = scmp.ne.s32.totalorder %s19, %s22
    %p31 = scmp.eq.s32.totalorder %s14, 7
    %p32 = por %p30, %p31
    %p33 = scmp.ne.s32.totalorder %s22, %s23
    %p34 = scmp.eq.s32.totalorder %s14, 0
    %p35 = por %p33, %p34
    %p36 = scmp.ne.s32.totalorder %s22, %s23
    %p37 = scmp.eq.s32.totalorder %s15, 7
    %p38 = por %p36, %p37
    %p40 = scmp.ne.s32.totalorder %s23, %s39
    %p41 = scmp.eq.s32.totalorder %s15, 0
    %p42 = por %p40, %p41
    %s44 = sadd.s32 %s43, 1
    %p47 = scmp.eq.s32.totalorder %s9, 7
    %p48 = scmp.ne.s32.totalorder %s43, %s45
    %p49 = scmp.eq.s32.totalorder %s9, 0
    %p50 = por %p48, %p49
    %p51 = scmp.ne.s32.totalorder %s43, %s45
    %p52 = scmp.eq.s32.totalorder %s14, 7
    %p53 = por %p51, %p52
    %p54 = scmp.ne.s32.totalorder %s45, %s46
    %p55 = scmp.eq.s32.totalorder %s14, 0
    %p56 = por %p54, %p55
    %p57 = scmp.ne.s32.totalorder %s45, %s46
    %p58 = scmp.eq.s32.totalorder %s15, 7
    %p59 = por %p57, %p58
    %p61 = scmp.ne.s32.totalorder %s46, %s60
    %p62 = scmp.eq.s32.totalorder %s15, 0
    %p63 = por %p61, %p62
    %s65 = sadd.s32 %s64, 1
    %p68 = scmp.eq.s32.totalorder %s9, 7
    %p69 = scmp.ne.s32.totalorder %s64, %s66
    %p70 = scmp.eq.s32.totalorder %s9, 0
    %p71 = por %p69, %p70
    %p72 = scmp.ne.s32.totalorder %s64, %s66
    %p73 = scmp.eq.s32.totalorder %s14, 7
    %p74 = por %p72, %p73
    %p75 = scmp.ne.s32.totalorder %s66, %s67
    %p76 = scmp.eq.s32.totalorder %s14, 0
    %p77 = por %p75, %p76
    %p78 = scmp.ne.s32.totalorder %s66, %s67
    %p79 = scmp.eq.s32.totalorder %s15, 7
    %p80 = por %p78, %p79
    %p82 = scmp.ne.s32.totalorder %s67, %s81
    %p83 = scmp.eq.s32.totalorder %s15, 0
    %p84 = por %p82, %p83
    %s85 = ssub.s32 %s9, %s16
    %p86 = scmp.eq.s32.totalorder %s85, 0
    %s88 = sadd.s32 %s87, 1
    %s89 = scalar_select %p86, %s87, %s88
    %p92 = pneg %p86
    %p93 = scmp.eq.s32.totalorder %s9, 7
    %p94 = por %p92, %p93
    %p95 = scmp.ne.s32.totalorder %s87, %s90
    %p96 = scmp.eq.s32.totalorder %s9, 0
    %p97 = por %p95, %p96
    %p98 = scmp.ne.s32.totalorder %s87, %s90
    %p99 = scmp.eq.s32.totalorder %s14, 7
    %p100 = por %p98, %p99
    %p101 = scmp.ne.s32.totalorder %s90, %s91
    %p102 = scmp.eq.s32.totalorder %s14, 0
    %p103 = por %p101, %p102
    %p104 = scmp.ne.s32.totalorder %s90, %s91
    %p105 = scmp.eq.s32.totalorder %s15, 7
    %p106 = por %p104, %p105
    %p108 = scmp.ne.s32.totalorder %s91, %s107
    %p109 = scmp.eq.s32.totalorder %s15, 0
    %p110 = por %p108, %p109
    %p111 = scmp.le.s32.totalorder 1, %s9
    %p112 = scmp.lt.s32.totalorder %s9, 9
    %p113 = pnand %p111, %p112
    %p114 = pneg %p113
    // Predicated region
    $region9: #{relation_module_forward.5} parent=5 // pred_check
      _
    $region10: #{relation_module_forward.5} parent=5 // pred_check_branch
      %116 = sbr.rel (%p113) target = $region12
    $region11: #{relation_module_forward.5} parent=5 // pred_region
      %s117 = ssub.s32 %s9, 1
      // Predicated region
      $region13: #{relation_module_forward.5} parent=11 // pred_check
        %p118 = pneg %p56
      $region14: #{relation_module_forward.5} parent=11 // pred_check_branch
        %120 = sbr.rel (%p118) target = $region16
      $region15: #{relation_module_forward.5} parent=11 // pred_region
        _
      $region16: #{relation_module_forward.5} parent=11 // pred_fallthru
        _
      // Predicated region
      $region17: #{relation_module_forward.5} parent=11 // pred_check
        %p121 = pneg %p77
      $region18: #{relation_module_forward.5} parent=11 // pred_check_branch
        %123 = sbr.rel (%p121) target = $region20
      $region19: #{relation_module_forward.5} parent=11 // pred_region
        _
      $region20: #{relation_module_forward.5} parent=11 // pred_fallthru
        _
    $region12: #{relation_module_forward.5} parent=5 // pred_fallthru
      _
    %p124 = scmp.lt.s32.totalorder %s9, 8
    // Predicated region
    $region21: #{relation_module_forward.5} parent=5 // pred_check
      %p125 = pneg %p124
    $region22: #{relation_module_forward.5} parent=5 // pred_check_branch
      %127 = sbr.rel (%p125) target = $region24
    $region23: #{relation_module_forward.5} parent=5 // pred_region
      // Predicated region
      $region25: #{relation_module_forward.5} parent=23 // pred_check
        %p128 = pneg %p29
      $region26: #{relation_module_forward.5} parent=23 // pred_check_branch
        %130 = sbr.rel (%p128) target = $region28
      $region27: #{relation_module_forward.5} parent=23 // pred_region
        %p131 = scmp.lt.s32.totalorder %s9, 7
        %s132 = scalar_select %p131, %s9, 7
        %s133 = smul.addr %s132, 32
        %s134 = smul.addr %s133, 8
        %s135 = scalar_lea.vmem %s0, %s134
      $region28: #{relation_module_forward.5} parent=23 // pred_fallthru
        _
    $region24: #{relation_module_forward.5} parent=5 // pred_fallthru
      _
    %p136 = scmp.le.s32.totalorder 1, %s9
    %p137 = scmp.lt.s32.totalorder %s9, 9
    %p138 = pnand %p136, %p137
    %p139 = pneg %p138
    // Predicated region
    $region29: #{relation_module_forward.5} parent=5 // pred_check
      _
    $region30: #{relation_module_forward.5} parent=5 // pred_check_branch
      %141 = sbr.rel (%p138) target = $region32
    $region31: #{relation_module_forward.5} parent=5 // pred_region
      %s142 = ssub.s32 %s9, 1
      %p143 = scmp.lt.s32.totalorder %s14, 7
      %s144 = scalar_select %p143, %s14, 7
      %s145 = smul.addr %s144, 32
      %s146 = smul.addr %s145, 8
      %s147 = scalar_lea.vmem %s0, %s146
      %p148 = pneg %p35
      %p149 = pneg %p32
      %p150 = pneg %p56
      %p151 = pneg %p53
      %p152 = pneg %p77
      %p153 = pneg %p74
      %p154 = pneg %p103
      %p155 = pneg %p100
      %p156 = scmp.lt.s32.totalorder %s14, 7
      %s157 = scalar_select %p156, %s14, 7
      %s158 = smul.addr %s157, 32
      %s159 = smul.addr %s158, 8
      %s160 = scalar_lea.vmem %s3, %s159
      %p161 = scmp.lt.s32.totalorder %s14, 7
      %s162 = scalar_select %p161, %s14, 7
      %s163 = smul.addr %s162, 32
      %s164 = smul.addr %s163, 8
      %s165 = scalar_lea.vmem %s0, %s164
      %p166 = scmp.lt.s32.totalorder %s14, 7
      %s167 = scalar_select %p166, %s14, 7
      %s168 = smul.addr %s167, 32
      %s169 = smul.addr %s168, 8
      %s170 = scalar_lea.vmem %s3, %s169
      %v171 = vld [vmem:[%s165] sm:$0xff]
      %v172 = vld [vmem:[%s165 + $0x8] sm:$0xff]
      %v173 = vld [vmem:[%s165 + $0x10] sm:$0xff]
      %v174 = vld [vmem:[%s165 + $0x18] sm:$0xff]
      %v175 = vld [vmem:[%s165 + $0x20] sm:$0xff]
      %v176 = vld [vmem:[%s165 + $0x28] sm:$0xff]
      %v177 = vld [vmem:[%s165 + $0x30] sm:$0xff]
      %v178 = vld [vmem:[%s165 + $0x38] sm:$0xff]
      %v179 = vld [vmem:[%s165 + $0x40] sm:$0xff]
      %v180 = vld [vmem:[%s165 + $0x48] sm:$0xff]
      %v181 = vld [vmem:[%s165 + $0x50] sm:$0xff]
      %v182 = vld [vmem:[%s165 + $0x58] sm:$0xff]
      %v183 = vld [vmem:[%s165 + $0x60] sm:$0xff]
      %v184 = vld [vmem:[%s165 + $0x68] sm:$0xff]
      %v185 = vld [vmem:[%s165 + $0x70] sm:$0xff]
      %v186 = vld [vmem:[%s165 + $0x78] sm:$0xff]
      %v187 = vld [vmem:[%s165 + $0x80] sm:$0xff]
      %v188 = vld [vmem:[%s165 + $0x88] sm:$0xff]
      %v189 = vld [vmem:[%s165 + $0x90] sm:$0xff]
      %v190 = vld [vmem:[%s165 + $0x98] sm:$0xff]
      %v191 = vld [vmem:[%s165 + $0xa0] sm:$0xff]
      %v192 = vld [vmem:[%s165 + $0xa8] sm:$0xff]
      %v193 = vld [vmem:[%s165 + $0xb0] sm:$0xff]
      %v194 = vld [vmem:[%s165 + $0xb8] sm:$0xff]
      %v195 = vld [vmem:[%s165 + $0xc0] sm:$0xff]
      %v196 = vld [vmem:[%s165 + $0xc8] sm:$0xff]
      %v197 = vld [vmem:[%s165 + $0xd0] sm:$0xff]
      %v198 = vld [vmem:[%s165 + $0xd8] sm:$0xff]
      %v199 = vld [vmem:[%s165 + $0xe0] sm:$0xff]
      %v200 = vld [vmem:[%s165 + $0xe8] sm:$0xff]
      %v201 = vld [vmem:[%s165 + $0xf0] sm:$0xff]
      %v202 = vld [vmem:[%s165 + $0xf8] sm:$0xff]
      %v203 = vld [vmem:[%s1] sm:$0x1]
      %v205 = vlaneseq
      %v206 = vshrl.u32 %v205, 7
      %v207 = vsub.s32 0, %v206
      %v208 = vrot.slane %v203, %v207
      %v210 = vmul.f32 %v171, %v208
      %v211 = vmul.f32 %v172, %v208
      %v212 = vmul.f32 %v173, %v208
      %v213 = vmul.f32 %v174, %v208
      %v214 = vmul.f32 %v175, %v208
      %v215 = vmul.f32 %v176, %v208
      %v216 = vmul.f32 %v177, %v208
      %v217 = vmul.f32 %v178, %v208
      %v218 = vmul.f32 %v179, %v208
      %v219 = vmul.f32 %v180, %v208
      %v220 = vmul.f32 %v181, %v208
      %v221 = vmul.f32 %v182, %v208
      %v222 = vmul.f32 %v183, %v208
      %v223 = vmul.f32 %v184, %v208
      %v224 = vmul.f32 %v185, %v208
      %v225 = vmul.f32 %v186, %v208
      %v226 = vmul.f32 %v187, %v208
      %v227 = vmul.f32 %v188, %v208
      %v228 = vmul.f32 %v189, %v208
      %v229 = vmul.f32 %v190, %v208
      %v230 = vmul.f32 %v191, %v208
      %v231 = vmul.f32 %v192, %v208
      %v232 = vmul.f32 %v193, %v208
      %v233 = vmul.f32 %v194, %v208
      %v234 = vmul.f32 %v195, %v208
      %v235 = vmul.f32 %v196, %v208
      %v236 = vmul.f32 %v197, %v208
      %v237 = vmul.f32 %v198, %v208
      %v238 = vmul.f32 %v199, %v208
      %v239 = vmul.f32 %v200, %v208
      %v240 = vmul.f32 %v201, %v208
      %v241 = vmul.f32 %v202, %v208
      %v242 = vld [vmem:[%s2] sm:$0x1]
      %v244 = vlaneseq
      %v245 = vshrl.u32 %v244, 7
      %v246 = vsub.s32 0, %v245
      %v247 = vrot.slane %v242, %v246
      %v249 = vadd.f32 %v210, %v247
      %v250 = vadd.f32 %v211, %v247
      %v251 = vadd.f32 %v212, %v247
      %v252 = vadd.f32 %v213, %v247
      %v253 = vadd.f32 %v214, %v247
      %v254 = vadd.f32 %v215, %v247
      %v255 = vadd.f32 %v216, %v247
      %v256 = vadd.f32 %v217, %v247
      %v257 = vadd.f32 %v218, %v247
      %v258 = vadd.f32 %v219, %v247
      %v259 = vadd.f32 %v220, %v247
      %v260 = vadd.f32 %v221, %v247
      %v261 = vadd.f32 %v222, %v247
      %v262 = vadd.f32 %v223, %v247
      %v263 = vadd.f32 %v224, %v247
      %v264 = vadd.f32 %v225, %v247
      %v265 = vadd.f32 %v226, %v247
      %v266 = vadd.f32 %v227, %v247
      %v267 = vadd.f32 %v228, %v247
      %v268 = vadd.f32 %v229, %v247
      %v269 = vadd.f32 %v230, %v247
      %v270 = vadd.f32 %v231, %v247
      %v271 = vadd.f32 %v232, %v247
      %v272 = vadd.f32 %v233, %v247
      %v273 = vadd.f32 %v234, %v247
      %v274 = vadd.f32 %v235, %v247
      %v275 = vadd.f32 %v236, %v247
      %v276 = vadd.f32 %v237, %v247
      %v277 = vadd.f32 %v238, %v247
      %v278 = vadd.f32 %v239, %v247
      %v279 = vadd.f32 %v240, %v247
      %v280 = vadd.f32 %v241, %v247
      %281 = vst [vmem:[%s170] sm:$0xff] %v249
      %282 = vst [vmem:[%s170 + $0x8] sm:$0xff] %v250
      %283 = vst [vmem:[%s170 + $0x10] sm:$0xff] %v251
      %284 = vst [vmem:[%s170 + $0x18] sm:$0xff] %v252
      %285 = vst [vmem:[%s170 + $0x20] sm:$0xff] %v253
      %286 = vst [vmem:[%s170 + $0x28] sm:$0xff] %v254
      %287 = vst [vmem:[%s170 + $0x30] sm:$0xff] %v255
      %288 = vst [vmem:[%s170 + $0x38] sm:$0xff] %v256
      %289 = vst [vmem:[%s170 + $0x40] sm:$0xff] %v257
      %290 = vst [vmem:[%s170 + $0x48] sm:$0xff] %v258
      %291 = vst [vmem:[%s170 + $0x50] sm:$0xff] %v259
      %292 = vst [vmem:[%s170 + $0x58] sm:$0xff] %v260
      %293 = vst [vmem:[%s170 + $0x60] sm:$0xff] %v261
      %294 = vst [vmem:[%s170 + $0x68] sm:$0xff] %v262
      %295 = vst [vmem:[%s170 + $0x70] sm:$0xff] %v263
      %296 = vst [vmem:[%s170 + $0x78] sm:$0xff] %v264
      %297 = vst [vmem:[%s170 + $0x80] sm:$0xff] %v265
      %298 = vst [vmem:[%s170 + $0x88] sm:$0xff] %v266
      %299 = vst [vmem:[%s170 + $0x90] sm:$0xff] %v267
      %300 = vst [vmem:[%s170 + $0x98] sm:$0xff] %v268
      %301 = vst [vmem:[%s170 + $0xa0] sm:$0xff] %v269
      %302 = vst [vmem:[%s170 + $0xa8] sm:$0xff] %v270
      %303 = vst [vmem:[%s170 + $0xb0] sm:$0xff] %v271
      %304 = vst [vmem:[%s170 + $0xb8] sm:$0xff] %v272
      %305 = vst [vmem:[%s170 + $0xc0] sm:$0xff] %v273
      %306 = vst [vmem:[%s170 + $0xc8] sm:$0xff] %v274
      %307 = vst [vmem:[%s170 + $0xd0] sm:$0xff] %v275
      %308 = vst [vmem:[%s170 + $0xd8] sm:$0xff] %v276
      %309 = vst [vmem:[%s170 + $0xe0] sm:$0xff] %v277
      %310 = vst [vmem:[%s170 + $0xe8] sm:$0xff] %v278
      %311 = vst [vmem:[%s170 + $0xf0] sm:$0xff] %v279
      %312 = vst [vmem:[%s170 + $0xf8] sm:$0xff] %v280
      %p313 = scmp.lt.s32.totalorder %s14, 7
      %s314 = scalar_select %p313, %s14, 7
      %s315 = smul.addr %s314, 32
      %s316 = smul.addr %s315, 8
      %s317 = scalar_lea.vmem %s3, %s316
      // Predicated region
      $region33: #{relation_module_forward.5} parent=31 // pred_check
        %p318 = pneg %p100
      $region34: #{relation_module_forward.5} parent=31 // pred_check_branch
        %320 = sbr.rel (%p318) target = $region36
      $region35: #{relation_module_forward.5} parent=31 // pred_region
        _
      $region36: #{relation_module_forward.5} parent=31 // pred_fallthru
        _
    $region32: #{relation_module_forward.5} parent=5 // pred_fallthru
      _
    %p321 = scmp.le.s32.totalorder 2, %s9
    // Predicated region
    $region37: #{relation_module_forward.5} parent=5 // pred_check
      %p322 = pneg %p321
    $region38: #{relation_module_forward.5} parent=5 // pred_check_branch
      %324 = sbr.rel (%p322) target = $region40
    $region39: #{relation_module_forward.5} parent=5 // pred_region
      %s325 = ssub.s32 %s9, 2
      // Predicated region
      $region41: #{relation_module_forward.5} parent=39 // pred_check
        %p326 = pneg %p106
      $region42: #{relation_module_forward.5} parent=39 // pred_check_branch
        %328 = sbr.rel (%p326) target = $region44
      $region43: #{relation_module_forward.5} parent=39 // pred_region
        %p329 = scmp.lt.s32.totalorder %s15, 7
        %s330 = scalar_select %p329, %s15, 7
        %s331 = smul.addr %s330, 32
        %s332 = smul.addr %s331, 8
        %s333 = scalar_lea.vmem %s3, %s332
      $region44: #{relation_module_forward.5} parent=39 // pred_fallthru
        _
    $region40: #{relation_module_forward.5} parent=5 // pred_fallthru
      _
  $region6: #{relation_module_forward.5} parent=0 // loop_footer
    %s13 = sadd.s32 1, %s9
  $region7: #{relation_module_forward.5} parent=0 // loop_footer_branch
    %8 = sbr.rel target = $region3
  $region8: #{relation_module_forward.5} parent=0 // loop_exit
    _

// kernel: relation_module_forward.3
$region0: #{relation_module_forward.3}
  #allocation0 [shape = 'u32[]', space=smem, size = 0x4, offset = 0x4, fixed_abs, tag = 'smem constant byte address 0x4 - core index']
  #allocation1 [shape = 'u32[144,128]{1,0:T(1,128)}', space=vmem, size = 0x12000, scoped, tag = 'internal scratch']
  %s0 = inlined_call_operand.vmem [shape: bf16[2,18,18,4], index: 0, kind: input, shape index: {}]
  %s1 = inlined_call_operand.vmem [shape: bf16[3,3,4,128], index: 1, kind: input, shape index: {}]
  %s2 = inlined_call_operand.vmem [shape: f32[2,17,17,128], index: 2, kind: output, shape index: {0}]
  %s3 = inlined_call_operand.vmem [shape: f32[2,2,128], index: 3, kind: output, shape index: {1}]
  %4 = xla_tuple %s2, %s3
  %s5 = sld [smem:[#allocation0]]
  $region49: #{relation_module_forward.3} parent=0
    _
  %s7 = ssub.s32 1, %s5
  %s8 = scalar_select 0, %s7, %s5
  loop: start=0, step=1, limit=4
  $region2: #{relation_module_forward.3} parent=0 // loop_pre_header
    _
  $region3: #{relation_module_forward.3} parent=0 // loop_header
    %s10 = sphi 0, %s14
    %p11 = scmp.ge.s32.totalorder %s10, 4
    %s20 = sphi 0, %s22
    %s23 = sphi 0, %s20
    %s24 = sphi 0, %s23
    %s40 = sphi 0, %s24
    %s44 = sphi 0, %s44
    %s46 = sphi 0, %s44
    %s47 = sphi 0, %s46
    %s61 = sphi 0, %s47
    %s67 = sphi 0, %s69
    %s70 = sphi 0, %s67
    %s71 = sphi 0, %s70
    %s87 = sphi 0, %s71
    %s93 = sphi 0, %s95
    %s96 = sphi 0, %s93
    %s97 = sphi 0, %s96
    %s113 = sphi 0, %s97
  $region4: #{relation_module_forward.3} parent=0 // loop_header_branch
    %13 = sbr.rel (%p11) target = $region8
  $region5: #{relation_module_forward.3} parent=0 // loop_body
    %s15 = ssub.s32 %s10, 1
    %s16 = ssub.s32 %s10, 2
    %s17 = sadd.s32 %s10, 1
    %s18 = ssub.s32 %s10, %s17
    %p19 = scmp.eq.s32.totalorder %s18, 0
    %s21 = sadd.s32 %s20, 1
    %s22 = scalar_select %p19, %s20, %s21
    %p25 = pneg %p19
    %p26 = scmp.eq.s32.totalorder %s10, 1
    %p27 = por %p25, %p26
    %p28 = scmp.ne.s32.totalorder %s20, %s23
    %p29 = scmp.eq.s32.totalorder %s10, 0
    %p30 = por %p28, %p29
    %p31 = scmp.ne.s32.totalorder %s20, %s23
    %p32 = scmp.eq.s32.totalorder %s15, 1
    %p33 = por %p31, %p32
    %p34 = scmp.ne.s32.totalorder %s23, %s24
    %p35 = scmp.eq.s32.totalorder %s15, 0
    %p36 = por %p34, %p35
    %p37 = scmp.ne.s32.totalorder %s23, %s24
    %p38 = scmp.eq.s32.totalorder %s16, 1
    %p39 = por %p37, %p38
    %p41 = scmp.ne.s32.totalorder %s24, %s40
    %p42 = scmp.eq.s32.totalorder %s16, 0
    %p43 = por %p41, %p42
    %s45 = sadd.s32 %s44, 1
    %p48 = scmp.eq.s32.totalorder %s10, 1
    %p49 = scmp.ne.s32.totalorder %s44, %s46
    %p50 = scmp.eq.s32.totalorder %s10, 0
    %p51 = por %p49, %p50
    %p52 = scmp.ne.s32.totalorder %s44, %s46
    %p53 = scmp.eq.s32.totalorder %s15, 1
    %p54 = por %p52, %p53
    %p55 = scmp.ne.s32.totalorder %s46, %s47
    %p56 = scmp.eq.s32.totalorder %s15, 0
    %p57 = por %p55, %p56
    %p58 = scmp.ne.s32.totalorder %s46, %s47
    %p59 = scmp.eq.s32.totalorder %s16, 1
    %p60 = por %p58, %p59
    %p62 = scmp.ne.s32.totalorder %s47, %s61
    %p63 = scmp.eq.s32.totalorder %s16, 0
    %p64 = por %p62, %p63
    %s65 = ssub.s32 %s10, %s17
    %p66 = scmp.eq.s32.totalorder %s65, 0
    %s68 = sadd.s32 %s67, 1
    %s69 = scalar_select %p66, %s67, %s68
    %p72 = pneg %p66
    %p73 = scmp.eq.s32.totalorder %s10, 1
    %p74 = por %p72, %p73
    %p75 = scmp.ne.s32.totalorder %s67, %s70
    %p76 = scmp.eq.s32.totalorder %s10, 0
    %p77 = por %p75, %p76
    %p78 = scmp.ne.s32.totalorder %s67, %s70
    %p79 = scmp.eq.s32.totalorder %s15, 1
    %p80 = por %p78, %p79
    %p81 = scmp.ne.s32.totalorder %s70, %s71
    %p82 = scmp.eq.s32.totalorder %s15, 0
    %p83 = por %p81, %p82
    %p84 = scmp.ne.s32.totalorder %s70, %s71
    %p85 = scmp.eq.s32.totalorder %s16, 1
    %p86 = por %p84, %p85
    %p88 = scmp.ne.s32.totalorder %s71, %s87
    %p89 = scmp.eq.s32.totalorder %s16, 0
    %p90 = por %p88, %p89
    %s91 = ssub.s32 %s10, %s17
    %p92 = scmp.eq.s32.totalorder %s91, 0
    %s94 = sadd.s32 %s93, 1
    %s95 = scalar_select %p92, %s93, %s94
    %p98 = pneg %p92
    %p99 = scmp.eq.s32.totalorder %s10, 1
    %p100 = por %p98, %p99
    %p101 = scmp.ne.s32.totalorder %s93, %s96
    %p102 = scmp.eq.s32.totalorder %s10, 0
    %p103 = por %p101, %p102
    %p104 = scmp.ne.s32.totalorder %s93, %s96
    %p105 = scmp.eq.s32.totalorder %s15, 1
    %p106 = por %p104, %p105
    %p107 = scmp.ne.s32.totalorder %s96, %s97
    %p108 = scmp.eq.s32.totalorder %s15, 0
    %p109 = por %p107, %p108
    %p110 = scmp.ne.s32.totalorder %s96, %s97
    %p111 = scmp.eq.s32.totalorder %s16, 1
    %p112 = por %p110, %p111
    %p114 = scmp.ne.s32.totalorder %s97, %s113
    %p115 = scmp.eq.s32.totalorder %s16, 0
    %p116 = por %p114, %p115
    %p117 = scmp.le.s32.totalorder 1, %s10
    %p118 = scmp.lt.s32.totalorder %s10, 3
    %p119 = pnand %p117, %p118
    %p120 = pneg %p119
    // Predicated region
    $region9: #{relation_module_forward.3} parent=5 // pred_check
      _
    $region10: #{relation_module_forward.3} parent=5 // pred_check_branch
      %122 = sbr.rel (%p119) target = $region12
    $region11: #{relation_module_forward.3} parent=5 // pred_region
      %s123 = ssub.s32 %s10, 1
      // Predicated region
      $region13: #{relation_module_forward.3} parent=11 // pred_check
        %p124 = pneg %p57
      $region14: #{relation_module_forward.3} parent=11 // pred_check_branch
        %126 = sbr.rel (%p124) target = $region16
      $region15: #{relation_module_forward.3} parent=11 // pred_region
        _
      $region16: #{relation_module_forward.3} parent=11 // pred_fallthru
        _
    $region12: #{relation_module_forward.3} parent=5 // pred_fallthru
      _
    %p127 = scmp.lt.s32.totalorder %s10, 2
    // Predicated region
    $region17: #{relation_module_forward.3} parent=5 // pred_check
      %p128 = pneg %p127
    $region18: #{relation_module_forward.3} parent=5 // pred_check_branch
      %130 = sbr.rel (%p128) target = $region20
    $region19: #{relation_module_forward.3} parent=5 // pred_region
      // Predicated region
      $region21: #{relation_module_forward.3} parent=19 // pred_check
        %p131 = pneg %p30
      $region22: #{relation_module_forward.3} parent=19 // pred_check_branch
        %133 = sbr.rel (%p131) target = $region24
      $region23: #{relation_module_forward.3} parent=19 // pred_region
        %p134 = scmp.lt.s32.totalorder %s10, 1
        %s135 = scalar_select %p134, %s10, 1
        %s136 = smul.addr %s135, 54
        %s137 = smul.addr %s136, 4
        %s138 = scalar_lea.vmem %s0, %s137
      $region24: #{relation_module_forward.3} parent=19 // pred_fallthru
        _
    $region20: #{relation_module_forward.3} parent=5 // pred_fallthru
      _
    %p139 = scmp.le.s32.totalorder 1, %s10
    %p140 = scmp.lt.s32.totalorder %s10, 3
    %p141 = pnand %p139, %p140
    %p142 = pneg %p141
    // Predicated region
    $region25: #{relation_module_forward.3} parent=5 // pred_check
      _
    $region26: #{relation_module_forward.3} parent=5 // pred_check_branch
      %144 = sbr.rel (%p141) target = $region28
    $region27: #{relation_module_forward.3} parent=5 // pred_region
      %s145 = ssub.s32 %s10, 1
      %p146 = scmp.lt.s32.totalorder %s15, 1
      %s147 = scalar_select %p146, %s15, 1
      %s148 = smul.addr %s147, 54
      %s149 = smul.addr %s148, 4
      %s150 = scalar_lea.vmem %s0, %s149
      %p151 = pneg %p36
      %p152 = pneg %p33
      %p153 = pneg %p57
      %p154 = pneg %p54
      %p155 = pneg %p83
      %p156 = pneg %p80
      %p157 = scmp.lt.s32.totalorder %s15, 1
      %s158 = scalar_select %p157, %s15, 1
      %s159 = smul.addr %s158, 51
      %s160 = smul.addr %s159, 8
      %s161 = scalar_lea.vmem %s2, %s160
      %p162 = pneg %p109
      %p163 = pneg %p106
      %p164 = scmp.lt.s32.totalorder %s15, 1
      %s165 = scalar_select %p164, %s15, 1
      %s166 = smul.addr %s165, 2
      %s167 = scalar_lea.vmem %s3, %s166
      %p168 = scmp.lt.s32.totalorder %s15, 1
      %s169 = scalar_select %p168, %s15, 1
      %s170 = smul.addr %s169, 54
      %s171 = smul.addr %s170, 4
      %s172 = scalar_lea.vmem %s0, %s171
      %p173 = scmp.lt.s32.totalorder %s15, 1
      %s174 = scalar_select %p173, %s15, 1
      %s175 = smul.addr %s174, 51
      %s176 = smul.addr %s175, 8
      %s177 = scalar_lea.vmem %s2, %s176
      %p178 = scmp.lt.s32.totalorder %s15, 1
      %s179 = scalar_select %p178, %s15, 1
      %s180 = smul.addr %s179, 2
      %s181 = scalar_lea.vmem %s3, %s180
      %v183 = vld [vmem:[%s172] sm:$0xf]
      %v184 = vld [vmem:[%s172 + $0x4] sm:$0xf]
      %v185 = vld [vmem:[%s172 + $0xc] sm:$0xf]
      %v186 = vld [vmem:[%s172 + $0x10] sm:$0xf]
      %v187 = vld [vmem:[%s172 + $0x18] sm:$0xf]
      %v188 = vld [vmem:[%s172 + $0x1c] sm:$0xf]
      %v189 = vld [vmem:[%s172 + $0x24] sm:$0xf]
      %v190 = vld [vmem:[%s172 + $0x28] sm:$0xf]
      %v191 = vld [vmem:[%s172 + $0x30] sm:$0xf]
      %v192 = vld [vmem:[%s172 + $0x34] sm:$0xf]
      %v193 = vld [vmem:[%s172 + $0x3c] sm:$0xf]
      %v194 = vld [vmem:[%s172 + $0x40] sm:$0xf]
      %v195 = vld [vmem:[%s172 + $0x48] sm:$0xf]
      %v196 = vld [vmem:[%s172 + $0x4c] sm:$0xf]
      %v197 = vld [vmem:[%s172 + $0x54] sm:$0xf]
      %v198 = vld [vmem:[%s172 + $0x58] sm:$0xf]
      %v199 = vld [vmem:[%s172 + $0x60] sm:$0xf]
      %v200 = vld [vmem:[%s172 + $0x64] sm:$0xf]
      %v201 = vld [vmem:[%s172 + $0x6c] sm:$0xf]
      %v202 = vld [vmem:[%s172 + $0x70] sm:$0xf]
      %v203 = vld [vmem:[%s172 + $0x78] sm:$0xf]
      %v204 = vld [vmem:[%s172 + $0x7c] sm:$0xf]
      %v205 = vld [vmem:[%s172 + $0x84] sm:$0xf]
      %v206 = vld [vmem:[%s172 + $0x88] sm:$0xf]
      %v207 = vld [vmem:[%s172 + $0x90] sm:$0xf]
      %v208 = vld [vmem:[%s172 + $0x94] sm:$0xf]
      %v209 = vld [vmem:[%s172 + $0x9c] sm:$0xf]
      %v210 = vld [vmem:[%s172 + $0xa0] sm:$0xf]
      %v211 = vld [vmem:[%s172 + $0xa8] sm:$0xf]
      %v212 = vld [vmem:[%s172 + $0xac] sm:$0xf]
      %v213 = vld [vmem:[%s172 + $0xb4] sm:$0xf]
      %v214 = vld [vmem:[%s172 + $0xb8] sm:$0xf]
      %v215 = vld [vmem:[%s1] sm:$0x3]
      %v216 = vld [vmem:[%s172 + $0x8] sm:$0x1]
      %v217 = vld [vmem:[%s172 + $0x14] sm:$0x1]
      %v218 = vld [vmem:[%s172 + $0x20] sm:$0x1]
      %v219 = vld [vmem:[%s172 + $0x2c] sm:$0x1]
      %v220 = vld [vmem:[%s172 + $0x38] sm:$0x1]
      %v221 = vld [vmem:[%s172 + $0x44] sm:$0x1]
      %v222 = vld [vmem:[%s172 + $0x50] sm:$0x1]
      %v223 = vld [vmem:[%s172 + $0x5c] sm:$0x1]
      %v224 = vld [vmem:[%s172 + $0x68] sm:$0x1]
      %v225 = vld [vmem:[%s172 + $0x74] sm:$0x1]
      %v226 = vld [vmem:[%s172 + $0x80] sm:$0x1]
      %v227 = vld [vmem:[%s172 + $0x8c] sm:$0x1]
      %v228 = vld [vmem:[%s172 + $0x98] sm:$0x1]
      %v229 = vld [vmem:[%s172 + $0xa4] sm:$0x1]
      %v230 = vld [vmem:[%s172 + $0xb0] sm:$0x1]
      %v231 = vld [vmem:[%s172 + $0xbc] sm:$0x1]
      %vm232 = vsmask.f32 3328
      %vm233 = vsmask.f32 7440
      %vm234 = vmor %vm232, %vm233
      %v236 = vshrl.u32 %v183, 16
      %v238 = vrot.slane %v236, 4
      %v239 = vshll.u32 %v183, 16
      %v241 = vrot.slane %v239, 5
      %v242 = vor.u32 %v238, %v241
      %v243 = vrot.slane %v242, 4
      %v245 = vshll.u32 %v184, 16
      %v247 = vrot.slane %v245, 5
      %v248 = vsel %vm234, %v243, %v247
      %v249 = vshrl.u32 %v184, 16
      %v251 = vrot.slane %v249, 4
      %v252 = vor.u32 %v251, %v247
      %v253 = vrot.slane %v252, 4
      %v255 = vshll.u32 %v216, 16
      %v257 = vrot.slane %v255, 5
      %v258 = vsel %vm234, %v253, %v257
      %v260 = vshrl.u32 %v185, 16
      %v262 = vrot.slane %v260, 4
      %v263 = vshll.u32 %v185, 16
      %v265 = vrot.slane %v263, 5
      %v266 = vor.u32 %v262, %v265
      %v267 = vrot.slane %v266, 4
      %v269 = vshll.u32 %v186, 16
      %v271 = vrot.slane %v269, 5
      %v272 = vsel %vm234, %v267, %v271
      %v273 = vshrl.u32 %v186, 16
      %v275 = vrot.slane %v273, 4
      %v276 = vor.u32 %v275, %v271
      %v277 = vrot.slane %v276, 4
      %v279 = vshll.u32 %v217, 16
      %v281 = vrot.slane %v279, 5
      %v282 = vsel %vm234, %v277, %v281
      %v284 = vshrl.u32 %v187, 16
      %v286 = vrot.slane %v284, 4
      %v287 = vshll.u32 %v187, 16
      %v289 = vrot.slane %v287, 5
      %v290 = vor.u32 %v286, %v289
      %v291 = vrot.slane %v290, 4
      %v293 = vshll.u32 %v188, 16
      %v295 = vrot.slane %v293, 5
      %v296 = vsel %vm234, %v291, %v295
      %v297 = vshrl.u32 %v188, 16
      %v299 = vrot.slane %v297, 4
      %v300 = vor.u32 %v299, %v295
      %v301 = vrot.slane %v300, 4
      %v303 = vshll.u32 %v218, 16
      %v305 = vrot.slane %v303, 5
      %v306 = vsel %vm234, %v301, %v305
      %v308 = vshrl.u32 %v189, 16
      %v310 = vrot.slane %v308, 4
      %v311 = vshll.u32 %v189, 16
      %v313 = vrot.slane %v311, 5
      %v314 = vor.u32 %v310, %v313
      %v315 = vrot.slane %v314, 4
      %v317 = vshll.u32 %v190, 16
      %v319 = vrot.slane %v317, 5
      %v320 = vsel %vm234, %v315, %v319
      %v321 = vshrl.u32 %v190, 16
      %v323 = vrot.slane %v321, 4
      %v324 = vor.u32 %v323, %v319
      %v325 = vrot.slane %v324, 4
      %v327 = vshll.u32 %v219, 16
      %v329 = vrot.slane %v327, 5
      %v330 = vsel %vm234, %v325, %v329
      %v332 = vshrl.u32 %v191, 16
      %v334 = vrot.slane %v332, 4
      %v335 = vshll.u32 %v191, 16
      %v337 = vrot.slane %v335, 5
      %v338 = vor.u32 %v334, %v337
      %v339 = vrot.slane %v338, 4
      %v341 = vshll.u32 %v192, 16
      %v343 = vrot.slane %v341, 5
      %v344 = vsel %vm234, %v339, %v343
      %v345 = vshrl.u32 %v192, 16
      %v347 = vrot.slane %v345, 4
      %v348 = vor.u32 %v347, %v343
      %v349 = vrot.slane %v348, 4
      %v351 = vshll.u32 %v220, 16
      %v353 = vrot.slane %v351, 5
      %v354 = vsel %vm234, %v349, %v353
      %v356 = vshrl.u32 %v193, 16
      %v358 = vrot.slane %v356, 4
      %v359 = vshll.u32 %v193, 16
      %v361 = vrot.slane %v359, 5
      %v362 = vor.u32 %v358, %v361
      %v363 = vrot.slane %v362, 4
      %v365 = vshll.u32 %v194, 16
      %v367 = vrot.slane %v365, 5
      %v368 = vsel %vm234, %v363, %v367
      %v369 = vshrl.u32 %v194, 16
      %v371 = vrot.slane %v369, 4
      %v372 = vor.u32 %v371, %v367
      %v373 = vrot.slane %v372, 4
      %v375 = vshll.u32 %v221, 16
      %v377 = vrot.slane %v375, 5
      %v378 = vsel %vm234, %v373, %v377
      %v380 = vshrl.u32 %v195, 16
      %v382 = vrot.slane %v380, 4
      %v383 = vshll.u32 %v195, 16
      %v385 = vrot.slane %v383, 5
      %v386 = vor.u32 %v382, %v385
      %v387 = vrot.slane %v386, 4
      %v389 = vshll.u32 %v196, 16
      %v391 = vrot.slane %v389, 5
      %v392 = vsel %vm234, %v387, %v391
      %v393 = vshrl.u32 %v196, 16
      %v395 = vrot.slane %v393, 4
      %v396 = vor.u32 %v395, %v391
      %v397 = vrot.slane %v396, 4
      %v399 = vshll.u32 %v222, 16
      %v401 = vrot.slane %v399, 5
      %v402 = vsel %vm234, %v397, %v401
      %v404 = vshrl.u32 %v197, 16
      %v406 = vrot.slane %v404, 4
      %v407 = vshll.u32 %v197, 16
      %v409 = vrot.slane %v407, 5
      %v410 = vor.u32 %v406, %v409
      %v411 = vrot.slane %v410, 4
      %v413 = vshll.u32 %v198, 16
      %v415 = vrot.slane %v413, 5
      %v416 = vsel %vm234, %v411, %v415
      %v417 = vshrl.u32 %v198, 16
      %v419 = vrot.slane %v417, 4
      %v420 = vor.u32 %v419, %v415
      %v421 = vrot.slane %v420, 4
      %v423 = vshll.u32 %v223, 16
      %v425 = vrot.slane %v423, 5
      %v426 = vsel %vm234, %v421, %v425
      %v428 = vshrl.u32 %v199, 16
      %v430 = vrot.slane %v428, 4
      %v431 = vshll.u32 %v199, 16
      %v433 = vrot.slane %v431, 5
      %v434 = vor.u32 %v430, %v433
      %v435 = vrot.slane %v434, 4
      %v437 = vshll.u32 %v200, 16
      %v439 = vrot.slane %v437, 5
      %v440 = vsel %vm234, %v435, %v439
      %v441 = vshrl.u32 %v200, 16
      %v443 = vrot.slane %v441, 4
      %v444 = vor.u32 %v443, %v439
      %v445 = vrot.slane %v444, 4
      %v447 = vshll.u32 %v224, 16
      %v449 = vrot.slane %v447, 5
      %v450 = vsel %vm234, %v445, %v449
      %v452 = vshrl.u32 %v201, 16
      %v454 = vrot.slane %v452, 4
      %v455 = vshll.u32 %v201, 16
      %v457 = vrot.slane %v455, 5
      %v458 = vor.u32 %v454, %v457
      %v459 = vrot.slane %v458, 4
      %v461 = vshll.u32 %v202, 16
      %v463 = vrot.slane %v461, 5
      %v464 = vsel %vm234, %v459, %v463
      %v465 = vshrl.u32 %v202, 16
      %v467 = vrot.slane %v465, 4
      %v468 = vor.u32 %v467, %v463
      %v469 = vrot.slane %v468, 4
      %v471 = vshll.u32 %v225, 16
      %v473 = vrot.slane %v471, 5
      %v474 = vsel %vm234, %v469, %v473
      %v476 = vshrl.u32 %v203, 16
      %v478 = vrot.slane %v476, 4
      %v479 = vshll.u32 %v203, 16
      %v481 = vrot.slane %v479, 5
      %v482 = vor.u32 %v478, %v481
      %v483 = vrot.slane %v482, 4
      %v485 = vshll.u32 %v204, 16
      %v487 = vrot.slane %v485, 5
      %v488 = vsel %vm234, %v483, %v487
      %v489 = vshrl.u32 %v204, 16
      %v491 = vrot.slane %v489, 4
      %v492 = vor.u32 %v491, %v487
      %v493 = vrot.slane %v492, 4
      %v495 = vshll.u32 %v226, 16
      %v497 = vrot.slane %v495, 5
      %v498 = vsel %vm234, %v493, %v497
      %v500 = vshrl.u32 %v205, 16
      %v502 = vrot.slane %v500, 4
      %v503 = vshll.u32 %v205, 16
      %v505 = vrot.slane %v503, 5
      %v506 = vor.u32 %v502, %v505
      %v507 = vrot.slane %v506, 4
      %v509 = vshll.u32 %v206, 16
      %v511 = vrot.slane %v509, 5
      %v512 = vsel %vm234, %v507, %v511
      %v513 = vshrl.u32 %v206, 16
      %v515 = vrot.slane %v513, 4
      %v516 = vor.u32 %v515, %v511
      %v517 = vrot.slane %v516, 4
      %v519 = vshll.u32 %v227, 16
      %v521 = vrot.slane %v519, 5
      %v522 = vsel %vm234, %v517, %v521
      %v524 = vshrl.u32 %v207, 16
      %v526 = vrot.slane %v524, 4
      %v527 = vshll.u32 %v207, 16
      %v529 = vrot.slane %v527, 5
      %v530 = vor.u32 %v526, %v529
      %v531 = vrot.slane %v530, 4
      %v533 = vshll.u32 %v208, 16
      %v535 = vrot.slane %v533, 5
      %v536 = vsel %vm234, %v531, %v535
      %v537 = vshrl.u32 %v208, 16
      %v539 = vrot.slane %v537, 4
      %v540 = vor.u32 %v539, %v535
      %v541 = vrot.slane %v540, 4
      %v543 = vshll.u32 %v228, 16
      %v545 = vrot.slane %v543, 5
      %v546 = vsel %vm234, %v541, %v545
      %v548 = vshrl.u32 %v209, 16
      %v550 = vrot.slane %v548, 4
      %v551 = vshll.u32 %v209, 16
      %v553 = vrot.slane %v551, 5
      %v554 = vor.u32 %v550, %v553
      %v555 = vrot.slane %v554, 4
      %v557 = vshll.u32 %v210, 16
      %v559 = vrot.slane %v557, 5
      %v560 = vsel %vm234, %v555, %v559
      %v561 = vshrl.u32 %v210, 16
      %v563 = vrot.slane %v561, 4
      %v564 = vor.u32 %v563, %v559
      %v565 = vrot.slane %v564, 4
      %v567 = vshll.u32 %v229, 16
      %v569 = vrot.slane %v567, 5
      %v570 = vsel %vm234, %v565, %v569
      %v572 = vshrl.u32 %v211, 16
      %v574 = vrot.slane %v572, 4
      %v575 = vshll.u32 %v211, 16
      %v577 = vrot.slane %v575, 5
      %v578 = vor.u32 %v574, %v577
      %v579 = vrot.slane %v578, 4
      %v581 = vshll.u32 %v212, 16
      %v583 = vrot.slane %v581, 5
      %v584 = vsel %vm234, %v579, %v583
      %v585 = vshrl.u32 %v212, 16
      %v587 = vrot.slane %v585, 4
      %v588 = vor.u32 %v587, %v583
      %v589 = vrot.slane %v588, 4
      %v591 = vshll.u32 %v230, 16
      %v593 = vrot.slane %v591, 5
      %v594 = vsel %vm234, %v589, %v593
      %v596 = vshrl.u32 %v213, 16
      %v598 = vrot.slane %v596, 4
      %v599 = vshll.u32 %v213, 16
      %v601 = vrot.slane %v599, 5
      %v602 = vor.u32 %v598, %v601
      %v603 = vrot.slane %v602, 4
      %v605 = vshll.u32 %v214, 16
      %v607 = vrot.slane %v605, 5
      %v608 = vsel %vm234, %v603, %v607
      %v609 = vshrl.u32 %v214, 16
      %v611 = vrot.slane %v609, 4
      %v612 = vor.u32 %v611, %v607
      %v613 = vrot.slane %v612, 4
      %v615 = vshll.u32 %v231, 16
      %v617 = vrot.slane %v615, 5
      %v618 = vsel %vm234, %v613, %v617
      %s619 = scalar_lea.vmem %s1, 2
      %v620 = vld [vmem:[%s619] sm:$0x3]
      %v621 = vunpack.c.l.b16 %v248
      %v622 = vunpack.c.l.b16 %v258
      %v623 = vunpack.c.l.b16 %v272
      %v624 = vunpack.c.l.b16 %v282
      %v625 = vunpack.c.l.b16 %v296
      %v626 = vunpack.c.l.b16 %v306
      %v627 = vunpack.c.l.b16 %v320
      %v628 = vunpack.c.l.b16 %v330
      %v629 = vunpack.c.l.b16 %v344
      %v630 = vunpack.c.l.b16 %v354
      %v631 = vunpack.c.l.b16 %v368
      %v632 = vunpack.c.l.b16 %v378
      %v633 = vunpack.c.l.b16 %v392
      %v634 = vunpack.c.l.b16 %v402
      %v635 = vunpack.c.l.b16 %v416
      %v636 = vunpack.c.l.b16 %v426
      %v637 = vunpack.c.l.b16 %v440
      %v638 = vunpack.c.l.b16 %v450
      %v639 = vunpack.c.l.b16 %v464
      %v640 = vunpack.c.l.b16 %v474
      %v641 = vunpack.c.l.b16 %v488
      %v642 = vunpack.c.l.b16 %v498
      %v643 = vunpack.c.l.b16 %v512
      %v644 = vunpack.c.l.b16 %v522
      %v645 = vunpack.c.l.b16 %v536
      %v646 = vunpack.c.l.b16 %v546
      %v647 = vunpack.c.l.b16 %v560
      %v648 = vunpack.c.l.b16 %v570
      %v649 = vunpack.c.l.b16 %v584
      %v650 = vunpack.c.l.b16 %v594
      %v651 = vunpack.c.l.b16 %v608
      %v652 = vunpack.c.l.b16 %v618
      %v653 = vpack.c.b16 %v622, %v621
      %v654 = vpack.c.b16 %v624, %v623
      %v655 = vpack.c.b16 %v626, %v625
      %v656 = vpack.c.b16 %v628, %v627
      %v657 = vpack.c.b16 %v630, %v629
      %v658 = vpack.c.b16 %v632, %v631
      %v659 = vpack.c.b16 %v634, %v633
      %v660 = vpack.c.b16 %v636, %v635
      %v661 = vpack.c.b16 %v638, %v637
      %v662 = vpack.c.b16 %v640, %v639
      %v663 = vpack.c.b16 %v642, %v641
      %v664 = vpack.c.b16 %v644, %v643
      %v665 = vpack.c.b16 %v646, %v645
      %v666 = vpack.c.b16 %v648, %v647
      %v667 = vpack.c.b16 %v650, %v649
      %v668 = vpack.c.b16 %v652, %v651
      %vm669 = vcmask 31744
      %v671 = vsel %vm669, %v653, 0
      %v674 = vsel %vm669, %v654, 0
      %v677 = vsel %vm669, %v655, 0
      %v680 = vsel %vm669, %v656, 0
      %v683 = vsel %vm669, %v657, 0
      %v686 = vsel %vm669, %v658, 0
      %v689 = vsel %vm669, %v659, 0
      %v692 = vsel %vm669, %v660, 0
      %v695 = vsel %vm669, %v661, 0
      %v698 = vsel %vm669, %v662, 0
      %v701 = vsel %vm669, %v663, 0
      %v704 = vsel %vm669, %v664, 0
      %v707 = vsel %vm669, %v665, 0
      %v710 = vsel %vm669, %v666, 0
      %v713 = vsel %vm669, %v667, 0
      %v716 = vsel %vm669, %v668, 0
      %vm718 = vcmask 1041408
      %v720 = vsel %vm718, %v620, 0
      %722 = vmatprep.subr.bf16.mxu0 0
      %723 = vmatpush1.bf16.msra.mxu0 %v720
      %724 = vmatprep.subr.bf16.mxu0 0
      %725 = vmatpush1.bf16.msra.mxu0 0
      %726 = vmatprep.subr.bf16.mxu0 0
      %727 = vmatpush1.bf16.msra.mxu0 0
      %728 = vmatprep.subr.bf16.mxu0 0
      %729 = vmatpush1.bf16.msra.mxu0 0
      %730 = vmatprep.subr.bf16.mxu0 0
      %731 = vmatpush1.bf16.msra.mxu0 0
      %732 = vmatprep.subr.bf16.mxu0 0
      %733 = vmatpush1.bf16.msra.mxu0 0
      %734 = vmatprep.subr.bf16.mxu0 0
      %735 = vmatpush1.bf16.msra.mxu0 0
      %736 = vmatprep.subr.bf16.mxu0 0
      %737 = vmatpush1.bf16.msra.mxu0 0
      %738 = vmatprep.subr.bf16.mxu0 0
      %739 = vmatpush1.bf16.msra.mxu0 0
      %740 = vmatprep.subr.bf16.mxu0 0
      %741 = vmatpush1.bf16.msra.mxu0 0
      %742 = vmatprep.subr.bf16.mxu0 0
      %743 = vmatpush1.bf16.msra.mxu0 0
      %744 = vmatprep.subr.bf16.mxu0 0
      %745 = vmatpush1.bf16.msra.mxu0 0
      %746 = vmatprep.subr.bf16.mxu0 0
      %747 = vmatpush1.bf16.msra.mxu0 0
      %748 = vmatprep.subr.bf16.mxu0 0
      %749 = vmatpush1.bf16.msra.mxu0 0
      %750 = vmatprep.subr.bf16.mxu0 0
      %751 = vmatpush1.bf16.msra.mxu0 0
      %752 = vmatprep.subr.bf16.mxu0 0
      %753 = vmatpush1.bf16.msra.mxu0 0
      %754 = vmatprep.mubr.bf16.mxu0 0
      %755 = vmatmul.mubr.bf16.gmra.mrb[0].mxu0 %v671
      %v756 = vpop.f32.mrb[0].mxu0
      %v757 = vadd.f32 0.0, %v756
      %v758 = vpop.f32.mrb[0].mxu0
      %v759 = vpop.f32.mrb[0].mxu0
      %v760 = vadd.f32 0.0, %v759
      %v761 = vpop.f32.mrb[0].mxu0
      %762 = vmatprep.mubr.bf16.mxu0 0
      %763 = vmatmul.mubr.bf16.gmra.mrb[0].mxu0 %v674
      %v764 = vpop.f32.mrb[0].mxu0
      %v765 = vadd.f32 0.0, %v764
      %v766 = vpop.f32.mrb[0].mxu0
      %v767 = vpop.f32.mrb[0].mxu0
      %v768 = vadd.f32 0.0, %v767
      %v769 = vpop.f32.mrb[0].mxu0
      %770 = vmatprep.mubr.bf16.mxu0 0
      %771 = vmatmul.mubr.bf16.gmra.mrb[0].mxu0 %v677
      %v772 = vpop.f32.mrb[0].mxu0
      %v773 = vadd.f32 0.0, %v772
      %v774 = vpop.f32.mrb[0].mxu0
      %v775 = vpop.f32.mrb[0].mxu0
      %v776 = vadd.f32 0.0, %v775
      %v777 = vpop.f32.mrb[0].mxu0
      %778 = vmatprep.mubr.bf16.mxu0 0
      %779 = vmatmul.mubr.bf16.gmra.mrb[0].mxu0 %v680
      %v780 = vpop.f32.mrb[0].mxu0
      %v781 = vadd.f32 0.0, %v780
      %v782 = vpop.f32.mrb[0].mxu0
      %v783 = vpop.f32.mrb[0].mxu0
      %v784 = vadd.f32 0.0, %v783
      %v785 = vpop.f32.mrb[0].mxu0
      %786 = vmatprep.mubr.bf16.mxu0 0
      %787 = vmatmul.mubr.bf16.gmra.mrb[0].mxu0 %v683
      %v788 = vpop.f32.mrb[0].mxu0
      %v789 = vadd.f32 0.0, %v788
      %v790 = vpop.f32.mrb[0].mxu0
      %v791 = vpop.f32.mrb[0].mxu0
      %v792 = vadd.f32 0.0, %v791
      %v793 = vpop.f32.mrb[0].mxu0
      %794 = vmatprep.mubr.bf16.mxu0 0
      %795 = vmatmul.mubr.bf16.gmra.mrb[0].mxu0 %v686
      %v796 = vpop.f32.mrb[0].mxu0
      %v797 = vadd.f32 0.0, %v796
      %v798 = vpop.f32.mrb[0].mxu0
      %v799 = vpop.f32.mrb[0].mxu0
      %v800 = vadd.f32 0.0, %v799
      %v801 = vpop.f32.mrb[0].mxu0
      %802 = vmatprep.mubr.bf16.mxu0 0
      %803 = vmatmul.mubr.bf16.gmra.mrb[0].mxu0 %v689
      %v804 = vpop.f32.mrb[0].mxu0
      %v805 = vadd.f32 0.0, %v804
      %v806 = vpop.f32.mrb[0].mxu0
      %v807 = vpop.f32.mrb[0].mxu0
      %v808 = vadd.f32 0.0, %v807
      %v809 = vpop.f32.mrb[0].mxu0
      %810 = vmatprep.mubr.bf16.mxu0 0
      %811 = vmatmul.mubr.bf16.gmra.mrb[0].mxu0 %v692
      %v812 = vpop.f32.mrb[0].mxu0
      %v813 = vadd.f32 0.0, %v812
      %v814 = vpop.f32.mrb[0].mxu0
      %v815 = vpop.f32.mrb[0].mxu0
      %v816 = vadd.f32 0.0, %v815
      %v817 = vpop.f32.mrb[0].mxu0
      %818 = vmatprep.mubr.bf16.mxu0 0
      %819 = vmatmul.mubr.bf16.gmra.mrb[0].mxu0 %v695
      %v820 = vpop.f32.mrb[0].mxu0
      %v821 = vadd.f32 0.0, %v820
      %v822 = vpop.f32.mrb[0].mxu0
      %v823 = vpop.f32.mrb[0].mxu0
      %v824 = vadd.f32 0.0, %v823
      %v825 = vpop.f32.mrb[0].mxu0
      %826 = vmatprep.mubr.bf16.mxu0 0
      %827 = vmatmul.mubr.bf16.gmra.mrb[0].mxu0 %v698
      %v828 = vpop.f32.mrb[0].mxu0
      %v829 = vadd.f32 0.0, %v828
      %v830 = vpop.f32.mrb[0].mxu0
      %v831 = vpop.f32.mrb[0].mxu0
      %v832 = vadd.f32 0.0, %v831
      %v833 = vpop.f32.mrb[0].mxu0
      %834 = vmatprep.mubr.bf16.mxu0 0
      %835 = vmatmul.mubr.bf16.gmra.mrb[0].mxu0 %v701
      %v836 = vpop.f32.mrb[0].mxu0
      %v837 = vadd.f32 0.0, %v836
      %v838 = vpop.f32.mrb[0].mxu0
      %v839 = vpop.f32.mrb[0].mxu0
      %v840 = vadd.f32 0.0, %v839
      %v841 = vpop.f32.mrb[0].mxu0
      %842 = vmatprep.mubr.bf16.mxu0 0
      %843 = vmatmul.mubr.bf16.gmra.mrb[0].mxu0 %v704
      %v844 = vpop.f32.mrb[0].mxu0
      %v845 = vadd.f32 0.0, %v844
      %v846 = vpop.f32.mrb[0].mxu0
      %v847 = vpop.f32.mrb[0].mxu0
      %v848 = vadd.f32 0.0, %v847
      %v849 = vpop.f32.mrb[0].mxu0
      %850 = vmatprep.mubr.bf16.mxu0 0
      %851 = vmatmul.mubr.bf16.gmra.mrb[0].mxu0 %v707
      %v852 = vpop.f32.mrb[0].mxu0
      %v853 = vadd.f32 0.0, %v852
      %v854 = vpop.f32.mrb[0].mxu0
      %v855 = vpop.f32.mrb[0].mxu0
      %v856 = vadd.f32 0.0, %v855
      %v857 = vpop.f32.mrb[0].mxu0
      %858 = vmatprep.mubr.bf16.mxu0 0
      %859 = vmatmul.mubr.bf16.gmra.mrb[0].mxu0 %v710
      %v860 = vpop.f32.mrb[0].mxu0
      %v861 = vadd.f32 0.0, %v860
      %v862 = vpop.f32.mrb[0].mxu0
      %v863 = vpop.f32.mrb[0].mxu0
      %v864 = vadd.f32 0.0, %v863
      %v865 = vpop.f32.mrb[0].mxu0
      %866 = vmatprep.mubr.bf16.mxu0 0
      %867 = vmatmul.mubr.bf16.gmra.mrb[0].mxu0 %v713
      %v868 = vpop.f32.mrb[0].mxu0
      %v869 = vadd.f32 0.0, %v868
      %v870 = vpop.f32.mrb[0].mxu0
      %v871 = vpop.f32.mrb[0].mxu0
      %v872 = vadd.f32 0.0, %v871
      %v873 = vpop.f32.mrb[0].mxu0
      %874 = vmatprep.mubr.bf16.mxu0 0
      %875 = vmatmul.mubr.bf16.gmra.mrb[0].mxu0 %v716
      %v876 = vpop.f32.mrb[0].mxu0
      %v877 = vadd.f32 0.0, %v876
      %v878 = vpop.f32.mrb[0].mxu0
      %v879 = vpop.f32.mrb[0].mxu0
      %v880 = vadd.f32 0.0, %v879
      %v881 = vpop.f32.mrb[0].mxu0
      %882 = vdwg.mxu0
      %v915 = vunpack.c.l.b16 %v183
      %v916 = vunpack.c.l.b16 %v184
      %v917 = vunpack.c.l.b16 %v185
      %v918 = vunpack.c.l.b16 %v186
      %v919 = vunpack.c.l.b16 %v187
      %v920 = vunpack.c.l.b16 %v188
      %v921 = vunpack.c.l.b16 %v189
      %v922 = vunpack.c.l.b16 %v190
      %v923 = vunpack.c.l.b16 %v191
      %v924 = vunpack.c.l.b16 %v192
      %v925 = vunpack.c.l.b16 %v193
      %v926 = vunpack.c.l.b16 %v194
      %v927 = vunpack.c.l.b16 %v195
      %v928 = vunpack.c.l.b16 %v196
      %v929 = vunpack.c.l.b16 %v197
      %v930 = vunpack.c.l.b16 %v198
      %v931 = vunpack.c.l.b16 %v199
      %v932 = vunpack.c.l.b16 %v200
      %v933 = vunpack.c.l.b16 %v201
      %v934 = vunpack.c.l.b16 %v202
      %v935 = vunpack.c.l.b16 %v203
      %v936 = vunpack.c.l.b16 %v204
      %v937 = vunpack.c.l.b16 %v205
      %v938 = vunpack.c.l.b16 %v206
      %v939 = vunpack.c.l.b16 %v207
      %v940 = vunpack.c.l.b16 %v208
      %v941 = vunpack.c.l.b16 %v209
      %v942 = vunpack.c.l.b16 %v210
      %v943 = vunpack.c.l.b16 %v211
      %v944 = vunpack.c.l.b16 %v212
      %v945 = vunpack.c.l.b16 %v213
      %v946 = vunpack.c.l.b16 %v214
      %v947 = vpack.c.b16 %v916, %v915
      %v948 = vpack.c.b16 %v918, %v917
      %v949 = vpack.c.b16 %v920, %v919
      %v950 = vpack.c.b16 %v922, %v921
      %v951 = vpack.c.b16 %v924, %v923
      %v952 = vpack.c.b16 %v926, %v925
      %v953 = vpack.c.b16 %v928, %v927
      %v954 = vpack.c.b16 %v930, %v929
      %v955 = vpack.c.b16 %v932, %v931
      %v956 = vpack.c.b16 %v934, %v933
      %v957 = vpack.c.b16 %v936, %v935
      %v958 = vpack.c.b16 %v938, %v937
      %v959 = vpack.c.b16 %v940, %v939
      %v960 = vpack.c.b16 %v942, %v941
      %v961 = vpack.c.b16 %v944, %v943
      %v962 = vpack.c.b16 %v946, %v945
      %v964 = vsel %vm669, %v947, 0
      %v967 = vsel %vm669, %v948, 0
      %v970 = vsel %vm669, %v949, 0
      %v973 = vsel %vm669, %v950, 0
      %v976 = vsel %vm669, %v951, 0
      %v979 = vsel %vm669, %v952, 0
      %v982 = vsel %vm669, %v953, 0
      %v985 = vsel %vm669, %v954, 0
      %v988 = vsel %vm669, %v955, 0
      %v991 = vsel %vm669, %v956, 0
      %v994 = vsel %vm669, %v957, 0
      %v997 = vsel %vm669, %v958, 0
      %v1000 = vsel %vm669, %v959, 0
      %v1003 = vsel %vm669, %v960, 0
      %v1006 = vsel %vm669, %v961, 0
      %v1009 = vsel %vm669, %v962, 0
      %v1012 = vsel %vm718, %v215, 0
      %1014 = vmatprep.subr.bf16.mxu0 0
      %1015 = vmatpush1.bf16.msra.mxu0 %v1012
      %1016 = vmatprep.subr.bf16.mxu0 0
      %1017 = vmatpush1.bf16.msra.mxu0 0
      %1018 = vmatprep.subr.bf16.mxu0 0
      %1019 = vmatpush1.bf16.msra.mxu0 0
      %1020 = vmatprep.subr.bf16.mxu0 0
      %1021 = vmatpush1.bf16.msra.mxu0 0
      %1022 = vmatprep.subr.bf16.mxu0 0
      %1023 = vmatpush1.bf16.msra.mxu0 0
      %1024 = vmatprep.subr.bf16.mxu0 0
      %1025 = vmatpush1.bf16.msra.mxu0 0
      %1026 = vmatprep.subr.bf16.mxu0 0
      %1027 = vmatpush1.bf16.msra.mxu0 0
      %1028 = vmatprep.subr.bf16.mxu0 0
      %1029 = vmatpush1.bf16.msra.mxu0 0
      %1030 = vmatprep.subr.bf16.mxu0 0
      %1031 = vmatpush1.bf16.msra.mxu0 0
      %1032 = vmatprep.subr.bf16.mxu0 0
      %1033 = vmatpush1.bf16.msra.mxu0 0
      %1034 = vmatprep.subr.bf16.mxu0 0
      %1035 = vmatpush1.bf16.msra.mxu0 0
      %1036 = vmatprep.subr.bf16.mxu0 0
      %1037 = vmatpush1.bf16.msra.mxu0 0
      %1038 = vmatprep.subr.bf16.mxu0 0
      %1039 = vmatpush1.bf16.msra.mxu0 0
      %1040 = vmatprep.subr.bf16.mxu0 0
      %1041 = vmatpush1.bf16.msra.mxu0 0
      %1042 = vmatprep.subr.bf16.mxu0 0
      %1043 = vmatpush1.bf16.msra.mxu0 0
      %1044 = vmatprep.subr.bf16.mxu0 0
      %1045 = vmatpush1.bf16.msra.mxu0 0
      %1046 = vmatprep.mubr.bf16.mxu0 0
      %1047 = vmatmul.mubr.bf16.gmra.mrb[0].mxu0 %v964
      %v1048 = vpop.f32.mrb[0].mxu0
      %v1049 = vadd.f32 %v757, %v1048
      %v1050 = vpop.f32.mrb[0].mxu0
      %v1051 = vpop.f32.mrb[0].mxu0
      %v1052 = vadd.f32 %v760, %v1051
      %v1053 = vpop.f32.mrb[0].mxu0
      %1054 = vmatprep.mubr.bf16.mxu0 0
      %1055 = vmatmul.mubr.bf16.gmra.mrb[0].mxu0 %v967
      %v1056 = vpop.f32.mrb[0].mxu0
      %v1057 = vadd.f32 %v765, %v1056
      %v1058 = vpop.f32.mrb[0].mxu0
      %v1059 = vpop.f32.mrb[0].mxu0
      %v1060 = vadd.f32 %v768, %v1059
      %v1061 = vpop.f32.mrb[0].mxu0
      %1062 = vmatprep.mubr.bf16.mxu0 0
      %1063 = vmatmul.mubr.bf16.gmra.mrb[0].mxu0 %v970
      %v1064 = vpop.f32.mrb[0].mxu0
      %v1065 = vadd.f32 %v773, %v1064
      %v1066 = vpop.f32.mrb[0].mxu0
      %v1067 = vpop.f32.mrb[0].mxu0
      %v1068 = vadd.f32 %v776, %v1067
      %v1069 = vpop.f32.mrb[0].mxu0
      %1070 = vmatprep.mubr.bf16.mxu0 0
      %1071 = vmatmul.mubr.bf16.gmra.mrb[0].mxu0 %v973
      %v1072 = vpop.f32.mrb[0].mxu0
      %v1073 = vadd.f32 %v781, %v1072
      %v1074 = vpop.f32.mrb[0].mxu0
      %v1075 = vpop.f32.mrb[0].mxu0
      %v1076 = vadd.f32 %v784, %v1075
      %v1077 = vpop.f32.mrb[0].mxu0
      %1078 = vmatprep.mubr.bf16.mxu0 0
      %1079 = vmatmul.mubr.bf16.gmra.mrb[0].mxu0 %v976
      %v1080 = vpop.f32.mrb[0].mxu0
      %v1081 = vadd.f32 %v789, %v1080
      %v1082 = vpop.f32.mrb[0].mxu0
      %v1083 = vpop.f32.mrb[0].mxu0
      %v1084 = vadd.f32 %v792, %v1083
      %v1085 = vpop.f32.mrb[0].mxu0
      %1086 = vmatprep.mubr.bf16.mxu0 0
      %1087 = vmatmul.mubr.bf16.gmra.mrb[0].mxu0 %v979
      %v1088 = vpop.f32.mrb[0].mxu0
      %v1089 = vadd.f32 %v797, %v1088
      %v1090 = vpop.f32.mrb[0].mxu0
      %v1091 = vpop.f32.mrb[0].mxu0
      %v1092 = vadd.f32 %v800, %v1091
      %v1093 = vpop.f32.mrb[0].mxu0
      %1094 = vmatprep.mubr.bf16.mxu0 0
      %1095 = vmatmul.mubr.bf16.gmra.mrb[0].mxu0 %v982
      %v1096 = vpop.f32.mrb[0].mxu0
      %v1097 = vadd.f32 %v805, %v1096
      %v1098 = vpop.f32.mrb[0].mxu0
      %v1099 = vpop.f32.mrb[0].mxu0
      %v1100 = vadd.f32 %v808, %v1099
      %v1101 = vpop.f32.mrb[0].mxu0
      %1102 = vmatprep.mubr.bf16.mxu0 0
      %1103 = vmatmul.mubr.bf16.gmra.mrb[0].mxu0 %v985
      %v1104 = vpop.f32.mrb[0].mxu0
      %v1105 = vadd.f32 %v813, %v1104
      %v1106 = vpop.f32.mrb[0].mxu0
      %v1107 = vpop.f32.mrb[0].mxu0
      %v1108 = vadd.f32 %v816, %v1107
      %v1109 = vpop.f32.mrb[0].mxu0
      %1110 = vmatprep.mubr.bf16.mxu0 0
      %1111 = vmatmul.mubr.bf16.gmra.mrb[0].mxu0 %v988
      %v1112 = vpop.f32.mrb[0].mxu0
      %v1113 = vadd.f32 %v821, %v1112
      %v1114 = vpop.f32.mrb[0].mxu0
      %v1115 = vpop.f32.mrb[0].mxu0
      %v1116 = vadd.f32 %v824, %v1115
      %v1117 = vpop.f32.mrb[0].mxu0
      %1118 = vmatprep.mubr.bf16.mxu0 0
      %1119 = vmatmul.mubr.bf16.gmra.mrb[0].mxu0 %v991
      %v1120 = vpop.f32.mrb[0].mxu0
      %v1121 = vadd.f32 %v829, %v1120
      %v1122 = vpop.f32.mrb[0].mxu0
      %v1123 = vpop.f32.mrb[0].mxu0
      %v1124 = vadd.f32 %v832, %v1123
      %v1125 = vpop.f32.mrb[0].mxu0
      %1126 = vmatprep.mubr.bf16.mxu0 0
      %1127 = vmatmul.mubr.bf16.gmra.mrb[0].mxu0 %v994
      %v1128 = vpop.f32.mrb[0].mxu0
      %v1129 = vadd.f32 %v837, %v1128
      %v1130 = vpop.f32.mrb[0].mxu0
      %v1131 = vpop.f32.mrb[0].mxu0
      %v1132 = vadd.f32 %v840, %v1131
      %v1133 = vpop.f32.mrb[0].mxu0
      %1134 = vmatprep.mubr.bf16.mxu0 0
      %1135 = vmatmul.mubr.bf16.gmra.mrb[0].mxu0 %v997
      %v1136 = vpop.f32.mrb[0].mxu0
      %v1137 = vadd.f32 %v845, %v1136
      %v1138 = vpop.f32.mrb[0].mxu0
      %v1139 = vpop.f32.mrb[0].mxu0
      %v1140 = vadd.f32 %v848, %v1139
      %v1141 = vpop.f32.mrb[0].mxu0
      %1142 = vmatprep.mubr.bf16.mxu0 0
      %1143 = vmatmul.mubr.bf16.gmra.mrb[0].mxu0 %v1000
      %v1144 = vpop.f32.mrb[0].mxu0
      %v1145 = vadd.f32 %v853, %v1144
      %v1146 = vpop.f32.mrb[0].mxu0
      %v1147 = vpop.f32.mrb[0].mxu0
      %v1148 = vadd.f32 %v856, %v1147
      %v1149 = vpop.f32.mrb[0].mxu0
      %1150 = vmatprep.mubr.bf16.mxu0 0
      %1151 = vmatmul.mubr.bf16.gmra.mrb[0].mxu0 %v1003
      %v1152 = vpop.f32.mrb[0].mxu0
      %v1153 = vadd.f32 %v861, %v1152
      %v1154 = vpop.f32.mrb[0].mxu0
      %v1155 = vpop.f32.mrb[0].mxu0
      %v1156 = vadd.f32 %v864, %v1155
      %v1157 = vpop.f32.mrb[0].mxu0
      %1158 = vmatprep.mubr.bf16.mxu0 0
      %1159 = vmatmul.mubr.bf16.gmra.mrb[0].mxu0 %v1006
      %v1160 = vpop.f32.mrb[0].mxu0
      %v1161 = vadd.f32 %v869, %v1160
      %v1162 = vpop.f32.mrb[0].mxu0
      %v1163 = vpop.f32.mrb[0].mxu0
      %v1164 = vadd.f32 %v872, %v1163
      %v1165 = vpop.f32.mrb[0].mxu0
      %1166 = vmatprep.mubr.bf16.mxu0 0
      %1167 = vmatmul.mubr.bf16.gmra.mrb[0].mxu0 %v1009
      %v1168 = vpop.f32.mrb[0].mxu0
      %v1169 = vadd.f32 %v877, %v1168
      %v1170 = vpop.f32.mrb[0].mxu0
      %v1171 = vpop.f32.mrb[0].mxu0
      %v1172 = vadd.f32 %v880, %v1171
      %v1173 = vpop.f32.mrb[0].mxu0
      %1174 = vdwg.mxu0
      %v1175 = vld [vmem:[%s172] sm:$0xe]
      %v1176 = vld [vmem:[%s172 + $0xc] sm:$0xe]
      %v1177 = vld [vmem:[%s172 + $0x18] sm:$0xe]
      %v1178 = vld [vmem:[%s172 + $0x24] sm:$0xe]
      %v1179 = vld [vmem:[%s172 + $0x30] sm:$0xe]
      %v1180 = vld [vmem:[%s172 + $0x3c] sm:$0xe]
      %v1181 = vld [vmem:[%s172 + $0x48] sm:$0xe]
      %v1182 = vld [vmem:[%s172 + $0x54] sm:$0xe]
      %v1183 = vld [vmem:[%s172 + $0x60] sm:$0xe]
      %v1184 = vld [vmem:[%s172 + $0x6c] sm:$0xe]
      %v1185 = vld [vmem:[%s172 + $0x78] sm:$0xe]
      %v1186 = vld [vmem:[%s172 + $0x84] sm:$0xe]
      %v1187 = vld [vmem:[%s172 + $0x90] sm:$0xe]
      %v1188 = vld [vmem:[%s172 + $0x9c] sm:$0xe]
      %v1189 = vld [vmem:[%s172 + $0xa8] sm:$0xe]
      %v1190 = vld [vmem:[%s172 + $0xb4] sm:$0xe]
      %vm1223 = vcmask 1042432
      %vm1224 = vcmask 1046532
      %vm1225 = vmor %vm1223, %vm1224
      %v1226 = vrot.slane %v1175, 5
      %v1227 = vrot.slane %v1226, 4
      %v1228 = vrot.slane %v184, 5
      %v1229 = vsel %vm1225, %v1227, %v1228
      %v1230 = vrot.slane %v1228, 4
      %v1231 = vrot.slane %v216, 5
      %v1232 = vsel %vm1225, %v1230, %v1231
      %v1233 = vrot.slane %v1176, 5
      %v1234 = vrot.slane %v1233, 4
      %v1235 = vrot.slane %v186, 5
      %v1236 = vsel %vm1225, %v1234, %v1235
      %v1237 = vrot.slane %v1235, 4
      %v1238 = vrot.slane %v217, 5
      %v1239 = vsel %vm1225, %v1237, %v1238
      %v1240 = vrot.slane %v1177, 5
      %v1241 = vrot.slane %v1240, 4
      %v1242 = vrot.slane %v188, 5
      %v1243 = vsel %vm1225, %v1241, %v1242
      %v1244 = vrot.slane %v1242, 4
      %v1245 = vrot.slane %v218, 5
      %v1246 = vsel %vm1225, %v1244, %v1245
      %v1247 = vrot.slane %v1178, 5
      %v1248 = vrot.slane %v1247, 4
      %v1249 = vrot.slane %v190, 5
      %v1250 = vsel %vm1225, %v1248, %v1249
      %v1251 = vrot.slane %v1249, 4
      %v1252 = vrot.slane %v219, 5
      %v1253 = vsel %vm1225, %v1251, %v1252
      %v1254 = vrot.slane %v1179, 5
      %v1255 = vrot.slane %v1254, 4
      %v1256 = vrot.slane %v192, 5
      %v1257 = vsel %vm1225, %v1255, %v1256
      %v1258 = vrot.slane %v1256, 4
      %v1259 = vrot.slane %v220, 5
      %v1260 = vsel %vm1225, %v1258, %v1259
      %v1261 = vrot.slane %v1180, 5
      %v1262 = vrot.slane %v1261, 4
      %v1263 = vrot.slane %v194, 5
      %v1264 = vsel %vm1225, %v1262, %v1263
      %v1265 = vrot.slane %v1263, 4
      %v1266 = vrot.slane %v221, 5
      %v1267 = vsel %vm1225, %v1265, %v1266
      %v1268 = vrot.slane %v1181, 5
      %v1269 = vrot.slane %v1268, 4
      %v1270 = vrot.slane %v196, 5
      %v1271 = vsel %vm1225, %v1269, %v1270
      %v1272 = vrot.slane %v1270, 4
      %v1273 = vrot.slane %v222, 5
      %v1274 = vsel %vm1225, %v1272, %v1273
      %v1275 = vrot.slane %v1182, 5
      %v1276 = vrot.slane %v1275, 4
      %v1277 = vrot.slane %v198, 5
      %v1278 = vsel %vm1225, %v1276, %v1277
      %v1279 = vrot.slane %v1277, 4
      %v1280 = vrot.slane %v223, 5
      %v1281 = vsel %vm1225, %v1279, %v1280
      %v1282 = vrot.slane %v1183, 5
      %v1283 = vrot.slane %v1282, 4
      %v1284 = vrot.slane %v200, 5
      %v1285 = vsel %vm1225, %v1283, %v1284
      %v1286 = vrot.slane %v1284, 4
      %v1287 = vrot.slane %v224, 5
      %v1288 = vsel %vm1225, %v1286, %v1287
      %v1289 = vrot.slane %v1184, 5
      %v1290 = vrot.slane %v1289, 4
      %v1291 = vrot.slane %v202, 5
      %v1292 = vsel %vm1225, %v1290, %v1291
      %v1293 = vrot.slane %v1291, 4
      %v1294 = vrot.slane %v225, 5
      %v1295 = vsel %vm1225, %v1293, %v1294
      %v1296 = vrot.slane %v1185, 5
      %v1297 = vrot.slane %v1296, 4
      %v1298 = vrot.slane %v204, 5
      %v1299 = vsel %vm1225, %v1297, %v1298
      %v1300 = vrot.slane %v1298, 4
      %v1301 = vrot.slane %v226, 5
      %v1302 = vsel %vm1225, %v1300, %v1301
      %v1303 = vrot.slane %v1186, 5
      %v1304 = vrot.slane %v1303, 4
      %v1305 = vrot.slane %v206, 5
      %v1306 = vsel %vm1225, %v1304, %v1305
      %v1307 = vrot.slane %v1305, 4
      %v1308 = vrot.slane %v227, 5
      %v1309 = vsel %vm1225, %v1307, %v1308
      %v1310 = vrot.slane %v1187, 5
      %v1311 = vrot.slane %v1310, 4
      %v1312 = vrot.slane %v208, 5
      %v1313 = vsel %vm1225, %v1311, %v1312
      %v1314 = vrot.slane %v1312, 4
      %v1315 = vrot.slane %v228, 5
      %v1316 = vsel %vm1225, %v1314, %v1315
      %v1317 = vrot.slane %v1188, 5
      %v1318 = vrot.slane %v1317, 4
      %v1319 = vrot.slane %v210, 5
      %v1320 = vsel %vm1225, %v1318, %v1319
      %v1321 = vrot.slane %v1319, 4
      %v1322 = vrot.slane %v229, 5
      %v1323 = vsel %vm1225, %v1321, %v1322
      %v1324 = vrot.slane %v1189, 5
      %v1325 = vrot.slane %v1324, 4
      %v1326 = vrot.slane %v212, 5
      %v1327 = vsel %vm1225, %v1325, %v1326
      %v1328 = vrot.slane %v1326, 4
      %v1329 = vrot.slane %v230, 5
      %v1330 = vsel %vm1225, %v1328, %v1329
      %v1331 = vrot.slane %v1190, 5
      %v1332 = vrot.slane %v1331, 4
      %v1333 = vrot.slane %v214, 5
      %v1334 = vsel %vm1225, %v1332, %v1333
      %v1335 = vrot.slane %v1333, 4
      %v1336 = vrot.slane %v231, 5
      %v1337 = vsel %vm1225, %v1335, %v1336
      %s1338 = scalar_lea.vmem %s1, 4
      %v1339 = vld [vmem:[%s1338] sm:$0x3]
      %v1340 = vunpack.c.l.b16 %v1229
      %v1341 = vunpack.c.l.b16 %v1232
      %v1342 = vunpack.c.l.b16 %v1236
      %v1343 = vunpack.c.l.b16 %v1239
      %v1344 = vunpack.c.l.b16 %v1243
      %v1345 = vunpack.c.l.b16 %v1246
      %v1346 = vunpack.c.l.b16 %v1250
      %v1347 = vunpack.c.l.b16 %v1253
      %v1348 = vunpack.c.l.b16 %v1257
      %v1349 = vunpack.c.l.b16 %v1260
      %v1350 = vunpack.c.l.b16 %v1264
      %v1351 = vunpack.c.l.b16 %v1267
      %v1352 = vunpack.c.l.b16 %v1271
      %v1353 = vunpack.c.l.b16 %v1274
      %v1354 = vunpack.c.l.b16 %v1278
      %v1355 = vunpack.c.l.b16 %v1281
      %v1356 = vunpack.c.l.b16 %v1285
      %v1357 = vunpack.c.l.b16 %v1288
      %v1358 = vunpack.c.l.b16 %v1292
      %v1359 = vunpack.c.l.b16 %v1295
      %v1360 = vunpack.c.l.b16 %v1299
      %v1361 = vunpack.c.l.b16 %v1302
      %v1362 = vunpack.c.l.b16 %v1306
      %v1363 = vunpack.c.l.b16 %v1309
      %v1364 = vunpack.c.l.b16 %v1313
      %v1365 = vunpack.c.l.b16 %v1316
      %v1366 = vunpack.c.l.b16 %v1320
      %v1367 = vunpack.c.l.b16 %v1323
      %v1368 = vunpack.c.l.b16 %v1327
      %v1369 = vunpack.c.l.b16 %v1330
      %v1370 = vunpack.c.l.b16 %v1334
      %v1371 = vunpack.c.l.b16 %v1337
      %v1372 = vpack.c.b16 %v1341, %v1340
      %v1373 = vpack.c.b16 %v1343, %v1342
      %v1374 = vpack.c.b16 %v1345, %v1344
      %v1375 = vpack.c.b16 %v1347, %v1346
      %v1376 = vpack.c.b16 %v1349, %v1348
      %v1377 = vpack.c.b16 %v1351, %v1350
      %v1378 = vpack.c.b16 %v1353, %v1352
      %v1379 = vpack.c.b16 %v1355, %v1354
      %v1380 = vpack.c.b16 %v1357, %v1356
      %v1381 = vpack.c.b16 %v1359, %v1358
      %v1382 = vpack.c.b16 %v1361, %v1360
      %v1383 = vpack.c.b16 %v1363, %v1362
      %v1384 = vpack.c.b16 %v1365, %v1364
      %v1385 = vpack.c.b16 %v1367, %v1366
      %v1386 = vpack.c.b16 %v1369, %v1368
      %v1387 = vpack.c.b16 %v1371, %v1370
      %v1389 = vsel %vm669, %v1372, 0
      %v1392 = vsel %vm669, %v1373, 0
      %v1395 = vsel %vm669, %v1374, 0
      %v1398 = vsel %vm669, %v1375, 0
      %v1401 = vsel %vm669, %v1376, 0
      %v1404 = vsel %vm669, %v1377, 0
      %v1407 = vsel %vm669, %v1378, 0
      %v1410 = vsel %vm669, %v1379, 0
      %v1413 = vsel %vm669, %v1380, 0
      %v1416 = vsel %vm669, %v1381, 0
      %v1419 = vsel %vm669, %v1382, 0
      %v1422 = vsel %vm669, %v1383, 0
      %v1425 = vsel %vm669, %v1384, 0
      %v1428 = vsel %vm669, %v1385, 0
      %v1431 = vsel %vm669, %v1386, 0
      %v1434 = vsel %vm669, %v1387, 0
      %v1437 = vsel %vm718, %v1339, 0
      %1439 = vmatprep.subr.bf16.mxu0 0
      %1440 = vmatpush1.bf16.msra.mxu0 %v1437
      %1441 = vmatprep.subr.bf16.mxu0 0
      %1442 = vmatpush1.bf16.msra.mxu0 0
      %1443 = vmatprep.subr.bf16.mxu0 0
      %1444 = vmatpush1.bf16.msra.mxu0 0
      %1445 = vmatprep.subr.bf16.mxu0 0
      %1446 = vmatpush1.bf16.msra.mxu0 0
      %1447 = vmatprep.subr.bf16.mxu0 0
      %1448 = vmatpush1.bf16.msra.mxu0 0
      %1449 = vmatprep.subr.bf16.mxu0 0
      %1450 = vmatpush1.bf16.msra.mxu0 0
      %1451 = vmatprep.subr.bf16.mxu0 0
      %1452 = vmatpush1.bf16.msra.mxu0 0
      %1453 = vmatprep.subr.bf16.mxu0 0
      %1454 = vmatpush1.bf16.msra.mxu0 0
      %1455 = vmatprep.subr.bf16.mxu0 0
      %1456 = vmatpush1.bf16.msra.mxu0 0
      %1457 = vmatprep.subr.bf16.mxu0 0
      %1458 = vmatpush1.bf16.msra.mxu0 0
      %1459 = vmatprep.subr.bf16.mxu0 0
      %1460 = vmatpush1.bf16.msra.mxu0 0
      %1461 = vmatprep.subr.bf16.mxu0 0
      %1462 = vmatpush1.bf16.msra.mxu0 0
      %1463 = vmatprep.subr.bf16.mxu0 0
      %1464 = vmatpush1.bf16.msra.mxu0 0
      %1465 = vmatprep.subr.bf16.mxu0 0
      %1466 = vmatpush1.bf16.msra.mxu0 0
      %1467 = vmatprep.subr.bf16.mxu0 0
      %1468 = vmatpush1.bf16.msra.mxu0 0
      %1469 = vmatprep.subr.bf16.mxu0 0
      %1470 = vmatpush1.bf16.msra.mxu0 0
      %1471 = vmatprep.mubr.bf16.mxu0 0
      %1472 = vmatmul.mubr.bf16.gmra.mrb[0].mxu0 %v1389
      %v1473 = vpop.f32.mrb[0].mxu0
      %v1474 = vadd.f32 0.0, %v1473
      %v1475 = vpop.f32.mrb[0].mxu0
      %v1476 = vpop.f32.mrb[0].mxu0
      %v1477 = vadd.f32 0.0, %v1476
      %v1478 = vpop.f32.mrb[0].mxu0
      %1479 = vmatprep.mubr.bf16.mxu0 0
      %1480 = vmatmul.mubr.bf16.gmra.mrb[0].mxu0 %v1392
      %v1481 = vpop.f32.mrb[0].mxu0
      %v1482 = vadd.f32 0.0, %v1481
      %v1483 = vpop.f32.mrb[0].mxu0
      %v1484 = vpop.f32.mrb[0].mxu0
      %v1485 = vadd.f32 0.0, %v1484
      %v1486 = vpop.f32.mrb[0].mxu0
      %1487 = vmatprep.mubr.bf16.mxu0 0
      %1488 = vmatmul.mubr.bf16.gmra.mrb[0].mxu0 %v1395
      %v1489 = vpop.f32.mrb[0].mxu0
      %v1490 = vadd.f32 0.0, %v1489
      %v1491 = vpop.f32.mrb[0].mxu0
      %v1492 = vpop.f32.mrb[0].mxu0
      %v1493 = vadd.f32 0.0, %v1492
      %v1494 = vpop.f32.mrb[0].mxu0
      %1495 = vmatprep.mubr.bf16.mxu0 0
      %1496 = vmatmul.mubr.bf16.gmra.mrb[0].mxu0 %v1398
      %v1497 = vpop.f32.mrb[0].mxu0
      %v1498 = vadd.f32 0.0, %v1497
      %v1499 = vpop.f32.mrb[0].mxu0
      %v1500 = vpop.f32.mrb[0].mxu0
      %v1501 = vadd.f32 0.0, %v1500
      %v1502 = vpop.f32.mrb[0].mxu0
      %1503 = vmatprep.mubr.bf16.mxu0 0
      %1504 = vmatmul.mubr.bf16.gmra.mrb[0].mxu0 %v1401
      %v1505 = vpop.f32.mrb[0].mxu0
      %v1506 = vadd.f32 0.0, %v1505
      %v1507 = vpop.f32.mrb[0].mxu0
      %v1508 = vpop.f32.mrb[0].mxu0
      %v1509 = vadd.f32 0.0, %v1508
      %v1510 = vpop.f32.mrb[0].mxu0
      %1511 = vmatprep.mubr.bf16.mxu0 0
      %1512 = vmatmul.mubr.bf16.gmra.mrb[0].mxu0 %v1404
      %v1513 = vpop.f32.mrb[0].mxu0
      %v1514 = vadd.f32 0.0, %v1513
      %v1515 = vpop.f32.mrb[0].mxu0
      %v1516 = vpop.f32.mrb[0].mxu0
      %v1517 = vadd.f32 0.0, %v1516
      %v1518 = vpop.f32.mrb[0].mxu0
      %1519 = vmatprep.mubr.bf16.mxu0 0
      %1520 = vmatmul.mubr.bf16.gmra.mrb[0].mxu0 %v1407
      %v1521 = vpop.f32.mrb[0].mxu0
      %v1522 = vadd.f32 0.0, %v1521
      %v1523 = vpop.f32.mrb[0].mxu0
      %v1524 = vpop.f32.mrb[0].mxu0
      %v1525 = vadd.f32 0.0, %v1524
      %v1526 = vpop.f32.mrb[0].mxu0
      %1527 = vmatprep.mubr.bf16.mxu0 0
      %1528 = vmatmul.mubr.bf16.gmra.mrb[0].mxu0 %v1410
      %v1529 = vpop.f32.mrb[0].mxu0
      %v1530 = vadd.f32 0.0, %v1529
      %v1531 = vpop.f32.mrb[0].mxu0
      %v1532 = vpop.f32.mrb[0].mxu0
      %v1533 = vadd.f32 0.0, %v1532
      %v1534 = vpop.f32.mrb[0].mxu0
      %1535 = vmatprep.mubr.bf16.mxu0 0
      %1536 = vmatmul.mubr.bf16.gmra.mrb[0].mxu0 %v1413
      %v1537 = vpop.f32.mrb[0].mxu0
      %v1538 = vadd.f32 0.0, %v1537
      %v1539 = vpop.f32.mrb[0].mxu0
      %v1540 = vpop.f32.mrb[0].mxu0
      %v1541 = vadd.f32 0.0, %v1540
      %v1542 = vpop.f32.mrb[0].mxu0
      %1543 = vmatprep.mubr.bf16.mxu0 0
      %1544 = vmatmul.mubr.bf16.gmra.mrb[0].mxu0 %v1416
      %v1545 = vpop.f32.mrb[0].mxu0
      %v1546 = vadd.f32 0.0, %v1545
      %v1547 = vpop.f32.mrb[0].mxu0
      %v1548 = vpop.f32.mrb[0].mxu0
      %v1549 = vadd.f32 0.0, %v1548
      %v1550 = vpop.f32.mrb[0].mxu0
      %1551 = vmatprep.mubr.bf16.mxu0 0
      %1552 = vmatmul.mubr.bf16.gmra.mrb[0].mxu0 %v1419
      %v1553 = vpop.f32.mrb[0].mxu0
      %v1554 = vadd.f32 0.0, %v1553
      %v1555 = vpop.f32.mrb[0].mxu0
      %v1556 = vpop.f32.mrb[0].mxu0
      %v1557 = vadd.f32 0.0, %v1556
      %v1558 = vpop.f32.mrb[0].mxu0
      %1559 = vmatprep.mubr.bf16.mxu0 0
      %1560 = vmatmul.mubr.bf16.gmra.mrb[0].mxu0 %v1422
      %v1561 = vpop.f32.mrb[0].mxu0
      %v1562 = vadd.f32 0.0, %v1561
      %v1563 = vpop.f32.mrb[0].mxu0
      %v1564 = vpop.f32.mrb[0].mxu0
      %v1565 = vadd.f32 0.0, %v1564
      %v1566 = vpop.f32.mrb[0].mxu0
      %1567 = vmatprep.mubr.bf16.mxu0 0
      %1568 = vmatmul.mubr.bf16.gmra.mrb[0].mxu0 %v1425
      %v1569 = vpop.f32.mrb[0].mxu0
      %v1570 = vadd.f32 0.0, %v1569
      %v1571 = vpop.f32.mrb[0].mxu0
      %v1572 = vpop.f32.mrb[0].mxu0
      %v1573 = vadd.f32 0.0, %v1572
      %v1574 = vpop.f32.mrb[0].mxu0
      %1575 = vmatprep.mubr.bf16.mxu0 0
      %1576 = vmatmul.mubr.bf16.gmra.mrb[0].mxu0 %v1428
      %v1577 = vpop.f32.mrb[0].mxu0
      %v1578 = vadd.f32 0.0, %v1577
      %v1579 = vpop.f32.mrb[0].mxu0
      %v1580 = vpop.f32.mrb[0].mxu0
      %v1581 = vadd.f32 0.0, %v1580
      %v1582 = vpop.f32.mrb[0].mxu0
      %1583 = vmatprep.mubr.bf16.mxu0 0
      %1584 = vmatmul.mubr.bf16.gmra.mrb[0].mxu0 %v1431
      %v1585 = vpop.f32.mrb[0].mxu0
      %v1586 = vadd.f32 0.0, %v1585
      %v1587 = vpop.f32.mrb[0].mxu0
      %v1588 = vpop.f32.mrb[0].mxu0
      %v1589 = vadd.f32 0.0, %v1588
      %v1590 = vpop.f32.mrb[0].mxu0
      %1591 = vmatprep.mubr.bf16.mxu0 0
      %1592 = vmatmul.mubr.bf16.gmra.mrb[0].mxu0 %v1434
      %v1593 = vpop.f32.mrb[0].mxu0
      %v1594 = vadd.f32 0.0, %v1593
      %v1595 = vpop.f32.mrb[0].mxu0
      %v1596 = vpop.f32.mrb[0].mxu0
      %v1597 = vadd.f32 0.0, %v1596
      %v1598 = vpop.f32.mrb[0].mxu0
      %1599 = vdwg.mxu0
      %v1600 = vadd.f32 %v1049, %v1474
      %v1601 = vadd.f32 %v1052, %v1477
      %v1602 = vadd.f32 %v1057, %v1482
      %v1603 = vadd.f32 %v1060, %v1485
      %v1604 = vadd.f32 %v1065, %v1490
      %v1605 = vadd.f32 %v1068, %v1493
      %v1606 = vadd.f32 %v1073, %v1498
      %v1607 = vadd.f32 %v1076, %v1501
      %v1608 = vadd.f32 %v1081, %v1506
      %v1609 = vadd.f32 %v1084, %v1509
      %v1610 = vadd.f32 %v1089, %v1514
      %v1611 = vadd.f32 %v1092, %v1517
      %v1612 = vadd.f32 %v1097, %v1522
      %v1613 = vadd.f32 %v1100, %v1525
      %v1614 = vadd.f32 %v1105, %v1530
      %v1615 = vadd.f32 %v1108, %v1533
      %v1616 = vadd.f32 %v1113, %v1538
      %v1617 = vadd.f32 %v1116, %v1541
      %v1618 = vadd.f32 %v1121, %v1546
      %v1619 = vadd.f32 %v1124, %v1549
      %v1620 = vadd.f32 %v1129, %v1554
      %v1621 = vadd.f32 %v1132, %v1557
      %v1622 = vadd.f32 %v1137, %v1562
      %v1623 = vadd.f32 %v1140, %v1565
      %v1624 = vadd.f32 %v1145, %v1570
      %v1625 = vadd.f32 %v1148, %v1573
      %v1626 = vadd.f32 %v1153, %v1578
      %v1627 = vadd.f32 %v1156, %v1581
      %v1628 = vadd.f32 %v1161, %v1586
      %v1629 = vadd.f32 %v1164, %v1589
      %v1630 = vadd.f32 %v1169, %v1594
      %v1631 = vadd.f32 %v1172, %v1597
      %s1632 = scalar_lea.vmem %s172, 12
      %v1633 = vld [vmem:[%s1632] sm:$0xf]
      %v1634 = vld [vmem:[%s1632 + $0x4] sm:$0xf]
      %v1635 = vld [vmem:[%s1632 + $0xc] sm:$0xf]
      %v1636 = vld [vmem:[%s1632 + $0x10] sm:$0xf]
      %v1637 = vld [vmem:[%s1632 + $0x18] sm:$0xf]
      %v1638 = vld [vmem:[%s1632 + $0x1c] sm:$0xf]
      %v1639 = vld [vmem:[%s1632 + $0x24] sm:$0xf]
      %v1640 = vld [vmem:[%s1632 + $0x28] sm:$0xf]
      %v1641 = vld [vmem:[%s1632 + $0x30] sm:$0xf]
      %v1642 = vld [vmem:[%s1632 + $0x34] sm:$0xf]
      %v1643 = vld [vmem:[%s1632 + $0x3c] sm:$0xf]
      %v1644 = vld [vmem:[%s1632 + $0x40] sm:$0xf]
      %v1645 = vld [vmem:[%s1632 + $0x48] sm:$0xf]
      %v1646 = vld [vmem:[%s1632 + $0x4c] sm:$0xf]
      %v1647 = vld [vmem:[%s1632 + $0x54] sm:$0xf]
      %v1648 = vld [vmem:[%s1632 + $0x58] sm:$0xf]
      %v1649 = vld [vmem:[%s1632 + $0x60] sm:$0xf]
      %v1650 = vld [vmem:[%s1632 + $0x64] sm:$0xf]
      %v1651 = vld [vmem:[%s1632 + $0x6c] sm:$0xf]
      %v1652 = vld [vmem:[%s1632 + $0x70] sm:$0xf]
      %v1653 = vld [vmem:[%s1632 + $0x78] sm:$0xf]
      %v1654 = vld [vmem:[%s1632 + $0x7c] sm:$0xf]
      %v1655 = vld [vmem:[%s1632 + $0x84] sm:$0xf]
      %v1656 = vld [vmem:[%s1632 + $0x88] sm:$0xf]
      %v1657 = vld [vmem:[%s1632 + $0x90] sm:$0xf]
      %v1658 = vld [vmem:[%s1632 + $0x94] sm:$0xf]
      %v1659 = vld [vmem:[%s1632 + $0x9c] sm:$0xf]
      %v1660 = vld [vmem:[%s1632 + $0xa0] sm:$0xf]
      %v1661 = vld [vmem:[%s1632 + $0xa8] sm:$0xf]
      %v1662 = vld [vmem:[%s1632 + $0xac] sm:$0xf]
      %v1663 = vld [vmem:[%s1632 + $0xb4] sm:$0xf]
      %v1664 = vld [vmem:[%s1632 + $0xb8] sm:$0xf]
      %s1665 = scalar_lea.vmem %s1, 6
      %v1666 = vld [vmem:[%s1665] sm:$0x3]
      %v1699 = vunpack.c.l.b16 %v1633
      %v1700 = vunpack.c.l.b16 %v1634
      %v1701 = vunpack.c.l.b16 %v1635
      %v1702 = vunpack.c.l.b16 %v1636
      %v1703 = vunpack.c.l.b16 %v1637
      %v1704 = vunpack.c.l.b16 %v1638
      %v1705 = vunpack.c.l.b16 %v1639
      %v1706 = vunpack.c.l.b16 %v1640
      %v1707 = vunpack.c.l.b16 %v1641
      %v1708 = vunpack.c.l.b16 %v1642
      %v1709 = vunpack.c.l.b16 %v1643
      %v1710 = vunpack.c.l.b16 %v1644
      %v1711 = vunpack.c.l.b16 %v1645
      %v1712 = vunpack.c.l.b16 %v1646
      %v1713 = vunpack.c.l.b16 %v1647
      %v1714 = vunpack.c.l.b16 %v1648
      %v1715 = vunpack.c.l.b16 %v1649
      %v1716 = vunpack.c.l.b16 %v1650
      %v1717 = vunpack.c.l.b16 %v1651
      %v1718 = vunpack.c.l.b16 %v1652
      %v1719 = vunpack.c.l.b16 %v1653
      %v1720 = vunpack.c.l.b16 %v1654
      %v1721 = vunpack.c.l.b16 %v1655
      %v1722 = vunpack.c.l.b16 %v1656
      %v1723 = vunpack.c.l.b16 %v1657
      %v1724 = vunpack.c.l.b16 %v1658
      %v1725 = vunpack.c.l.b16 %v1659
      %v1726 = vunpack.c.l.b16 %v1660
      %v1727 = vunpack.c.l.b16 %v1661
      %v1728 = vunpack.c.l.b16 %v1662
      %v1729 = vunpack.c.l.b16 %v1663
      %v1730 = vunpack.c.l.b16 %v1664
      %v1731 = vpack.c.b16 %v1700, %v1699
      %v1732 = vpack.c.b16 %v1702, %v1701
      %v1733 = vpack.c.b16 %v1704, %v1703
      %v1734 = vpack.c.b16 %v1706, %v1705
      %v1735 = vpack.c.b16 %v1708, %v1707
      %v1736 = vpack.c.b16 %v1710, %v1709
      %v1737 = vpack.c.b16 %v1712, %v1711
      %v1738 = vpack.c.b16 %v1714, %v1713
      %v1739 = vpack.c.b16 %v1716, %v1715
      %v1740 = vpack.c.b16 %v1718, %v1717
      %v1741 = vpack.c.b16 %v1720, %v1719
      %v1742 = vpack.c.b16 %v1722, %v1721
      %v1743 = vpack.c.b16 %v1724, %v1723
      %v1744 = vpack.c.b16 %v1726, %v1725
      %v1745 = vpack.c.b16 %v1728, %v1727
      %v1746 = vpack.c.b16 %v1730, %v1729
      %v1748 = vsel %vm669, %v1731, 0
      %v1751 = vsel %vm669, %v1732, 0
      %v1754 = vsel %vm669, %v1733, 0
      %v1757 = vsel %vm669, %v1734, 0
      %v1760 = vsel %vm669, %v1735, 0
      %v1763 = vsel %vm669, %v1736, 0
      %v1766 = vsel %vm669, %v1737, 0
      %v1769 = vsel %vm669, %v1738, 0
      %v1772 = vsel %vm669, %v1739, 0
      %v1775 = vsel %vm669, %v1740, 0
      %v1778 = vsel %vm669, %v1741, 0
      %v1781 = vsel %vm669, %v1742, 0
      %v1784 = vsel %vm669, %v1743, 0
      %v1787 = vsel %vm669, %v1744, 0
      %v1790 = vsel %vm669, %v1745, 0
      %v1793 = vsel %vm669, %v1746, 0
      %v1796 = vsel %vm718, %v1666, 0
      %1798 = vmatprep.subr.bf16.mxu0 0
      %1799 = vmatpush1.bf16.msra.mxu0 %v1796
      %1800 = vmatprep.subr.bf16.mxu0 0
      %1801 = vmatpush1.bf16.msra.mxu0 0
      %1802 = vmatprep.subr.bf16.mxu0 0
      %1803 = vmatpush1.bf16.msra.mxu0 0
      %1804 = vmatprep.subr.bf16.mxu0 0
      %1805 = vmatpush1.bf16.msra.mxu0 0
      %1806 = vmatprep.subr.bf16.mxu0 0
      %1807 = vmatpush1.bf16.msra.mxu0 0
      %1808 = vmatprep.subr.bf16.mxu0 0
      %1809 = vmatpush1.bf16.msra.mxu0 0
      %1810 = vmatprep.subr.bf16.mxu0 0
      %1811 = vmatpush1.bf16.msra.mxu0 0
      %1812 = vmatprep.subr.bf16.mxu0 0
      %1813 = vmatpush1.bf16.msra.mxu0 0
      %1814 = vmatprep.subr.bf16.mxu0 0
      %1815 = vmatpush1.bf16.msra.mxu0 0
      %1816 = vmatprep.subr.bf16.mxu0 0
      %1817 = vmatpush1.bf16.msra.mxu0 0
      %1818 = vmatprep.subr.bf16.mxu0 0
      %1819 = vmatpush1.bf16.msra.mxu0 0
      %1820 = vmatprep.subr.bf16.mxu0 0
      %1821 = vmatpush1.bf16.msra.mxu0 0
      %1822 = vmatprep.subr.bf16.mxu0 0
      %1823 = vmatpush1.bf16.msra.mxu0 0
      %1824 = vmatprep.subr.bf16.mxu0 0
      %1825 = vmatpush1.bf16.msra.mxu0 0
      %1826 = vmatprep.subr.bf16.mxu0 0
      %1827 = vmatpush1.bf16.msra.mxu0 0
      %1828 = vmatprep.subr.bf16.mxu0 0
      %1829 = vmatpush1.bf16.msra.mxu0 0
      %1830 = vmatprep.mubr.bf16.mxu0 0
      %1831 = vmatmul.mubr.bf16.gmra.mrb[0].mxu0 %v1748
      %v1832 = vpop.f32.mrb[0].mxu0
      %v1833 = vadd.f32 0.0, %v1832
      %v1834 = vpop.f32.mrb[0].mxu0
      %v1835 = vpop.f32.mrb[0].mxu0
      %v1836 = vadd.f32 0.0, %v1835
      %v1837 = vpop.f32.mrb[0].mxu0
      %1838 = vmatprep.mubr.bf16.mxu0 0
      %1839 = vmatmul.mubr.bf16.gmra.mrb[0].mxu0 %v1751
      %v1840 = vpop.f32.mrb[0].mxu0
      %v1841 = vadd.f32 0.0, %v1840
      %v1842 = vpop.f32.mrb[0].mxu0
      %v1843 = vpop.f32.mrb[0].mxu0
      %v1844 = vadd.f32 0.0, %v1843
      %v1845 = vpop.f32.mrb[0].mxu0
      %1846 = vmatprep.mubr.bf16.mxu0 0
      %1847 = vmatmul.mubr.bf16.gmra.mrb[0].mxu0 %v1754
      %v1848 = vpop.f32.mrb[0].mxu0
      %v1849 = vadd.f32 0.0, %v1848
      %v1850 = vpop.f32.mrb[0].mxu0
      %v1851 = vpop.f32.mrb[0].mxu0
      %v1852 = vadd.f32 0.0, %v1851
      %v1853 = vpop.f32.mrb[0].mxu0
      %1854 = vmatprep.mubr.bf16.mxu0 0
      %1855 = vmatmul.mubr.bf16.gmra.mrb[0].mxu0 %v1757
      %v1856 = vpop.f32.mrb[0].mxu0
      %v1857 = vadd.f32 0.0, %v1856
      %v1858 = vpop.f32.mrb[0].mxu0
      %v1859 = vpop.f32.mrb[0].mxu0
      %v1860 = vadd.f32 0.0, %v1859
      %v1861 = vpop.f32.mrb[0].mxu0
      %1862 = vmatprep.mubr.bf16.mxu0 0
      %1863 = vmatmul.mubr.bf16.gmra.mrb[0].mxu0 %v1760
      %v1864 = vpop.f32.mrb[0].mxu0
      %v1865 = vadd.f32 0.0, %v1864
      %v1866 = vpop.f32.mrb[0].mxu0
      %v1867 = vpop.f32.mrb[0].mxu0
      %v1868 = vadd.f32 0.0, %v1867
      %v1869 = vpop.f32.mrb[0].mxu0
      %1870 = vmatprep.mubr.bf16.mxu0 0
      %1871 = vmatmul.mubr.bf16.gmra.mrb[0].mxu0 %v1763
      %v1872 = vpop.f32.mrb[0].mxu0
      %v1873 = vadd.f32 0.0, %v1872
      %v1874 = vpop.f32.mrb[0].mxu0
      %v1875 = vpop.f32.mrb[0].mxu0
      %v1876 = vadd.f32 0.0, %v1875
      %v1877 = vpop.f32.mrb[0].mxu0
      %1878 = vmatprep.mubr.bf16.mxu0 0
      %1879 = vmatmul.mubr.bf16.gmra.mrb[0].mxu0 %v1766
      %v1880 = vpop.f32.mrb[0].mxu0
      %v1881 = vadd.f32 0.0, %v1880
      %v1882 = vpop.f32.mrb[0].mxu0
      %v1883 = vpop.f32.mrb[0].mxu0
      %v1884 = vadd.f32 0.0, %v1883
      %v1885 = vpop.f32.mrb[0].mxu0
      %1886 = vmatprep.mubr.bf16.mxu0 0
      %1887 = vmatmul.mubr.bf16.gmra.mrb[0].mxu0 %v1769
      %v1888 = vpop.f32.mrb[0].mxu0
      %v1889 = vadd.f32 0.0, %v1888
      %v1890 = vpop.f32.mrb[0].mxu0
      %v1891 = vpop.f32.mrb[0].mxu0
      %v1892 = vadd.f32 0.0, %v1891
      %v1893 = vpop.f32.mrb[0].mxu0
      %1894 = vmatprep.mubr.bf16.mxu0 0
      %1895 = vmatmul.mubr.bf16.gmra.mrb[0].mxu0 %v1772
      %v1896 = vpop.f32.mrb[0].mxu0
      %v1897 = vadd.f32 0.0, %v1896
      %v1898 = vpop.f32.mrb[0].mxu0
      %v1899 = vpop.f32.mrb[0].mxu0
      %v1900 = vadd.f32 0.0, %v1899
      %v1901 = vpop.f32.mrb[0].mxu0
      %1902 = vmatprep.mubr.bf16.mxu0 0
      %1903 = vmatmul.mubr.bf16.gmra.mrb[0].mxu0 %v1775
      %v1904 = vpop.f32.mrb[0].mxu0
      %v1905 = vadd.f32 0.0, %v1904
      %v1906 = vpop.f32.mrb[0].mxu0
      %v1907 = vpop.f32.mrb[0].mxu0
      %v1908 = vadd.f32 0.0, %v1907
      %v1909 = vpop.f32.mrb[0].mxu0
      %1910 = vmatprep.mubr.bf16.mxu0 0
      %1911 = vmatmul.mubr.bf16.gmra.mrb[0].mxu0 %v1778
      %v1912 = vpop.f32.mrb[0].mxu0
      %v1913 = vadd.f32 0.0, %v1912
      %v1914 = vpop.f32.mrb[0].mxu0
      %v1915 = vpop.f32.mrb[0].mxu0
      %v1916 = vadd.f32 0.0, %v1915
      %v1917 = vpop.f32.mrb[0].mxu0
      %1918 = vmatprep.mubr.bf16.mxu0 0
      %1919 = vmatmul.mubr.bf16.gmra.mrb[0].mxu0 %v1781
      %v1920 = vpop.f32.mrb[0].mxu0
      %v1921 = vadd.f32 0.0, %v1920
      %v1922 = vpop.f32.mrb[0].mxu0
      %v1923 = vpop.f32.mrb[0].mxu0
      %v1924 = vadd.f32 0.0, %v1923
      %v1925 = vpop.f32.mrb[0].mxu0
      %1926 = vmatprep.mubr.bf16.mxu0 0
      %1927 = vmatmul.mubr.bf16.gmra.mrb[0].mxu0 %v1784
      %v1928 = vpop.f32.mrb[0].mxu0
      %v1929 = vadd.f32 0.0, %v1928
      %v1930 = vpop.f32.mrb[0].mxu0
      %v1931 = vpop.f32.mrb[0].mxu0
      %v1932 = vadd.f32 0.0, %v1931
      %v1933 = vpop.f32.mrb[0].mxu0
      %1934 = vmatprep.mubr.bf16.mxu0 0
      %1935 = vmatmul.mubr.bf16.gmra.mrb[0].mxu0 %v1787
      %v1936 = vpop.f32.mrb[0].mxu0
      %v1937 = vadd.f32 0.0, %v1936
      %v1938 = vpop.f32.mrb[0].mxu0
      %v1939 = vpop.f32.mrb[0].mxu0
      %v1940 = vadd.f32 0.0, %v1939
      %v1941 = vpop.f32.mrb[0].mxu0
      %1942 = vmatprep.mubr.bf16.mxu0 0
      %1943 = vmatmul.mubr.bf16.gmra.mrb[0].mxu0 %v1790
      %v1944 = vpop.f32.mrb[0].mxu0
      %v1945 = vadd.f32 0.0, %v1944
      %v1946 = vpop.f32.mrb[0].mxu0
      %v1947 = vpop.f32.mrb[0].mxu0
      %v1948 = vadd.f32 0.0, %v1947
      %v1949 = vpop.f32.mrb[0].mxu0
      %1950 = vmatprep.mubr.bf16.mxu0 0
      %1951 = vmatmul.mubr.bf16.gmra.mrb[0].mxu0 %v1793
      %v1952 = vpop.f32.mrb[0].mxu0
      %v1953 = vadd.f32 0.0, %v1952
      %v1954 = vpop.f32.mrb[0].mxu0
      %v1955 = vpop.f32.mrb[0].mxu0
      %v1956 = vadd.f32 0.0, %v1955
      %v1957 = vpop.f32.mrb[0].mxu0
      %1958 = vdwg.mxu0
      %v1959 = vadd.f32 %v1600, %v1833
      %v1960 = vadd.f32 %v1601, %v1836
      %v1961 = vadd.f32 %v1602, %v1841
      %v1962 = vadd.f32 %v1603, %v1844
      %v1963 = vadd.f32 %v1604, %v1849
      %v1964 = vadd.f32 %v1605, %v1852
      %v1965 = vadd.f32 %v1606, %v1857
      %v1966 = vadd.f32 %v1607, %v1860
      %v1967 = vadd.f32 %v1608, %v1865
      %v1968 = vadd.f32 %v1609, %v1868
      %v1969 = vadd.f32 %v1610, %v1873
      %v1970 = vadd.f32 %v1611, %v1876
      %v1971 = vadd.f32 %v1612, %v1881
      %v1972 = vadd.f32 %v1613, %v1884
      %v1973 = vadd.f32 %v1614, %v1889
      %v1974 = vadd.f32 %v1615, %v1892
      %v1975 = vadd.f32 %v1616, %v1897
      %v1976 = vadd.f32 %v1617, %v1900
      %v1977 = vadd.f32 %v1618, %v1905
      %v1978 = vadd.f32 %v1619, %v1908
      %v1979 = vadd.f32 %v1620, %v1913
      %v1980 = vadd.f32 %v1621, %v1916
      %v1981 = vadd.f32 %v1622, %v1921
      %v1982 = vadd.f32 %v1623, %v1924
      %v1983 = vadd.f32 %v1624, %v1929
      %v1984 = vadd.f32 %v1625, %v1932
      %v1985 = vadd.f32 %v1626, %v1937
      %v1986 = vadd.f32 %v1627, %v1940
      %v1987 = vadd.f32 %v1628, %v1945
      %v1988 = vadd.f32 %v1629, %v1948
      %v1989 = vadd.f32 %v1630, %v1953
      %v1990 = vadd.f32 %v1631, %v1956
      %v1991 = vld [vmem:[%s1632] sm:$0xf]
      %v1992 = vld [vmem:[%s1632 + $0x4] sm:$0xf]
      %v1993 = vld [vmem:[%s1632 + $0x8] sm:$0x1]
      %v1994 = vld [vmem:[%s1632 + $0xc] sm:$0xf]
      %v1995 = vld [vmem:[%s1632 + $0x10] sm:$0xf]
      %v1996 = vld [vmem:[%s1632 + $0x14] sm:$0x1]
      %v1997 = vld [vmem:[%s1632 + $0x18] sm:$0xf]
      %v1998 = vld [vmem:[%s1632 + $0x1c] sm:$0xf]
      %v1999 = vld [vmem:[%s1632 + $0x20] sm:$0x1]
      %v2000 = vld [vmem:[%s1632 + $0x24] sm:$0xf]
      %v2001 = vld [vmem:[%s1632 + $0x28] sm:$0xf]
      %v2002 = vld [vmem:[%s1632 + $0x2c] sm:$0x1]
      %v2003 = vld [vmem:[%s1632 + $0x30] sm:$0xf]
      %v2004 = vld [vmem:[%s1632 + $0x34] sm:$0xf]
      %v2005 = vld [vmem:[%s1632 + $0x38] sm:$0x1]
      %v2006 = vld [vmem:[%s1632 + $0x3c] sm:$0xf]
      %v2007 = vld [vmem:[%s1632 + $0x40] sm:$0xf]
      %v2008 = vld [vmem:[%s1632 + $0x44] sm:$0x1]
      %v2009 = vld [vmem:[%s1632 + $0x48] sm:$0xf]
      %v2010 = vld [vmem:[%s1632 + $0x4c] sm:$0xf]
      %v2011 = vld [vmem:[%s1632 + $0x50] sm:$0x1]
      %v2012 = vld [vmem:[%s1632 + $0x54] sm:$0xf]
      %v2013 = vld [vmem:[%s1632 + $0x58] sm:$0xf]
      %v2014 = vld [vmem:[%s1632 + $0x5c] sm:$0x1]
      %v2015 = vld [vmem:[%s1632 + $0x60] sm:$0xf]
      %v2016 = vld [vmem:[%s1632 + $0x64] sm:$0xf]
      %v2017 = vld [vmem:[%s1632 + $0x68] sm:$0x1]
      %v2018 = vld [vmem:[%s1632 + $0x6c] sm:$0xf]
      %v2019 = vld [vmem:[%s1632 + $0x70] sm:$0xf]
      %v2020 = vld [vmem:[%s1632 + $0x74] sm:$0x1]
      %v2021 = vld [vmem:[%s1632 + $0x78] sm:$0xf]
      %v2022 = vld [vmem:[%s1632 + $0x7c] sm:$0xf]
      %v2023 = vld [vmem:[%s1632 + $0x80] sm:$0x1]
      %v2024 = vld [vmem:[%s1632 + $0x84] sm:$0xf]
      %v2025 = vld [vmem:[%s1632 + $0x88] sm:$0xf]
      %v2026 = vld [vmem:[%s1632 + $0x8c] sm:$0x1]
      %v2027 = vld [vmem:[%s1632 + $0x90] sm:$0xf]
      %v2028 = vld [vmem:[%s1632 + $0x94] sm:$0xf]
      %v2029 = vld [vmem:[%s1632 + $0x98] sm:$0x1]
      %v2030 = vld [vmem:[%s1632 + $0x9c] sm:$0xf]
      %v2031 = vld [vmem:[%s1632 + $0xa0] sm:$0xf]
      %v2032 = vld [vmem:[%s1632 + $0xa4] sm:$0x1]
      %v2033 = vld [vmem:[%s1632 + $0xa8] sm:$0xf]
      %v2034 = vld [vmem:[%s1632 + $0xac] sm:$0xf]
      %v2035 = vld [vmem:[%s1632 + $0xb0] sm:$0x1]
      %v2036 = vld [vmem:[%s1632 + $0xb4] sm:$0xf]
      %v2037 = vld [vmem:[%s1632 + $0xb8] sm:$0xf]
      %v2038 = vld [vmem:[%s1632 + $0xbc] sm:$0x1]
      %v2040 = vshrl.u32 %v1991, 16
      %v2042 = vrot.slane %v2040, 4
      %v2043 = vshll.u32 %v1991, 16
      %v2045 = vrot.slane %v2043, 5
      %v2046 = vor.u32 %v2042, %v2045
      %v2047 = vrot.slane %v2046, 4
      %v2049 = vshll.u32 %v1992, 16
      %v2051 = vrot.slane %v2049, 5
      %v2052 = vsel %vm234, %v2047, %v2051
      %v2053 = vshrl.u32 %v1992, 16
      %v2055 = vrot.slane %v2053, 4
      %v2056 = vor.u32 %v2055, %v2051
      %v2057 = vrot.slane %v2056, 4
      %v2059 = vshll.u32 %v1993, 16
      %v2061 = vrot.slane %v2059, 5
      %v2062 = vsel %vm234, %v2057, %v2061
      %v2064 = vshrl.u32 %v1994, 16
      %v2066 = vrot.slane %v2064, 4
      %v2067 = vshll.u32 %v1994, 16
      %v2069 = vrot.slane %v2067, 5
      %v2070 = vor.u32 %v2066, %v2069
      %v2071 = vrot.slane %v2070, 4
      %v2073 = vshll.u32 %v1995, 16
      %v2075 = vrot.slane %v2073, 5
      %v2076 = vsel %vm234, %v2071, %v2075
      %v2077 = vshrl.u32 %v1995, 16
      %v2079 = vrot.slane %v2077, 4
      %v2080 = vor.u32 %v2079, %v2075
      %v2081 = vrot.slane %v2080, 4
      %v2083 = vshll.u32 %v1996, 16
      %v2085 = vrot.slane %v2083, 5
      %v2086 = vsel %vm234, %v2081, %v2085
      %v2088 = vshrl.u32 %v1997, 16
      %v2090 = vrot.slane %v2088, 4
      %v2091 = vshll.u32 %v1997, 16
      %v2093 = vrot.slane %v2091, 5
      %v2094 = vor.u32 %v2090, %v2093
      %v2095 = vrot.slane %v2094, 4
      %v2097 = vshll.u32 %v1998, 16
      %v2099 = vrot.slane %v2097, 5
      %v2100 = vsel %vm234, %v2095, %v2099
      %v2101 = vshrl.u32 %v1998, 16
      %v2103 = vrot.slane %v2101, 4
      %v2104 = vor.u32 %v2103, %v2099
      %v2105 = vrot.slane %v2104, 4
      %v2107 = vshll.u32 %v1999, 16
      %v2109 = vrot.slane %v2107, 5
      %v2110 = vsel %vm234, %v2105, %v2109
      %v2112 = vshrl.u32 %v2000, 16
      %v2114 = vrot.slane %v2112, 4
      %v2115 = vshll.u32 %v2000, 16
      %v2117 = vrot.slane %v2115, 5
      %v2118 = vor.u32 %v2114, %v2117
      %v2119 = vrot.slane %v2118, 4
      %v2121 = vshll.u32 %v2001, 16
      %v2123 = vrot.slane %v2121, 5
      %v2124 = vsel %vm234, %v2119, %v2123
      %v2125 = vshrl.u32 %v2001, 16
      %v2127 = vrot.slane %v2125, 4
      %v2128 = vor.u32 %v2127, %v2123
      %v2129 = vrot.slane %v2128, 4
      %v2131 = vshll.u32 %v2002, 16
      %v2133 = vrot.slane %v2131, 5
      %v2134 = vsel %vm234, %v2129, %v2133
      %v2136 = vshrl.u32 %v2003, 16
      %v2138 = vrot.slane %v2136, 4
      %v2139 = vshll.u32 %v2003, 16
      %v2141 = vrot.slane %v2139, 5
      %v2142 = vor.u32 %v2138, %v2141
      %v2143 = vrot.slane %v2142, 4
      %v2145 = vshll.u32 %v2004, 16
      %v2147 = vrot.slane %v2145, 5
      %v2148 = vsel %vm234, %v2143, %v2147
      %v2149 = vshrl.u32 %v2004, 16
      %v2151 = vrot.slane %v2149, 4
      %v2152 = vor.u32 %v2151, %v2147
      %v2153 = vrot.slane %v2152, 4
      %v2155 = vshll.u32 %v2005, 16
      %v2157 = vrot.slane %v2155, 5
      %v2158 = vsel %vm234, %v2153, %v2157
      %v2160 = vshrl.u32 %v2006, 16
      %v2162 = vrot.slane %v2160, 4
      %v2163 = vshll.u32 %v2006, 16
      %v2165 = vrot.slane %v2163, 5
      %v2166 = vor.u32 %v2162, %v2165
      %v2167 = vrot.slane %v2166, 4
      %v2169 = vshll.u32 %v2007, 16
      %v2171 = vrot.slane %v2169, 5
      %v2172 = vsel %vm234, %v2167, %v2171
      %v2173 = vshrl.u32 %v2007, 16
      %v2175 = vrot.slane %v2173, 4
      %v2176 = vor.u32 %v2175, %v2171
      %v2177 = vrot.slane %v2176, 4
      %v2179 = vshll.u32 %v2008, 16
      %v2181 = vrot.slane %v2179, 5
      %v2182 = vsel %vm234, %v2177, %v2181
      %v2184 = vshrl.u32 %v2009, 16
      %v2186 = vrot.slane %v2184, 4
      %v2187 = vshll.u32 %v2009, 16
      %v2189 = vrot.slane %v2187, 5
      %v2190 = vor.u32 %v2186, %v2189
      %v2191 = vrot.slane %v2190, 4
      %v2193 = vshll.u32 %v2010, 16
      %v2195 = vrot.slane %v2193, 5
      %v2196 = vsel %vm234, %v2191, %v2195
      %v2197 = vshrl.u32 %v2010, 16
      %v2199 = vrot.slane %v2197, 4
      %v2200 = vor.u32 %v2199, %v2195
      %v2201 = vrot.slane %v2200, 4
      %v2203 = vshll.u32 %v2011, 16
      %v2205 = vrot.slane %v2203, 5
      %v2206 = vsel %vm234, %v2201, %v2205
      %v2208 = vshrl.u32 %v2012, 16
      %v2210 = vrot.slane %v2208, 4
      %v2211 = vshll.u32 %v2012, 16
      %v2213 = vrot.slane %v2211, 5
      %v2214 = vor.u32 %v2210, %v2213
      %v2215 = vrot.slane %v2214, 4
      %v2217 = vshll.u32 %v2013, 16
      %v2219 = vrot.slane %v2217, 5
      %v2220 = vsel %vm234, %v2215, %v2219
      %v2221 = vshrl.u32 %v2013, 16
      %v2223 = vrot.slane %v2221, 4
      %v2224 = vor.u32 %v2223, %v2219
      %v2225 = vrot.slane %v2224, 4
      %v2227 = vshll.u32 %v2014, 16
      %v2229 = vrot.slane %v2227, 5
      %v2230 = vsel %vm234, %v2225, %v2229
      %v2232 = vshrl.u32 %v2015, 16
      %v2234 = vrot.slane %v2232, 4
      %v2235 = vshll.u32 %v2015, 16
      %v2237 = vrot.slane %v2235, 5
      %v2238 = vor.u32 %v2234, %v2237
      %v2239 = vrot.slane %v2238, 4
      %v2241 = vshll.u32 %v2016, 16
      %v2243 = vrot.slane %v2241, 5
      %v2244 = vsel %vm234, %v2239, %v2243
      %v2245 = vshrl.u32 %v2016, 16
      %v2247 = vrot.slane %v2245, 4
      %v2248 = vor.u32 %v2247, %v2243
      %v2249 = vrot.slane %v2248, 4
      %v2251 = vshll.u32 %v2017, 16
      %v2253 = vrot.slane %v2251, 5
      %v2254 = vsel %vm234, %v2249, %v2253
      %v2256 = vshrl.u32 %v2018, 16
      %v2258 = vrot.slane %v2256, 4
      %v2259 = vshll.u32 %v2018, 16
      %v2261 = vrot.slane %v2259, 5
      %v2262 = vor.u32 %v2258, %v2261
      %v2263 = vrot.slane %v2262, 4
      %v2265 = vshll.u32 %v2019, 16
      %v2267 = vrot.slane %v2265, 5
      %v2268 = vsel %vm234, %v2263, %v2267
      %v2269 = vshrl.u32 %v2019, 16
      %v2271 = vrot.slane %v2269, 4
      %v2272 = vor.u32 %v2271, %v2267
      %v2273 = vrot.slane %v2272, 4
      %v2275 = vshll.u32 %v2020, 16
      %v2277 = vrot.slane %v2275, 5
      %v2278 = vsel %vm234, %v2273, %v2277
      %v2280 = vshrl.u32 %v2021, 16
      %v2282 = vrot.slane %v2280, 4
      %v2283 = vshll.u32 %v2021, 16
      %v2285 = vrot.slane %v2283, 5
      %v2286 = vor.u32 %v2282, %v2285
      %v2287 = vrot.slane %v2286, 4
      %v2289 = vshll.u32 %v2022, 16
      %v2291 = vrot.slane %v2289, 5
      %v2292 = vsel %vm234, %v2287, %v2291
      %v2293 = vshrl.u32 %v2022, 16
      %v2295 = vrot.slane %v2293, 4
      %v2296 = vor.u32 %v2295, %v2291
      %v2297 = vrot.slane %v2296, 4
      %v2299 = vshll.u32 %v2023, 16
      %v2301 = vrot.slane %v2299, 5
      %v2302 = vsel %vm234, %v2297, %v2301
      %v2304 = vshrl.u32 %v2024, 16
      %v2306 = vrot.slane %v2304, 4
      %v2307 = vshll.u32 %v2024, 16
      %v2309 = vrot.slane %v2307, 5
      %v2310 = vor.u32 %v2306, %v2309
      %v2311 = vrot.slane %v2310, 4
      %v2313 = vshll.u32 %v2025, 16
      %v2315 = vrot.slane %v2313, 5
      %v2316 = vsel %vm234, %v2311, %v2315
      %v2317 = vshrl.u32 %v2025, 16
      %v2319 = vrot.slane %v2317, 4
      %v2320 = vor.u32 %v2319, %v2315
      %v2321 = vrot.slane %v2320, 4
      %v2323 = vshll.u32 %v2026, 16
      %v2325 = vrot.slane %v2323, 5
      %v2326 = vsel %vm234, %v2321, %v2325
      %v2328 = vshrl.u32 %v2027, 16
      %v2330 = vrot.slane %v2328, 4
      %v2331 = vshll.u32 %v2027, 16
      %v2333 = vrot.slane %v2331, 5
      %v2334 = vor.u32 %v2330, %v2333
      %v2335 = vrot.slane %v2334, 4
      %v2337 = vshll.u32 %v2028, 16
      %v2339 = vrot.slane %v2337, 5
      %v2340 = vsel %vm234, %v2335, %v2339
      %v2341 = vshrl.u32 %v2028, 16
      %v2343 = vrot.slane %v2341, 4
      %v2344 = vor.u32 %v2343, %v2339
      %v2345 = vrot.slane %v2344, 4
      %v2347 = vshll.u32 %v2029, 16
      %v2349 = vrot.slane %v2347, 5
      %v2350 = vsel %vm234, %v2345, %v2349
      %v2352 = vshrl.u32 %v2030, 16
      %v2354 = vrot.slane %v2352, 4
      %v2355 = vshll.u32 %v2030, 16
      %v2357 = vrot.slane %v2355, 5
      %v2358 = vor.u32 %v2354, %v2357
      %v2359 = vrot.slane %v2358, 4
      %v2361 = vshll.u32 %v2031, 16
      %v2363 = vrot.slane %v2361, 5
      %v2364 = vsel %vm234, %v2359, %v2363
      %v2365 = vshrl.u32 %v2031, 16
      %v2367 = vrot.slane %v2365, 4
      %v2368 = vor.u32 %v2367, %v2363
      %v2369 = vrot.slane %v2368, 4
      %v2371 = vshll.u32 %v2032, 16
      %v2373 = vrot.slane %v2371, 5
      %v2374 = vsel %vm234, %v2369, %v2373
      %v2376 = vshrl.u32 %v2033, 16
      %v2378 = vrot.slane %v2376, 4
      %v2379 = vshll.u32 %v2033, 16
      %v2381 = vrot.slane %v2379, 5
      %v2382 = vor.u32 %v2378, %v2381
      %v2383 = vrot.slane %v2382, 4
      %v2385 = vshll.u32 %v2034, 16
      %v2387 = vrot.slane %v2385, 5
      %v2388 = vsel %vm234, %v2383, %v2387
      %v2389 = vshrl.u32 %v2034, 16
      %v2391 = vrot.slane %v2389, 4
      %v2392 = vor.u32 %v2391, %v2387
      %v2393 = vrot.slane %v2392, 4
      %v2395 = vshll.u32 %v2035, 16
      %v2397 = vrot.slane %v2395, 5
      %v2398 = vsel %vm234, %v2393, %v2397
      %v2400 = vshrl.u32 %v2036, 16
      %v2402 = vrot.slane %v2400, 4
      %v2403 = vshll.u32 %v2036, 16
      %v2405 = vrot.slane %v2403, 5
      %v2406 = vor.u32 %v2402, %v2405
      %v2407 = vrot.slane %v2406, 4
      %v2409 = vshll.u32 %v2037, 16
      %v2411 = vrot.slane %v2409, 5
      %v2412 = vsel %vm234, %v2407, %v2411
      %v2413 = vshrl.u32 %v2037, 16
      %v2415 = vrot.slane %v2413, 4
      %v2416 = vor.u32 %v2415, %v2411
      %v2417 = vrot.slane %v2416, 4
      %v2419 = vshll.u32 %v2038, 16
      %v2421 = vrot.slane %v2419, 5
      %v2422 = vsel %vm234, %v2417, %v2421
      %s2423 = scalar_lea.vmem %s1, 8
      %v2424 = vld [vmem:[%s2423] sm:$0x3]
      %v2425 = vunpack.c.l.b16 %v2052
      %v2426 = vunpack.c.l.b16 %v2062
      %v2427 = vunpack.c.l.b16 %v2076
      %v2428 = vunpack.c.l.b16 %v2086
      %v2429 = vunpack.c.l.b16 %v2100
      %v2430 = vunpack.c.l.b16 %v2110
      %v2431 = vunpack.c.l.b16 %v2124
      %v2432 = vunpack.c.l.b16 %v2134
      %v2433 = vunpack.c.l.b16 %v2148
      %v2434 = vunpack.c.l.b16 %v2158
      %v2435 = vunpack.c.l.b16 %v2172
      %v2436 = vunpack.c.l.b16 %v2182
      %v2437 = vunpack.c.l.b16 %v2196
      %v2438 = vunpack.c.l.b16 %v2206
      %v2439 = vunpack.c.l.b16 %v2220
      %v2440 = vunpack.c.l.b16 %v2230
      %v2441 = vunpack.c.l.b16 %v2244
      %v2442 = vunpack.c.l.b16 %v2254
      %v2443 = vunpack.c.l.b16 %v2268
      %v2444 = vunpack.c.l.b16 %v2278
      %v2445 = vunpack.c.l.b16 %v2292
      %v2446 = vunpack.c.l.b16 %v2302
      %v2447 = vunpack.c.l.b16 %v2316
      %v2448 = vunpack.c.l.b16 %v2326
      %v2449 = vunpack.c.l.b16 %v2340
      %v2450 = vunpack.c.l.b16 %v2350
      %v2451 = vunpack.c.l.b16 %v2364
      %v2452 = vunpack.c.l.b16 %v2374
      %v2453 = vunpack.c.l.b16 %v2388
      %v2454 = vunpack.c.l.b16 %v2398
      %v2455 = vunpack.c.l.b16 %v2412
      %v2456 = vunpack.c.l.b16 %v2422
      %v2457 = vpack.c.b16 %v2426, %v2425
      %v2458 = vpack.c.b16 %v2428, %v2427
      %v2459 = vpack.c.b16 %v2430, %v2429
      %v2460 = vpack.c.b16 %v2432, %v2431
      %v2461 = vpack.c.b16 %v2434, %v2433
      %v2462 = vpack.c.b16 %v2436, %v2435
      %v2463 = vpack.c.b16 %v2438, %v2437
      %v2464 = vpack.c.b16 %v2440, %v2439
      %v2465 = vpack.c.b16 %v2442, %v2441
      %v2466 = vpack.c.b16 %v2444, %v2443
      %v2467 = vpack.c.b16 %v2446, %v2445
      %v2468 = vpack.c.b16 %v2448, %v2447
      %v2469 = vpack.c.b16 %v2450, %v2449
      %v2470 = vpack.c.b16 %v2452, %v2451
      %v2471 = vpack.c.b16 %v2454, %v2453
      %v2472 = vpack.c.b16 %v2456, %v2455
      %v2474 = vsel %vm669, %v2457, 0
      %v2477 = vsel %vm669, %v2458, 0
      %v2480 = vsel %vm669, %v2459, 0
      %v2483 = vsel %vm669, %v2460, 0
      %v2486 = vsel %vm669, %v2461, 0
      %v2489 = vsel %vm669, %v2462, 0
      %v2492 = vsel %vm669, %v2463, 0
      %v2495 = vsel %vm669, %v2464, 0
      %v2498 = vsel %vm669, %v2465, 0
      %v2501 = vsel %vm669, %v2466, 0
      %v2504 = vsel %vm669, %v2467, 0
      %v2507 = vsel %vm669, %v2468, 0
      %v2510 = vsel %vm669, %v2469, 0
      %v2513 = vsel %vm669, %v2470, 0
      %v2516 = vsel %vm669, %v2471, 0
      %v2519 = vsel %vm669, %v2472, 0
      %v2522 = vsel %vm718, %v2424, 0
      %2524 = vmatprep.subr.bf16.mxu0 0
      %2525 = vmatpush1.bf16.msra.mxu0 %v2522
      %2526 = vmatprep.subr.bf16.mxu0 0
      %2527 = vmatpush1.bf16.msra.mxu0 0
      %2528 = vmatprep.subr.bf16.mxu0 0
      %2529 = vmatpush1.bf16.msra.mxu0 0
      %2530 = vmatprep.subr.bf16.mxu0 0
      %2531 = vmatpush1.bf16.msra.mxu0 0
      %2532 = vmatprep.subr.bf16.mxu0 0
      %2533 = vmatpush1.bf16.msra.mxu0 0
      %2534 = vmatprep.subr.bf16.mxu0 0
      %2535 = vmatpush1.bf16.msra.mxu0 0
      %2536 = vmatprep.subr.bf16.mxu0 0
      %2537 = vmatpush1.bf16.msra.mxu0 0
      %2538 = vmatprep.subr.bf16.mxu0 0
      %2539 = vmatpush1.bf16.msra.mxu0 0
      %2540 = vmatprep.subr.bf16.mxu0 0
      %2541 = vmatpush1.bf16.msra.mxu0 0
      %2542 = vmatprep.subr.bf16.mxu0 0
      %2543 = vmatpush1.bf16.msra.mxu0 0
      %2544 = vmatprep.subr.bf16.mxu0 0
      %2545 = vmatpush1.bf16.msra.mxu0 0
      %2546 = vmatprep.subr.bf16.mxu0 0
      %2547 = vmatpush1.bf16.msra.mxu0 0
      %2548 = vmatprep.subr.bf16.mxu0 0
      %2549 = vmatpush1.bf16.msra.mxu0 0
      %2550 = vmatprep.subr.bf16.mxu0 0
      %2551 = vmatpush1.bf16.msra.mxu0 0
      %2552 = vmatprep.subr.bf16.mxu0 0
      %2553 = vmatpush1.bf16.msra.mxu0 0
      %2554 = vmatprep.subr.bf16.mxu0 0
      %2555 = vmatpush1.bf16.msra.mxu0 0
      %2556 = vmatprep.mubr.bf16.mxu0 0
      %2557 = vmatmul.mubr.bf16.gmra.mrb[0].mxu0 %v2474
      %v2558 = vpop.f32.mrb[0].mxu0
      %v2559 = vadd.f32 0.0, %v2558
      %v2560 = vpop.f32.mrb[0].mxu0
      %v2561 = vpop.f32.mrb[0].mxu0
      %v2562 = vadd.f32 0.0, %v2561
      %v2563 = vpop.f32.mrb[0].mxu0
      %2564 = vmatprep.mubr.bf16.mxu0 0
      %2565 = vmatmul.mubr.bf16.gmra.mrb[0].mxu0 %v2477
      %v2566 = vpop.f32.mrb[0].mxu0
      %v2567 = vadd.f32 0.0, %v2566
      %v2568 = vpop.f32.mrb[0].mxu0
      %v2569 = vpop.f32.mrb[0].mxu0
      %v2570 = vadd.f32 0.0, %v2569
      %v2571 = vpop.f32.mrb[0].mxu0
      %2572 = vmatprep.mubr.bf16.mxu0 0
      %2573 = vmatmul.mubr.bf16.gmra.mrb[0].mxu0 %v2480
      %v2574 = vpop.f32.mrb[0].mxu0
      %v2575 = vadd.f32 0.0, %v2574
      %v2576 = vpop.f32.mrb[0].mxu0
      %v2577 = vpop.f32.mrb[0].mxu0
      %v2578 = vadd.f32 0.0, %v2577
      %v2579 = vpop.f32.mrb[0].mxu0
      %2580 = vmatprep.mubr.bf16.mxu0 0
      %2581 = vmatmul.mubr.bf16.gmra.mrb[0].mxu0 %v2483
      %v2582 = vpop.f32.mrb[0].mxu0
      %v2583 = vadd.f32 0.0, %v2582
      %v2584 = vpop.f32.mrb[0].mxu0
      %v2585 = vpop.f32.mrb[0].mxu0
      %v2586 = vadd.f32 0.0, %v2585
      %v2587 = vpop.f32.mrb[0].mxu0
      %2588 = vmatprep.mubr.bf16.mxu0 0
      %2589 = vmatmul.mubr.bf16.gmra.mrb[0].mxu0 %v2486
      %v2590 = vpop.f32.mrb[0].mxu0
      %v2591 = vadd.f32 0.0, %v2590
      %v2592 = vpop.f32.mrb[0].mxu0
      %v2593 = vpop.f32.mrb[0].mxu0
      %v2594 = vadd.f32 0.0, %v2593
      %v2595 = vpop.f32.mrb[0].mxu0
      %2596 = vmatprep.mubr.bf16.mxu0 0
      %2597 = vmatmul.mubr.bf16.gmra.mrb[0].mxu0 %v2489
      %v2598 = vpop.f32.mrb[0].mxu0
      %v2599 = vadd.f32 0.0, %v2598
      %v2600 = vpop.f32.mrb[0].mxu0
      %v2601 = vpop.f32.mrb[0].mxu0
      %v2602 = vadd.f32 0.0, %v2601
      %v2603 = vpop.f32.mrb[0].mxu0
      %2604 = vmatprep.mubr.bf16.mxu0 0
      %2605 = vmatmul.mubr.bf16.gmra.mrb[0].mxu0 %v2492
      %v2606 = vpop.f32.mrb[0].mxu0
      %v2607 = vadd.f32 0.0, %v2606
      %v2608 = vpop.f32.mrb[0].mxu0
      %v2609 = vpop.f32.mrb[0].mxu0
      %v2610 = vadd.f32 0.0, %v2609
      %v2611 = vpop.f32.mrb[0].mxu0
      %2612 = vmatprep.mubr.bf16.mxu0 0
      %2613 = vmatmul.mubr.bf16.gmra.mrb[0].mxu0 %v2495
      %v2614 = vpop.f32.mrb[0].mxu0
      %v2615 = vadd.f32 0.0, %v2614
      %v2616 = vpop.f32.mrb[0].mxu0
      %v2617 = vpop.f32.mrb[0].mxu0
      %v2618 = vadd.f32 0.0, %v2617
      %v2619 = vpop.f32.mrb[0].mxu0
      %2620 = vmatprep.mubr.bf16.mxu0 0
      %2621 = vmatmul.mubr.bf16.gmra.mrb[0].mxu0 %v2498
      %v2622 = vpop.f32.mrb[0].mxu0
      %v2623 = vadd.f32 0.0, %v2622
      %v2624 = vpop.f32.mrb[0].mxu0
      %v2625 = vpop.f32.mrb[0].mxu0
      %v2626 = vadd.f32 0.0, %v2625
      %v2627 = vpop.f32.mrb[0].mxu0
      %2628 = vmatprep.mubr.bf16.mxu0 0
      %2629 = vmatmul.mubr.bf16.gmra.mrb[0].mxu0 %v2501
      %v2630 = vpop.f32.mrb[0].mxu0
      %v2631 = vadd.f32 0.0, %v2630
      %v2632 = vpop.f32.mrb[0].mxu0
      %v2633 = vpop.f32.mrb[0].mxu0
      %v2634 = vadd.f32 0.0, %v2633
      %v2635 = vpop.f32.mrb[0].mxu0
      %2636 = vmatprep.mubr.bf16.mxu0 0
      %2637 = vmatmul.mubr.bf16.gmra.mrb[0].mxu0 %v2504
      %v2638 = vpop.f32.mrb[0].mxu0
      %v2639 = vadd.f32 0.0, %v2638
      %v2640 = vpop.f32.mrb[0].mxu0
      %v2641 = vpop.f32.mrb[0].mxu0
      %v2642 = vadd.f32 0.0, %v2641
      %v2643 = vpop.f32.mrb[0].mxu0
      %2644 = vmatprep.mubr.bf16.mxu0 0
      %2645 = vmatmul.mubr.bf16.gmra.mrb[0].mxu0 %v2507
      %v2646 = vpop.f32.mrb[0].mxu0
      %v2647 = vadd.f32 0.0, %v2646
      %v2648 = vpop.f32.mrb[0].mxu0
      %v2649 = vpop.f32.mrb[0].mxu0
      %v2650 = vadd.f32 0.0, %v2649
      %v2651 = vpop.f32.mrb[0].mxu0
      %2652 = vmatprep.mubr.bf16.mxu0 0
      %2653 = vmatmul.mubr.bf16.gmra.mrb[0].mxu0 %v2510
      %v2654 = vpop.f32.mrb[0].mxu0
      %v2655 = vadd.f32 0.0, %v2654
      %v2656 = vpop.f32.mrb[0].mxu0
      %v2657 = vpop.f32.mrb[0].mxu0
      %v2658 = vadd.f32 0.0, %v2657
      %v2659 = vpop.f32.mrb[0].mxu0
      %2660 = vmatprep.mubr.bf16.mxu0 0
      %2661 = vmatmul.mubr.bf16.gmra.mrb[0].mxu0 %v2513
      %v2662 = vpop.f32.mrb[0].mxu0
      %v2663 = vadd.f32 0.0, %v2662
      %v2664 = vpop.f32.mrb[0].mxu0
      %v2665 = vpop.f32.mrb[0].mxu0
      %v2666 = vadd.f32 0.0, %v2665
      %v2667 = vpop.f32.mrb[0].mxu0
      %2668 = vmatprep.mubr.bf16.mxu0 0
      %2669 = vmatmul.mubr.bf16.gmra.mrb[0].mxu0 %v2516
      %v2670 = vpop.f32.mrb[0].mxu0
      %v2671 = vadd.f32 0.0, %v2670
      %v2672 = vpop.f32.mrb[0].mxu0
      %v2673 = vpop.f32.mrb[0].mxu0
      %v2674 = vadd.f32 0.0, %v2673
      %v2675 = vpop.f32.mrb[0].mxu0
      %2676 = vmatprep.mubr.bf16.mxu0 0
      %2677 = vmatmul.mubr.bf16.gmra.mrb[0].mxu0 %v2519
      %v2678 = vpop.f32.mrb[0].mxu0
      %v2679 = vadd.f32 0.0, %v2678
      %v2680 = vpop.f32.mrb[0].mxu0
      %v2681 = vpop.f32.mrb[0].mxu0
      %v2682 = vadd.f32 0.0, %v2681
      %v2683 = vpop.f32.mrb[0].mxu0
      %2684 = vdwg.mxu0
      %v2685 = vadd.f32 %v1959, %v2559
      %v2686 = vadd.f32 %v1960, %v2562
      %v2687 = vadd.f32 %v1961, %v2567
      %v2688 = vadd.f32 %v1962, %v2570
      %v2689 = vadd.f32 %v1963, %v2575
      %v2690 = vadd.f32 %v1964, %v2578
      %v2691 = vadd.f32 %v1965, %v2583
      %v2692 = vadd.f32 %v1966, %v2586
      %v2693 = vadd.f32 %v1967, %v2591
      %v2694 = vadd.f32 %v1968, %v2594
      %v2695 = vadd.f32 %v1969, %v2599
      %v2696 = vadd.f32 %v1970, %v2602
      %v2697 = vadd.f32 %v1971, %v2607
      %v2698 = vadd.f32 %v1972, %v2610
      %v2699 = vadd.f32 %v1973, %v2615
      %v2700 = vadd.f32 %v1974, %v2618
      %v2701 = vadd.f32 %v1975, %v2623
      %v2702 = vadd.f32 %v1976, %v2626
      %v2703 = vadd.f32 %v1977, %v2631
      %v2704 = vadd.f32 %v1978, %v2634
      %v2705 = vadd.f32 %v1979, %v2639
      %v2706 = vadd.f32 %v1980, %v2642
      %v2707 = vadd.f32 %v1981, %v2647
      %v2708 = vadd.f32 %v1982, %v2650
      %v2709 = vadd.f32 %v1983, %v2655
      %v2710 = vadd.f32 %v1984, %v2658
      %v2711 = vadd.f32 %v1985, %v2663
      %v2712 = vadd.f32 %v1986, %v2666
      %v2713 = vadd.f32 %v1987, %v2671
      %v2714 = vadd.f32 %v1988, %v2674
      %v2715 = vadd.f32 %v1989, %v2679
      %v2716 = vadd.f32 %v1990, %v2682
      %v2717 = vld [vmem:[%s1632] sm:$0xe]
      %v2718 = vld [vmem:[%s1632 + $0xc] sm:$0xe]
      %v2719 = vld [vmem:[%s1632 + $0x18] sm:$0xe]
      %v2720 = vld [vmem:[%s1632 + $0x24] sm:$0xe]
      %v2721 = vld [vmem:[%s1632 + $0x30] sm:$0xe]
      %v2722 = vld [vmem:[%s1632 + $0x3c] sm:$0xe]
      %v2723 = vld [vmem:[%s1632 + $0x48] sm:$0xe]
      %v2724 = vld [vmem:[%s1632 + $0x54] sm:$0xe]
      %v2725 = vld [vmem:[%s1632 + $0x60] sm:$0xe]
      %v2726 = vld [vmem:[%s1632 + $0x6c] sm:$0xe]
      %v2727 = vld [vmem:[%s1632 + $0x78] sm:$0xe]
      %v2728 = vld [vmem:[%s1632 + $0x84] sm:$0xe]
      %v2729 = vld [vmem:[%s1632 + $0x90] sm:$0xe]
      %v2730 = vld [vmem:[%s1632 + $0x9c] sm:$0xe]
      %v2731 = vld [vmem:[%s1632 + $0xa8] sm:$0xe]
      %v2732 = vld [vmem:[%s1632 + $0xb4] sm:$0xe]
      %v2781 = vrot.slane %v2717, 5
      %v2782 = vrot.slane %v2781, 4
      %v2783 = vrot.slane %v1992, 5
      %v2784 = vsel %vm1225, %v2782, %v2783
      %v2785 = vrot.slane %v2783, 4
      %v2786 = vrot.slane %v1993, 5
      %v2787 = vsel %vm1225, %v2785, %v2786
      %v2788 = vrot.slane %v2718, 5
      %v2789 = vrot.slane %v2788, 4
      %v2790 = vrot.slane %v1995, 5
      %v2791 = vsel %vm1225, %v2789, %v2790
      %v2792 = vrot.slane %v2790, 4
      %v2793 = vrot.slane %v1996, 5
      %v2794 = vsel %vm1225, %v2792, %v2793
      %v2795 = vrot.slane %v2719, 5
      %v2796 = vrot.slane %v2795, 4
      %v2797 = vrot.slane %v1998, 5
      %v2798 = vsel %vm1225, %v2796, %v2797
      %v2799 = vrot.slane %v2797, 4
      %v2800 = vrot.slane %v1999, 5
      %v2801 = vsel %vm1225, %v2799, %v2800
      %v2802 = vrot.slane %v2720, 5
      %v2803 = vrot.slane %v2802, 4
      %v2804 = vrot.slane %v2001, 5
      %v2805 = vsel %vm1225, %v2803, %v2804
      %v2806 = vrot.slane %v2804, 4
      %v2807 = vrot.slane %v2002, 5
      %v2808 = vsel %vm1225, %v2806, %v2807
      %v2809 = vrot.slane %v2721, 5
      %v2810 = vrot.slane %v2809, 4
      %v2811 = vrot.slane %v2004, 5
      %v2812 = vsel %vm1225, %v2810, %v2811
      %v2813 = vrot.slane %v2811, 4
      %v2814 = vrot.slane %v2005, 5
      %v2815 = vsel %vm1225, %v2813, %v2814
      %v2816 = vrot.slane %v2722, 5
      %v2817 = vrot.slane %v2816, 4
      %v2818 = vrot.slane %v2007, 5
      %v2819 = vsel %vm1225, %v2817, %v2818
      %v2820 = vrot.slane %v2818, 4
      %v2821 = vrot.slane %v2008, 5
      %v2822 = vsel %vm1225, %v2820, %v2821
      %v2823 = vrot.slane %v2723, 5
      %v2824 = vrot.slane %v2823, 4
      %v2825 = vrot.slane %v2010, 5
      %v2826 = vsel %vm1225, %v2824, %v2825
      %v2827 = vrot.slane %v2825, 4
      %v2828 = vrot.slane %v2011, 5
      %v2829 = vsel %vm1225, %v2827, %v2828
      %v2830 = vrot.slane %v2724, 5
      %v2831 = vrot.slane %v2830, 4
      %v2832 = vrot.slane %v2013, 5
      %v2833 = vsel %vm1225, %v2831, %v2832
      %v2834 = vrot.slane %v2832, 4
      %v2835 = vrot.slane %v2014, 5
      %v2836 = vsel %vm1225, %v2834, %v2835
      %v2837 = vrot.slane %v2725, 5
      %v2838 = vrot.slane %v2837, 4
      %v2839 = vrot.slane %v2016, 5
      %v2840 = vsel %vm1225, %v2838, %v2839
      %v2841 = vrot.slane %v2839, 4
      %v2842 = vrot.slane %v2017, 5
      %v2843 = vsel %vm1225, %v2841, %v2842
      %v2844 = vrot.slane %v2726, 5
      %v2845 = vrot.slane %v2844, 4
      %v2846 = vrot.slane %v2019, 5
      %v2847 = vsel %vm1225, %v2845, %v2846
      %v2848 = vrot.slane %v2846, 4
      %v2849 = vrot.slane %v2020, 5
      %v2850 = vsel %vm1225, %v2848, %v2849
      %v2851 = vrot.slane %v2727, 5
      %v2852 = vrot.slane %v2851, 4
      %v2853 = vrot.slane %v2022, 5
      %v2854 = vsel %vm1225, %v2852, %v2853
      %v2855 = vrot.slane %v2853, 4
      %v2856 = vrot.slane %v2023, 5
      %v2857 = vsel %vm1225, %v2855, %v2856
      %v2858 = vrot.slane %v2728, 5
      %v2859 = vrot.slane %v2858, 4
      %v2860 = vrot.slane %v2025, 5
      %v2861 = vsel %vm1225, %v2859, %v2860
      %v2862 = vrot.slane %v2860, 4
      %v2863 = vrot.slane %v2026, 5
      %v2864 = vsel %vm1225, %v2862, %v2863
      %v2865 = vrot.slane %v2729, 5
      %v2866 = vrot.slane %v2865, 4
      %v2867 = vrot.slane %v2028, 5
      %v2868 = vsel %vm1225, %v2866, %v2867
      %v2869 = vrot.slane %v2867, 4
      %v2870 = vrot.slane %v2029, 5
      %v2871 = vsel %vm1225, %v2869, %v2870
      %v2872 = vrot.slane %v2730, 5
      %v2873 = vrot.slane %v2872, 4
      %v2874 = vrot.slane %v2031, 5
      %v2875 = vsel %vm1225, %v2873, %v2874
      %v2876 = vrot.slane %v2874, 4
      %v2877 = vrot.slane %v2032, 5
      %v2878 = vsel %vm1225, %v2876, %v2877
      %v2879 = vrot.slane %v2731, 5
      %v2880 = vrot.slane %v2879, 4
      %v2881 = vrot.slane %v2034, 5
      %v2882 = vsel %vm1225, %v2880, %v2881
      %v2883 = vrot.slane %v2881, 4
      %v2884 = vrot.slane %v2035, 5
      %v2885 = vsel %vm1225, %v2883, %v2884
      %v2886 = vrot.slane %v2732, 5
      %v2887 = vrot.slane %v2886, 4
      %v2888 = vrot.slane %v2037, 5
      %v2889 = vsel %vm1225, %v2887, %v2888
      %v2890 = vrot.slane %v2888, 4
      %v2891 = vrot.slane %v2038, 5
      %v2892 = vsel %vm1225, %v2890, %v2891
      %s2893 = scalar_lea.vmem %s1, 10
      %v2894 = vld [vmem:[%s2893] sm:$0x3]
      %v2895 = vunpack.c.l.b16 %v2784
      %v2896 = vunpack.c.l.b16 %v2787
      %v2897 = vunpack.c.l.b16 %v2791
      %v2898 = vunpack.c.l.b16 %v2794
      %v2899 = vunpack.c.l.b16 %v2798
      %v2900 = vunpack.c.l.b16 %v2801
      %v2901 = vunpack.c.l.b16 %v2805
      %v2902 = vunpack.c.l.b16 %v2808
      %v2903 = vunpack.c.l.b16 %v2812
      %v2904 = vunpack.c.l.b16 %v2815
      %v2905 = vunpack.c.l.b16 %v2819
      %v2906 = vunpack.c.l.b16 %v2822
      %v2907 = vunpack.c.l.b16 %v2826
      %v2908 = vunpack.c.l.b16 %v2829
      %v2909 = vunpack.c.l.b16 %v2833
      %v2910 = vunpack.c.l.b16 %v2836
      %v2911 = vunpack.c.l.b16 %v2840
      %v2912 = vunpack.c.l.b16 %v2843
      %v2913 = vunpack.c.l.b16 %v2847
      %v2914 = vunpack.c.l.b16 %v2850
      %v2915 = vunpack.c.l.b16 %v2854
      %v2916 = vunpack.c.l.b16 %v2857
      %v2917 = vunpack.c.l.b16 %v2861
      %v2918 = vunpack.c.l.b16 %v2864
      %v2919 = vunpack.c.l.b16 %v2868
      %v2920 = vunpack.c.l.b16 %v2871
      %v2921 = vunpack.c.l.b16 %v2875
      %v2922 = vunpack.c.l.b16 %v2878
      %v2923 = vunpack.c.l.b16 %v2882
      %v2924 = vunpack.c.l.b16 %v2885
      %v2925 = vunpack.c.l.b16 %v2889
      %v2926 = vunpack.c.l.b16 %v2892
      %v2927 = vpack.c.b16 %v2896, %v2895
      %v2928 = vpack.c.b16 %v2898, %v2897
      %v2929 = vpack.c.b16 %v2900, %v2899
      %v2930 = vpack.c.b16 %v2902, %v2901
      %v2931 = vpack.c.b16 %v2904, %v2903
      %v2932 = vpack.c.b16 %v2906, %v2905
      %v2933 = vpack.c.b16 %v2908, %v2907
      %v2934 = vpack.c.b16 %v2910, %v2909
      %v2935 = vpack.c.b16 %v2912, %v2911
      %v2936 = vpack.c.b16 %v2914, %v2913
      %v2937 = vpack.c.b16 %v2916, %v2915
      %v2938 = vpack.c.b16 %v2918, %v2917
      %v2939 = vpack.c.b16 %v2920, %v2919
      %v2940 = vpack.c.b16 %v2922, %v2921
      %v2941 = vpack.c.b16 %v2924, %v2923
      %v2942 = vpack.c.b16 %v2926, %v2925
      %v2944 = vsel %vm669, %v2927, 0
      %v2947 = vsel %vm669, %v2928, 0
      %v2950 = vsel %vm669, %v2929, 0
      %v2953 = vsel %vm669, %v2930, 0
      %v2956 = vsel %vm669, %v2931, 0
      %v2959 = vsel %vm669, %v2932, 0
      %v2962 = vsel %vm669, %v2933, 0
      %v2965 = vsel %vm669, %v2934, 0
      %v2968 = vsel %vm669, %v2935, 0
      %v2971 = vsel %vm669, %v2936, 0
      %v2974 = vsel %vm669, %v2937, 0
      %v2977 = vsel %vm669, %v2938, 0
      %v2980 = vsel %vm669, %v2939, 0
      %v2983 = vsel %vm669, %v2940, 0
      %v2986 = vsel %vm669, %v2941, 0
      %v2989 = vsel %vm669, %v2942, 0
      %v2992 = vsel %vm718, %v2894, 0
      %2994 = vmatprep.subr.bf16.mxu0 0
      %2995 = vmatpush1.bf16.msra.mxu0 %v2992
      %2996 = vmatprep.subr.bf16.mxu0 0
      %2997 = vmatpush1.bf16.msra.mxu0 0
      %2998 = vmatprep.subr.bf16.mxu0 0
      %2999 = vmatpush1.bf16.msra.mxu0 0
      %3000 = vmatprep.subr.bf16.mxu0 0
      %3001 = vmatpush1.bf16.msra.mxu0 0
      %3002 = vmatprep.subr.bf16.mxu0 0
      %3003 = vmatpush1.bf16.msra.mxu0 0
      %3004 = vmatprep.subr.bf16.mxu0 0
      %3005 = vmatpush1.bf16.msra.mxu0 0
      %3006 = vmatprep.subr.bf16.mxu0 0
      %3007 = vmatpush1.bf16.msra.mxu0 0
      %3008 = vmatprep.subr.bf16.mxu0 0
      %3009 = vmatpush1.bf16.msra.mxu0 0
      %3010 = vmatprep.subr.bf16.mxu0 0
      %3011 = vmatpush1.bf16.msra.mxu0 0
      %3012 = vmatprep.subr.bf16.mxu0 0
      %3013 = vmatpush1.bf16.msra.mxu0 0
      %3014 = vmatprep.subr.bf16.mxu0 0
      %3015 = vmatpush1.bf16.msra.mxu0 0
      %3016 = vmatprep.subr.bf16.mxu0 0
      %3017 = vmatpush1.bf16.msra.mxu0 0
      %3018 = vmatprep.subr.bf16.mxu0 0
      %3019 = vmatpush1.bf16.msra.mxu0 0
      %3020 = vmatprep.subr.bf16.mxu0 0
      %3021 = vmatpush1.bf16.msra.mxu0 0
      %3022 = vmatprep.subr.bf16.mxu0 0
      %3023 = vmatpush1.bf16.msra.mxu0 0
      %3024 = vmatprep.subr.bf16.mxu0 0
      %3025 = vmatpush1.bf16.msra.mxu0 0
      %3026 = vmatprep.mubr.bf16.mxu0 0
      %3027 = vmatmul.mubr.bf16.gmra.mrb[0].mxu0 %v2944
      %v3028 = vpop.f32.mrb[0].mxu0
      %v3029 = vadd.f32 0.0, %v3028
      %v3030 = vpop.f32.mrb[0].mxu0
      %v3031 = vpop.f32.mrb[0].mxu0
      %v3032 = vadd.f32 0.0, %v3031
      %v3033 = vpop.f32.mrb[0].mxu0
      %3034 = vmatprep.mubr.bf16.mxu0 0
      %3035 = vmatmul.mubr.bf16.gmra.mrb[0].mxu0 %v2947
      %v3036 = vpop.f32.mrb[0].mxu0
      %v3037 = vadd.f32 0.0, %v3036
      %v3038 = vpop.f32.mrb[0].mxu0
      %v3039 = vpop.f32.mrb[0].mxu0
      %v3040 = vadd.f32 0.0, %v3039
      %v3041 = vpop.f32.mrb[0].mxu0
      %3042 = vmatprep.mubr.bf16.mxu0 0
      %3043 = vmatmul.mubr.bf16.gmra.mrb[0].mxu0 %v2950
      %v3044 = vpop.f32.mrb[0].mxu0
      %v3045 = vadd.f32 0.0, %v3044
      %v3046 = vpop.f32.mrb[0].mxu0
      %v3047 = vpop.f32.mrb[0].mxu0
      %v3048 = vadd.f32 0.0, %v3047
      %v3049 = vpop.f32.mrb[0].mxu0
      %3050 = vmatprep.mubr.bf16.mxu0 0
      %3051 = vmatmul.mubr.bf16.gmra.mrb[0].mxu0 %v2953
      %v3052 = vpop.f32.mrb[0].mxu0
      %v3053 = vadd.f32 0.0, %v3052
      %v3054 = vpop.f32.mrb[0].mxu0
      %v3055 = vpop.f32.mrb[0].mxu0
      %v3056 = vadd.f32 0.0, %v3055
      %v3057 = vpop.f32.mrb[0].mxu0
      %3058 = vmatprep.mubr.bf16.mxu0 0
      %3059 = vmatmul.mubr.bf16.gmra.mrb[0].mxu0 %v2956
      %v3060 = vpop.f32.mrb[0].mxu0
      %v3061 = vadd.f32 0.0, %v3060
      %v3062 = vpop.f32.mrb[0].mxu0
      %v3063 = vpop.f32.mrb[0].mxu0
      %v3064 = vadd.f32 0.0, %v3063
      %v3065 = vpop.f32.mrb[0].mxu0
      %3066 = vmatprep.mubr.bf16.mxu0 0
      %3067 = vmatmul.mubr.bf16.gmra.mrb[0].mxu0 %v2959
      %v3068 = vpop.f32.mrb[0].mxu0
      %v3069 = vadd.f32 0.0, %v3068
      %v3070 = vpop.f32.mrb[0].mxu0
      %v3071 = vpop.f32.mrb[0].mxu0
      %v3072 = vadd.f32 0.0, %v3071
      %v3073 = vpop.f32.mrb[0].mxu0
      %3074 = vmatprep.mubr.bf16.mxu0 0
      %3075 = vmatmul.mubr.bf16.gmra.mrb[0].mxu0 %v2962
      %v3076 = vpop.f32.mrb[0].mxu0
      %v3077 = vadd.f32 0.0, %v3076
      %v3078 = vpop.f32.mrb[0].mxu0
      %v3079 = vpop.f32.mrb[0].mxu0
      %v3080 = vadd.f32 0.0, %v3079
      %v3081 = vpop.f32.mrb[0].mxu0
      %3082 = vmatprep.mubr.bf16.mxu0 0
      %3083 = vmatmul.mubr.bf16.gmra.mrb[0].mxu0 %v2965
      %v3084 = vpop.f32.mrb[0].mxu0
      %v3085 = vadd.f32 0.0, %v3084
      %v3086 = vpop.f32.mrb[0].mxu0
      %v3087 = vpop.f32.mrb[0].mxu0
      %v3088 = vadd.f32 0.0, %v3087
      %v3089 = vpop.f32.mrb[0].mxu0
      %3090 = vmatprep.mubr.bf16.mxu0 0
      %3091 = vmatmul.mubr.bf16.gmra.mrb[0].mxu0 %v2968
      %v3092 = vpop.f32.mrb[0].mxu0
      %v3093 = vadd.f32 0.0, %v3092
      %v3094 = vpop.f32.mrb[0].mxu0
      %v3095 = vpop.f32.mrb[0].mxu0
      %v3096 = vadd.f32 0.0, %v3095
      %v3097 = vpop.f32.mrb[0].mxu0
      %3098 = vmatprep.mubr.bf16.mxu0 0
      %3099 = vmatmul.mubr.bf16.gmra.mrb[0].mxu0 %v2971
      %v3100 = vpop.f32.mrb[0].mxu0
      %v3101 = vadd.f32 0.0, %v3100
      %v3102 = vpop.f32.mrb[0].mxu0
      %v3103 = vpop.f32.mrb[0].mxu0
      %v3104 = vadd.f32 0.0, %v3103
      %v3105 = vpop.f32.mrb[0].mxu0
      %3106 = vmatprep.mubr.bf16.mxu0 0
      %3107 = vmatmul.mubr.bf16.gmra.mrb[0].mxu0 %v2974
      %v3108 = vpop.f32.mrb[0].mxu0
      %v3109 = vadd.f32 0.0, %v3108
      %v3110 = vpop.f32.mrb[0].mxu0
      %v3111 = vpop.f32.mrb[0].mxu0
      %v3112 = vadd.f32 0.0, %v3111
      %v3113 = vpop.f32.mrb[0].mxu0
      %3114 = vmatprep.mubr.bf16.mxu0 0
      %3115 = vmatmul.mubr.bf16.gmra.mrb[0].mxu0 %v2977
      %v3116 = vpop.f32.mrb[0].mxu0
      %v3117 = vadd.f32 0.0, %v3116
      %v3118 = vpop.f32.mrb[0].mxu0
      %v3119 = vpop.f32.mrb[0].mxu0
      %v3120 = vadd.f32 0.0, %v3119
      %v3121 = vpop.f32.mrb[0].mxu0
      %3122 = vmatprep.mubr.bf16.mxu0 0
      %3123 = vmatmul.mubr.bf16.gmra.mrb[0].mxu0 %v2980
      %v3124 = vpop.f32.mrb[0].mxu0
      %v3125 = vadd.f32 0.0, %v3124
      %v3126 = vpop.f32.mrb[0].mxu0
      %v3127 = vpop.f32.mrb[0].mxu0
      %v3128 = vadd.f32 0.0, %v3127
      %v3129 = vpop.f32.mrb[0].mxu0
      %3130 = vmatprep.mubr.bf16.mxu0 0
      %3131 = vmatmul.mubr.bf16.gmra.mrb[0].mxu0 %v2983
      %v3132 = vpop.f32.mrb[0].mxu0
      %v3133 = vadd.f32 0.0, %v3132
      %v3134 = vpop.f32.mrb[0].mxu0
      %v3135 = vpop.f32.mrb[0].mxu0
      %v3136 = vadd.f32 0.0, %v3135
      %v3137 = vpop.f32.mrb[0].mxu0
      %3138 = vmatprep.mubr.bf16.mxu0 0
      %3139 = vmatmul.mubr.bf16.gmra.mrb[0].mxu0 %v2986
      %v3140 = vpop.f32.mrb[0].mxu0
      %v3141 = vadd.f32 0.0, %v3140
      %v3142 = vpop.f32.mrb[0].mxu0
      %v3143 = vpop.f32.mrb[0].mxu0
      %v3144 = vadd.f32 0.0, %v3143
      %v3145 = vpop.f32.mrb[0].mxu0
      %3146 = vmatprep.mubr.bf16.mxu0 0
      %3147 = vmatmul.mubr.bf16.gmra.mrb[0].mxu0 %v2989
      %v3148 = vpop.f32.mrb[0].mxu0
      %v3149 = vadd.f32 0.0, %v3148
      %v3150 = vpop.f32.mrb[0].mxu0
      %v3151 = vpop.f32.mrb[0].mxu0
      %v3152 = vadd.f32 0.0, %v3151
      %v3153 = vpop.f32.mrb[0].mxu0
      %3154 = vdwg.mxu0
      %v3155 = vadd.f32 %v2685, %v3029
      %v3156 = vadd.f32 %v2686, %v3032
      %v3157 = vadd.f32 %v2687, %v3037
      %v3158 = vadd.f32 %v2688, %v3040
      %v3159 = vadd.f32 %v2689, %v3045
      %v3160 = vadd.f32 %v2690, %v3048
      %v3161 = vadd.f32 %v2691, %v3053
      %v3162 = vadd.f32 %v2692, %v3056
      %v3163 = vadd.f32 %v2693, %v3061
      %v3164 = vadd.f32 %v2694, %v3064
      %v3165 = vadd.f32 %v2695, %v3069
      %v3166 = vadd.f32 %v2696, %v3072
      %v3167 = vadd.f32 %v2697, %v3077
      %v3168 = vadd.f32 %v2698, %v3080
      %v3169 = vadd.f32 %v2699, %v3085
      %v3170 = vadd.f32 %v2700, %v3088
      %v3171 = vadd.f32 %v2701, %v3093
      %v3172 = vadd.f32 %v2702, %v3096
      %v3173 = vadd.f32 %v2703, %v3101
      %v3174 = vadd.f32 %v2704, %v3104
      %v3175 = vadd.f32 %v2705, %v3109
      %v3176 = vadd.f32 %v2706, %v3112
      %v3177 = vadd.f32 %v2707, %v3117
      %v3178 = vadd.f32 %v2708, %v3120
      %v3179 = vadd.f32 %v2709, %v3125
      %v3180 = vadd.f32 %v2710, %v3128
      %v3181 = vadd.f32 %v2711, %v3133
      %v3182 = vadd.f32 %v2712, %v3136
      %v3183 = vadd.f32 %v2713, %v3141
      %v3184 = vadd.f32 %v2714, %v3144
      %v3185 = vadd.f32 %v2715, %v3149
      %v3186 = vadd.f32 %v2716, %v3152
      %s3187 = scalar_lea.vmem %s172, 24
      %v3188 = vld [vmem:[%s3187] sm:$0xf]
      %v3189 = vld [vmem:[%s3187 + $0x4] sm:$0xf]
      %v3190 = vld [vmem:[%s3187 + $0xc] sm:$0xf]
      %v3191 = vld [vmem:[%s3187 + $0x10] sm:$0xf]
      %v3192 = vld [vmem:[%s3187 + $0x18] sm:$0xf]
      %v3193 = vld [vmem:[%s3187 + $0x1c] sm:$0xf]
      %v3194 = vld [vmem:[%s3187 + $0x24] sm:$0xf]
      %v3195 = vld [vmem:[%s3187 + $0x28] sm:$0xf]
      %v3196 = vld [vmem:[%s3187 + $0x30] sm:$0xf]
      %v3197 = vld [vmem:[%s3187 + $0x34] sm:$0xf]
      %v3198 = vld [vmem:[%s3187 + $0x3c] sm:$0xf]
      %v3199 = vld [vmem:[%s3187 + $0x40] sm:$0xf]
      %v3200 = vld [vmem:[%s3187 + $0x48] sm:$0xf]
      %v3201 = vld [vmem:[%s3187 + $0x4c] sm:$0xf]
      %v3202 = vld [vmem:[%s3187 + $0x54] sm:$0xf]
      %v3203 = vld [vmem:[%s3187 + $0x58] sm:$0xf]
      %v3204 = vld [vmem:[%s3187 + $0x60] sm:$0xf]
      %v3205 = vld [vmem:[%s3187 + $0x64] sm:$0xf]
      %v3206 = vld [vmem:[%s3187 + $0x6c] sm:$0xf]
      %v3207 = vld [vmem:[%s3187 + $0x70] sm:$0xf]
      %v3208 = vld [vmem:[%s3187 + $0x78] sm:$0xf]
      %v3209 = vld [vmem:[%s3187 + $0x7c] sm:$0xf]
      %v3210 = vld [vmem:[%s3187 + $0x84] sm:$0xf]
      %v3211 = vld [vmem:[%s3187 + $0x88] sm:$0xf]
      %v3212 = vld [vmem:[%s3187 + $0x90] sm:$0xf]
      %v3213 = vld [vmem:[%s3187 + $0x94] sm:$0xf]
      %v3214 = vld [vmem:[%s3187 + $0x9c] sm:$0xf]
      %v3215 = vld [vmem:[%s3187 + $0xa0] sm:$0xf]
      %v3216 = vld [vmem:[%s3187 + $0xa8] sm:$0xf]
      %v3217 = vld [vmem:[%s3187 + $0xac] sm:$0xf]
      %v3218 = vld [vmem:[%s3187 + $0xb4] sm:$0xf]
      %v3219 = vld [vmem:[%s3187 + $0xb8] sm:$0xf]
      %s3220 = scalar_lea.vmem %s1, 12
      %v3221 = vld [vmem:[%s3220] sm:$0x3]
      %v3254 = vunpack.c.l.b16 %v3188
      %v3255 = vunpack.c.l.b16 %v3189
      %v3256 = vunpack.c.l.b16 %v3190
      %v3257 = vunpack.c.l.b16 %v3191
      %v3258 = vunpack.c.l.b16 %v3192
      %v3259 = vunpack.c.l.b16 %v3193
      %v3260 = vunpack.c.l.b16 %v3194
      %v3261 = vunpack.c.l.b16 %v3195
      %v3262 = vunpack.c.l.b16 %v3196
      %v3263 = vunpack.c.l.b16 %v3197
      %v3264 = vunpack.c.l.b16 %v3198
      %v3265 = vunpack.c.l.b16 %v3199
      %v3266 = vunpack.c.l.b16 %v3200
      %v3267 = vunpack.c.l.b16 %v3201
      %v3268 = vunpack.c.l.b16 %v3202
      %v3269 = vunpack.c.l.b16 %v3203
      %v3270 = vunpack.c.l.b16 %v3204
      %v3271 = vunpack.c.l.b16 %v3205
      %v3272 = vunpack.c.l.b16 %v3206
      %v3273 = vunpack.c.l.b16 %v3207
      %v3274 = vunpack.c.l.b16 %v3208
      %v3275 = vunpack.c.l.b16 %v3209
      %v3276 = vunpack.c.l.b16 %v3210
      %v3277 = vunpack.c.l.b16 %v3211
      %v3278 = vunpack.c.l.b16 %v3212
      %v3279 = vunpack.c.l.b16 %v3213
      %v3280 = vunpack.c.l.b16 %v3214
      %v3281 = vunpack.c.l.b16 %v3215
      %v3282 = vunpack.c.l.b16 %v3216
      %v3283 = vunpack.c.l.b16 %v3217
      %v3284 = vunpack.c.l.b16 %v3218
      %v3285 = vunpack.c.l.b16 %v3219
      %v3286 = vpack.c.b16 %v3255, %v3254
      %v3287 = vpack.c.b16 %v3257, %v3256
      %v3288 = vpack.c.b16 %v3259, %v3258
      %v3289 = vpack.c.b16 %v3261, %v3260
      %v3290 = vpack.c.b16 %v3263, %v3262
      %v3291 = vpack.c.b16 %v3265, %v3264
      %v3292 = vpack.c.b16 %v3267, %v3266
      %v3293 = vpack.c.b16 %v3269, %v3268
      %v3294 = vpack.c.b16 %v3271, %v3270
      %v3295 = vpack.c.b16 %v3273, %v3272
      %v3296 = vpack.c.b16 %v3275, %v3274
      %v3297 = vpack.c.b16 %v3277, %v3276
      %v3298 = vpack.c.b16 %v3279, %v3278
      %v3299 = vpack.c.b16 %v3281, %v3280
      %v3300 = vpack.c.b16 %v3283, %v3282
      %v3301 = vpack.c.b16 %v3285, %v3284
      %v3303 = vsel %vm669, %v3286, 0
      %v3306 = vsel %vm669, %v3287, 0
      %v3309 = vsel %vm669, %v3288, 0
      %v3312 = vsel %vm669, %v3289, 0
      %v3315 = vsel %vm669, %v3290, 0
      %v3318 = vsel %vm669, %v3291, 0
      %v3321 = vsel %vm669, %v3292, 0
      %v3324 = vsel %vm669, %v3293, 0
      %v3327 = vsel %vm669, %v3294, 0
      %v3330 = vsel %vm669, %v3295, 0
      %v3333 = vsel %vm669, %v3296, 0
      %v3336 = vsel %vm669, %v3297, 0
      %v3339 = vsel %vm669, %v3298, 0
      %v3342 = vsel %vm669, %v3299, 0
      %v3345 = vsel %vm669, %v3300, 0
      %v3348 = vsel %vm669, %v3301, 0
      %v3351 = vsel %vm718, %v3221, 0
      %3353 = vmatprep.subr.bf16.mxu0 0
      %3354 = vmatpush1.bf16.msra.mxu0 %v3351
      %3355 = vmatprep.subr.bf16.mxu0 0
      %3356 = vmatpush1.bf16.msra.mxu0 0
      %3357 = vmatprep.subr.bf16.mxu0 0
      %3358 = vmatpush1.bf16.msra.mxu0 0
      %3359 = vmatprep.subr.bf16.mxu0 0
      %3360 = vmatpush1.bf16.msra.mxu0 0
      %3361 = vmatprep.subr.bf16.mxu0 0
      %3362 = vmatpush1.bf16.msra.mxu0 0
      %3363 = vmatprep.subr.bf16.mxu0 0
      %3364 = vmatpush1.bf16.msra.mxu0 0
      %3365 = vmatprep.subr.bf16.mxu0 0
      %3366 = vmatpush1.bf16.msra.mxu0 0
      %3367 = vmatprep.subr.bf16.mxu0 0
      %3368 = vmatpush1.bf16.msra.mxu0 0
      %3369 = vmatprep.subr.bf16.mxu0 0
      %3370 = vmatpush1.bf16.msra.mxu0 0
      %3371 = vmatprep.subr.bf16.mxu0 0
      %3372 = vmatpush1.bf16.msra.mxu0 0
      %3373 = vmatprep.subr.bf16.mxu0 0
      %3374 = vmatpush1.bf16.msra.mxu0 0
      %3375 = vmatprep.subr.bf16.mxu0 0
      %3376 = vmatpush1.bf16.msra.mxu0 0
      %3377 = vmatprep.subr.bf16.mxu0 0
      %3378 = vmatpush1.bf16.msra.mxu0 0
      %3379 = vmatprep.subr.bf16.mxu0 0
      %3380 = vmatpush1.bf16.msra.mxu0 0
      %3381 = vmatprep.subr.bf16.mxu0 0
      %3382 = vmatpush1.bf16.msra.mxu0 0
      %3383 = vmatprep.subr.bf16.mxu0 0
      %3384 = vmatpush1.bf16.msra.mxu0 0
      %3385 = vmatprep.mubr.bf16.mxu0 0
      %3386 = vmatmul.mubr.bf16.gmra.mrb[0].mxu0 %v3303
      %v3387 = vpop.f32.mrb[0].mxu0
      %v3388 = vadd.f32 0.0, %v3387
      %v3389 = vpop.f32.mrb[0].mxu0
      %v3390 = vpop.f32.mrb[0].mxu0
      %v3391 = vadd.f32 0.0, %v3390
      %v3392 = vpop.f32.mrb[0].mxu0
      %3393 = vmatprep.mubr.bf16.mxu0 0
      %3394 = vmatmul.mubr.bf16.gmra.mrb[0].mxu0 %v3306
      %v3395 = vpop.f32.mrb[0].mxu0
      %v3396 = vadd.f32 0.0, %v3395
      %v3397 = vpop.f32.mrb[0].mxu0
      %v3398 = vpop.f32.mrb[0].mxu0
      %v3399 = vadd.f32 0.0, %v3398
      %v3400 = vpop.f32.mrb[0].mxu0
      %3401 = vmatprep.mubr.bf16.mxu0 0
      %3402 = vmatmul.mubr.bf16.gmra.mrb[0].mxu0 %v3309
      %v3403 = vpop.f32.mrb[0].mxu0
      %v3404 = vadd.f32 0.0, %v3403
      %v3405 = vpop.f32.mrb[0].mxu0
      %v3406 = vpop.f32.mrb[0].mxu0
      %v3407 = vadd.f32 0.0, %v3406
      %v3408 = vpop.f32.mrb[0].mxu0
      %3409 = vmatprep.mubr.bf16.mxu0 0
      %3410 = vmatmul.mubr.bf16.gmra.mrb[0].mxu0 %v3312
      %v3411 = vpop.f32.mrb[0].mxu0
      %v3412 = vadd.f32 0.0, %v3411
      %v3413 = vpop.f32.mrb[0].mxu0
      %v3414 = vpop.f32.mrb[0].mxu0
      %v3415 = vadd.f32 0.0, %v3414
      %v3416 = vpop.f32.mrb[0].mxu0
      %3417 = vmatprep.mubr.bf16.mxu0 0
      %3418 = vmatmul.mubr.bf16.gmra.mrb[0].mxu0 %v3315
      %v3419 = vpop.f32.mrb[0].mxu0
      %v3420 = vadd.f32 0.0, %v3419
      %v3421 = vpop.f32.mrb[0].mxu0
      %v3422 = vpop.f32.mrb[0].mxu0
      %v3423 = vadd.f32 0.0, %v3422
      %v3424 = vpop.f32.mrb[0].mxu0
      %3425 = vmatprep.mubr.bf16.mxu0 0
      %3426 = vmatmul.mubr.bf16.gmra.mrb[0].mxu0 %v3318
      %v3427 = vpop.f32.mrb[0].mxu0
      %v3428 = vadd.f32 0.0, %v3427
      %v3429 = vpop.f32.mrb[0].mxu0
      %v3430 = vpop.f32.mrb[0].mxu0
      %v3431 = vadd.f32 0.0, %v3430
      %v3432 = vpop.f32.mrb[0].mxu0
      %3433 = vmatprep.mubr.bf16.mxu0 0
      %3434 = vmatmul.mubr.bf16.gmra.mrb[0].mxu0 %v3321
      %v3435 = vpop.f32.mrb[0].mxu0
      %v3436 = vadd.f32 0.0, %v3435
      %v3437 = vpop.f32.mrb[0].mxu0
      %v3438 = vpop.f32.mrb[0].mxu0
      %v3439 = vadd.f32 0.0, %v3438
      %v3440 = vpop.f32.mrb[0].mxu0
      %3441 = vmatprep.mubr.bf16.mxu0 0
      %3442 = vmatmul.mubr.bf16.gmra.mrb[0].mxu0 %v3324
      %v3443 = vpop.f32.mrb[0].mxu0
      %v3444 = vadd.f32 0.0, %v3443
      %v3445 = vpop.f32.mrb[0].mxu0
      %v3446 = vpop.f32.mrb[0].mxu0
      %v3447 = vadd.f32 0.0, %v3446
      %v3448 = vpop.f32.mrb[0].mxu0
      %3449 = vmatprep.mubr.bf16.mxu0 0
      %3450 = vmatmul.mubr.bf16.gmra.mrb[0].mxu0 %v3327
      %v3451 = vpop.f32.mrb[0].mxu0
      %v3452 = vadd.f32 0.0, %v3451
      %v3453 = vpop.f32.mrb[0].mxu0
      %v3454 = vpop.f32.mrb[0].mxu0
      %v3455 = vadd.f32 0.0, %v3454
      %v3456 = vpop.f32.mrb[0].mxu0
      %3457 = vmatprep.mubr.bf16.mxu0 0
      %3458 = vmatmul.mubr.bf16.gmra.mrb[0].mxu0 %v3330
      %v3459 = vpop.f32.mrb[0].mxu0
      %v3460 = vadd.f32 0.0, %v3459
      %v3461 = vpop.f32.mrb[0].mxu0
      %v3462 = vpop.f32.mrb[0].mxu0
      %v3463 = vadd.f32 0.0, %v3462
      %v3464 = vpop.f32.mrb[0].mxu0
      %3465 = vmatprep.mubr.bf16.mxu0 0
      %3466 = vmatmul.mubr.bf16.gmra.mrb[0].mxu0 %v3333
      %v3467 = vpop.f32.mrb[0].mxu0
      %v3468 = vadd.f32 0.0, %v3467
      %v3469 = vpop.f32.mrb[0].mxu0
      %v3470 = vpop.f32.mrb[0].mxu0
      %v3471 = vadd.f32 0.0, %v3470
      %v3472 = vpop.f32.mrb[0].mxu0
      %3473 = vmatprep.mubr.bf16.mxu0 0
      %3474 = vmatmul.mubr.bf16.gmra.mrb[0].mxu0 %v3336
      %v3475 = vpop.f32.mrb[0].mxu0
      %v3476 = vadd.f32 0.0, %v3475
      %v3477 = vpop.f32.mrb[0].mxu0
      %v3478 = vpop.f32.mrb[0].mxu0
      %v3479 = vadd.f32 0.0, %v3478
      %v3480 = vpop.f32.mrb[0].mxu0
      %3481 = vmatprep.mubr.bf16.mxu0 0
      %3482 = vmatmul.mubr.bf16.gmra.mrb[0].mxu0 %v3339
      %v3483 = vpop.f32.mrb[0].mxu0
      %v3484 = vadd.f32 0.0, %v3483
      %v3485 = vpop.f32.mrb[0].mxu0
      %v3486 = vpop.f32.mrb[0].mxu0
      %v3487 = vadd.f32 0.0, %v3486
      %v3488 = vpop.f32.mrb[0].mxu0
      %3489 = vmatprep.mubr.bf16.mxu0 0
      %3490 = vmatmul.mubr.bf16.gmra.mrb[0].mxu0 %v3342
      %v3491 = vpop.f32.mrb[0].mxu0
      %v3492 = vadd.f32 0.0, %v3491
      %v3493 = vpop.f32.mrb[0].mxu0
      %v3494 = vpop.f32.mrb[0].mxu0
      %v3495 = vadd.f32 0.0, %v3494
      %v3496 = vpop.f32.mrb[0].mxu0
      %3497 = vmatprep.mubr.bf16.mxu0 0
      %3498 = vmatmul.mubr.bf16.gmra.mrb[0].mxu0 %v3345
      %v3499 = vpop.f32.mrb[0].mxu0
      %v3500 = vadd.f32 0.0, %v3499
      %v3501 = vpop.f32.mrb[0].mxu0
      %v3502 = vpop.f32.mrb[0].mxu0
      %v3503 = vadd.f32 0.0, %v3502
      %v3504 = vpop.f32.mrb[0].mxu0
      %3505 = vmatprep.mubr.bf16.mxu0 0
      %3506 = vmatmul.mubr.bf16.gmra.mrb[0].mxu0 %v3348
      %v3507 = vpop.f32.mrb[0].mxu0
      %v3508 = vadd.f32 0.0, %v3507
      %v3509 = vpop.f32.mrb[0].mxu0
      %v3510 = vpop.f32.mrb[0].mxu0
      %v3511 = vadd.f32 0.0, %v3510
      %v3512 = vpop.f32.mrb[0].mxu0
      %3513 = vdwg.mxu0
      %v3514 = vadd.f32 %v3155, %v3388
      %v3515 = vadd.f32 %v3156, %v3391
      %v3516 = vadd.f32 %v3157, %v3396
      %v3517 = vadd.f32 %v3158, %v3399
      %v3518 = vadd.f32 %v3159, %v3404
      %v3519 = vadd.f32 %v3160, %v3407
      %v3520 = vadd.f32 %v3161, %v3412
      %v3521 = vadd.f32 %v3162, %v3415
      %v3522 = vadd.f32 %v3163, %v3420
      %v3523 = vadd.f32 %v3164, %v3423
      %v3524 = vadd.f32 %v3165, %v3428
      %v3525 = vadd.f32 %v3166, %v3431
      %v3526 = vadd.f32 %v3167, %v3436
      %v3527 = vadd.f32 %v3168, %v3439
      %v3528 = vadd.f32 %v3169, %v3444
      %v3529 = vadd.f32 %v3170, %v3447
      %v3530 = vadd.f32 %v3171, %v3452
      %v3531 = vadd.f32 %v3172, %v3455
      %v3532 = vadd.f32 %v3173, %v3460
      %v3533 = vadd.f32 %v3174, %v3463
      %v3534 = vadd.f32 %v3175, %v3468
      %v3535 = vadd.f32 %v3176, %v3471
      %v3536 = vadd.f32 %v3177, %v3476
      %v3537 = vadd.f32 %v3178, %v3479
      %v3538 = vadd.f32 %v3179, %v3484
      %v3539 = vadd.f32 %v3180, %v3487
      %v3540 = vadd.f32 %v3181, %v3492
      %v3541 = vadd.f32 %v3182, %v3495
      %v3542 = vadd.f32 %v3183, %v3500
      %v3543 = vadd.f32 %v3184, %v3503
      %v3544 = vadd.f32 %v3185, %v3508
      %v3545 = vadd.f32 %v3186, %v3511
      %v3546 = vld [vmem:[%s3187] sm:$0xf]
      %v3547 = vld [vmem:[%s3187 + $0x4] sm:$0xf]
      %v3548 = vld [vmem:[%s3187 + $0x8] sm:$0x1]
      %v3549 = vld [vmem:[%s3187 + $0xc] sm:$0xf]
      %v3550 = vld [vmem:[%s3187 + $0x10] sm:$0xf]
      %v3551 = vld [vmem:[%s3187 + $0x14] sm:$0x1]
      %v3552 = vld [vmem:[%s3187 + $0x18] sm:$0xf]
      %v3553 = vld [vmem:[%s3187 + $0x1c] sm:$0xf]
      %v3554 = vld [vmem:[%s3187 + $0x20] sm:$0x1]
      %v3555 = vld [vmem:[%s3187 + $0x24] sm:$0xf]
      %v3556 = vld [vmem:[%s3187 + $0x28] sm:$0xf]
      %v3557 = vld [vmem:[%s3187 + $0x2c] sm:$0x1]
      %v3558 = vld [vmem:[%s3187 + $0x30] sm:$0xf]
      %v3559 = vld [vmem:[%s3187 + $0x34] sm:$0xf]
      %v3560 = vld [vmem:[%s3187 + $0x38] sm:$0x1]
      %v3561 = vld [vmem:[%s3187 + $0x3c] sm:$0xf]
      %v3562 = vld [vmem:[%s3187 + $0x40] sm:$0xf]
      %v3563 = vld [vmem:[%s3187 + $0x44] sm:$0x1]
      %v3564 = vld [vmem:[%s3187 + $0x48] sm:$0xf]
      %v3565 = vld [vmem:[%s3187 + $0x4c] sm:$0xf]
      %v3566 = vld [vmem:[%s3187 + $0x50] sm:$0x1]
      %v3567 = vld [vmem:[%s3187 + $0x54] sm:$0xf]
      %v3568 = vld [vmem:[%s3187 + $0x58] sm:$0xf]
      %v3569 = vld [vmem:[%s3187 + $0x5c] sm:$0x1]
      %v3570 = vld [vmem:[%s3187 + $0x60] sm:$0xf]
      %v3571 = vld [vmem:[%s3187 + $0x64] sm:$0xf]
      %v3572 = vld [vmem:[%s3187 + $0x68] sm:$0x1]
      %v3573 = vld [vmem:[%s3187 + $0x6c] sm:$0xf]
      %v3574 = vld [vmem:[%s3187 + $0x70] sm:$0xf]
      %v3575 = vld [vmem:[%s3187 + $0x74] sm:$0x1]
      %v3576 = vld [vmem:[%s3187 + $0x78] sm:$0xf]
      %v3577 = vld [vmem:[%s3187 + $0x7c] sm:$0xf]
      %v3578 = vld [vmem:[%s3187 + $0x80] sm:$0x1]
      %v3579 = vld [vmem:[%s3187 + $0x84] sm:$0xf]
      %v3580 = vld [vmem:[%s3187 + $0x88] sm:$0xf]
      %v3581 = vld [vmem:[%s3187 + $0x8c] sm:$0x1]
      %v3582 = vld [vmem:[%s3187 + $0x90] sm:$0xf]
      %v3583 = vld [vmem:[%s3187 + $0x94] sm:$0xf]
      %v3584 = vld [vmem:[%s3187 + $0x98] sm:$0x1]
      %v3585 = vld [vmem:[%s3187 + $0x9c] sm:$0xf]
      %v3586 = vld [vmem:[%s3187 + $0xa0] sm:$0xf]
      %v3587 = vld [vmem:[%s3187 + $0xa4] sm:$0x1]
      %v3588 = vld [vmem:[%s3187 + $0xa8] sm:$0xf]
      %v3589 = vld [vmem:[%s3187 + $0xac] sm:$0xf]
      %v3590 = vld [vmem:[%s3187 + $0xb0] sm:$0x1]
      %v3591 = vld [vmem:[%s3187 + $0xb4] sm:$0xf]
      %v3592 = vld [vmem:[%s3187 + $0xb8] sm:$0xf]
      %v3593 = vld [vmem:[%s3187 + $0xbc] sm:$0x1]
      %v3595 = vshrl.u32 %v3546, 16
      %v3597 = vrot.slane %v3595, 4
      %v3598 = vshll.u32 %v3546, 16
      %v3600 = vrot.slane %v3598, 5
      %v3601 = vor.u32 %v3597, %v3600
      %v3602 = vrot.slane %v3601, 4
      %v3604 = vshll.u32 %v3547, 16
      %v3606 = vrot.slane %v3604, 5
      %v3607 = vsel %vm234, %v3602, %v3606
      %v3608 = vshrl.u32 %v3547, 16
      %v3610 = vrot.slane %v3608, 4
      %v3611 = vor.u32 %v3610, %v3606
      %v3612 = vrot.slane %v3611, 4
      %v3614 = vshll.u32 %v3548, 16
      %v3616 = vrot.slane %v3614, 5
      %v3617 = vsel %vm234, %v3612, %v3616
      %v3619 = vshrl.u32 %v3549, 16
      %v3621 = vrot.slane %v3619, 4
      %v3622 = vshll.u32 %v3549, 16
      %v3624 = vrot.slane %v3622, 5
      %v3625 = vor.u32 %v3621, %v3624
      %v3626 = vrot.slane %v3625, 4
      %v3628 = vshll.u32 %v3550, 16
      %v3630 = vrot.slane %v3628, 5
      %v3631 = vsel %vm234, %v3626, %v3630
      %v3632 = vshrl.u32 %v3550, 16
      %v3634 = vrot.slane %v3632, 4
      %v3635 = vor.u32 %v3634, %v3630
      %v3636 = vrot.slane %v3635, 4
      %v3638 = vshll.u32 %v3551, 16
      %v3640 = vrot.slane %v3638, 5
      %v3641 = vsel %vm234, %v3636, %v3640
      %v3643 = vshrl.u32 %v3552, 16
      %v3645 = vrot.slane %v3643, 4
      %v3646 = vshll.u32 %v3552, 16
      %v3648 = vrot.slane %v3646, 5
      %v3649 = vor.u32 %v3645, %v3648
      %v3650 = vrot.slane %v3649, 4
      %v3652 = vshll.u32 %v3553, 16
      %v3654 = vrot.slane %v3652, 5
      %v3655 = vsel %vm234, %v3650, %v3654
      %v3656 = vshrl.u32 %v3553, 16
      %v3658 = vrot.slane %v3656, 4
      %v3659 = vor.u32 %v3658, %v3654
      %v3660 = vrot.slane %v3659, 4
      %v3662 = vshll.u32 %v3554, 16
      %v3664 = vrot.slane %v3662, 5
      %v3665 = vsel %vm234, %v3660, %v3664
      %v3667 = vshrl.u32 %v3555, 16
      %v3669 = vrot.slane %v3667, 4
      %v3670 = vshll.u32 %v3555, 16
      %v3672 = vrot.slane %v3670, 5
      %v3673 = vor.u32 %v3669, %v3672
      %v3674 = vrot.slane %v3673, 4
      %v3676 = vshll.u32 %v3556, 16
      %v3678 = vrot.slane %v3676, 5
      %v3679 = vsel %vm234, %v3674, %v3678
      %v3680 = vshrl.u32 %v3556, 16
      %v3682 = vrot.slane %v3680, 4
      %v3683 = vor.u32 %v3682, %v3678
      %v3684 = vrot.slane %v3683, 4
      %v3686 = vshll.u32 %v3557, 16
      %v3688 = vrot.slane %v3686, 5
      %v3689 = vsel %vm234, %v3684, %v3688
      %v3691 = vshrl.u32 %v3558, 16
      %v3693 = vrot.slane %v3691, 4
      %v3694 = vshll.u32 %v3558, 16
      %v3696 = vrot.slane %v3694, 5
      %v3697 = vor.u32 %v3693, %v3696
      %v3698 = vrot.slane %v3697, 4
      %v3700 = vshll.u32 %v3559, 16
      %v3702 = vrot.slane %v3700, 5
      %v3703 = vsel %vm234, %v3698, %v3702
      %v3704 = vshrl.u32 %v3559, 16
      %v3706 = vrot.slane %v3704, 4
      %v3707 = vor.u32 %v3706, %v3702
      %v3708 = vrot.slane %v3707, 4
      %v3710 = vshll.u32 %v3560, 16
      %v3712 = vrot.slane %v3710, 5
      %v3713 = vsel %vm234, %v3708, %v3712
      %v3715 = vshrl.u32 %v3561, 16
      %v3717 = vrot.slane %v3715, 4
      %v3718 = vshll.u32 %v3561, 16
      %v3720 = vrot.slane %v3718, 5
      %v3721 = vor.u32 %v3717, %v3720
      %v3722 = vrot.slane %v3721, 4
      %v3724 = vshll.u32 %v3562, 16
      %v3726 = vrot.slane %v3724, 5
      %v3727 = vsel %vm234, %v3722, %v3726
      %v3728 = vshrl.u32 %v3562, 16
      %v3730 = vrot.slane %v3728, 4
      %v3731 = vor.u32 %v3730, %v3726
      %v3732 = vrot.slane %v3731, 4
      %v3734 = vshll.u32 %v3563, 16
      %v3736 = vrot.slane %v3734, 5
      %v3737 = vsel %vm234, %v3732, %v3736
      %v3739 = vshrl.u32 %v3564, 16
      %v3741 = vrot.slane %v3739, 4
      %v3742 = vshll.u32 %v3564, 16
      %v3744 = vrot.slane %v3742, 5
      %v3745 = vor.u32 %v3741, %v3744
      %v3746 = vrot.slane %v3745, 4
      %v3748 = vshll.u32 %v3565, 16
      %v3750 = vrot.slane %v3748, 5
      %v3751 = vsel %vm234, %v3746, %v3750
      %v3752 = vshrl.u32 %v3565, 16
      %v3754 = vrot.slane %v3752, 4
      %v3755 = vor.u32 %v3754, %v3750
      %v3756 = vrot.slane %v3755, 4
      %v3758 = vshll.u32 %v3566, 16
      %v3760 = vrot.slane %v3758, 5
      %v3761 = vsel %vm234, %v3756, %v3760
      %v3763 = vshrl.u32 %v3567, 16
      %v3765 = vrot.slane %v3763, 4
      %v3766 = vshll.u32 %v3567, 16
      %v3768 = vrot.slane %v3766, 5
      %v3769 = vor.u32 %v3765, %v3768
      %v3770 = vrot.slane %v3769, 4
      %v3772 = vshll.u32 %v3568, 16
      %v3774 = vrot.slane %v3772, 5
      %v3775 = vsel %vm234, %v3770, %v3774
      %v3776 = vshrl.u32 %v3568, 16
      %v3778 = vrot.slane %v3776, 4
      %v3779 = vor.u32 %v3778, %v3774
      %v3780 = vrot.slane %v3779, 4
      %v3782 = vshll.u32 %v3569, 16
      %v3784 = vrot.slane %v3782, 5
      %v3785 = vsel %vm234, %v3780, %v3784
      %v3787 = vshrl.u32 %v3570, 16
      %v3789 = vrot.slane %v3787, 4
      %v3790 = vshll.u32 %v3570, 16
      %v3792 = vrot.slane %v3790, 5
      %v3793 = vor.u32 %v3789, %v3792
      %v3794 = vrot.slane %v3793, 4
      %v3796 = vshll.u32 %v3571, 16
      %v3798 = vrot.slane %v3796, 5
      %v3799 = vsel %vm234, %v3794, %v3798
      %v3800 = vshrl.u32 %v3571, 16
      %v3802 = vrot.slane %v3800, 4
      %v3803 = vor.u32 %v3802, %v3798
      %v3804 = vrot.slane %v3803, 4
      %v3806 = vshll.u32 %v3572, 16
      %v3808 = vrot.slane %v3806, 5
      %v3809 = vsel %vm234, %v3804, %v3808
      %v3811 = vshrl.u32 %v3573, 16
      %v3813 = vrot.slane %v3811, 4
      %v3814 = vshll.u32 %v3573, 16
      %v3816 = vrot.slane %v3814, 5
      %v3817 = vor.u32 %v3813, %v3816
      %v3818 = vrot.slane %v3817, 4
      %v3820 = vshll.u32 %v3574, 16
      %v3822 = vrot.slane %v3820, 5
      %v3823 = vsel %vm234, %v3818, %v3822
      %v3824 = vshrl.u32 %v3574, 16
      %v3826 = vrot.slane %v3824, 4
      %v3827 = vor.u32 %v3826, %v3822
      %v3828 = vrot.slane %v3827, 4
      %v3830 = vshll.u32 %v3575, 16
      %v3832 = vrot.slane %v3830, 5
      %v3833 = vsel %vm234, %v3828, %v3832
      %v3835 = vshrl.u32 %v3576, 16
      %v3837 = vrot.slane %v3835, 4
      %v3838 = vshll.u32 %v3576, 16
      %v3840 = vrot.slane %v3838, 5
      %v3841 = vor.u32 %v3837, %v3840
      %v3842 = vrot.slane %v3841, 4
      %v3844 = vshll.u32 %v3577, 16
      %v3846 = vrot.slane %v3844, 5
      %v3847 = vsel %vm234, %v3842, %v3846
      %v3848 = vshrl.u32 %v3577, 16
      %v3850 = vrot.slane %v3848, 4
      %v3851 = vor.u32 %v3850, %v3846
      %v3852 = vrot.slane %v3851, 4
      %v3854 = vshll.u32 %v3578, 16
      %v3856 = vrot.slane %v3854, 5
      %v3857 = vsel %vm234, %v3852, %v3856
      %v3859 = vshrl.u32 %v3579, 16
      %v3861 = vrot.slane %v3859, 4
      %v3862 = vshll.u32 %v3579, 16
      %v3864 = vrot.slane %v3862, 5
      %v3865 = vor.u32 %v3861, %v3864
      %v3866 = vrot.slane %v3865, 4
      %v3868 = vshll.u32 %v3580, 16
      %v3870 = vrot.slane %v3868, 5
      %v3871 = vsel %vm234, %v3866, %v3870
      %v3872 = vshrl.u32 %v3580, 16
      %v3874 = vrot.slane %v3872, 4
      %v3875 = vor.u32 %v3874, %v3870
      %v3876 = vrot.slane %v3875, 4
      %v3878 = vshll.u32 %v3581, 16
      %v3880 = vrot.slane %v3878, 5
      %v3881 = vsel %vm234, %v3876, %v3880
      %v3883 = vshrl.u32 %v3582, 16
      %v3885 = vrot.slane %v3883, 4
      %v3886 = vshll.u32 %v3582, 16
      %v3888 = vrot.slane %v3886, 5
      %v3889 = vor.u32 %v3885, %v3888
      %v3890 = vrot.slane %v3889, 4
      %v3892 = vshll.u32 %v3583, 16
      %v3894 = vrot.slane %v3892, 5
      %v3895 = vsel %vm234, %v3890, %v3894
      %v3896 = vshrl.u32 %v3583, 16
      %v3898 = vrot.slane %v3896, 4
      %v3899 = vor.u32 %v3898, %v3894
      %v3900 = vrot.slane %v3899, 4
      %v3902 = vshll.u32 %v3584, 16
      %v3904 = vrot.slane %v3902, 5
      %v3905 = vsel %vm234, %v3900, %v3904
      %v3907 = vshrl.u32 %v3585, 16
      %v3909 = vrot.slane %v3907, 4
      %v3910 = vshll.u32 %v3585, 16
      %v3912 = vrot.slane %v3910, 5
      %v3913 = vor.u32 %v3909, %v3912
      %v3914 = vrot.slane %v3913, 4
      %v3916 = vshll.u32 %v3586, 16
      %v3918 = vrot.slane %v3916, 5
      %v3919 = vsel %vm234, %v3914, %v3918
      %v3920 = vshrl.u32 %v3586, 16
      %v3922 = vrot.slane %v3920, 4
      %v3923 = vor.u32 %v3922, %v3918
      %v3924 = vrot.slane %v3923, 4
      %v3926 = vshll.u32 %v3587, 16
      %v3928 = vrot.slane %v3926, 5
      %v3929 = vsel %vm234, %v3924, %v3928
      %v3931 = vshrl.u32 %v3588, 16
      %v3933 = vrot.slane %v3931, 4
      %v3934 = vshll.u32 %v3588, 16
      %v3936 = vrot.slane %v3934, 5
      %v3937 = vor.u32 %v3933, %v3936
      %v3938 = vrot.slane %v3937, 4
      %v3940 = vshll.u32 %v3589, 16
      %v3942 = vrot.slane %v3940, 5
      %v3943 = vsel %vm234, %v3938, %v3942
      %v3944 = vshrl.u32 %v3589, 16
      %v3946 = vrot.slane %v3944, 4
      %v3947 = vor.u32 %v3946, %v3942
      %v3948 = vrot.slane %v3947, 4
      %v3950 = vshll.u32 %v3590, 16
      %v3952 = vrot.slane %v3950, 5
      %v3953 = vsel %vm234, %v3948, %v3952
      %v3955 = vshrl.u32 %v3591, 16
      %v3957 = vrot.slane %v3955, 4
      %v3958 = vshll.u32 %v3591, 16
      %v3960 = vrot.slane %v3958, 5
      %v3961 = vor.u32 %v3957, %v3960
      %v3962 = vrot.slane %v3961, 4
      %v3964 = vshll.u32 %v3592, 16
      %v3966 = vrot.slane %v3964, 5
      %v3967 = vsel %vm234, %v3962, %v3966
      %v3968 = vshrl.u32 %v3592, 16
      %v3970 = vrot.slane %v3968, 4
      %v3971 = vor.u32 %v3970, %v3966
      %v3972 = vrot.slane %v3971, 4
      %v3974 = vshll.u32 %v3593, 16
      %v3976 = vrot.slane %v3974, 5
      %v3977 = vsel %vm234, %v3972, %v3976
      %s3978 = scalar_lea.vmem %s1, 14
      %v3979 = vld [vmem:[%s3978] sm:$0x3]
      %v3980 = vunpack.c.l.b16 %v3607
      %v3981 = vunpack.c.l.b16 %v3617
      %v3982 = vunpack.c.l.b16 %v3631
      %v3983 = vunpack.c.l.b16 %v3641
      %v3984 = vunpack.c.l.b16 %v3655
      %v3985 = vunpack.c.l.b16 %v3665
      %v3986 = vunpack.c.l.b16 %v3679
      %v3987 = vunpack.c.l.b16 %v3689
      %v3988 = vunpack.c.l.b16 %v3703
      %v3989 = vunpack.c.l.b16 %v3713
      %v3990 = vunpack.c.l.b16 %v3727
      %v3991 = vunpack.c.l.b16 %v3737
      %v3992 = vunpack.c.l.b16 %v3751
      %v3993 = vunpack.c.l.b16 %v3761
      %v3994 = vunpack.c.l.b16 %v3775
      %v3995 = vunpack.c.l.b16 %v3785
      %v3996 = vunpack.c.l.b16 %v3799
      %v3997 = vunpack.c.l.b16 %v3809
      %v3998 = vunpack.c.l.b16 %v3823
      %v3999 = vunpack.c.l.b16 %v3833
      %v4000 = vunpack.c.l.b16 %v3847
      %v4001 = vunpack.c.l.b16 %v3857
      %v4002 = vunpack.c.l.b16 %v3871
      %v4003 = vunpack.c.l.b16 %v3881
      %v4004 = vunpack.c.l.b16 %v3895
      %v4005 = vunpack.c.l.b16 %v3905
      %v4006 = vunpack.c.l.b16 %v3919
      %v4007 = vunpack.c.l.b16 %v3929
      %v4008 = vunpack.c.l.b16 %v3943
      %v4009 = vunpack.c.l.b16 %v3953
      %v4010 = vunpack.c.l.b16 %v3967
      %v4011 = vunpack.c.l.b16 %v3977
      %v4012 = vpack.c.b16 %v3981, %v3980
      %v4013 = vpack.c.b16 %v3983, %v3982
      %v4014 = vpack.c.b16 %v3985, %v3984
      %v4015 = vpack.c.b16 %v3987, %v3986
      %v4016 = vpack.c.b16 %v3989, %v3988
      %v4017 = vpack.c.b16 %v3991, %v3990
      %v4018 = vpack.c.b16 %v3993, %v3992
      %v4019 = vpack.c.b16 %v3995, %v3994
      %v4020 = vpack.c.b16 %v3997, %v3996
      %v4021 = vpack.c.b16 %v3999, %v3998
      %v4022 = vpack.c.b16 %v4001, %v4000
      %v4023 = vpack.c.b16 %v4003, %v4002
      %v4024 = vpack.c.b16 %v4005, %v4004
      %v4025 = vpack.c.b16 %v4007, %v4006
      %v4026 = vpack.c.b16 %v4009, %v4008
      %v4027 = vpack.c.b16 %v4011, %v4010
      %v4029 = vsel %vm669, %v4012, 0
      %v4032 = vsel %vm669, %v4013, 0
      %v4035 = vsel %vm669, %v4014, 0
      %v4038 = vsel %vm669, %v4015, 0
      %v4041 = vsel %vm669, %v4016, 0
      %v4044 = vsel %vm669, %v4017, 0
      %v4047 = vsel %vm669, %v4018, 0
      %v4050 = vsel %vm669, %v4019, 0
      %v4053 = vsel %vm669, %v4020, 0
      %v4056 = vsel %vm669, %v4021, 0
      %v4059 = vsel %vm669, %v4022, 0
      %v4062 = vsel %vm669, %v4023, 0
      %v4065 = vsel %vm669, %v4024, 0
      %v4068 = vsel %vm669, %v4025, 0
      %v4071 = vsel %vm669, %v4026, 0
      %v4074 = vsel %vm669, %v4027, 0
      %v4077 = vsel %vm718, %v3979, 0
      %4079 = vmatprep.subr.bf16.mxu0 0
      %4080 = vmatpush1.bf16.msra.mxu0 %v4077
      %4081 = vmatprep.subr.bf16.mxu0 0
      %4082 = vmatpush1.bf16.msra.mxu0 0
      %4083 = vmatprep.subr.bf16.mxu0 0
      %4084 = vmatpush1.bf16.msra.mxu0 0
      %4085 = vmatprep.subr.bf16.mxu0 0
      %4086 = vmatpush1.bf16.msra.mxu0 0
      %4087 = vmatprep.subr.bf16.mxu0 0
      %4088 = vmatpush1.bf16.msra.mxu0 0
      %4089 = vmatprep.subr.bf16.mxu0 0
      %4090 = vmatpush1.bf16.msra.mxu0 0
      %4091 = vmatprep.subr.bf16.mxu0 0
      %4092 = vmatpush1.bf16.msra.mxu0 0
      %4093 = vmatprep.subr.bf16.mxu0 0
      %4094 = vmatpush1.bf16.msra.mxu0 0
      %4095 = vmatprep.subr.bf16.mxu0 0
      %4096 = vmatpush1.bf16.msra.mxu0 0
      %4097 = vmatprep.subr.bf16.mxu0 0
      %4098 = vmatpush1.bf16.msra.mxu0 0
      %4099 = vmatprep.subr.bf16.mxu0 0
      %4100 = vmatpush1.bf16.msra.mxu0 0
      %4101 = vmatprep.subr.bf16.mxu0 0
      %4102 = vmatpush1.bf16.msra.mxu0 0
      %4103 = vmatprep.subr.bf16.mxu0 0
      %4104 = vmatpush1.bf16.msra.mxu0 0
      %4105 = vmatprep.subr.bf16.mxu0 0
      %4106 = vmatpush1.bf16.msra.mxu0 0
      %4107 = vmatprep.subr.bf16.mxu0 0
      %4108 = vmatpush1.bf16.msra.mxu0 0
      %4109 = vmatprep.subr.bf16.mxu0 0
      %4110 = vmatpush1.bf16.msra.mxu0 0
      %4111 = vmatprep.mubr.bf16.mxu0 0
      %4112 = vmatmul.mubr.bf16.gmra.mrb[0].mxu0 %v4029
      %v4113 = vpop.f32.mrb[0].mxu0
      %v4114 = vadd.f32 0.0, %v4113
      %v4115 = vpop.f32.mrb[0].mxu0
      %v4116 = vpop.f32.mrb[0].mxu0
      %v4117 = vadd.f32 0.0, %v4116
      %v4118 = vpop.f32.mrb[0].mxu0
      %4119 = vmatprep.mubr.bf16.mxu0 0
      %4120 = vmatmul.mubr.bf16.gmra.mrb[0].mxu0 %v4032
      %v4121 = vpop.f32.mrb[0].mxu0
      %v4122 = vadd.f32 0.0, %v4121
      %v4123 = vpop.f32.mrb[0].mxu0
      %v4124 = vpop.f32.mrb[0].mxu0
      %v4125 = vadd.f32 0.0, %v4124
      %v4126 = vpop.f32.mrb[0].mxu0
      %4127 = vmatprep.mubr.bf16.mxu0 0
      %4128 = vmatmul.mubr.bf16.gmra.mrb[0].mxu0 %v4035
      %v4129 = vpop.f32.mrb[0].mxu0
      %v4130 = vadd.f32 0.0, %v4129
      %v4131 = vpop.f32.mrb[0].mxu0
      %v4132 = vpop.f32.mrb[0].mxu0
      %v4133 = vadd.f32 0.0, %v4132
      %v4134 = vpop.f32.mrb[0].mxu0
      %4135 = vmatprep.mubr.bf16.mxu0 0
      %4136 = vmatmul.mubr.bf16.gmra.mrb[0].mxu0 %v4038
      %v4137 = vpop.f32.mrb[0].mxu0
      %v4138 = vadd.f32 0.0, %v4137
      %v4139 = vpop.f32.mrb[0].mxu0
      %v4140 = vpop.f32.mrb[0].mxu0
      %v4141 = vadd.f32 0.0, %v4140
      %v4142 = vpop.f32.mrb[0].mxu0
      %4143 = vmatprep.mubr.bf16.mxu0 0
      %4144 = vmatmul.mubr.bf16.gmra.mrb[0].mxu0 %v4041
      %v4145 = vpop.f32.mrb[0].mxu0
      %v4146 = vadd.f32 0.0, %v4145
      %v4147 = vpop.f32.mrb[0].mxu0
      %v4148 = vpop.f32.mrb[0].mxu0
      %v4149 = vadd.f32 0.0, %v4148
      %v4150 = vpop.f32.mrb[0].mxu0
      %4151 = vmatprep.mubr.bf16.mxu0 0
      %4152 = vmatmul.mubr.bf16.gmra.mrb[0].mxu0 %v4044
      %v4153 = vpop.f32.mrb[0].mxu0
      %v4154 = vadd.f32 0.0, %v4153
      %v4155 = vpop.f32.mrb[0].mxu0
      %v4156 = vpop.f32.mrb[0].mxu0
      %v4157 = vadd.f32 0.0, %v4156
      %v4158 = vpop.f32.mrb[0].mxu0
      %4159 = vmatprep.mubr.bf16.mxu0 0
      %4160 = vmatmul.mubr.bf16.gmra.mrb[0].mxu0 %v4047
      %v4161 = vpop.f32.mrb[0].mxu0
      %v4162 = vadd.f32 0.0, %v4161
      %v4163 = vpop.f32.mrb[0].mxu0
      %v4164 = vpop.f32.mrb[0].mxu0
      %v4165 = vadd.f32 0.0, %v4164
      %v4166 = vpop.f32.mrb[0].mxu0
      %4167 = vmatprep.mubr.bf16.mxu0 0
      %4168 = vmatmul.mubr.bf16.gmra.mrb[0].mxu0 %v4050
      %v4169 = vpop.f32.mrb[0].mxu0
      %v4170 = vadd.f32 0.0, %v4169
      %v4171 = vpop.f32.mrb[0].mxu0
      %v4172 = vpop.f32.mrb[0].mxu0
      %v4173 = vadd.f32 0.0, %v4172
      %v4174 = vpop.f32.mrb[0].mxu0
      %4175 = vmatprep.mubr.bf16.mxu0 0
      %4176 = vmatmul.mubr.bf16.gmra.mrb[0].mxu0 %v4053
      %v4177 = vpop.f32.mrb[0].mxu0
      %v4178 = vadd.f32 0.0, %v4177
      %v4179 = vpop.f32.mrb[0].mxu0
      %v4180 = vpop.f32.mrb[0].mxu0
      %v4181 = vadd.f32 0.0, %v4180
      %v4182 = vpop.f32.mrb[0].mxu0
      %4183 = vmatprep.mubr.bf16.mxu0 0
      %4184 = vmatmul.mubr.bf16.gmra.mrb[0].mxu0 %v4056
      %v4185 = vpop.f32.mrb[0].mxu0
      %v4186 = vadd.f32 0.0, %v4185
      %v4187 = vpop.f32.mrb[0].mxu0
      %v4188 = vpop.f32.mrb[0].mxu0
      %v4189 = vadd.f32 0.0, %v4188
      %v4190 = vpop.f32.mrb[0].mxu0
      %4191 = vmatprep.mubr.bf16.mxu0 0
      %4192 = vmatmul.mubr.bf16.gmra.mrb[0].mxu0 %v4059
      %v4193 = vpop.f32.mrb[0].mxu0
      %v4194 = vadd.f32 0.0, %v4193
      %v4195 = vpop.f32.mrb[0].mxu0
      %v4196 = vpop.f32.mrb[0].mxu0
      %v4197 = vadd.f32 0.0, %v4196
      %v4198 = vpop.f32.mrb[0].mxu0
      %4199 = vmatprep.mubr.bf16.mxu0 0
      %4200 = vmatmul.mubr.bf16.gmra.mrb[0].mxu0 %v4062
      %v4201 = vpop.f32.mrb[0].mxu0
      %v4202 = vadd.f32 0.0, %v4201
      %v4203 = vpop.f32.mrb[0].mxu0
      %v4204 = vpop.f32.mrb[0].mxu0
      %v4205 = vadd.f32 0.0, %v4204
      %v4206 = vpop.f32.mrb[0].mxu0
      %4207 = vmatprep.mubr.bf16.mxu0 0
      %4208 = vmatmul.mubr.bf16.gmra.mrb[0].mxu0 %v4065
      %v4209 = vpop.f32.mrb[0].mxu0
      %v4210 = vadd.f32 0.0, %v4209
      %v4211 = vpop.f32.mrb[0].mxu0
      %v4212 = vpop.f32.mrb[0].mxu0
      %v4213 = vadd.f32 0.0, %v4212
      %v4214 = vpop.f32.mrb[0].mxu0
      %4215 = vmatprep.mubr.bf16.mxu0 0
      %4216 = vmatmul.mubr.bf16.gmra.mrb[0].mxu0 %v4068
      %v4217 = vpop.f32.mrb[0].mxu0
      %v4218 = vadd.f32 0.0, %v4217
      %v4219 = vpop.f32.mrb[0].mxu0
      %v4220 = vpop.f32.mrb[0].mxu0
      %v4221 = vadd.f32 0.0, %v4220
      %v4222 = vpop.f32.mrb[0].mxu0
      %4223 = vmatprep.mubr.bf16.mxu0 0
      %4224 = vmatmul.mubr.bf16.gmra.mrb[0].mxu0 %v4071
      %v4225 = vpop.f32.mrb[0].mxu0
      %v4226 = vadd.f32 0.0, %v4225
      %v4227 = vpop.f32.mrb[0].mxu0
      %v4228 = vpop.f32.mrb[0].mxu0
      %v4229 = vadd.f32 0.0, %v4228
      %v4230 = vpop.f32.mrb[0].mxu0
      %4231 = vmatprep.mubr.bf16.mxu0 0
      %4232 = vmatmul.mubr.bf16.gmra.mrb[0].mxu0 %v4074
      %v4233 = vpop.f32.mrb[0].mxu0
      %v4234 = vadd.f32 0.0, %v4233
      %v4235 = vpop.f32.mrb[0].mxu0
      %v4236 = vpop.f32.mrb[0].mxu0
      %v4237 = vadd.f32 0.0, %v4236
      %v4238 = vpop.f32.mrb[0].mxu0
      %4239 = vdwg.mxu0
      %v4240 = vadd.f32 %v3514, %v4114
      %v4241 = vadd.f32 %v3515, %v4117
      %v4242 = vadd.f32 %v3516, %v4122
      %v4243 = vadd.f32 %v3517, %v4125
      %v4244 = vadd.f32 %v3518, %v4130
      %v4245 = vadd.f32 %v3519, %v4133
      %v4246 = vadd.f32 %v3520, %v4138
      %v4247 = vadd.f32 %v3521, %v4141
      %v4248 = vadd.f32 %v3522, %v4146
      %v4249 = vadd.f32 %v3523, %v4149
      %v4250 = vadd.f32 %v3524, %v4154
      %v4251 = vadd.f32 %v3525, %v4157
      %v4252 = vadd.f32 %v3526, %v4162
      %v4253 = vadd.f32 %v3527, %v4165
      %v4254 = vadd.f32 %v3528, %v4170
      %v4255 = vadd.f32 %v3529, %v4173
      %v4256 = vadd.f32 %v3530, %v4178
      %v4257 = vadd.f32 %v3531, %v4181
      %v4258 = vadd.f32 %v3532, %v4186
      %v4259 = vadd.f32 %v3533, %v4189
      %v4260 = vadd.f32 %v3534, %v4194
      %v4261 = vadd.f32 %v3535, %v4197
      %v4262 = vadd.f32 %v3536, %v4202
      %v4263 = vadd.f32 %v3537, %v4205
      %v4264 = vadd.f32 %v3538, %v4210
      %v4265 = vadd.f32 %v3539, %v4213
      %v4266 = vadd.f32 %v3540, %v4218
      %v4267 = vadd.f32 %v3541, %v4221
      %v4268 = vadd.f32 %v3542, %v4226
      %v4269 = vadd.f32 %v3543, %v4229
      %v4270 = vadd.f32 %v3544, %v4234
      %v4271 = vadd.f32 %v3545, %v4237
      %v4272 = vld [vmem:[%s3187] sm:$0xe]
      %v4273 = vld [vmem:[%s3187 + $0xc] sm:$0xe]
      %v4274 = vld [vmem:[%s3187 + $0x18] sm:$0xe]
      %v4275 = vld [vmem:[%s3187 + $0x24] sm:$0xe]
      %v4276 = vld [vmem:[%s3187 + $0x30] sm:$0xe]
      %v4277 = vld [vmem:[%s3187 + $0x3c] sm:$0xe]
      %v4278 = vld [vmem:[%s3187 + $0x48] sm:$0xe]
      %v4279 = vld [vmem:[%s3187 + $0x54] sm:$0xe]
      %v4280 = vld [vmem:[%s3187 + $0x60] sm:$0xe]
      %v4281 = vld [vmem:[%s3187 + $0x6c] sm:$0xe]
      %v4282 = vld [vmem:[%s3187 + $0x78] sm:$0xe]
      %v4283 = vld [vmem:[%s3187 + $0x84] sm:$0xe]
      %v4284 = vld [vmem:[%s3187 + $0x90] sm:$0xe]
      %v4285 = vld [vmem:[%s3187 + $0x9c] sm:$0xe]
      %v4286 = vld [vmem:[%s3187 + $0xa8] sm:$0xe]
      %v4287 = vld [vmem:[%s3187 + $0xb4] sm:$0xe]
      %v4336 = vrot.slane %v4272, 5
      %v4337 = vrot.slane %v4336, 4
      %v4338 = vrot.slane %v3547, 5
      %v4339 = vsel %vm1225, %v4337, %v4338
      %v4340 = vrot.slane %v4338, 4
      %v4341 = vrot.slane %v3548, 5
      %v4342 = vsel %vm1225, %v4340, %v4341
      %v4343 = vrot.slane %v4273, 5
      %v4344 = vrot.slane %v4343, 4
      %v4345 = vrot.slane %v3550, 5
      %v4346 = vsel %vm1225, %v4344, %v4345
      %v4347 = vrot.slane %v4345, 4
      %v4348 = vrot.slane %v3551, 5
      %v4349 = vsel %vm1225, %v4347, %v4348
      %v4350 = vrot.slane %v4274, 5
      %v4351 = vrot.slane %v4350, 4
      %v4352 = vrot.slane %v3553, 5
      %v4353 = vsel %vm1225, %v4351, %v4352
      %v4354 = vrot.slane %v4352, 4
      %v4355 = vrot.slane %v3554, 5
      %v4356 = vsel %vm1225, %v4354, %v4355
      %v4357 = vrot.slane %v4275, 5
      %v4358 = vrot.slane %v4357, 4
      %v4359 = vrot.slane %v3556, 5
      %v4360 = vsel %vm1225, %v4358, %v4359
      %v4361 = vrot.slane %v4359, 4
      %v4362 = vrot.slane %v3557, 5
      %v4363 = vsel %vm1225, %v4361, %v4362
      %v4364 = vrot.slane %v4276, 5
      %v4365 = vrot.slane %v4364, 4
      %v4366 = vrot.slane %v3559, 5
      %v4367 = vsel %vm1225, %v4365, %v4366
      %v4368 = vrot.slane %v4366, 4
      %v4369 = vrot.slane %v3560, 5
      %v4370 = vsel %vm1225, %v4368, %v4369
      %v4371 = vrot.slane %v4277, 5
      %v4372 = vrot.slane %v4371, 4
      %v4373 = vrot.slane %v3562, 5
      %v4374 = vsel %vm1225, %v4372, %v4373
      %v4375 = vrot.slane %v4373, 4
      %v4376 = vrot.slane %v3563, 5
      %v4377 = vsel %vm1225, %v4375, %v4376
      %v4378 = vrot.slane %v4278, 5
      %v4379 = vrot.slane %v4378, 4
      %v4380 = vrot.slane %v3565, 5
      %v4381 = vsel %vm1225, %v4379, %v4380
      %v4382 = vrot.slane %v4380, 4
      %v4383 = vrot.slane %v3566, 5
      %v4384 = vsel %vm1225, %v4382, %v4383
      %v4385 = vrot.slane %v4279, 5
      %v4386 = vrot.slane %v4385, 4
      %v4387 = vrot.slane %v3568, 5
      %v4388 = vsel %vm1225, %v4386, %v4387
      %v4389 = vrot.slane %v4387, 4
      %v4390 = vrot.slane %v3569, 5
      %v4391 = vsel %vm1225, %v4389, %v4390
      %v4392 = vrot.slane %v4280, 5
      %v4393 = vrot.slane %v4392, 4
      %v4394 = vrot.slane %v3571, 5
      %v4395 = vsel %vm1225, %v4393, %v4394
      %v4396 = vrot.slane %v4394, 4
      %v4397 = vrot.slane %v3572, 5
      %v4398 = vsel %vm1225, %v4396, %v4397
      %v4399 = vrot.slane %v4281, 5
      %v4400 = vrot.slane %v4399, 4
      %v4401 = vrot.slane %v3574, 5
      %v4402 = vsel %vm1225, %v4400, %v4401
      %v4403 = vrot.slane %v4401, 4
      %v4404 = vrot.slane %v3575, 5
      %v4405 = vsel %vm1225, %v4403, %v4404
      %v4406 = vrot.slane %v4282, 5
      %v4407 = vrot.slane %v4406, 4
      %v4408 = vrot.slane %v3577, 5
      %v4409 = vsel %vm1225, %v4407, %v4408
      %v4410 = vrot.slane %v4408, 4
      %v4411 = vrot.slane %v3578, 5
      %v4412 = vsel %vm1225, %v4410, %v4411
      %v4413 = vrot.slane %v4283, 5
      %v4414 = vrot.slane %v4413, 4
      %v4415 = vrot.slane %v3580, 5
      %v4416 = vsel %vm1225, %v4414, %v4415
      %v4417 = vrot.slane %v4415, 4
      %v4418 = vrot.slane %v3581, 5
      %v4419 = vsel %vm1225, %v4417, %v4418
      %v4420 = vrot.slane %v4284, 5
      %v4421 = vrot.slane %v4420, 4
      %v4422 = vrot.slane %v3583, 5
      %v4423 = vsel %vm1225, %v4421, %v4422
      %v4424 = vrot.slane %v4422, 4
      %v4425 = vrot.slane %v3584, 5
      %v4426 = vsel %vm1225, %v4424, %v4425
      %v4427 = vrot.slane %v4285, 5
      %v4428 = vrot.slane %v4427, 4
      %v4429 = vrot.slane %v3586, 5
      %v4430 = vsel %vm1225, %v4428, %v4429
      %v4431 = vrot.slane %v4429, 4
      %v4432 = vrot.slane %v3587, 5
      %v4433 = vsel %vm1225, %v4431, %v4432
      %v4434 = vrot.slane %v4286, 5
      %v4435 = vrot.slane %v4434, 4
      %v4436 = vrot.slane %v3589, 5
      %v4437 = vsel %vm1225, %v4435, %v4436
      %v4438 = vrot.slane %v4436, 4
      %v4439 = vrot.slane %v3590, 5
      %v4440 = vsel %vm1225, %v4438, %v4439
      %v4441 = vrot.slane %v4287, 5
      %v4442 = vrot.slane %v4441, 4
      %v4443 = vrot.slane %v3592, 5
      %v4444 = vsel %vm1225, %v4442, %v4443
      %v4445 = vrot.slane %v4443, 4
      %v4446 = vrot.slane %v3593, 5
      %v4447 = vsel %vm1225, %v4445, %v4446
      %s4448 = scalar_lea.vmem %s1, 16
      %v4449 = vld [vmem:[%s4448] sm:$0x3]
      %v4450 = vunpack.c.l.b16 %v4339
      %v4451 = vunpack.c.l.b16 %v4342
      %v4452 = vunpack.c.l.b16 %v4346
      %v4453 = vunpack.c.l.b16 %v4349
      %v4454 = vunpack.c.l.b16 %v4353
      %v4455 = vunpack.c.l.b16 %v4356
      %v4456 = vunpack.c.l.b16 %v4360
      %v4457 = vunpack.c.l.b16 %v4363
      %v4458 = vunpack.c.l.b16 %v4367
      %v4459 = vunpack.c.l.b16 %v4370
      %v4460 = vunpack.c.l.b16 %v4374
      %v4461 = vunpack.c.l.b16 %v4377
      %v4462 = vunpack.c.l.b16 %v4381
      %v4463 = vunpack.c.l.b16 %v4384
      %v4464 = vunpack.c.l.b16 %v4388
      %v4465 = vunpack.c.l.b16 %v4391
      %v4466 = vunpack.c.l.b16 %v4395
      %v4467 = vunpack.c.l.b16 %v4398
      %v4468 = vunpack.c.l.b16 %v4402
      %v4469 = vunpack.c.l.b16 %v4405
      %v4470 = vunpack.c.l.b16 %v4409
      %v4471 = vunpack.c.l.b16 %v4412
      %v4472 = vunpack.c.l.b16 %v4416
      %v4473 = vunpack.c.l.b16 %v4419
      %v4474 = vunpack.c.l.b16 %v4423
      %v4475 = vunpack.c.l.b16 %v4426
      %v4476 = vunpack.c.l.b16 %v4430
      %v4477 = vunpack.c.l.b16 %v4433
      %v4478 = vunpack.c.l.b16 %v4437
      %v4479 = vunpack.c.l.b16 %v4440
      %v4480 = vunpack.c.l.b16 %v4444
      %v4481 = vunpack.c.l.b16 %v4447
      %v4482 = vpack.c.b16 %v4451, %v4450
      %v4483 = vpack.c.b16 %v4453, %v4452
      %v4484 = vpack.c.b16 %v4455, %v4454
      %v4485 = vpack.c.b16 %v4457, %v4456
      %v4486 = vpack.c.b16 %v4459, %v4458
      %v4487 = vpack.c.b16 %v4461, %v4460
      %v4488 = vpack.c.b16 %v4463, %v4462
      %v4489 = vpack.c.b16 %v4465, %v4464
      %v4490 = vpack.c.b16 %v4467, %v4466
      %v4491 = vpack.c.b16 %v4469, %v4468
      %v4492 = vpack.c.b16 %v4471, %v4470
      %v4493 = vpack.c.b16 %v4473, %v4472
      %v4494 = vpack.c.b16 %v4475, %v4474
      %v4495 = vpack.c.b16 %v4477, %v4476
      %v4496 = vpack.c.b16 %v4479, %v4478
      %v4497 = vpack.c.b16 %v4481, %v4480
      %v4499 = vsel %vm669, %v4482, 0
      %v4502 = vsel %vm669, %v4483, 0
      %v4505 = vsel %vm669, %v4484, 0
      %v4508 = vsel %vm669, %v4485, 0
      %v4511 = vsel %vm669, %v4486, 0
      %v4514 = vsel %vm669, %v4487, 0
      %v4517 = vsel %vm669, %v4488, 0
      %v4520 = vsel %vm669, %v4489, 0
      %v4523 = vsel %vm669, %v4490, 0
      %v4526 = vsel %vm669, %v4491, 0
      %v4529 = vsel %vm669, %v4492, 0
      %v4532 = vsel %vm669, %v4493, 0
      %v4535 = vsel %vm669, %v4494, 0
      %v4538 = vsel %vm669, %v4495, 0
      %v4541 = vsel %vm669, %v4496, 0
      %v4544 = vsel %vm669, %v4497, 0
      %v4547 = vsel %vm718, %v4449, 0
      %4549 = vmatprep.subr.bf16.mxu0 0
      %4550 = vmatpush1.bf16.msra.mxu0 %v4547
      %4551 = vmatprep.subr.bf16.mxu0 0
      %4552 = vmatpush1.bf16.msra.mxu0 0
      %4553 = vmatprep.subr.bf16.mxu0 0
      %4554 = vmatpush1.bf16.msra.mxu0 0
      %4555 = vmatprep.subr.bf16.mxu0 0
      %4556 = vmatpush1.bf16.msra.mxu0 0
      %4557 = vmatprep.subr.bf16.mxu0 0
      %4558 = vmatpush1.bf16.msra.mxu0 0
      %4559 = vmatprep.subr.bf16.mxu0 0
      %4560 = vmatpush1.bf16.msra.mxu0 0
      %4561 = vmatprep.subr.bf16.mxu0 0
      %4562 = vmatpush1.bf16.msra.mxu0 0
      %4563 = vmatprep.subr.bf16.mxu0 0
      %4564 = vmatpush1.bf16.msra.mxu0 0
      %4565 = vmatprep.subr.bf16.mxu0 0
      %4566 = vmatpush1.bf16.msra.mxu0 0
      %4567 = vmatprep.subr.bf16.mxu0 0
      %4568 = vmatpush1.bf16.msra.mxu0 0
      %4569 = vmatprep.subr.bf16.mxu0 0
      %4570 = vmatpush1.bf16.msra.mxu0 0
      %4571 = vmatprep.subr.bf16.mxu0 0
      %4572 = vmatpush1.bf16.msra.mxu0 0
      %4573 = vmatprep.subr.bf16.mxu0 0
      %4574 = vmatpush1.bf16.msra.mxu0 0
      %4575 = vmatprep.subr.bf16.mxu0 0
      %4576 = vmatpush1.bf16.msra.mxu0 0
      %4577 = vmatprep.subr.bf16.mxu0 0
      %4578 = vmatpush1.bf16.msra.mxu0 0
      %4579 = vmatprep.subr.bf16.mxu0 0
      %4580 = vmatpush1.bf16.msra.mxu0 0
      %4581 = vmatprep.mubr.bf16.mxu0 0
      %4582 = vmatmul.mubr.bf16.gmra.mrb[0].mxu0 %v4499
      %v4583 = vpop.f32.mrb[0].mxu0
      %v4584 = vadd.f32 0.0, %v4583
      %v4585 = vpop.f32.mrb[0].mxu0
      %v4586 = vpop.f32.mrb[0].mxu0
      %v4587 = vadd.f32 0.0, %v4586
      %v4588 = vpop.f32.mrb[0].mxu0
      %4589 = vmatprep.mubr.bf16.mxu0 0
      %4590 = vmatmul.mubr.bf16.gmra.mrb[0].mxu0 %v4502
      %v4591 = vpop.f32.mrb[0].mxu0
      %v4592 = vadd.f32 0.0, %v4591
      %v4593 = vpop.f32.mrb[0].mxu0
      %v4594 = vpop.f32.mrb[0].mxu0
      %v4595 = vadd.f32 0.0, %v4594
      %v4596 = vpop.f32.mrb[0].mxu0
      %4597 = vmatprep.mubr.bf16.mxu0 0
      %4598 = vmatmul.mubr.bf16.gmra.mrb[0].mxu0 %v4505
      %v4599 = vpop.f32.mrb[0].mxu0
      %v4600 = vadd.f32 0.0, %v4599
      %v4601 = vpop.f32.mrb[0].mxu0
      %v4602 = vpop.f32.mrb[0].mxu0
      %v4603 = vadd.f32 0.0, %v4602
      %v4604 = vpop.f32.mrb[0].mxu0
      %4605 = vmatprep.mubr.bf16.mxu0 0
      %4606 = vmatmul.mubr.bf16.gmra.mrb[0].mxu0 %v4508
      %v4607 = vpop.f32.mrb[0].mxu0
      %v4608 = vadd.f32 0.0, %v4607
      %v4609 = vpop.f32.mrb[0].mxu0
      %v4610 = vpop.f32.mrb[0].mxu0
      %v4611 = vadd.f32 0.0, %v4610
      %v4612 = vpop.f32.mrb[0].mxu0
      %4613 = vmatprep.mubr.bf16.mxu0 0
      %4614 = vmatmul.mubr.bf16.gmra.mrb[0].mxu0 %v4511
      %v4615 = vpop.f32.mrb[0].mxu0
      %v4616 = vadd.f32 0.0, %v4615
      %v4617 = vpop.f32.mrb[0].mxu0
      %v4618 = vpop.f32.mrb[0].mxu0
      %v4619 = vadd.f32 0.0, %v4618
      %v4620 = vpop.f32.mrb[0].mxu0
      %4621 = vmatprep.mubr.bf16.mxu0 0
      %4622 = vmatmul.mubr.bf16.gmra.mrb[0].mxu0 %v4514
      %v4623 = vpop.f32.mrb[0].mxu0
      %v4624 = vadd.f32 0.0, %v4623
      %v4625 = vpop.f32.mrb[0].mxu0
      %v4626 = vpop.f32.mrb[0].mxu0
      %v4627 = vadd.f32 0.0, %v4626
      %v4628 = vpop.f32.mrb[0].mxu0
      %4629 = vmatprep.mubr.bf16.mxu0 0
      %4630 = vmatmul.mubr.bf16.gmra.mrb[0].mxu0 %v4517
      %v4631 = vpop.f32.mrb[0].mxu0
      %v4632 = vadd.f32 0.0, %v4631
      %v4633 = vpop.f32.mrb[0].mxu0
      %v4634 = vpop.f32.mrb[0].mxu0
      %v4635 = vadd.f32 0.0, %v4634
      %v4636 = vpop.f32.mrb[0].mxu0
      %4637 = vmatprep.mubr.bf16.mxu0 0
      %4638 = vmatmul.mubr.bf16.gmra.mrb[0].mxu0 %v4520
      %v4639 = vpop.f32.mrb[0].mxu0
      %v4640 = vadd.f32 0.0, %v4639
      %v4641 = vpop.f32.mrb[0].mxu0
      %v4642 = vpop.f32.mrb[0].mxu0
      %v4643 = vadd.f32 0.0, %v4642
      %v4644 = vpop.f32.mrb[0].mxu0
      %4645 = vmatprep.mubr.bf16.mxu0 0
      %4646 = vmatmul.mubr.bf16.gmra.mrb[0].mxu0 %v4523
      %v4647 = vpop.f32.mrb[0].mxu0
      %v4648 = vadd.f32 0.0, %v4647
      %v4649 = vpop.f32.mrb[0].mxu0
      %v4650 = vpop.f32.mrb[0].mxu0
      %v4651 = vadd.f32 0.0, %v4650
      %v4652 = vpop.f32.mrb[0].mxu0
      %4653 = vmatprep.mubr.bf16.mxu0 0
      %4654 = vmatmul.mubr.bf16.gmra.mrb[0].mxu0 %v4526
      %v4655 = vpop.f32.mrb[0].mxu0
      %v4656 = vadd.f32 0.0, %v4655
      %v4657 = vpop.f32.mrb[0].mxu0
      %v4658 = vpop.f32.mrb[0].mxu0
      %v4659 = vadd.f32 0.0, %v4658
      %v4660 = vpop.f32.mrb[0].mxu0
      %4661 = vmatprep.mubr.bf16.mxu0 0
      %4662 = vmatmul.mubr.bf16.gmra.mrb[0].mxu0 %v4529
      %v4663 = vpop.f32.mrb[0].mxu0
      %v4664 = vadd.f32 0.0, %v4663
      %v4665 = vpop.f32.mrb[0].mxu0
      %v4666 = vpop.f32.mrb[0].mxu0
      %v4667 = vadd.f32 0.0, %v4666
      %v4668 = vpop.f32.mrb[0].mxu0
      %4669 = vmatprep.mubr.bf16.mxu0 0
      %4670 = vmatmul.mubr.bf16.gmra.mrb[0].mxu0 %v4532
      %v4671 = vpop.f32.mrb[0].mxu0
      %v4672 = vadd.f32 0.0, %v4671
      %v4673 = vpop.f32.mrb[0].mxu0
      %v4674 = vpop.f32.mrb[0].mxu0
      %v4675 = vadd.f32 0.0, %v4674
      %v4676 = vpop.f32.mrb[0].mxu0
      %4677 = vmatprep.mubr.bf16.mxu0 0
      %4678 = vmatmul.mubr.bf16.gmra.mrb[0].mxu0 %v4535
      %v4679 = vpop.f32.mrb[0].mxu0
      %v4680 = vadd.f32 0.0, %v4679
      %v4681 = vpop.f32.mrb[0].mxu0
      %v4682 = vpop.f32.mrb[0].mxu0
      %v4683 = vadd.f32 0.0, %v4682
      %v4684 = vpop.f32.mrb[0].mxu0
      %4685 = vmatprep.mubr.bf16.mxu0 0
      %4686 = vmatmul.mubr.bf16.gmra.mrb[0].mxu0 %v4538
      %v4687 = vpop.f32.mrb[0].mxu0
      %v4688 = vadd.f32 0.0, %v4687
      %v4689 = vpop.f32.mrb[0].mxu0
      %v4690 = vpop.f32.mrb[0].mxu0
      %v4691 = vadd.f32 0.0, %v4690
      %v4692 = vpop.f32.mrb[0].mxu0
      %4693 = vmatprep.mubr.bf16.mxu0 0
      %4694 = vmatmul.mubr.bf16.gmra.mrb[0].mxu0 %v4541
      %v4695 = vpop.f32.mrb[0].mxu0
      %v4696 = vadd.f32 0.0, %v4695
      %v4697 = vpop.f32.mrb[0].mxu0
      %v4698 = vpop.f32.mrb[0].mxu0
      %v4699 = vadd.f32 0.0, %v4698
      %v4700 = vpop.f32.mrb[0].mxu0
      %4701 = vmatprep.mubr.bf16.mxu0 0
      %4702 = vmatmul.mubr.bf16.gmra.mrb[0].mxu0 %v4544
      %v4703 = vpop.f32.mrb[0].mxu0
      %v4704 = vadd.f32 0.0, %v4703
      %v4705 = vpop.f32.mrb[0].mxu0
      %v4706 = vpop.f32.mrb[0].mxu0
      %v4707 = vadd.f32 0.0, %v4706
      %v4708 = vpop.f32.mrb[0].mxu0
      %4709 = vdwg.mxu0
      %v4710 = vadd.f32 %v4240, %v4584
      %v4711 = vadd.f32 %v4241, %v4587
      %v4712 = vadd.f32 %v4242, %v4592
      %v4713 = vadd.f32 %v4243, %v4595
      %v4714 = vadd.f32 %v4244, %v4600
      %v4715 = vadd.f32 %v4245, %v4603
      %v4716 = vadd.f32 %v4246, %v4608
      %v4717 = vadd.f32 %v4247, %v4611
      %v4718 = vadd.f32 %v4248, %v4616
      %v4719 = vadd.f32 %v4249, %v4619
      %v4720 = vadd.f32 %v4250, %v4624
      %v4721 = vadd.f32 %v4251, %v4627
      %v4722 = vadd.f32 %v4252, %v4632
      %v4723 = vadd.f32 %v4253, %v4635
      %v4724 = vadd.f32 %v4254, %v4640
      %v4725 = vadd.f32 %v4255, %v4643
      %v4726 = vadd.f32 %v4256, %v4648
      %v4727 = vadd.f32 %v4257, %v4651
      %v4728 = vadd.f32 %v4258, %v4656
      %v4729 = vadd.f32 %v4259, %v4659
      %v4730 = vadd.f32 %v4260, %v4664
      %v4731 = vadd.f32 %v4261, %v4667
      %v4732 = vadd.f32 %v4262, %v4672
      %v4733 = vadd.f32 %v4263, %v4675
      %v4734 = vadd.f32 %v4264, %v4680
      %v4735 = vadd.f32 %v4265, %v4683
      %v4736 = vadd.f32 %v4266, %v4688
      %v4737 = vadd.f32 %v4267, %v4691
      %v4738 = vadd.f32 %v4268, %v4696
      %v4739 = vadd.f32 %v4269, %v4699
      %v4740 = vadd.f32 %v4270, %v4704
      %v4741 = vadd.f32 %v4271, %v4707
      %4742 = vst [vmem:[%s177] sm:$0xff] 0.0
      %4743 = vst [vmem:[%s177 + $0x8] sm:$0xff] 0.0
      %4744 = vst [vmem:[%s177 + $0x10] sm:$0x1] 0.0
      %4745 = vst [vmem:[%s177 + $0x18] sm:$0xff] 0.0
      %4746 = vst [vmem:[%s177 + $0x20] sm:$0xff] 0.0
      %4747 = vst [vmem:[%s177 + $0x28] sm:$0x1] 0.0
      %4748 = vst [vmem:[%s177 + $0x30] sm:$0xff] 0.0
      %4749 = vst [vmem:[%s177 + $0x38] sm:$0xff] 0.0
      %4750 = vst [vmem:[%s177 + $0x40] sm:$0x1] 0.0
      %4751 = vst [vmem:[%s177 + $0x48] sm:$0xff] 0.0
      %4752 = vst [vmem:[%s177 + $0x50] sm:$0xff] 0.0
      %4753 = vst [vmem:[%s177 + $0x58] sm:$0x1] 0.0
      %4754 = vst [vmem:[%s177 + $0x60] sm:$0xff] 0.0
      %4755 = vst [vmem:[%s177 + $0x68] sm:$0xff] 0.0
      %4756 = vst [vmem:[%s177 + $0x70] sm:$0x1] 0.0
      %4757 = vst [vmem:[%s177 + $0x78] sm:$0xff] 0.0
      %4758 = vst [vmem:[%s177 + $0x80] sm:$0xff] 0.0
      %4759 = vst [vmem:[%s177 + $0x88] sm:$0x1] 0.0
      %4760 = vst [vmem:[%s177 + $0x90] sm:$0xff] 0.0
      %4761 = vst [vmem:[%s177 + $0x98] sm:$0xff] 0.0
      %4762 = vst [vmem:[%s177 + $0xa0] sm:$0x1] 0.0
      %4763 = vst [vmem:[%s177 + $0xa8] sm:$0xff] 0.0
      %4764 = vst [vmem:[%s177 + $0xb0] sm:$0xff] 0.0
      %4765 = vst [vmem:[%s177 + $0xb8] sm:$0x1] 0.0
      %4766 = vst [vmem:[%s177 + $0xc0] sm:$0xff] 0.0
      %4767 = vst [vmem:[%s177 + $0xc8] sm:$0xff] 0.0
      %4768 = vst [vmem:[%s177 + $0xd0] sm:$0x1] 0.0
      %4769 = vst [vmem:[%s177 + $0xd8] sm:$0xff] 0.0
      %4770 = vst [vmem:[%s177 + $0xe0] sm:$0xff] 0.0
      %4771 = vst [vmem:[%s177 + $0xe8] sm:$0x1] 0.0
      %4772 = vst [vmem:[%s177 + $0xf0] sm:$0xff] 0.0
      %4773 = vst [vmem:[%s177 + $0xf8] sm:$0xff] 0.0
      %4774 = vst [vmem:[%s177 + $0x100] sm:$0x1] 0.0
      %4775 = vst [vmem:[%s177 + $0x108] sm:$0xff] 0.0
      %4776 = vst [vmem:[%s177 + $0x110] sm:$0xff] 0.0
      %4777 = vst [vmem:[%s177 + $0x118] sm:$0x1] 0.0
      %4778 = vst [vmem:[%s177 + $0x120] sm:$0xff] 0.0
      %4779 = vst [vmem:[%s177 + $0x128] sm:$0xff] 0.0
      %4780 = vst [vmem:[%s177 + $0x130] sm:$0x1] 0.0
      %4781 = vst [vmem:[%s177 + $0x138] sm:$0xff] 0.0
      %4782 = vst [vmem:[%s177 + $0x140] sm:$0xff] 0.0
      %4783 = vst [vmem:[%s177 + $0x148] sm:$0x1] 0.0
      %4784 = vst [vmem:[%s177 + $0x150] sm:$0xff] 0.0
      %4785 = vst [vmem:[%s177 + $0x158] sm:$0xff] 0.0
      %4786 = vst [vmem:[%s177 + $0x160] sm:$0x1] 0.0
      %4787 = vst [vmem:[%s177 + $0x168] sm:$0xff] 0.0
      %4788 = vst [vmem:[%s177 + $0x170] sm:$0xff] 0.0
      %4789 = vst [vmem:[%s177 + $0x178] sm:$0x1] 0.0
      %4790 = vst [vmem:[%s177 + $0x180] sm:$0xff] 0.0
      %4791 = vst [vmem:[%s177 + $0x188] sm:$0xff] 0.0
      %4792 = vst [vmem:[%s177 + $0x190] sm:$0x1] 0.0
      %4793 = vst [vmem:[%s177] sm:$0xff] %v4710
      %4794 = vst [vmem:[%s177 + $0x8] sm:$0xff] %v4711
      %4795 = vst [vmem:[%s177 + $0x18] sm:$0xff] %v4712
      %4796 = vst [vmem:[%s177 + $0x20] sm:$0xff] %v4713
      %4797 = vst [vmem:[%s177 + $0x30] sm:$0xff] %v4714
      %4798 = vst [vmem:[%s177 + $0x38] sm:$0xff] %v4715
      %4799 = vst [vmem:[%s177 + $0x48] sm:$0xff] %v4716
      %4800 = vst [vmem:[%s177 + $0x50] sm:$0xff] %v4717
      %4801 = vst [vmem:[%s177 + $0x60] sm:$0xff] %v4718
      %4802 = vst [vmem:[%s177 + $0x68] sm:$0xff] %v4719
      %4803 = vst [vmem:[%s177 + $0x78] sm:$0xff] %v4720
      %4804 = vst [vmem:[%s177 + $0x80] sm:$0xff] %v4721
      %4805 = vst [vmem:[%s177 + $0x90] sm:$0xff] %v4722
      %4806 = vst [vmem:[%s177 + $0x98] sm:$0xff] %v4723
      %4807 = vst [vmem:[%s177 + $0xa8] sm:$0xff] %v4724
      %4808 = vst [vmem:[%s177 + $0xb0] sm:$0xff] %v4725
      %4809 = vst [vmem:[%s177 + $0xc0] sm:$0xff] %v4726
      %4810 = vst [vmem:[%s177 + $0xc8] sm:$0xff] %v4727
      %4811 = vst [vmem:[%s177 + $0xd8] sm:$0xff] %v4728
      %4812 = vst [vmem:[%s177 + $0xe0] sm:$0xff] %v4729
      %4813 = vst [vmem:[%s177 + $0xf0] sm:$0xff] %v4730
      %4814 = vst [vmem:[%s177 + $0xf8] sm:$0xff] %v4731
      %4815 = vst [vmem:[%s177 + $0x108] sm:$0xff] %v4732
      %4816 = vst [vmem:[%s177 + $0x110] sm:$0xff] %v4733
      %4817 = vst [vmem:[%s177 + $0x120] sm:$0xff] %v4734
      %4818 = vst [vmem:[%s177 + $0x128] sm:$0xff] %v4735
      %4819 = vst [vmem:[%s177 + $0x138] sm:$0xff] %v4736
      %4820 = vst [vmem:[%s177 + $0x140] sm:$0xff] %v4737
      %4821 = vst [vmem:[%s177 + $0x150] sm:$0xff] %v4738
      %4822 = vst [vmem:[%s177 + $0x158] sm:$0xff] %v4739
      %4823 = vst [vmem:[%s177 + $0x168] sm:$0xff] %v4740
      %4824 = vst [vmem:[%s177 + $0x170] sm:$0xff] %v4741
      %v4825 = vadd.f32 %v4710, %v4711
      %v4826 = vadd.f32 %v4825, %v4712
      %v4827 = vadd.f32 %v4826, %v4713
      %v4828 = vadd.f32 %v4827, %v4714
      %v4829 = vadd.f32 %v4828, %v4715
      %v4830 = vadd.f32 %v4829, %v4716
      %v4831 = vadd.f32 %v4830, %v4717
      %v4832 = vadd.f32 %v4831, %v4718
      %v4833 = vadd.f32 %v4832, %v4719
      %v4834 = vadd.f32 %v4833, %v4720
      %v4835 = vadd.f32 %v4834, %v4721
      %v4836 = vadd.f32 %v4835, %v4722
      %v4837 = vadd.f32 %v4836, %v4723
      %v4838 = vadd.f32 %v4837, %v4724
      %v4839 = vadd.f32 %v4838, %v4725
      %v4840 = vadd.f32 %v4839, %v4726
      %v4841 = vadd.f32 %v4840, %v4727
      %v4842 = vadd.f32 %v4841, %v4728
      %v4843 = vadd.f32 %v4842, %v4729
      %v4844 = vadd.f32 %v4843, %v4730
      %v4845 = vadd.f32 %v4844, %v4731
      %v4846 = vadd.f32 %v4845, %v4732
      %v4847 = vadd.f32 %v4846, %v4733
      %v4848 = vadd.f32 %v4847, %v4734
      %v4849 = vadd.f32 %v4848, %v4735
      %v4850 = vadd.f32 %v4849, %v4736
      %v4851 = vadd.f32 %v4850, %v4737
      %v4852 = vadd.f32 %v4851, %v4738
      %v4853 = vadd.f32 %v4852, %v4739
      %v4854 = vadd.f32 %v4853, %v4740
      %v4855 = vadd.f32 %v4854, %v4741
      %v4856 = vrot.slane %v4855, 4
      %v4857 = vadd.f32 %v4855, %v4856
      %v4858 = vrot.slane %v4857, 2
      %v4859 = vadd.f32 %v4857, %v4858
      %v4860 = vrot.slane %v4859, 1
      %v4861 = vadd.f32 %v4859, %v4860
      %4862 = vst [vmem:[%s181] sm:$0x1] %v4861
      %v4863 = vmul.f32 %v4710, %v4710
      %v4864 = vmul.f32 %v4711, %v4711
      %v4865 = vmul.f32 %v4712, %v4712
      %v4866 = vmul.f32 %v4713, %v4713
      %v4867 = vmul.f32 %v4714, %v4714
      %v4868 = vmul.f32 %v4715, %v4715
      %v4869 = vmul.f32 %v4716, %v4716
      %v4870 = vmul.f32 %v4717, %v4717
      %v4871 = vmul.f32 %v4718, %v4718
      %v4872 = vmul.f32 %v4719, %v4719
      %v4873 = vmul.f32 %v4720, %v4720
      %v4874 = vmul.f32 %v4721, %v4721
      %v4875 = vmul.f32 %v4722, %v4722
      %v4876 = vmul.f32 %v4723, %v4723
      %v4877 = vmul.f32 %v4724, %v4724
      %v4878 = vmul.f32 %v4725, %v4725
      %v4879 = vmul.f32 %v4726, %v4726
      %v4880 = vmul.f32 %v4727, %v4727
      %v4881 = vmul.f32 %v4728, %v4728
      %v4882 = vmul.f32 %v4729, %v4729
      %v4883 = vmul.f32 %v4730, %v4730
      %v4884 = vmul.f32 %v4731, %v4731
      %v4885 = vmul.f32 %v4732, %v4732
      %v4886 = vmul.f32 %v4733, %v4733
      %v4887 = vmul.f32 %v4734, %v4734
      %v4888 = vmul.f32 %v4735, %v4735
      %v4889 = vmul.f32 %v4736, %v4736
      %v4890 = vmul.f32 %v4737, %v4737
      %v4891 = vmul.f32 %v4738, %v4738
      %v4892 = vmul.f32 %v4739, %v4739
      %v4893 = vmul.f32 %v4740, %v4740
      %v4894 = vmul.f32 %v4741, %v4741
      %v4895 = vadd.f32 %v4863, %v4864
      %v4896 = vadd.f32 %v4895, %v4865
      %v4897 = vadd.f32 %v4896, %v4866
      %v4898 = vadd.f32 %v4897, %v4867
      %v4899 = vadd.f32 %v4898, %v4868
      %v4900 = vadd.f32 %v4899, %v4869
      %v4901 = vadd.f32 %v4900, %v4870
      %v4902 = vadd.f32 %v4901, %v4871
      %v4903 = vadd.f32 %v4902, %v4872
      %v4904 = vadd.f32 %v4903, %v4873
      %v4905 = vadd.f32 %v4904, %v4874
      %v4906 = vadd.f32 %v4905, %v4875
      %v4907 = vadd.f32 %v4906, %v4876
      %v4908 = vadd.f32 %v4907, %v4877
      %v4909 = vadd.f32 %v4908, %v4878
      %v4910 = vadd.f32 %v4909, %v4879
      %v4911 = vadd.f32 %v4910, %v4880
      %v4912 = vadd.f32 %v4911, %v4881
      %v4913 = vadd.f32 %v4912, %v4882
      %v4914 = vadd.f32 %v4913, %v4883
      %v4915 = vadd.f32 %v4914, %v4884
      %v4916 = vadd.f32 %v4915, %v4885
      %v4917 = vadd.f32 %v4916, %v4886
      %v4918 = vadd.f32 %v4917, %v4887
      %v4919 = vadd.f32 %v4918, %v4888
      %v4920 = vadd.f32 %v4919, %v4889
      %v4921 = vadd.f32 %v4920, %v4890
      %v4922 = vadd.f32 %v4921, %v4891
      %v4923 = vadd.f32 %v4922, %v4892
      %v4924 = vadd.f32 %v4923, %v4893
      %v4925 = vadd.f32 %v4924, %v4894
      %v4926 = vrot.slane %v4925, 4
      %v4927 = vadd.f32 %v4925, %v4926
      %v4928 = vrot.slane %v4927, 2
      %v4929 = vadd.f32 %v4927, %v4928
      %v4930 = vrot.slane %v4929, 1
      %v4931 = vadd.f32 %v4929, %v4930
      %4932 = vst [vmem:[%s181 + $0x1] sm:$0x1] %v4931
      %p4933 = scmp.lt.s32.totalorder %s15, 1
      %s4934 = scalar_select %p4933, %s15, 1
      %s4935 = smul.addr %s4934, 51
      %s4936 = smul.addr %s4935, 8
      %s4937 = scalar_lea.vmem %s2, %s4936
      %p4938 = scmp.lt.s32.totalorder %s15, 1
      %s4939 = scalar_select %p4938, %s15, 1
      %s4940 = smul.addr %s4939, 2
      %s4941 = scalar_lea.vmem %s3, %s4940
      // Predicated region
      $region29: #{relation_module_forward.3} parent=27 // pred_check
        %p4942 = pneg %p80
      $region30: #{relation_module_forward.3} parent=27 // pred_check_branch
        %4944 = sbr.rel (%p4942) target = $region32
      $region31: #{relation_module_forward.3} parent=27 // pred_region
        _
      $region32: #{relation_module_forward.3} parent=27 // pred_fallthru
        _
      // Predicated region
      $region33: #{relation_module_forward.3} parent=27 // pred_check
        %p4945 = pneg %p106
      $region34: #{relation_module_forward.3} parent=27 // pred_check_branch
        %4947 = sbr.rel (%p4945) target = $region36
      $region35: #{relation_module_forward.3} parent=27 // pred_region
        _
      $region36: #{relation_module_forward.3} parent=27 // pred_fallthru
        _
    $region28: #{relation_module_forward.3} parent=5 // pred_fallthru
      _
    %p4948 = scmp.le.s32.totalorder 2, %s10
    // Predicated region
    $region37: #{relation_module_forward.3} parent=5 // pred_check
      %p4949 = pneg %p4948
    $region38: #{relation_module_forward.3} parent=5 // pred_check_branch
      %4951 = sbr.rel (%p4949) target = $region40
    $region39: #{relation_module_forward.3} parent=5 // pred_region
      %s4952 = ssub.s32 %s10, 2
      // Predicated region
      $region41: #{relation_module_forward.3} parent=39 // pred_check
        %p4953 = pneg %p86
      $region42: #{relation_module_forward.3} parent=39 // pred_check_branch
        %4955 = sbr.rel (%p4953) target = $region44
      $region43: #{relation_module_forward.3} parent=39 // pred_region
        %p4956 = scmp.lt.s32.totalorder %s16, 1
        %s4957 = scalar_select %p4956, %s16, 1
        %s4958 = smul.addr %s4957, 51
        %s4959 = smul.addr %s4958, 8
        %s4960 = scalar_lea.vmem %s2, %s4959
      $region44: #{relation_module_forward.3} parent=39 // pred_fallthru
        _
      // Predicated region
      $region45: #{relation_module_forward.3} parent=39 // pred_check
        %p4961 = pneg %p112
      $region46: #{relation_module_forward.3} parent=39 // pred_check_branch
        %4963 = sbr.rel (%p4961) target = $region48
      $region47: #{relation_module_forward.3} parent=39 // pred_region
        %p4964 = scmp.lt.s32.totalorder %s16, 1
        %s4965 = scalar_select %p4964, %s16, 1
        %s4966 = smul.addr %s4965, 2
        %s4967 = scalar_lea.vmem %s3, %s4966
      $region48: #{relation_module_forward.3} parent=39 // pred_fallthru
        _
    $region40: #{relation_module_forward.3} parent=5 // pred_fallthru
      _
  $region6: #{relation_module_forward.3} parent=0 // loop_footer
    %s14 = sadd.s32 1, %s10
  $region7: #{relation_module_forward.3} parent=0 // loop_footer_branch
    %9 = sbr.rel target = $region3
  $region8: #{relation_module_forward.3} parent=0 // loop_exit
    _

// kernel: relation_module_forward.4
$region0: #{relation_module_forward.4}
  #allocation0 [shape = 'u32[]', space=smem, size = 0x4, offset = 0x4, fixed_abs, tag = 'smem constant byte address 0x4 - core index']
  #allocation1 [shape = 'u32[144,128]{1,0:T(1,128)}', space=vmem, size = 0x12000, scoped, tag = 'internal scratch']
  #allocation2 [shape = 'bf16[17,17,128]{2,1,0:T(8,128)(2,1)}', space=vmem, size = 0x19800, scoped, tag = 'scratch operand']
  %s0 = inlined_call_operand.vmem [shape: f32[2,17,17,128], index: 0, kind: input, shape index: {}]
  %s1 = inlined_call_operand.vmem [shape: f32[1,128], index: 1, kind: input, shape index: {}]
  %s2 = inlined_call_operand.vmem [shape: f32[1,128], index: 2, kind: input, shape index: {}]
  %s3 = inlined_call_operand.vmem [shape: bf16[3,3,128,128], index: 3, kind: input, shape index: {}]
  %s4 = inlined_call_operand.vmem [shape: f32[2,4,256,128], index: 4, kind: output, shape index: {0}]
  %s5 = inlined_call_operand.vmem [shape: f32[2,2,128], index: 5, kind: output, shape index: {1}]
  %6 = xla_tuple %s4, %s5
  %s7 = sld [smem:[#allocation0]]
  $region57: #{relation_module_forward.4} parent=0
    _
  %s9 = ssub.s32 1, %s7
  %s10 = scalar_select 0, %s9, %s7
  loop: start=0, step=1, limit=4
  $region2: #{relation_module_forward.4} parent=0 // loop_pre_header
    _
  $region3: #{relation_module_forward.4} parent=0 // loop_header
    %s12 = sphi 0, %s16
    %p13 = scmp.ge.s32.totalorder %s12, 4
    %s22 = sphi 0, %s24
    %s25 = sphi 0, %s22
    %s26 = sphi 0, %s25
    %s42 = sphi 0, %s26
    %s46 = sphi 0, %s46
    %s48 = sphi 0, %s46
    %s49 = sphi 0, %s48
    %s63 = sphi 0, %s49
    %s67 = sphi 0, %s67
    %s69 = sphi 0, %s67
    %s70 = sphi 0, %s69
    %s84 = sphi 0, %s70
    %s88 = sphi 0, %s88
    %s90 = sphi 0, %s88
    %s91 = sphi 0, %s90
    %s105 = sphi 0, %s91
    %s111 = sphi 0, %s113
    %s114 = sphi 0, %s111
    %s115 = sphi 0, %s114
    %s131 = sphi 0, %s115
    %s137 = sphi 0, %s139
    %s140 = sphi 0, %s137
    %s141 = sphi 0, %s140
    %s157 = sphi 0, %s141
  $region4: #{relation_module_forward.4} parent=0 // loop_header_branch
    %15 = sbr.rel (%p13) target = $region8
  $region5: #{relation_module_forward.4} parent=0 // loop_body
    %s17 = ssub.s32 %s12, 1
    %s18 = ssub.s32 %s12, 2
    %s19 = sadd.s32 %s12, 1
    %s20 = ssub.s32 %s12, %s19
    %p21 = scmp.eq.s32.totalorder %s20, 0
    %s23 = sadd.s32 %s22, 1
    %s24 = scalar_select %p21, %s22, %s23
    %p27 = pneg %p21
    %p28 = scmp.eq.s32.totalorder %s12, 1
    %p29 = por %p27, %p28
    %p30 = scmp.ne.s32.totalorder %s22, %s25
    %p31 = scmp.eq.s32.totalorder %s12, 0
    %p32 = por %p30, %p31
    %p33 = scmp.ne.s32.totalorder %s22, %s25
    %p34 = scmp.eq.s32.totalorder %s17, 1
    %p35 = por %p33, %p34
    %p36 = scmp.ne.s32.totalorder %s25, %s26
    %p37 = scmp.eq.s32.totalorder %s17, 0
    %p38 = por %p36, %p37
    %p39 = scmp.ne.s32.totalorder %s25, %s26
    %p40 = scmp.eq.s32.totalorder %s18, 1
    %p41 = por %p39, %p40
    %p43 = scmp.ne.s32.totalorder %s26, %s42
    %p44 = scmp.eq.s32.totalorder %s18, 0
    %p45 = por %p43, %p44
    %s47 = sadd.s32 %s46, 1
    %p50 = scmp.eq.s32.totalorder %s12, 1
    %p51 = scmp.ne.s32.totalorder %s46, %s48
    %p52 = scmp.eq.s32.totalorder %s12, 0
    %p53 = por %p51, %p52
    %p54 = scmp.ne.s32.totalorder %s46, %s48
    %p55 = scmp.eq.s32.totalorder %s17, 1
    %p56 = por %p54, %p55
    %p57 = scmp.ne.s32.totalorder %s48, %s49
    %p58 = scmp.eq.s32.totalorder %s17, 0
    %p59 = por %p57, %p58
    %p60 = scmp.ne.s32.totalorder %s48, %s49
    %p61 = scmp.eq.s32.totalorder %s18, 1
    %p62 = por %p60, %p61
    %p64 = scmp.ne.s32.totalorder %s49, %s63
    %p65 = scmp.eq.s32.totalorder %s18, 0
    %p66 = por %p64, %p65
    %s68 = sadd.s32 %s67, 1
    %p71 = scmp.eq.s32.totalorder %s12, 1
    %p72 = scmp.ne.s32.totalorder %s67, %s69
    %p73 = scmp.eq.s32.totalorder %s12, 0
    %p74 = por %p72, %p73
    %p75 = scmp.ne.s32.totalorder %s67, %s69
    %p76 = scmp.eq.s32.totalorder %s17, 1
    %p77 = por %p75, %p76
    %p78 = scmp.ne.s32.totalorder %s69, %s70
    %p79 = scmp.eq.s32.totalorder %s17, 0
    %p80 = por %p78, %p79
    %p81 = scmp.ne.s32.totalorder %s69, %s70
    %p82 = scmp.eq.s32.totalorder %s18, 1
    %p83 = por %p81, %p82
    %p85 = scmp.ne.s32.totalorder %s70, %s84
    %p86 = scmp.eq.s32.totalorder %s18, 0
    %p87 = por %p85, %p86
    %s89 = sadd.s32 %s88, 1
    %p92 = scmp.eq.s32.totalorder %s12, 1
    %p93 = scmp.ne.s32.totalorder %s88, %s90
    %p94 = scmp.eq.s32.totalorder %s12, 0
    %p95 = por %p93, %p94
    %p96 = scmp.ne.s32.totalorder %s88, %s90
    %p97 = scmp.eq.s32.totalorder %s17, 1
    %p98 = por %p96, %p97
    %p99 = scmp.ne.s32.totalorder %s90, %s91
    %p100 = scmp.eq.s32.totalorder %s17, 0
    %p101 = por %p99, %p100
    %p102 = scmp.ne.s32.totalorder %s90, %s91
    %p103 = scmp.eq.s32.totalorder %s18, 1
    %p104 = por %p102, %p103
    %p106 = scmp.ne.s32.totalorder %s91, %s105
    %p107 = scmp.eq.s32.totalorder %s18, 0
    %p108 = por %p106, %p107
    %s109 = ssub.s32 %s12, %s19
    %p110 = scmp.eq.s32.totalorder %s109, 0
    %s112 = sadd.s32 %s111, 1
    %s113 = scalar_select %p110, %s111, %s112
    %p116 = pneg %p110
    %p117 = scmp.eq.s32.totalorder %s12, 1
    %p118 = por %p116, %p117
    %p119 = scmp.ne.s32.totalorder %s111, %s114
    %p120 = scmp.eq.s32.totalorder %s12, 0
    %p121 = por %p119, %p120
    %p122 = scmp.ne.s32.totalorder %s111, %s114
    %p123 = scmp.eq.s32.totalorder %s17, 1
    %p124 = por %p122, %p123
    %p125 = scmp.ne.s32.totalorder %s114, %s115
    %p126 = scmp.eq.s32.totalorder %s17, 0
    %p127 = por %p125, %p126
    %p128 = scmp.ne.s32.totalorder %s114, %s115
    %p129 = scmp.eq.s32.totalorder %s18, 1
    %p130 = por %p128, %p129
    %p132 = scmp.ne.s32.totalorder %s115, %s131
    %p133 = scmp.eq.s32.totalorder %s18, 0
    %p134 = por %p132, %p133
    %s135 = ssub.s32 %s12, %s19
    %p136 = scmp.eq.s32.totalorder %s135, 0
    %s138 = sadd.s32 %s137, 1
    %s139 = scalar_select %p136, %s137, %s138
    %p142 = pneg %p136
    %p143 = scmp.eq.s32.totalorder %s12, 1
    %p144 = por %p142, %p143
    %p145 = scmp.ne.s32.totalorder %s137, %s140
    %p146 = scmp.eq.s32.totalorder %s12, 0
    %p147 = por %p145, %p146
    %p148 = scmp.ne.s32.totalorder %s137, %s140
    %p149 = scmp.eq.s32.totalorder %s17, 1
    %p150 = por %p148, %p149
    %p151 = scmp.ne.s32.totalorder %s140, %s141
    %p152 = scmp.eq.s32.totalorder %s17, 0
    %p153 = por %p151, %p152
    %p154 = scmp.ne.s32.totalorder %s140, %s141
    %p155 = scmp.eq.s32.totalorder %s18, 1
    %p156 = por %p154, %p155
    %p158 = scmp.ne.s32.totalorder %s141, %s157
    %p159 = scmp.eq.s32.totalorder %s18, 0
    %p160 = por %p158, %p159
    %p161 = scmp.le.s32.totalorder 1, %s12
    %p162 = scmp.lt.s32.totalorder %s12, 3
    %p163 = pnand %p161, %p162
    %p164 = pneg %p163
    // Predicated region
    $region9: #{relation_module_forward.4} parent=5 // pred_check
      _
    $region10: #{relation_module_forward.4} parent=5 // pred_check_branch
      %166 = sbr.rel (%p163) target = $region12
    $region11: #{relation_module_forward.4} parent=5 // pred_region
      %s167 = ssub.s32 %s12, 1
      // Predicated region
      $region13: #{relation_module_forward.4} parent=11 // pred_check
        %p168 = pneg %p59
      $region14: #{relation_module_forward.4} parent=11 // pred_check_branch
        %170 = sbr.rel (%p168) target = $region16
      $region15: #{relation_module_forward.4} parent=11 // pred_region
        _
      $region16: #{relation_module_forward.4} parent=11 // pred_fallthru
        _
      // Predicated region
      $region17: #{relation_module_forward.4} parent=11 // pred_check
        %p171 = pneg %p80
      $region18: #{relation_module_forward.4} parent=11 // pred_check_branch
        %173 = sbr.rel (%p171) target = $region20
      $region19: #{relation_module_forward.4} parent=11 // pred_region
        _
      $region20: #{relation_module_forward.4} parent=11 // pred_fallthru
        _
      // Predicated region
      $region21: #{relation_module_forward.4} parent=11 // pred_check
        %p174 = pneg %p101
      $region22: #{relation_module_forward.4} parent=11 // pred_check_branch
        %176 = sbr.rel (%p174) target = $region24
      $region23: #{relation_module_forward.4} parent=11 // pred_region
        _
      $region24: #{relation_module_forward.4} parent=11 // pred_fallthru
        _
    $region12: #{relation_module_forward.4} parent=5 // pred_fallthru
      _
    %p177 = scmp.lt.s32.totalorder %s12, 2
    // Predicated region
    $region25: #{relation_module_forward.4} parent=5 // pred_check
      %p178 = pneg %p177
    $region26: #{relation_module_forward.4} parent=5 // pred_check_branch
      %180 = sbr.rel (%p178) target = $region28
    $region27: #{relation_module_forward.4} parent=5 // pred_region
      // Predicated region
      $region29: #{relation_module_forward.4} parent=27 // pred_check
        %p181 = pneg %p32
      $region30: #{relation_module_forward.4} parent=27 // pred_check_branch
        %183 = sbr.rel (%p181) target = $region32
      $region31: #{relation_module_forward.4} parent=27 // pred_region
        %p184 = scmp.lt.s32.totalorder %s12, 1
        %s185 = scalar_select %p184, %s12, 1
        %s186 = smul.addr %s185, 51
        %s187 = smul.addr %s186, 8
        %s188 = scalar_lea.vmem %s0, %s187
      $region32: #{relation_module_forward.4} parent=27 // pred_fallthru
        _
    $region28: #{relation_module_forward.4} parent=5 // pred_fallthru
      _
    %p189 = scmp.le.s32.totalorder 1, %s12
    %p190 = scmp.lt.s32.totalorder %s12, 3
    %p191 = pnand %p189, %p190
    %p192 = pneg %p191
    // Predicated region
    $region33: #{relation_module_forward.4} parent=5 // pred_check
      _
    $region34: #{relation_module_forward.4} parent=5 // pred_check_branch
      %194 = sbr.rel (%p191) target = $region36
    $region35: #{relation_module_forward.4} parent=5 // pred_region
      %s195 = ssub.s32 %s12, 1
      %p196 = scmp.lt.s32.totalorder %s17, 1
      %s197 = scalar_select %p196, %s17, 1
      %s198 = smul.addr %s197, 51
      %s199 = smul.addr %s198, 8
      %s200 = scalar_lea.vmem %s0, %s199
      %p201 = pneg %p38
      %p202 = pneg %p35
      %p203 = pneg %p59
      %p204 = pneg %p56
      %p205 = pneg %p80
      %p206 = pneg %p77
      %p207 = pneg %p101
      %p208 = pneg %p98
      %p209 = pneg %p127
      %p210 = pneg %p124
      %p211 = scmp.lt.s32.totalorder %s17, 1
      %s212 = scalar_select %p211, %s17, 1
      %s213 = smul.addr %s212, 128
      %s214 = smul.addr %s213, 8
      %s215 = scalar_lea.vmem %s4, %s214
      %p216 = pneg %p153
      %p217 = pneg %p150
      %p218 = scmp.lt.s32.totalorder %s17, 1
      %s219 = scalar_select %p218, %s17, 1
      %s220 = smul.addr %s219, 2
      %s221 = scalar_lea.vmem %s5, %s220
      %p222 = scmp.lt.s32.totalorder %s17, 1
      %s223 = scalar_select %p222, %s17, 1
      %s224 = smul.addr %s223, 51
      %s225 = smul.addr %s224, 8
      %s226 = scalar_lea.vmem %s0, %s225
      %p227 = scmp.lt.s32.totalorder %s17, 1
      %s228 = scalar_select %p227, %s17, 1
      %s229 = smul.addr %s228, 128
      %s230 = smul.addr %s229, 8
      %s231 = scalar_lea.vmem %s4, %s230
      %p232 = scmp.lt.s32.totalorder %s17, 1
      %s233 = scalar_select %p232, %s17, 1
      %s234 = smul.addr %s233, 2
      %s235 = scalar_lea.vmem %s5, %s234
      %v237 = vld [vmem:[%s226] sm:$0xff]
      %v238 = vld [vmem:[%s226 + $0x8] sm:$0xff]
      %v239 = vld [vmem:[%s226 + $0x10] sm:$0x1]
      %v240 = vld [vmem:[%s226 + $0x18] sm:$0xff]
      %v241 = vld [vmem:[%s226 + $0x20] sm:$0xff]
      %v242 = vld [vmem:[%s226 + $0x28] sm:$0x1]
      %v243 = vld [vmem:[%s226 + $0x30] sm:$0xff]
      %v244 = vld [vmem:[%s226 + $0x38] sm:$0xff]
      %v245 = vld [vmem:[%s226 + $0x40] sm:$0x1]
      %v246 = vld [vmem:[%s226 + $0x48] sm:$0xff]
      %v247 = vld [vmem:[%s226 + $0x50] sm:$0xff]
      %v248 = vld [vmem:[%s226 + $0x58] sm:$0x1]
      %v249 = vld [vmem:[%s226 + $0x60] sm:$0xff]
      %v250 = vld [vmem:[%s226 + $0x68] sm:$0xff]
      %v251 = vld [vmem:[%s226 + $0x70] sm:$0x1]
      %v252 = vld [vmem:[%s226 + $0x78] sm:$0xff]
      %v253 = vld [vmem:[%s226 + $0x80] sm:$0xff]
      %v254 = vld [vmem:[%s226 + $0x88] sm:$0x1]
      %v255 = vld [vmem:[%s226 + $0x90] sm:$0xff]
      %v256 = vld [vmem:[%s226 + $0x98] sm:$0xff]
      %v257 = vld [vmem:[%s226 + $0xa0] sm:$0x1]
      %v258 = vld [vmem:[%s226 + $0xa8] sm:$0xff]
      %v259 = vld [vmem:[%s226 + $0xb0] sm:$0xff]
      %v260 = vld [vmem:[%s226 + $0xb8] sm:$0x1]
      %v261 = vld [vmem:[%s226 + $0xc0] sm:$0xff]
      %v262 = vld [vmem:[%s226 + $0xc8] sm:$0xff]
      %v263 = vld [vmem:[%s226 + $0xd0] sm:$0x1]
      %v264 = vld [vmem:[%s226 + $0xd8] sm:$0xff]
      %v265 = vld [vmem:[%s226 + $0xe0] sm:$0xff]
      %v266 = vld [vmem:[%s226 + $0xe8] sm:$0x1]
      %v267 = vld [vmem:[%s226 + $0xf0] sm:$0xff]
      %v268 = vld [vmem:[%s226 + $0xf8] sm:$0xff]
      %v269 = vld [vmem:[%s226 + $0x100] sm:$0x1]
      %v270 = vld [vmem:[%s226 + $0x108] sm:$0xff]
      %v271 = vld [vmem:[%s226 + $0x110] sm:$0xff]
      %v272 = vld [vmem:[%s226 + $0x118] sm:$0x1]
      %v273 = vld [vmem:[%s226 + $0x120] sm:$0xff]
      %v274 = vld [vmem:[%s226 + $0x128] sm:$0xff]
      %v275 = vld [vmem:[%s226 + $0x130] sm:$0x1]
      %v276 = vld [vmem:[%s226 + $0x138] sm:$0xff]
      %v277 = vld [vmem:[%s226 + $0x140] sm:$0xff]
      %v278 = vld [vmem:[%s226 + $0x148] sm:$0x1]
      %v279 = vld [vmem:[%s226 + $0x150] sm:$0xff]
      %v280 = vld [vmem:[%s226 + $0x158] sm:$0xff]
      %v281 = vld [vmem:[%s226 + $0x160] sm:$0x1]
      %v282 = vld [vmem:[%s226 + $0x168] sm:$0xff]
      %v283 = vld [vmem:[%s226 + $0x170] sm:$0xff]
      %v284 = vld [vmem:[%s226 + $0x178] sm:$0x1]
      %v285 = vld [vmem:[%s226 + $0x180] sm:$0xff]
      %v286 = vld [vmem:[%s226 + $0x188] sm:$0xff]
      %v287 = vld [vmem:[%s226 + $0x190] sm:$0x1]
      %v288 = vld [vmem:[%s1] sm:$0x1]
      %v290 = vlaneseq
      %v291 = vshrl.u32 %v290, 7
      %v292 = vsub.s32 0, %v291
      %v293 = vrot.slane %v288, %v292
      %v295 = vmul.f32 %v237, %v293
      %v296 = vmul.f32 %v238, %v293
      %v297 = vmul.f32 %v239, %v293
      %v298 = vmul.f32 %v240, %v293
      %v299 = vmul.f32 %v241, %v293
      %v300 = vmul.f32 %v242, %v293
      %v301 = vmul.f32 %v243, %v293
      %v302 = vmul.f32 %v244, %v293
      %v303 = vmul.f32 %v245, %v293
      %v304 = vmul.f32 %v246, %v293
      %v305 = vmul.f32 %v247, %v293
      %v306 = vmul.f32 %v248, %v293
      %v307 = vmul.f32 %v249, %v293
      %v308 = vmul.f32 %v250, %v293
      %v309 = vmul.f32 %v251, %v293
      %v310 = vmul.f32 %v252, %v293
      %v311 = vmul.f32 %v253, %v293
      %v312 = vmul.f32 %v254, %v293
      %v313 = vmul.f32 %v255, %v293
      %v314 = vmul.f32 %v256, %v293
      %v315 = vmul.f32 %v257, %v293
      %v316 = vmul.f32 %v258, %v293
      %v317 = vmul.f32 %v259, %v293
      %v318 = vmul.f32 %v260, %v293
      %v319 = vmul.f32 %v261, %v293
      %v320 = vmul.f32 %v262, %v293
      %v321 = vmul.f32 %v263, %v293
      %v322 = vmul.f32 %v264, %v293
      %v323 = vmul.f32 %v265, %v293
      %v324 = vmul.f32 %v266, %v293
      %v325 = vmul.f32 %v267, %v293
      %v326 = vmul.f32 %v268, %v293
      %v327 = vmul.f32 %v269, %v293
      %v328 = vmul.f32 %v270, %v293
      %v329 = vmul.f32 %v271, %v293
      %v330 = vmul.f32 %v272, %v293
      %v331 = vmul.f32 %v273, %v293
      %v332 = vmul.f32 %v274, %v293
      %v333 = vmul.f32 %v275, %v293
      %v334 = vmul.f32 %v276, %v293
      %v335 = vmul.f32 %v277, %v293
      %v336 = vmul.f32 %v278, %v293
      %v337 = vmul.f32 %v279, %v293
      %v338 = vmul.f32 %v280, %v293
      %v339 = vmul.f32 %v281, %v293
      %v340 = vmul.f32 %v282, %v293
      %v341 = vmul.f32 %v283, %v293
      %v342 = vmul.f32 %v284, %v293
      %v343 = vmul.f32 %v285, %v293
      %v344 = vmul.f32 %v286, %v293
      %v345 = vmul.f32 %v287, %v293
      %v346 = vld [vmem:[%s2] sm:$0x1]
      %v348 = vlaneseq
      %v349 = vshrl.u32 %v348, 7
      %v350 = vsub.s32 0, %v349
      %v351 = vrot.slane %v346, %v350
      %v353 = vadd.f32 %v295, %v351
      %v354 = vadd.f32 %v296, %v351
      %v355 = vadd.f32 %v297, %v351
      %v356 = vadd.f32 %v298, %v351
      %v357 = vadd.f32 %v299, %v351
      %v358 = vadd.f32 %v300, %v351
      %v359 = vadd.f32 %v301, %v351
      %v360 = vadd.f32 %v302, %v351
      %v361 = vadd.f32 %v303, %v351
      %v362 = vadd.f32 %v304, %v351
      %v363 = vadd.f32 %v305, %v351
      %v364 = vadd.f32 %v306, %v351
      %v365 = vadd.f32 %v307, %v351
      %v366 = vadd.f32 %v308, %v351
      %v367 = vadd.f32 %v309, %v351
      %v368 = vadd.f32 %v310, %v351
      %v369 = vadd.f32 %v311, %v351
      %v370 = vadd.f32 %v312, %v351
      %v371 = vadd.f32 %v313, %v351
      %v372 = vadd.f32 %v314, %v351
      %v373 = vadd.f32 %v315, %v351
      %v374 = vadd.f32 %v316, %v351
      %v375 = vadd.f32 %v317, %v351
      %v376 = vadd.f32 %v318, %v351
      %v377 = vadd.f32 %v319, %v351
      %v378 = vadd.f32 %v320, %v351
      %v379 = vadd.f32 %v321, %v351
      %v380 = vadd.f32 %v322, %v351
      %v381 = vadd.f32 %v323, %v351
      %v382 = vadd.f32 %v324, %v351
      %v383 = vadd.f32 %v325, %v351
      %v384 = vadd.f32 %v326, %v351
      %v385 = vadd.f32 %v327, %v351
      %v386 = vadd.f32 %v328, %v351
      %v387 = vadd.f32 %v329, %v351
      %v388 = vadd.f32 %v330, %v351
      %v389 = vadd.f32 %v331, %v351
      %v390 = vadd.f32 %v332, %v351
      %v391 = vadd.f32 %v333, %v351
      %v392 = vadd.f32 %v334, %v351
      %v393 = vadd.f32 %v335, %v351
      %v394 = vadd.f32 %v336, %v351
      %v395 = vadd.f32 %v337, %v351
      %v396 = vadd.f32 %v338, %v351
      %v397 = vadd.f32 %v339, %v351
      %v398 = vadd.f32 %v340, %v351
      %v399 = vadd.f32 %v341, %v351
      %v400 = vadd.f32 %v342, %v351
      %v401 = vadd.f32 %v343, %v351
      %v402 = vadd.f32 %v344, %v351
      %v403 = vadd.f32 %v345, %v351
      %v404 = vmax.f32 %v353, 0.0
      %v405 = vmax.f32 %v354, 0.0
      %v406 = vmax.f32 %v355, 0.0
      %v407 = vmax.f32 %v356, 0.0
      %v408 = vmax.f32 %v357, 0.0
      %v409 = vmax.f32 %v358, 0.0
      %v410 = vmax.f32 %v359, 0.0
      %v411 = vmax.f32 %v360, 0.0
      %v412 = vmax.f32 %v361, 0.0
      %v413 = vmax.f32 %v362, 0.0
      %v414 = vmax.f32 %v363, 0.0
      %v415 = vmax.f32 %v364, 0.0
      %v416 = vmax.f32 %v365, 0.0
      %v417 = vmax.f32 %v366, 0.0
      %v418 = vmax.f32 %v367, 0.0
      %v419 = vmax.f32 %v368, 0.0
      %v420 = vmax.f32 %v369, 0.0
      %v421 = vmax.f32 %v370, 0.0
      %v422 = vmax.f32 %v371, 0.0
      %v423 = vmax.f32 %v372, 0.0
      %v424 = vmax.f32 %v373, 0.0
      %v425 = vmax.f32 %v374, 0.0
      %v426 = vmax.f32 %v375, 0.0
      %v427 = vmax.f32 %v376, 0.0
      %v428 = vmax.f32 %v377, 0.0
      %v429 = vmax.f32 %v378, 0.0
      %v430 = vmax.f32 %v379, 0.0
      %v431 = vmax.f32 %v380, 0.0
      %v432 = vmax.f32 %v381, 0.0
      %v433 = vmax.f32 %v382, 0.0
      %v434 = vmax.f32 %v383, 0.0
      %v435 = vmax.f32 %v384, 0.0
      %v436 = vmax.f32 %v385, 0.0
      %v437 = vmax.f32 %v386, 0.0
      %v438 = vmax.f32 %v387, 0.0
      %v439 = vmax.f32 %v388, 0.0
      %v440 = vmax.f32 %v389, 0.0
      %v441 = vmax.f32 %v390, 0.0
      %v442 = vmax.f32 %v391, 0.0
      %v443 = vmax.f32 %v392, 0.0
      %v444 = vmax.f32 %v393, 0.0
      %v445 = vmax.f32 %v394, 0.0
      %v446 = vmax.f32 %v395, 0.0
      %v447 = vmax.f32 %v396, 0.0
      %v448 = vmax.f32 %v397, 0.0
      %v449 = vmax.f32 %v398, 0.0
      %v450 = vmax.f32 %v399, 0.0
      %v451 = vmax.f32 %v400, 0.0
      %v452 = vmax.f32 %v401, 0.0
      %v453 = vmax.f32 %v402, 0.0
      %v454 = vmax.f32 %v403, 0.0
      %v455 = vlaneseq
      %v456 = vshrl.u32 %v455, 7
      %v457 = vadd.s32 %v456, 8
      %v458 = vadd.s32 %v456, 16
      %vm459 = vcmp.lt.s32.totalorder %v456, 16
      %vm460 = vcmp.lt.s32.totalorder %v457, 16
      %vm461 = vcmp.lt.s32.totalorder %v458, 16
      %vm462 = vmand 1, %vm459
      %vm463 = vmand 1, %vm460
      %vm464 = vmand 1, %vm461
      %vm465 = vmand 0, %vm459
      %vm466 = vmand 0, %vm460
      %vm467 = vmand 0, %vm461
      %v468 = vsel %vm462, 1, 0
      %v469 = vsel %vm463, 1, 0
      %v470 = vsel %vm464, 1, 0
      %v471 = vsel %vm465, 1, 0
      %v472 = vsel %vm466, 1, 0
      %v473 = vsel %vm467, 1, 0
      %vm474 = vcmp.eq.s32.totalorder %v468, 1
      %vm475 = vcmp.eq.s32.totalorder %v469, 1
      %vm476 = vcmp.eq.s32.totalorder %v470, 1
      %vm477 = vcmp.eq.s32.totalorder %v471, 1
      %vm478 = vcmp.eq.s32.totalorder %v472, 1
      %vm479 = vcmp.eq.s32.totalorder %v473, 1
      %v480 = vsel %vm474, %v404, 0.0
      %v481 = vsel %vm475, %v405, 0.0
      %v482 = vsel %vm476, %v406, 0.0
      %v483 = vsel %vm474, %v407, 0.0
      %v484 = vsel %vm475, %v408, 0.0
      %v485 = vsel %vm476, %v409, 0.0
      %v486 = vsel %vm474, %v410, 0.0
      %v487 = vsel %vm475, %v411, 0.0
      %v488 = vsel %vm476, %v412, 0.0
      %v489 = vsel %vm474, %v413, 0.0
      %v490 = vsel %vm475, %v414, 0.0
      %v491 = vsel %vm476, %v415, 0.0
      %v492 = vsel %vm474, %v416, 0.0
      %v493 = vsel %vm475, %v417, 0.0
      %v494 = vsel %vm476, %v418, 0.0
      %v495 = vsel %vm474, %v419, 0.0
      %v496 = vsel %vm475, %v420, 0.0
      %v497 = vsel %vm476, %v421, 0.0
      %v498 = vsel %vm474, %v422, 0.0
      %v499 = vsel %vm475, %v423, 0.0
      %v500 = vsel %vm476, %v424, 0.0
      %v501 = vsel %vm474, %v425, 0.0
      %v502 = vsel %vm475, %v426, 0.0
      %v503 = vsel %vm476, %v427, 0.0
      %v504 = vsel %vm474, %v428, 0.0
      %v505 = vsel %vm475, %v429, 0.0
      %v506 = vsel %vm476, %v430, 0.0
      %v507 = vsel %vm474, %v431, 0.0
      %v508 = vsel %vm475, %v432, 0.0
      %v509 = vsel %vm476, %v433, 0.0
      %v510 = vsel %vm474, %v434, 0.0
      %v511 = vsel %vm475, %v435, 0.0
      %v512 = vsel %vm476, %v436, 0.0
      %v513 = vsel %vm474, %v437, 0.0
      %v514 = vsel %vm475, %v438, 0.0
      %v515 = vsel %vm476, %v439, 0.0
      %v516 = vsel %vm474, %v440, 0.0
      %v517 = vsel %vm475, %v441, 0.0
      %v518 = vsel %vm476, %v442, 0.0
      %v519 = vsel %vm474, %v443, 0.0
      %v520 = vsel %vm475, %v444, 0.0
      %v521 = vsel %vm476, %v445, 0.0
      %v522 = vsel %vm474, %v446, 0.0
      %v523 = vsel %vm475, %v447, 0.0
      %v524 = vsel %vm476, %v448, 0.0
      %v525 = vsel %vm474, %v449, 0.0
      %v526 = vsel %vm475, %v450, 0.0
      %v527 = vsel %vm476, %v451, 0.0
      %v528 = vsel %vm477, %v452, 0.0
      %v529 = vsel %vm478, %v453, 0.0
      %v530 = vsel %vm479, %v454, 0.0
      %v531 = vpack.c.bf16 %v481, %v480
      %v532 = vpack.c.bf16 %v482, %v482
      %v533 = vpack.c.bf16 %v484, %v483
      %v534 = vpack.c.bf16 %v485, %v485
      %v535 = vpack.c.bf16 %v487, %v486
      %v536 = vpack.c.bf16 %v488, %v488
      %v537 = vpack.c.bf16 %v490, %v489
      %v538 = vpack.c.bf16 %v491, %v491
      %v539 = vpack.c.bf16 %v493, %v492
      %v540 = vpack.c.bf16 %v494, %v494
      %v541 = vpack.c.bf16 %v496, %v495
      %v542 = vpack.c.bf16 %v497, %v497
      %v543 = vpack.c.bf16 %v499, %v498
      %v544 = vpack.c.bf16 %v500, %v500
      %v545 = vpack.c.bf16 %v502, %v501
      %v546 = vpack.c.bf16 %v503, %v503
      %v547 = vpack.c.bf16 %v505, %v504
      %v548 = vpack.c.bf16 %v506, %v506
      %v549 = vpack.c.bf16 %v508, %v507
      %v550 = vpack.c.bf16 %v509, %v509
      %v551 = vpack.c.bf16 %v511, %v510
      %v552 = vpack.c.bf16 %v512, %v512
      %v553 = vpack.c.bf16 %v514, %v513
      %v554 = vpack.c.bf16 %v515, %v515
      %v555 = vpack.c.bf16 %v517, %v516
      %v556 = vpack.c.bf16 %v518, %v518
      %v557 = vpack.c.bf16 %v520, %v519
      %v558 = vpack.c.bf16 %v521, %v521
      %v559 = vpack.c.bf16 %v523, %v522
      %v560 = vpack.c.bf16 %v524, %v524
      %v561 = vpack.c.bf16 %v526, %v525
      %v562 = vpack.c.bf16 %v527, %v527
      %v563 = vpack.c.bf16 %v529, %v528
      %v564 = vpack.c.bf16 %v530, %v530
      %v599 = vunpack.c.l.b16 %v531
      %v600 = vunpack.c.h.b16 %v531
      %v601 = vunpack.c.l.b16 %v532
      %v602 = vunpack.c.l.b16 %v533
      %v603 = vunpack.c.h.b16 %v533
      %v604 = vunpack.c.l.b16 %v534
      %v605 = vunpack.c.l.b16 %v535
      %v606 = vunpack.c.h.b16 %v535
      %v607 = vunpack.c.l.b16 %v536
      %v608 = vunpack.c.l.b16 %v537
      %v609 = vunpack.c.h.b16 %v537
      %v610 = vunpack.c.l.b16 %v538
      %v611 = vunpack.c.l.b16 %v539
      %v612 = vunpack.c.h.b16 %v539
      %v613 = vunpack.c.l.b16 %v540
      %v614 = vunpack.c.l.b16 %v541
      %v615 = vunpack.c.h.b16 %v541
      %v616 = vunpack.c.l.b16 %v542
      %v617 = vunpack.c.l.b16 %v543
      %v618 = vunpack.c.h.b16 %v543
      %v619 = vunpack.c.l.b16 %v544
      %v620 = vunpack.c.l.b16 %v545
      %v621 = vunpack.c.h.b16 %v545
      %v622 = vunpack.c.l.b16 %v546
      %v623 = vunpack.c.l.b16 %v547
      %v624 = vunpack.c.h.b16 %v547
      %v625 = vunpack.c.l.b16 %v548
      %v626 = vunpack.c.l.b16 %v549
      %v627 = vunpack.c.h.b16 %v549
      %v628 = vunpack.c.l.b16 %v550
      %v629 = vunpack.c.l.b16 %v551
      %v630 = vunpack.c.h.b16 %v551
      %v631 = vunpack.c.l.b16 %v552
      %v632 = vunpack.c.l.b16 %v553
      %v633 = vunpack.c.h.b16 %v553
      %v634 = vunpack.c.l.b16 %v554
      %v635 = vunpack.c.l.b16 %v555
      %v636 = vunpack.c.h.b16 %v555
      %v637 = vunpack.c.l.b16 %v556
      %v638 = vunpack.c.l.b16 %v557
      %v639 = vunpack.c.h.b16 %v557
      %v640 = vunpack.c.l.b16 %v558
      %v641 = vunpack.c.l.b16 %v559
      %v642 = vunpack.c.h.b16 %v559
      %v643 = vunpack.c.l.b16 %v560
      %v644 = vunpack.c.l.b16 %v561
      %v645 = vunpack.c.h.b16 %v561
      %v646 = vunpack.c.l.b16 %v562
      %v647 = vunpack.c.l.b16 %v563
      %v648 = vunpack.c.h.b16 %v563
      %v649 = vunpack.c.l.b16 %v564
      %v650 = vpack.c.b16 %v599, %v599
      %v651 = vpack.c.b16 %v600, %v600
      %v652 = vpack.c.b16 %v601, %v601
      %v653 = vpack.c.b16 %v602, %v602
      %v654 = vpack.c.b16 %v603, %v603
      %v655 = vpack.c.b16 %v604, %v604
      %v656 = vpack.c.b16 %v605, %v605
      %v657 = vpack.c.b16 %v606, %v606
      %v658 = vpack.c.b16 %v607, %v607
      %v659 = vpack.c.b16 %v608, %v608
      %v660 = vpack.c.b16 %v609, %v609
      %v661 = vpack.c.b16 %v610, %v610
      %v662 = vpack.c.b16 %v611, %v611
      %v663 = vpack.c.b16 %v612, %v612
      %v664 = vpack.c.b16 %v613, %v613
      %v665 = vpack.c.b16 %v614, %v614
      %v666 = vpack.c.b16 %v615, %v615
      %v667 = vpack.c.b16 %v616, %v616
      %v668 = vpack.c.b16 %v617, %v617
      %v669 = vpack.c.b16 %v618, %v618
      %v670 = vpack.c.b16 %v619, %v619
      %v671 = vpack.c.b16 %v620, %v620
      %v672 = vpack.c.b16 %v621, %v621
      %v673 = vpack.c.b16 %v622, %v622
      %v674 = vpack.c.b16 %v623, %v623
      %v675 = vpack.c.b16 %v624, %v624
      %v676 = vpack.c.b16 %v625, %v625
      %v677 = vpack.c.b16 %v626, %v626
      %v678 = vpack.c.b16 %v627, %v627
      %v679 = vpack.c.b16 %v628, %v628
      %v680 = vpack.c.b16 %v629, %v629
      %v681 = vpack.c.b16 %v630, %v630
      %v682 = vpack.c.b16 %v631, %v631
      %v683 = vpack.c.b16 %v632, %v632
      %v684 = vpack.c.b16 %v633, %v633
      %v685 = vpack.c.b16 %v634, %v634
      %v686 = vpack.c.b16 %v635, %v635
      %v687 = vpack.c.b16 %v636, %v636
      %v688 = vpack.c.b16 %v637, %v637
      %v689 = vpack.c.b16 %v638, %v638
      %v690 = vpack.c.b16 %v639, %v639
      %v691 = vpack.c.b16 %v640, %v640
      %v692 = vpack.c.b16 %v641, %v641
      %v693 = vpack.c.b16 %v642, %v642
      %v694 = vpack.c.b16 %v643, %v643
      %v695 = vpack.c.b16 %v644, %v644
      %v696 = vpack.c.b16 %v645, %v645
      %v697 = vpack.c.b16 %v646, %v646
      %v698 = vpack.c.b16 %v647, %v647
      %v699 = vpack.c.b16 %v648, %v648
      %v700 = vpack.c.b16 %v649, %v649
      %752 = vst [vmem:[#allocation2] sm:$0xf] %v650
      %753 = vst [vmem:[#allocation2 + $0x4] sm:$0xf] %v651
      %vm754 = vcmask 1040384
      %vm755 = vsmask.f32 256
      %vm756 = vmand %vm754, %vm755
      %v757 = vld [vmem:[#allocation2 + $0x8] sm:$0x1]
      %v758 = vsel %vm756, %v652, %v757
      %759 = vst [vmem:[#allocation2 + $0x8] sm:$0x1] %v758
      %760 = vst [vmem:[#allocation2 + $0xc] sm:$0xf] %v653
      %761 = vst [vmem:[#allocation2 + $0x10] sm:$0xf] %v654
      %v762 = vld [vmem:[#allocation2 + $0x14] sm:$0x1]
      %v763 = vsel %vm756, %v655, %v762
      %764 = vst [vmem:[#allocation2 + $0x14] sm:$0x1] %v763
      %765 = vst [vmem:[#allocation2 + $0x18] sm:$0xf] %v656
      %766 = vst [vmem:[#allocation2 + $0x1c] sm:$0xf] %v657
      %v767 = vld [vmem:[#allocation2 + $0x20] sm:$0x1]
      %v768 = vsel %vm756, %v658, %v767
      %769 = vst [vmem:[#allocation2 + $0x20] sm:$0x1] %v768
      %770 = vst [vmem:[#allocation2 + $0x24] sm:$0xf] %v659
      %771 = vst [vmem:[#allocation2 + $0x28] sm:$0xf] %v660
      %v772 = vld [vmem:[#allocation2 + $0x2c] sm:$0x1]
      %v773 = vsel %vm756, %v661, %v772
      %774 = vst [vmem:[#allocation2 + $0x2c] sm:$0x1] %v773
      %775 = vst [vmem:[#allocation2 + $0x30] sm:$0xf] %v662
      %776 = vst [vmem:[#allocation2 + $0x34] sm:$0xf] %v663
      %v777 = vld [vmem:[#allocation2 + $0x38] sm:$0x1]
      %v778 = vsel %vm756, %v664, %v777
      %779 = vst [vmem:[#allocation2 + $0x38] sm:$0x1] %v778
      %780 = vst [vmem:[#allocation2 + $0x3c] sm:$0xf] %v665
      %781 = vst [vmem:[#allocation2 + $0x40] sm:$0xf] %v666
      %v782 = vld [vmem:[#allocation2 + $0x44] sm:$0x1]
      %v783 = vsel %vm756, %v667, %v782
      %784 = vst [vmem:[#allocation2 + $0x44] sm:$0x1] %v783
      %785 = vst [vmem:[#allocation2 + $0x48] sm:$0xf] %v668
      %786 = vst [vmem:[#allocation2 + $0x4c] sm:$0xf] %v669
      %v787 = vld [vmem:[#allocation2 + $0x50] sm:$0x1]
      %v788 = vsel %vm756, %v670, %v787
      %789 = vst [vmem:[#allocation2 + $0x50] sm:$0x1] %v788
      %790 = vst [vmem:[#allocation2 + $0x54] sm:$0xf] %v671
      %791 = vst [vmem:[#allocation2 + $0x58] sm:$0xf] %v672
      %v792 = vld [vmem:[#allocation2 + $0x5c] sm:$0x1]
      %v793 = vsel %vm756, %v673, %v792
      %794 = vst [vmem:[#allocation2 + $0x5c] sm:$0x1] %v793
      %795 = vst [vmem:[#allocation2 + $0x60] sm:$0xf] %v674
      %796 = vst [vmem:[#allocation2 + $0x64] sm:$0xf] %v675
      %v797 = vld [vmem:[#allocation2 + $0x68] sm:$0x1]
      %v798 = vsel %vm756, %v676, %v797
      %799 = vst [vmem:[#allocation2 + $0x68] sm:$0x1] %v798
      %800 = vst [vmem:[#allocation2 + $0x6c] sm:$0xf] %v677
      %801 = vst [vmem:[#allocation2 + $0x70] sm:$0xf] %v678
      %v802 = vld [vmem:[#allocation2 + $0x74] sm:$0x1]
      %v803 = vsel %vm756, %v679, %v802
      %804 = vst [vmem:[#allocation2 + $0x74] sm:$0x1] %v803
      %805 = vst [vmem:[#allocation2 + $0x78] sm:$0xf] %v680
      %806 = vst [vmem:[#allocation2 + $0x7c] sm:$0xf] %v681
      %v807 = vld [vmem:[#allocation2 + $0x80] sm:$0x1]
      %v808 = vsel %vm756, %v682, %v807
      %809 = vst [vmem:[#allocation2 + $0x80] sm:$0x1] %v808
      %810 = vst [vmem:[#allocation2 + $0x84] sm:$0xf] %v683
      %811 = vst [vmem:[#allocation2 + $0x88] sm:$0xf] %v684
      %v812 = vld [vmem:[#allocation2 + $0x8c] sm:$0x1]
      %v813 = vsel %vm756, %v685, %v812
      %814 = vst [vmem:[#allocation2 + $0x8c] sm:$0x1] %v813
      %815 = vst [vmem:[#allocation2 + $0x90] sm:$0xf] %v686
      %816 = vst [vmem:[#allocation2 + $0x94] sm:$0xf] %v687
      %v817 = vld [vmem:[#allocation2 + $0x98] sm:$0x1]
      %v818 = vsel %vm756, %v688, %v817
      %819 = vst [vmem:[#allocation2 + $0x98] sm:$0x1] %v818
      %820 = vst [vmem:[#allocation2 + $0x9c] sm:$0xf] %v689
      %821 = vst [vmem:[#allocation2 + $0xa0] sm:$0xf] %v690
      %v822 = vld [vmem:[#allocation2 + $0xa4] sm:$0x1]
      %v823 = vsel %vm756, %v691, %v822
      %824 = vst [vmem:[#allocation2 + $0xa4] sm:$0x1] %v823
      %825 = vst [vmem:[#allocation2 + $0xa8] sm:$0xf] %v692
      %826 = vst [vmem:[#allocation2 + $0xac] sm:$0xf] %v693
      %v827 = vld [vmem:[#allocation2 + $0xb0] sm:$0x1]
      %v828 = vsel %vm756, %v694, %v827
      %829 = vst [vmem:[#allocation2 + $0xb0] sm:$0x1] %v828
      %830 = vst [vmem:[#allocation2 + $0xb4] sm:$0xf] %v695
      %831 = vst [vmem:[#allocation2 + $0xb8] sm:$0xf] %v696
      %v832 = vld [vmem:[#allocation2 + $0xbc] sm:$0x1]
      %v833 = vsel %vm756, %v697, %v832
      %834 = vst [vmem:[#allocation2 + $0xbc] sm:$0x1] %v833
      %835 = vst [vmem:[#allocation2 + $0xc0] sm:$0xf] %v698
      %836 = vst [vmem:[#allocation2 + $0xc4] sm:$0xf] %v699
      %v837 = vld [vmem:[#allocation2 + $0xc8] sm:$0x1]
      %v838 = vsel %vm756, %v700, %v837
      %839 = vst [vmem:[#allocation2 + $0xc8] sm:$0x1] %v838
      %v840 = vld [vmem:[#allocation2] sm:$0xf]
      %v841 = vld [vmem:[#allocation2 + $0x4] sm:$0xf]
      %v842 = vld [vmem:[#allocation2 + $0xc] sm:$0xf]
      %v843 = vld [vmem:[#allocation2 + $0x10] sm:$0xf]
      %v844 = vld [vmem:[#allocation2 + $0x18] sm:$0xf]
      %v845 = vld [vmem:[#allocation2 + $0x1c] sm:$0xf]
      %v846 = vld [vmem:[#allocation2 + $0x24] sm:$0xf]
      %v847 = vld [vmem:[#allocation2 + $0x28] sm:$0xf]
      %v848 = vld [vmem:[#allocation2 + $0x30] sm:$0xf]
      %v849 = vld [vmem:[#allocation2 + $0x34] sm:$0xf]
      %v850 = vld [vmem:[#allocation2 + $0x3c] sm:$0xf]
      %v851 = vld [vmem:[#allocation2 + $0x40] sm:$0xf]
      %v852 = vld [vmem:[#allocation2 + $0x48] sm:$0xf]
      %v853 = vld [vmem:[#allocation2 + $0x4c] sm:$0xf]
      %v854 = vld [vmem:[#allocation2 + $0x54] sm:$0xf]
      %v855 = vld [vmem:[#allocation2 + $0x58] sm:$0xf]
      %v856 = vld [vmem:[#allocation2 + $0x60] sm:$0xf]
      %v857 = vld [vmem:[#allocation2 + $0x64] sm:$0xf]
      %v858 = vld [vmem:[#allocation2 + $0x6c] sm:$0xf]
      %v859 = vld [vmem:[#allocation2 + $0x70] sm:$0xf]
      %v860 = vld [vmem:[#allocation2 + $0x78] sm:$0xf]
      %v861 = vld [vmem:[#allocation2 + $0x7c] sm:$0xf]
      %v862 = vld [vmem:[#allocation2 + $0x84] sm:$0xf]
      %v863 = vld [vmem:[#allocation2 + $0x88] sm:$0xf]
      %v864 = vld [vmem:[#allocation2 + $0x90] sm:$0xf]
      %v865 = vld [vmem:[#allocation2 + $0x94] sm:$0xf]
      %v866 = vld [vmem:[#allocation2 + $0x9c] sm:$0xf]
      %v867 = vld [vmem:[#allocation2 + $0xa0] sm:$0xf]
      %v868 = vld [vmem:[#allocation2 + $0xa8] sm:$0xf]
      %v869 = vld [vmem:[#allocation2 + $0xac] sm:$0xf]
      %v870 = vld [vmem:[#allocation2 + $0xb4] sm:$0xf]
      %v871 = vld [vmem:[#allocation2 + $0xb8] sm:$0xf]
      %s872 = scalar_lea.vmem %s3, 256
      %v873 = vld [vmem:[%s872] sm:$0xf]
      %v874 = vld [vmem:[%s872 + $0x4] sm:$0xf]
      %v875 = vld [vmem:[%s872 + $0x8] sm:$0xf]
      %v876 = vld [vmem:[%s872 + $0xc] sm:$0xf]
      %v877 = vld [vmem:[%s872 + $0x10] sm:$0xf]
      %v878 = vld [vmem:[%s872 + $0x14] sm:$0xf]
      %v879 = vld [vmem:[%s872 + $0x18] sm:$0xf]
      %v880 = vld [vmem:[%s872 + $0x1c] sm:$0xf]
      %v881 = vld [vmem:[%s872 + $0x20] sm:$0xf]
      %v882 = vld [vmem:[%s872 + $0x24] sm:$0xf]
      %v883 = vld [vmem:[%s872 + $0x28] sm:$0xf]
      %v884 = vld [vmem:[%s872 + $0x2c] sm:$0xf]
      %v885 = vld [vmem:[%s872 + $0x30] sm:$0xf]
      %v886 = vld [vmem:[%s872 + $0x34] sm:$0xf]
      %v887 = vld [vmem:[%s872 + $0x38] sm:$0xf]
      %v888 = vld [vmem:[%s872 + $0x3c] sm:$0xf]
      %v921 = vunpack.c.l.b16 %v840
      %v922 = vunpack.c.l.b16 %v841
      %v923 = vunpack.c.l.b16 %v842
      %v924 = vunpack.c.l.b16 %v843
      %v925 = vunpack.c.l.b16 %v844
      %v926 = vunpack.c.l.b16 %v845
      %v927 = vunpack.c.l.b16 %v846
      %v928 = vunpack.c.l.b16 %v847
      %v929 = vunpack.c.l.b16 %v848
      %v930 = vunpack.c.l.b16 %v849
      %v931 = vunpack.c.l.b16 %v850
      %v932 = vunpack.c.l.b16 %v851
      %v933 = vunpack.c.l.b16 %v852
      %v934 = vunpack.c.l.b16 %v853
      %v935 = vunpack.c.l.b16 %v854
      %v936 = vunpack.c.l.b16 %v855
      %v937 = vunpack.c.l.b16 %v856
      %v938 = vunpack.c.l.b16 %v857
      %v939 = vunpack.c.l.b16 %v858
      %v940 = vunpack.c.l.b16 %v859
      %v941 = vunpack.c.l.b16 %v860
      %v942 = vunpack.c.l.b16 %v861
      %v943 = vunpack.c.l.b16 %v862
      %v944 = vunpack.c.l.b16 %v863
      %v945 = vunpack.c.l.b16 %v864
      %v946 = vunpack.c.l.b16 %v865
      %v947 = vunpack.c.l.b16 %v866
      %v948 = vunpack.c.l.b16 %v867
      %v949 = vunpack.c.l.b16 %v868
      %v950 = vunpack.c.l.b16 %v869
      %v951 = vunpack.c.l.b16 %v870
      %v952 = vunpack.c.l.b16 %v871
      %v953 = vpack.c.b16 %v922, %v921
      %v954 = vpack.c.b16 %v924, %v923
      %v955 = vpack.c.b16 %v926, %v925
      %v956 = vpack.c.b16 %v928, %v927
      %v957 = vpack.c.b16 %v930, %v929
      %v958 = vpack.c.b16 %v932, %v931
      %v959 = vpack.c.b16 %v934, %v933
      %v960 = vpack.c.b16 %v936, %v935
      %v961 = vpack.c.b16 %v938, %v937
      %v962 = vpack.c.b16 %v940, %v939
      %v963 = vpack.c.b16 %v942, %v941
      %v964 = vpack.c.b16 %v944, %v943
      %v965 = vpack.c.b16 %v946, %v945
      %v966 = vpack.c.b16 %v948, %v947
      %v967 = vpack.c.b16 %v950, %v949
      %v968 = vpack.c.b16 %v952, %v951
      %v1001 = vunpack.c.l.b16 %v873
      %v1002 = vunpack.c.l.b16 %v874
      %v1003 = vunpack.c.l.b16 %v875
      %v1004 = vunpack.c.l.b16 %v876
      %v1005 = vunpack.c.l.b16 %v877
      %v1006 = vunpack.c.l.b16 %v878
      %v1007 = vunpack.c.l.b16 %v879
      %v1008 = vunpack.c.l.b16 %v880
      %v1009 = vunpack.c.l.b16 %v881
      %v1010 = vunpack.c.l.b16 %v882
      %v1011 = vunpack.c.l.b16 %v883
      %v1012 = vunpack.c.l.b16 %v884
      %v1013 = vunpack.c.l.b16 %v885
      %v1014 = vunpack.c.l.b16 %v886
      %v1015 = vunpack.c.l.b16 %v887
      %v1016 = vunpack.c.l.b16 %v888
      %v1017 = vpack.c.b16 %v1002, %v1001
      %v1018 = vpack.c.b16 %v1004, %v1003
      %v1019 = vpack.c.b16 %v1006, %v1005
      %v1020 = vpack.c.b16 %v1008, %v1007
      %v1021 = vpack.c.b16 %v1010, %v1009
      %v1022 = vpack.c.b16 %v1012, %v1011
      %v1023 = vpack.c.b16 %v1014, %v1013
      %v1024 = vpack.c.b16 %v1016, %v1015
      %1033 = vmatprep.subr.bf16.mxu0 0
      %1034 = vmatpush1.bf16.msra.mxu0 %v1017
      %1035 = vmatprep.subr.bf16.mxu0 0
      %1036 = vmatpush1.bf16.msra.mxu0 %v1018
      %1037 = vmatprep.subr.bf16.mxu0 0
      %1038 = vmatpush1.bf16.msra.mxu0 %v1019
      %1039 = vmatprep.subr.bf16.mxu0 0
      %1040 = vmatpush1.bf16.msra.mxu0 %v1020
      %1041 = vmatprep.subr.bf16.mxu0 0
      %1042 = vmatpush1.bf16.msra.mxu0 %v1021
      %1043 = vmatprep.subr.bf16.mxu0 0
      %1044 = vmatpush1.bf16.msra.mxu0 %v1022
      %1045 = vmatprep.subr.bf16.mxu0 0
      %1046 = vmatpush1.bf16.msra.mxu0 %v1023
      %1047 = vmatprep.subr.bf16.mxu0 0
      %1048 = vmatpush1.bf16.msra.mxu0 %v1024
      %1049 = vmatprep.subr.bf16.mxu0 0
      %1050 = vmatpush1.bf16.msra.mxu0 0
      %1051 = vmatprep.subr.bf16.mxu0 0
      %1052 = vmatpush1.bf16.msra.mxu0 0
      %1053 = vmatprep.subr.bf16.mxu0 0
      %1054 = vmatpush1.bf16.msra.mxu0 0
      %1055 = vmatprep.subr.bf16.mxu0 0
      %1056 = vmatpush1.bf16.msra.mxu0 0
      %1057 = vmatprep.subr.bf16.mxu0 0
      %1058 = vmatpush1.bf16.msra.mxu0 0
      %1059 = vmatprep.subr.bf16.mxu0 0
      %1060 = vmatpush1.bf16.msra.mxu0 0
      %1061 = vmatprep.subr.bf16.mxu0 0
      %1062 = vmatpush1.bf16.msra.mxu0 0
      %1063 = vmatprep.subr.bf16.mxu0 0
      %1064 = vmatpush1.bf16.msra.mxu0 0
      %1065 = vmatprep.mubr.bf16.mxu0 0
      %1066 = vmatmul.mubr.bf16.gmra.mrb[0].mxu0 %v953
      %v1067 = vpop.f32.mrb[0].mxu0
      %v1068 = vadd.f32 0.0, %v1067
      %v1069 = vpop.f32.mrb[0].mxu0
      %v1070 = vpop.f32.mrb[0].mxu0
      %v1071 = vadd.f32 0.0, %v1070
      %v1072 = vpop.f32.mrb[0].mxu0
      %1073 = vmatprep.mubr.bf16.mxu0 0
      %1074 = vmatmul.mubr.bf16.gmra.mrb[0].mxu0 %v954
      %v1075 = vpop.f32.mrb[0].mxu0
      %v1076 = vadd.f32 0.0, %v1075
      %v1077 = vpop.f32.mrb[0].mxu0
      %v1078 = vpop.f32.mrb[0].mxu0
      %v1079 = vadd.f32 0.0, %v1078
      %v1080 = vpop.f32.mrb[0].mxu0
      %1081 = vmatprep.mubr.bf16.mxu0 0
      %1082 = vmatmul.mubr.bf16.gmra.mrb[0].mxu0 %v955
      %v1083 = vpop.f32.mrb[0].mxu0
      %v1084 = vadd.f32 0.0, %v1083
      %v1085 = vpop.f32.mrb[0].mxu0
      %v1086 = vpop.f32.mrb[0].mxu0
      %v1087 = vadd.f32 0.0, %v1086
      %v1088 = vpop.f32.mrb[0].mxu0
      %1089 = vmatprep.mubr.bf16.mxu0 0
      %1090 = vmatmul.mubr.bf16.gmra.mrb[0].mxu0 %v956
      %v1091 = vpop.f32.mrb[0].mxu0
      %v1092 = vadd.f32 0.0, %v1091
      %v1093 = vpop.f32.mrb[0].mxu0
      %v1094 = vpop.f32.mrb[0].mxu0
      %v1095 = vadd.f32 0.0, %v1094
      %v1096 = vpop.f32.mrb[0].mxu0
      %1097 = vmatprep.mubr.bf16.mxu0 0
      %1098 = vmatmul.mubr.bf16.gmra.mrb[0].mxu0 %v957
      %v1099 = vpop.f32.mrb[0].mxu0
      %v1100 = vadd.f32 0.0, %v1099
      %v1101 = vpop.f32.mrb[0].mxu0
      %v1102 = vpop.f32.mrb[0].mxu0
      %v1103 = vadd.f32 0.0, %v1102
      %v1104 = vpop.f32.mrb[0].mxu0
      %1105 = vmatprep.mubr.bf16.mxu0 0
      %1106 = vmatmul.mubr.bf16.gmra.mrb[0].mxu0 %v958
      %v1107 = vpop.f32.mrb[0].mxu0
      %v1108 = vadd.f32 0.0, %v1107
      %v1109 = vpop.f32.mrb[0].mxu0
      %v1110 = vpop.f32.mrb[0].mxu0
      %v1111 = vadd.f32 0.0, %v1110
      %v1112 = vpop.f32.mrb[0].mxu0
      %1113 = vmatprep.mubr.bf16.mxu0 0
      %1114 = vmatmul.mubr.bf16.gmra.mrb[0].mxu0 %v959
      %v1115 = vpop.f32.mrb[0].mxu0
      %v1116 = vadd.f32 0.0, %v1115
      %v1117 = vpop.f32.mrb[0].mxu0
      %v1118 = vpop.f32.mrb[0].mxu0
      %v1119 = vadd.f32 0.0, %v1118
      %v1120 = vpop.f32.mrb[0].mxu0
      %1121 = vmatprep.mubr.bf16.mxu0 0
      %1122 = vmatmul.mubr.bf16.gmra.mrb[0].mxu0 %v960
      %v1123 = vpop.f32.mrb[0].mxu0
      %v1124 = vadd.f32 0.0, %v1123
      %v1125 = vpop.f32.mrb[0].mxu0
      %v1126 = vpop.f32.mrb[0].mxu0
      %v1127 = vadd.f32 0.0, %v1126
      %v1128 = vpop.f32.mrb[0].mxu0
      %1129 = vmatprep.mubr.bf16.mxu0 0
      %1130 = vmatmul.mubr.bf16.gmra.mrb[0].mxu0 %v961
      %v1131 = vpop.f32.mrb[0].mxu0
      %v1132 = vadd.f32 0.0, %v1131
      %v1133 = vpop.f32.mrb[0].mxu0
      %v1134 = vpop.f32.mrb[0].mxu0
      %v1135 = vadd.f32 0.0, %v1134
      %v1136 = vpop.f32.mrb[0].mxu0
      %1137 = vmatprep.mubr.bf16.mxu0 0
      %1138 = vmatmul.mubr.bf16.gmra.mrb[0].mxu0 %v962
      %v1139 = vpop.f32.mrb[0].mxu0
      %v1140 = vadd.f32 0.0, %v1139
      %v1141 = vpop.f32.mrb[0].mxu0
      %v1142 = vpop.f32.mrb[0].mxu0
      %v1143 = vadd.f32 0.0, %v1142
      %v1144 = vpop.f32.mrb[0].mxu0
      %1145 = vmatprep.mubr.bf16.mxu0 0
      %1146 = vmatmul.mubr.bf16.gmra.mrb[0].mxu0 %v963
      %v1147 = vpop.f32.mrb[0].mxu0
      %v1148 = vadd.f32 0.0, %v1147
      %v1149 = vpop.f32.mrb[0].mxu0
      %v1150 = vpop.f32.mrb[0].mxu0
      %v1151 = vadd.f32 0.0, %v1150
      %v1152 = vpop.f32.mrb[0].mxu0
      %1153 = vmatprep.mubr.bf16.mxu0 0
      %1154 = vmatmul.mubr.bf16.gmra.mrb[0].mxu0 %v964
      %v1155 = vpop.f32.mrb[0].mxu0
      %v1156 = vadd.f32 0.0, %v1155
      %v1157 = vpop.f32.mrb[0].mxu0
      %v1158 = vpop.f32.mrb[0].mxu0
      %v1159 = vadd.f32 0.0, %v1158
      %v1160 = vpop.f32.mrb[0].mxu0
      %1161 = vmatprep.mubr.bf16.mxu0 0
      %1162 = vmatmul.mubr.bf16.gmra.mrb[0].mxu0 %v965
      %v1163 = vpop.f32.mrb[0].mxu0
      %v1164 = vadd.f32 0.0, %v1163
      %v1165 = vpop.f32.mrb[0].mxu0
      %v1166 = vpop.f32.mrb[0].mxu0
      %v1167 = vadd.f32 0.0, %v1166
      %v1168 = vpop.f32.mrb[0].mxu0
      %1169 = vmatprep.mubr.bf16.mxu0 0
      %1170 = vmatmul.mubr.bf16.gmra.mrb[0].mxu0 %v966
      %v1171 = vpop.f32.mrb[0].mxu0
      %v1172 = vadd.f32 0.0, %v1171
      %v1173 = vpop.f32.mrb[0].mxu0
      %v1174 = vpop.f32.mrb[0].mxu0
      %v1175 = vadd.f32 0.0, %v1174
      %v1176 = vpop.f32.mrb[0].mxu0
      %1177 = vmatprep.mubr.bf16.mxu0 0
      %1178 = vmatmul.mubr.bf16.gmra.mrb[0].mxu0 %v967
      %v1179 = vpop.f32.mrb[0].mxu0
      %v1180 = vadd.f32 0.0, %v1179
      %v1181 = vpop.f32.mrb[0].mxu0
      %v1182 = vpop.f32.mrb[0].mxu0
      %v1183 = vadd.f32 0.0, %v1182
      %v1184 = vpop.f32.mrb[0].mxu0
      %1185 = vmatprep.mubr.bf16.mxu0 0
      %1186 = vmatmul.mubr.bf16.gmra.mrb[0].mxu0 %v968
      %v1187 = vpop.f32.mrb[0].mxu0
      %v1188 = vadd.f32 0.0, %v1187
      %v1189 = vpop.f32.mrb[0].mxu0
      %v1190 = vpop.f32.mrb[0].mxu0
      %v1191 = vadd.f32 0.0, %v1190
      %v1192 = vpop.f32.mrb[0].mxu0
      %1193 = vdwg.mxu0
      %1194 = vst [vmem:[%s231] sm:$0xff] %v1068
      %1195 = vst [vmem:[%s231 + $0x8] sm:$0xff] %v1071
      %1196 = vst [vmem:[%s231 + $0x10] sm:$0xff] %v1076
      %1197 = vst [vmem:[%s231 + $0x18] sm:$0xff] %v1079
      %1198 = vst [vmem:[%s231 + $0x20] sm:$0xff] %v1084
      %1199 = vst [vmem:[%s231 + $0x28] sm:$0xff] %v1087
      %1200 = vst [vmem:[%s231 + $0x30] sm:$0xff] %v1092
      %1201 = vst [vmem:[%s231 + $0x38] sm:$0xff] %v1095
      %1202 = vst [vmem:[%s231 + $0x40] sm:$0xff] %v1100
      %1203 = vst [vmem:[%s231 + $0x48] sm:$0xff] %v1103
      %1204 = vst [vmem:[%s231 + $0x50] sm:$0xff] %v1108
      %1205 = vst [vmem:[%s231 + $0x58] sm:$0xff] %v1111
      %1206 = vst [vmem:[%s231 + $0x60] sm:$0xff] %v1116
      %1207 = vst [vmem:[%s231 + $0x68] sm:$0xff] %v1119
      %1208 = vst [vmem:[%s231 + $0x70] sm:$0xff] %v1124
      %1209 = vst [vmem:[%s231 + $0x78] sm:$0xff] %v1127
      %1210 = vst [vmem:[%s231 + $0x80] sm:$0xff] %v1132
      %1211 = vst [vmem:[%s231 + $0x88] sm:$0xff] %v1135
      %1212 = vst [vmem:[%s231 + $0x90] sm:$0xff] %v1140
      %1213 = vst [vmem:[%s231 + $0x98] sm:$0xff] %v1143
      %1214 = vst [vmem:[%s231 + $0xa0] sm:$0xff] %v1148
      %1215 = vst [vmem:[%s231 + $0xa8] sm:$0xff] %v1151
      %1216 = vst [vmem:[%s231 + $0xb0] sm:$0xff] %v1156
      %1217 = vst [vmem:[%s231 + $0xb8] sm:$0xff] %v1159
      %1218 = vst [vmem:[%s231 + $0xc0] sm:$0xff] %v1164
      %1219 = vst [vmem:[%s231 + $0xc8] sm:$0xff] %v1167
      %1220 = vst [vmem:[%s231 + $0xd0] sm:$0xff] %v1172
      %1221 = vst [vmem:[%s231 + $0xd8] sm:$0xff] %v1175
      %1222 = vst [vmem:[%s231 + $0xe0] sm:$0xff] %v1180
      %1223 = vst [vmem:[%s231 + $0xe8] sm:$0xff] %v1183
      %1224 = vst [vmem:[%s231 + $0xf0] sm:$0xff] %v1188
      %1225 = vst [vmem:[%s231 + $0xf8] sm:$0xff] %v1191
      %v1226 = vadd.f32 %v1068, %v1071
      %v1227 = vadd.f32 %v1226, %v1076
      %v1228 = vadd.f32 %v1227, %v1079
      %v1229 = vadd.f32 %v1228, %v1084
      %v1230 = vadd.f32 %v1229, %v1087
      %v1231 = vadd.f32 %v1230, %v1092
      %v1232 = vadd.f32 %v1231, %v1095
      %v1233 = vadd.f32 %v1232, %v1100
      %v1234 = vadd.f32 %v1233, %v1103
      %v1235 = vadd.f32 %v1234, %v1108
      %v1236 = vadd.f32 %v1235, %v1111
      %v1237 = vadd.f32 %v1236, %v1116
      %v1238 = vadd.f32 %v1237, %v1119
      %v1239 = vadd.f32 %v1238, %v1124
      %v1240 = vadd.f32 %v1239, %v1127
      %v1241 = vadd.f32 %v1240, %v1132
      %v1242 = vadd.f32 %v1241, %v1135
      %v1243 = vadd.f32 %v1242, %v1140
      %v1244 = vadd.f32 %v1243, %v1143
      %v1245 = vadd.f32 %v1244, %v1148
      %v1246 = vadd.f32 %v1245, %v1151
      %v1247 = vadd.f32 %v1246, %v1156
      %v1248 = vadd.f32 %v1247, %v1159
      %v1249 = vadd.f32 %v1248, %v1164
      %v1250 = vadd.f32 %v1249, %v1167
      %v1251 = vadd.f32 %v1250, %v1172
      %v1252 = vadd.f32 %v1251, %v1175
      %v1253 = vadd.f32 %v1252, %v1180
      %v1254 = vadd.f32 %v1253, %v1183
      %v1255 = vadd.f32 %v1254, %v1188
      %v1256 = vadd.f32 %v1255, %v1191
      %v1257 = vrot.slane %v1256, 4
      %v1258 = vadd.f32 %v1256, %v1257
      %v1259 = vrot.slane %v1258, 2
      %v1260 = vadd.f32 %v1258, %v1259
      %v1261 = vrot.slane %v1260, 1
      %v1262 = vadd.f32 %v1260, %v1261
      %v1263 = vadd.f32 %v1262, 0.0
      %v1264 = vmul.f32 %v1068, %v1068
      %v1265 = vmul.f32 %v1071, %v1071
      %v1266 = vmul.f32 %v1076, %v1076
      %v1267 = vmul.f32 %v1079, %v1079
      %v1268 = vmul.f32 %v1084, %v1084
      %v1269 = vmul.f32 %v1087, %v1087
      %v1270 = vmul.f32 %v1092, %v1092
      %v1271 = vmul.f32 %v1095, %v1095
      %v1272 = vmul.f32 %v1100, %v1100
      %v1273 = vmul.f32 %v1103, %v1103
      %v1274 = vmul.f32 %v1108, %v1108
      %v1275 = vmul.f32 %v1111, %v1111
      %v1276 = vmul.f32 %v1116, %v1116
      %v1277 = vmul.f32 %v1119, %v1119
      %v1278 = vmul.f32 %v1124, %v1124
      %v1279 = vmul.f32 %v1127, %v1127
      %v1280 = vmul.f32 %v1132, %v1132
      %v1281 = vmul.f32 %v1135, %v1135
      %v1282 = vmul.f32 %v1140, %v1140
      %v1283 = vmul.f32 %v1143, %v1143
      %v1284 = vmul.f32 %v1148, %v1148
      %v1285 = vmul.f32 %v1151, %v1151
      %v1286 = vmul.f32 %v1156, %v1156
      %v1287 = vmul.f32 %v1159, %v1159
      %v1288 = vmul.f32 %v1164, %v1164
      %v1289 = vmul.f32 %v1167, %v1167
      %v1290 = vmul.f32 %v1172, %v1172
      %v1291 = vmul.f32 %v1175, %v1175
      %v1292 = vmul.f32 %v1180, %v1180
      %v1293 = vmul.f32 %v1183, %v1183
      %v1294 = vmul.f32 %v1188, %v1188
      %v1295 = vmul.f32 %v1191, %v1191
      %v1296 = vadd.f32 %v1264, %v1265
      %v1297 = vadd.f32 %v1296, %v1266
      %v1298 = vadd.f32 %v1297, %v1267
      %v1299 = vadd.f32 %v1298, %v1268
      %v1300 = vadd.f32 %v1299, %v1269
      %v1301 = vadd.f32 %v1300, %v1270
      %v1302 = vadd.f32 %v1301, %v1271
      %v1303 = vadd.f32 %v1302, %v1272
      %v1304 = vadd.f32 %v1303, %v1273
      %v1305 = vadd.f32 %v1304, %v1274
      %v1306 = vadd.f32 %v1305, %v1275
      %v1307 = vadd.f32 %v1306, %v1276
      %v1308 = vadd.f32 %v1307, %v1277
      %v1309 = vadd.f32 %v1308, %v1278
      %v1310 = vadd.f32 %v1309, %v1279
      %v1311 = vadd.f32 %v1310, %v1280
      %v1312 = vadd.f32 %v1311, %v1281
      %v1313 = vadd.f32 %v1312, %v1282
      %v1314 = vadd.f32 %v1313, %v1283
      %v1315 = vadd.f32 %v1314, %v1284
      %v1316 = vadd.f32 %v1315, %v1285
      %v1317 = vadd.f32 %v1316, %v1286
      %v1318 = vadd.f32 %v1317, %v1287
      %v1319 = vadd.f32 %v1318, %v1288
      %v1320 = vadd.f32 %v1319, %v1289
      %v1321 = vadd.f32 %v1320, %v1290
      %v1322 = vadd.f32 %v1321, %v1291
      %v1323 = vadd.f32 %v1322, %v1292
      %v1324 = vadd.f32 %v1323, %v1293
      %v1325 = vadd.f32 %v1324, %v1294
      %v1326 = vadd.f32 %v1325, %v1295
      %v1327 = vrot.slane %v1326, 4
      %v1328 = vadd.f32 %v1326, %v1327
      %v1329 = vrot.slane %v1328, 2
      %v1330 = vadd.f32 %v1328, %v1329
      %v1331 = vrot.slane %v1330, 1
      %v1332 = vadd.f32 %v1330, %v1331
      %v1333 = vadd.f32 %v1332, 0.0
      %v1334 = vld [vmem:[#allocation2] sm:$0xf]
      %v1335 = vld [vmem:[#allocation2 + $0x4] sm:$0xf]
      %v1336 = vld [vmem:[#allocation2 + $0x8] sm:$0x1]
      %v1337 = vld [vmem:[#allocation2 + $0xc] sm:$0xf]
      %v1338 = vld [vmem:[#allocation2 + $0x10] sm:$0xf]
      %v1339 = vld [vmem:[#allocation2 + $0x14] sm:$0x1]
      %v1340 = vld [vmem:[#allocation2 + $0x18] sm:$0xf]
      %v1341 = vld [vmem:[#allocation2 + $0x1c] sm:$0xf]
      %v1342 = vld [vmem:[#allocation2 + $0x20] sm:$0x1]
      %v1343 = vld [vmem:[#allocation2 + $0x24] sm:$0xf]
      %v1344 = vld [vmem:[#allocation2 + $0x28] sm:$0xf]
      %v1345 = vld [vmem:[#allocation2 + $0x2c] sm:$0x1]
      %v1346 = vld [vmem:[#allocation2 + $0x30] sm:$0xf]
      %v1347 = vld [vmem:[#allocation2 + $0x34] sm:$0xf]
      %v1348 = vld [vmem:[#allocation2 + $0x38] sm:$0x1]
      %v1349 = vld [vmem:[#allocation2 + $0x3c] sm:$0xf]
      %v1350 = vld [vmem:[#allocation2 + $0x40] sm:$0xf]
      %v1351 = vld [vmem:[#allocation2 + $0x44] sm:$0x1]
      %v1352 = vld [vmem:[#allocation2 + $0x48] sm:$0xf]
      %v1353 = vld [vmem:[#allocation2 + $0x4c] sm:$0xf]
      %v1354 = vld [vmem:[#allocation2 + $0x50] sm:$0x1]
      %v1355 = vld [vmem:[#allocation2 + $0x54] sm:$0xf]
      %v1356 = vld [vmem:[#allocation2 + $0x58] sm:$0xf]
      %v1357 = vld [vmem:[#allocation2 + $0x5c] sm:$0x1]
      %v1358 = vld [vmem:[#allocation2 + $0x60] sm:$0xf]
      %v1359 = vld [vmem:[#allocation2 + $0x64] sm:$0xf]
      %v1360 = vld [vmem:[#allocation2 + $0x68] sm:$0x1]
      %v1361 = vld [vmem:[#allocation2 + $0x6c] sm:$0xf]
      %v1362 = vld [vmem:[#allocation2 + $0x70] sm:$0xf]
      %v1363 = vld [vmem:[#allocation2 + $0x74] sm:$0x1]
      %v1364 = vld [vmem:[#allocation2 + $0x78] sm:$0xf]
      %v1365 = vld [vmem:[#allocation2 + $0x7c] sm:$0xf]
      %v1366 = vld [vmem:[#allocation2 + $0x80] sm:$0x1]
      %v1367 = vld [vmem:[#allocation2 + $0x84] sm:$0xf]
      %v1368 = vld [vmem:[#allocation2 + $0x88] sm:$0xf]
      %v1369 = vld [vmem:[#allocation2 + $0x8c] sm:$0x1]
      %v1370 = vld [vmem:[#allocation2 + $0x90] sm:$0xf]
      %v1371 = vld [vmem:[#allocation2 + $0x94] sm:$0xf]
      %v1372 = vld [vmem:[#allocation2 + $0x98] sm:$0x1]
      %v1373 = vld [vmem:[#allocation2 + $0x9c] sm:$0xf]
      %v1374 = vld [vmem:[#allocation2 + $0xa0] sm:$0xf]
      %v1375 = vld [vmem:[#allocation2 + $0xa4] sm:$0x1]
      %v1376 = vld [vmem:[#allocation2 + $0xa8] sm:$0xf]
      %v1377 = vld [vmem:[#allocation2 + $0xac] sm:$0xf]
      %v1378 = vld [vmem:[#allocation2 + $0xb0] sm:$0x1]
      %v1379 = vld [vmem:[#allocation2 + $0xb4] sm:$0xf]
      %v1380 = vld [vmem:[#allocation2 + $0xb8] sm:$0xf]
      %v1381 = vld [vmem:[#allocation2 + $0xbc] sm:$0x1]
      %vm1382 = vsmask.f32 3328
      %vm1383 = vsmask.f32 7440
      %vm1384 = vmor %vm1382, %vm1383
      %v1386 = vshrl.u32 %v1334, 16
      %v1388 = vrot.slane %v1386, 4
      %v1389 = vshll.u32 %v1334, 16
      %v1391 = vrot.slane %v1389, 5
      %v1392 = vor.u32 %v1388, %v1391
      %v1393 = vrot.slane %v1392, 4
      %v1395 = vshll.u32 %v1335, 16
      %v1397 = vrot.slane %v1395, 5
      %v1398 = vsel %vm1384, %v1393, %v1397
      %v1399 = vshrl.u32 %v1335, 16
      %v1401 = vrot.slane %v1399, 4
      %v1402 = vor.u32 %v1401, %v1397
      %v1403 = vrot.slane %v1402, 4
      %v1405 = vshll.u32 %v1336, 16
      %v1407 = vrot.slane %v1405, 5
      %v1408 = vsel %vm1384, %v1403, %v1407
      %v1410 = vshrl.u32 %v1337, 16
      %v1412 = vrot.slane %v1410, 4
      %v1413 = vshll.u32 %v1337, 16
      %v1415 = vrot.slane %v1413, 5
      %v1416 = vor.u32 %v1412, %v1415
      %v1417 = vrot.slane %v1416, 4
      %v1419 = vshll.u32 %v1338, 16
      %v1421 = vrot.slane %v1419, 5
      %v1422 = vsel %vm1384, %v1417, %v1421
      %v1423 = vshrl.u32 %v1338, 16
      %v1425 = vrot.slane %v1423, 4
      %v1426 = vor.u32 %v1425, %v1421
      %v1427 = vrot.slane %v1426, 4
      %v1429 = vshll.u32 %v1339, 16
      %v1431 = vrot.slane %v1429, 5
      %v1432 = vsel %vm1384, %v1427, %v1431
      %v1434 = vshrl.u32 %v1340, 16
      %v1436 = vrot.slane %v1434, 4
      %v1437 = vshll.u32 %v1340, 16
      %v1439 = vrot.slane %v1437, 5
      %v1440 = vor.u32 %v1436, %v1439
      %v1441 = vrot.slane %v1440, 4
      %v1443 = vshll.u32 %v1341, 16
      %v1445 = vrot.slane %v1443, 5
      %v1446 = vsel %vm1384, %v1441, %v1445
      %v1447 = vshrl.u32 %v1341, 16
      %v1449 = vrot.slane %v1447, 4
      %v1450 = vor.u32 %v1449, %v1445
      %v1451 = vrot.slane %v1450, 4
      %v1453 = vshll.u32 %v1342, 16
      %v1455 = vrot.slane %v1453, 5
      %v1456 = vsel %vm1384, %v1451, %v1455
      %v1458 = vshrl.u32 %v1343, 16
      %v1460 = vrot.slane %v1458, 4
      %v1461 = vshll.u32 %v1343, 16
      %v1463 = vrot.slane %v1461, 5
      %v1464 = vor.u32 %v1460, %v1463
      %v1465 = vrot.slane %v1464, 4
      %v1467 = vshll.u32 %v1344, 16
      %v1469 = vrot.slane %v1467, 5
      %v1470 = vsel %vm1384, %v1465, %v1469
      %v1471 = vshrl.u32 %v1344, 16
      %v1473 = vrot.slane %v1471, 4
      %v1474 = vor.u32 %v1473, %v1469
      %v1475 = vrot.slane %v1474, 4
      %v1477 = vshll.u32 %v1345, 16
      %v1479 = vrot.slane %v1477, 5
      %v1480 = vsel %vm1384, %v1475, %v1479
      %v1482 = vshrl.u32 %v1346, 16
      %v1484 = vrot.slane %v1482, 4
      %v1485 = vshll.u32 %v1346, 16
      %v1487 = vrot.slane %v1485, 5
      %v1488 = vor.u32 %v1484, %v1487
      %v1489 = vrot.slane %v1488, 4
      %v1491 = vshll.u32 %v1347, 16
      %v1493 = vrot.slane %v1491, 5
      %v1494 = vsel %vm1384, %v1489, %v1493
      %v1495 = vshrl.u32 %v1347, 16
      %v1497 = vrot.slane %v1495, 4
      %v1498 = vor.u32 %v1497, %v1493
      %v1499 = vrot.slane %v1498, 4
      %v1501 = vshll.u32 %v1348, 16
      %v1503 = vrot.slane %v1501, 5
      %v1504 = vsel %vm1384, %v1499, %v1503
      %v1506 = vshrl.u32 %v1349, 16
      %v1508 = vrot.slane %v1506, 4
      %v1509 = vshll.u32 %v1349, 16
      %v1511 = vrot.slane %v1509, 5
      %v1512 = vor.u32 %v1508, %v1511
      %v1513 = vrot.slane %v1512, 4
      %v1515 = vshll.u32 %v1350, 16
      %v1517 = vrot.slane %v1515, 5
      %v1518 = vsel %vm1384, %v1513, %v1517
      %v1519 = vshrl.u32 %v1350, 16
      %v1521 = vrot.slane %v1519, 4
      %v1522 = vor.u32 %v1521, %v1517
      %v1523 = vrot.slane %v1522, 4
      %v1525 = vshll.u32 %v1351, 16
      %v1527 = vrot.slane %v1525, 5
      %v1528 = vsel %vm1384, %v1523, %v1527
      %v1530 = vshrl.u32 %v1352, 16
      %v1532 = vrot.slane %v1530, 4
      %v1533 = vshll.u32 %v1352, 16
      %v1535 = vrot.slane %v1533, 5
      %v1536 = vor.u32 %v1532, %v1535
      %v1537 = vrot.slane %v1536, 4
      %v1539 = vshll.u32 %v1353, 16
      %v1541 = vrot.slane %v1539, 5
      %v1542 = vsel %vm1384, %v1537, %v1541
      %v1543 = vshrl.u32 %v1353, 16
      %v1545 = vrot.slane %v1543, 4
      %v1546 = vor.u32 %v1545, %v1541
      %v1547 = vrot.slane %v1546, 4
      %v1549 = vshll.u32 %v1354, 16
      %v1551 = vrot.slane %v1549, 5
      %v1552 = vsel %vm1384, %v1547, %v1551
      %v1554 = vshrl.u32 %v1355, 16
      %v1556 = vrot.slane %v1554, 4
      %v1557 = vshll.u32 %v1355, 16
      %v1559 = vrot.slane %v1557, 5
      %v1560 = vor.u32 %v1556, %v1559
      %v1561 = vrot.slane %v1560, 4
      %v1563 = vshll.u32 %v1356, 16
      %v1565 = vrot.slane %v1563, 5
      %v1566 = vsel %vm1384, %v1561, %v1565
      %v1567 = vshrl.u32 %v1356, 16
      %v1569 = vrot.slane %v1567, 4
      %v1570 = vor.u32 %v1569, %v1565
      %v1571 = vrot.slane %v1570, 4
      %v1573 = vshll.u32 %v1357, 16
      %v1575 = vrot.slane %v1573, 5
      %v1576 = vsel %vm1384, %v1571, %v1575
      %v1578 = vshrl.u32 %v1358, 16
      %v1580 = vrot.slane %v1578, 4
      %v1581 = vshll.u32 %v1358, 16
      %v1583 = vrot.slane %v1581, 5
      %v1584 = vor.u32 %v1580, %v1583
      %v1585 = vrot.slane %v1584, 4
      %v1587 = vshll.u32 %v1359, 16
      %v1589 = vrot.slane %v1587, 5
      %v1590 = vsel %vm1384, %v1585, %v1589
      %v1591 = vshrl.u32 %v1359, 16
      %v1593 = vrot.slane %v1591, 4
      %v1594 = vor.u32 %v1593, %v1589
      %v1595 = vrot.slane %v1594, 4
      %v1597 = vshll.u32 %v1360, 16
      %v1599 = vrot.slane %v1597, 5
      %v1600 = vsel %vm1384, %v1595, %v1599
      %v1602 = vshrl.u32 %v1361, 16
      %v1604 = vrot.slane %v1602, 4
      %v1605 = vshll.u32 %v1361, 16
      %v1607 = vrot.slane %v1605, 5
      %v1608 = vor.u32 %v1604, %v1607
      %v1609 = vrot.slane %v1608, 4
      %v1611 = vshll.u32 %v1362, 16
      %v1613 = vrot.slane %v1611, 5
      %v1614 = vsel %vm1384, %v1609, %v1613
      %v1615 = vshrl.u32 %v1362, 16
      %v1617 = vrot.slane %v1615, 4
      %v1618 = vor.u32 %v1617, %v1613
      %v1619 = vrot.slane %v1618, 4
      %v1621 = vshll.u32 %v1363, 16
      %v1623 = vrot.slane %v1621, 5
      %v1624 = vsel %vm1384, %v1619, %v1623
      %v1626 = vshrl.u32 %v1364, 16
      %v1628 = vrot.slane %v1626, 4
      %v1629 = vshll.u32 %v1364, 16
      %v1631 = vrot.slane %v1629, 5
      %v1632 = vor.u32 %v1628, %v1631
      %v1633 = vrot.slane %v1632, 4
      %v1635 = vshll.u32 %v1365, 16
      %v1637 = vrot.slane %v1635, 5
      %v1638 = vsel %vm1384, %v1633, %v1637
      %v1639 = vshrl.u32 %v1365, 16
      %v1641 = vrot.slane %v1639, 4
      %v1642 = vor.u32 %v1641, %v1637
      %v1643 = vrot.slane %v1642, 4
      %v1645 = vshll.u32 %v1366, 16
      %v1647 = vrot.slane %v1645, 5
      %v1648 = vsel %vm1384, %v1643, %v1647
      %v1650 = vshrl.u32 %v1367, 16
      %v1652 = vrot.slane %v1650, 4
      %v1653 = vshll.u32 %v1367, 16
      %v1655 = vrot.slane %v1653, 5
      %v1656 = vor.u32 %v1652, %v1655
      %v1657 = vrot.slane %v1656, 4
      %v1659 = vshll.u32 %v1368, 16
      %v1661 = vrot.slane %v1659, 5
      %v1662 = vsel %vm1384, %v1657, %v1661
      %v1663 = vshrl.u32 %v1368, 16
      %v1665 = vrot.slane %v1663, 4
      %v1666 = vor.u32 %v1665, %v1661
      %v1667 = vrot.slane %v1666, 4
      %v1669 = vshll.u32 %v1369, 16
      %v1671 = vrot.slane %v1669, 5
      %v1672 = vsel %vm1384, %v1667, %v1671
      %v1674 = vshrl.u32 %v1370, 16
      %v1676 = vrot.slane %v1674, 4
      %v1677 = vshll.u32 %v1370, 16
      %v1679 = vrot.slane %v1677, 5
      %v1680 = vor.u32 %v1676, %v1679
      %v1681 = vrot.slane %v1680, 4
      %v1683 = vshll.u32 %v1371, 16
      %v1685 = vrot.slane %v1683, 5
      %v1686 = vsel %vm1384, %v1681, %v1685
      %v1687 = vshrl.u32 %v1371, 16
      %v1689 = vrot.slane %v1687, 4
      %v1690 = vor.u32 %v1689, %v1685
      %v1691 = vrot.slane %v1690, 4
      %v1693 = vshll.u32 %v1372, 16
      %v1695 = vrot.slane %v1693, 5
      %v1696 = vsel %vm1384, %v1691, %v1695
      %v1698 = vshrl.u32 %v1373, 16
      %v1700 = vrot.slane %v1698, 4
      %v1701 = vshll.u32 %v1373, 16
      %v1703 = vrot.slane %v1701, 5
      %v1704 = vor.u32 %v1700, %v1703
      %v1705 = vrot.slane %v1704, 4
      %v1707 = vshll.u32 %v1374, 16
      %v1709 = vrot.slane %v1707, 5
      %v1710 = vsel %vm1384, %v1705, %v1709
      %v1711 = vshrl.u32 %v1374, 16
      %v1713 = vrot.slane %v1711, 4
      %v1714 = vor.u32 %v1713, %v1709
      %v1715 = vrot.slane %v1714, 4
      %v1717 = vshll.u32 %v1375, 16
      %v1719 = vrot.slane %v1717, 5
      %v1720 = vsel %vm1384, %v1715, %v1719
      %v1722 = vshrl.u32 %v1376, 16
      %v1724 = vrot.slane %v1722, 4
      %v1725 = vshll.u32 %v1376, 16
      %v1727 = vrot.slane %v1725, 5
      %v1728 = vor.u32 %v1724, %v1727
      %v1729 = vrot.slane %v1728, 4
      %v1731 = vshll.u32 %v1377, 16
      %v1733 = vrot.slane %v1731, 5
      %v1734 = vsel %vm1384, %v1729, %v1733
      %v1735 = vshrl.u32 %v1377, 16
      %v1737 = vrot.slane %v1735, 4
      %v1738 = vor.u32 %v1737, %v1733
      %v1739 = vrot.slane %v1738, 4
      %v1741 = vshll.u32 %v1378, 16
      %v1743 = vrot.slane %v1741, 5
      %v1744 = vsel %vm1384, %v1739, %v1743
      %v1746 = vshrl.u32 %v1379, 16
      %v1748 = vrot.slane %v1746, 4
      %v1749 = vshll.u32 %v1379, 16
      %v1751 = vrot.slane %v1749, 5
      %v1752 = vor.u32 %v1748, %v1751
      %v1753 = vrot.slane %v1752, 4
      %v1755 = vshll.u32 %v1380, 16
      %v1757 = vrot.slane %v1755, 5
      %v1758 = vsel %vm1384, %v1753, %v1757
      %v1759 = vshrl.u32 %v1380, 16
      %v1761 = vrot.slane %v1759, 4
      %v1762 = vor.u32 %v1761, %v1757
      %v1763 = vrot.slane %v1762, 4
      %v1765 = vshll.u32 %v1381, 16
      %v1767 = vrot.slane %v1765, 5
      %v1768 = vsel %vm1384, %v1763, %v1767
      %s1769 = scalar_lea.vmem %s3, 192
      %v1770 = vld [vmem:[%s1769] sm:$0xf]
      %v1771 = vld [vmem:[%s1769 + $0x4] sm:$0xf]
      %v1772 = vld [vmem:[%s1769 + $0x8] sm:$0xf]
      %v1773 = vld [vmem:[%s1769 + $0xc] sm:$0xf]
      %v1774 = vld [vmem:[%s1769 + $0x10] sm:$0xf]
      %v1775 = vld [vmem:[%s1769 + $0x14] sm:$0xf]
      %v1776 = vld [vmem:[%s1769 + $0x18] sm:$0xf]
      %v1777 = vld [vmem:[%s1769 + $0x1c] sm:$0xf]
      %v1778 = vld [vmem:[%s1769 + $0x20] sm:$0xf]
      %v1779 = vld [vmem:[%s1769 + $0x24] sm:$0xf]
      %v1780 = vld [vmem:[%s1769 + $0x28] sm:$0xf]
      %v1781 = vld [vmem:[%s1769 + $0x2c] sm:$0xf]
      %v1782 = vld [vmem:[%s1769 + $0x30] sm:$0xf]
      %v1783 = vld [vmem:[%s1769 + $0x34] sm:$0xf]
      %v1784 = vld [vmem:[%s1769 + $0x38] sm:$0xf]
      %v1785 = vld [vmem:[%s1769 + $0x3c] sm:$0xf]
      %s1786 = scalar_lea.vmem %s3, 320
      %v1787 = vld [vmem:[%s1786] sm:$0xf]
      %v1788 = vld [vmem:[%s1786 + $0x4] sm:$0xf]
      %v1789 = vld [vmem:[%s1786 + $0x8] sm:$0xf]
      %v1790 = vld [vmem:[%s1786 + $0xc] sm:$0xf]
      %v1791 = vld [vmem:[%s1786 + $0x10] sm:$0xf]
      %v1792 = vld [vmem:[%s1786 + $0x14] sm:$0xf]
      %v1793 = vld [vmem:[%s1786 + $0x18] sm:$0xf]
      %v1794 = vld [vmem:[%s1786 + $0x1c] sm:$0xf]
      %v1795 = vld [vmem:[%s1786 + $0x20] sm:$0xf]
      %v1796 = vld [vmem:[%s1786 + $0x24] sm:$0xf]
      %v1797 = vld [vmem:[%s1786 + $0x28] sm:$0xf]
      %v1798 = vld [vmem:[%s1786 + $0x2c] sm:$0xf]
      %v1799 = vld [vmem:[%s1786 + $0x30] sm:$0xf]
      %v1800 = vld [vmem:[%s1786 + $0x34] sm:$0xf]
      %v1801 = vld [vmem:[%s1786 + $0x38] sm:$0xf]
      %v1802 = vld [vmem:[%s1786 + $0x3c] sm:$0xf]
      %v1835 = vunpack.c.l.b16 %v1334
      %v1836 = vunpack.c.l.b16 %v1335
      %v1837 = vunpack.c.l.b16 %v1337
      %v1838 = vunpack.c.l.b16 %v1338
      %v1839 = vunpack.c.l.b16 %v1340
      %v1840 = vunpack.c.l.b16 %v1341
      %v1841 = vunpack.c.l.b16 %v1343
      %v1842 = vunpack.c.l.b16 %v1344
      %v1843 = vunpack.c.l.b16 %v1346
      %v1844 = vunpack.c.l.b16 %v1347
      %v1845 = vunpack.c.l.b16 %v1349
      %v1846 = vunpack.c.l.b16 %v1350
      %v1847 = vunpack.c.l.b16 %v1352
      %v1848 = vunpack.c.l.b16 %v1353
      %v1849 = vunpack.c.l.b16 %v1355
      %v1850 = vunpack.c.l.b16 %v1356
      %v1851 = vunpack.c.l.b16 %v1358
      %v1852 = vunpack.c.l.b16 %v1359
      %v1853 = vunpack.c.l.b16 %v1361
      %v1854 = vunpack.c.l.b16 %v1362
      %v1855 = vunpack.c.l.b16 %v1364
      %v1856 = vunpack.c.l.b16 %v1365
      %v1857 = vunpack.c.l.b16 %v1367
      %v1858 = vunpack.c.l.b16 %v1368
      %v1859 = vunpack.c.l.b16 %v1370
      %v1860 = vunpack.c.l.b16 %v1371
      %v1861 = vunpack.c.l.b16 %v1373
      %v1862 = vunpack.c.l.b16 %v1374
      %v1863 = vunpack.c.l.b16 %v1376
      %v1864 = vunpack.c.l.b16 %v1377
      %v1865 = vunpack.c.l.b16 %v1379
      %v1866 = vunpack.c.l.b16 %v1380
      %v1867 = vpack.c.b16 %v1836, %v1835
      %v1868 = vpack.c.b16 %v1838, %v1837
      %v1869 = vpack.c.b16 %v1840, %v1839
      %v1870 = vpack.c.b16 %v1842, %v1841
      %v1871 = vpack.c.b16 %v1844, %v1843
      %v1872 = vpack.c.b16 %v1846, %v1845
      %v1873 = vpack.c.b16 %v1848, %v1847
      %v1874 = vpack.c.b16 %v1850, %v1849
      %v1875 = vpack.c.b16 %v1852, %v1851
      %v1876 = vpack.c.b16 %v1854, %v1853
      %v1877 = vpack.c.b16 %v1856, %v1855
      %v1878 = vpack.c.b16 %v1858, %v1857
      %v1879 = vpack.c.b16 %v1860, %v1859
      %v1880 = vpack.c.b16 %v1862, %v1861
      %v1881 = vpack.c.b16 %v1864, %v1863
      %v1882 = vpack.c.b16 %v1866, %v1865
      %v1915 = vunpack.c.l.b16 %v1787
      %v1916 = vunpack.c.l.b16 %v1788
      %v1917 = vunpack.c.l.b16 %v1789
      %v1918 = vunpack.c.l.b16 %v1790
      %v1919 = vunpack.c.l.b16 %v1791
      %v1920 = vunpack.c.l.b16 %v1792
      %v1921 = vunpack.c.l.b16 %v1793
      %v1922 = vunpack.c.l.b16 %v1794
      %v1923 = vunpack.c.l.b16 %v1795
      %v1924 = vunpack.c.l.b16 %v1796
      %v1925 = vunpack.c.l.b16 %v1797
      %v1926 = vunpack.c.l.b16 %v1798
      %v1927 = vunpack.c.l.b16 %v1799
      %v1928 = vunpack.c.l.b16 %v1800
      %v1929 = vunpack.c.l.b16 %v1801
      %v1930 = vunpack.c.l.b16 %v1802
      %v1931 = vpack.c.b16 %v1916, %v1915
      %v1932 = vpack.c.b16 %v1918, %v1917
      %v1933 = vpack.c.b16 %v1920, %v1919
      %v1934 = vpack.c.b16 %v1922, %v1921
      %v1935 = vpack.c.b16 %v1924, %v1923
      %v1936 = vpack.c.b16 %v1926, %v1925
      %v1937 = vpack.c.b16 %v1928, %v1927
      %v1938 = vpack.c.b16 %v1930, %v1929
      %1947 = vmatprep.subr.bf16.mxu0 0
      %1948 = vmatpush1.bf16.msra.mxu0 %v1931
      %1949 = vmatprep.subr.bf16.mxu0 0
      %1950 = vmatpush1.bf16.msra.mxu0 %v1932
      %1951 = vmatprep.subr.bf16.mxu0 0
      %1952 = vmatpush1.bf16.msra.mxu0 %v1933
      %1953 = vmatprep.subr.bf16.mxu0 0
      %1954 = vmatpush1.bf16.msra.mxu0 %v1934
      %1955 = vmatprep.subr.bf16.mxu0 0
      %1956 = vmatpush1.bf16.msra.mxu0 %v1935
      %1957 = vmatprep.subr.bf16.mxu0 0
      %1958 = vmatpush1.bf16.msra.mxu0 %v1936
      %1959 = vmatprep.subr.bf16.mxu0 0
      %1960 = vmatpush1.bf16.msra.mxu0 %v1937
      %1961 = vmatprep.subr.bf16.mxu0 0
      %1962 = vmatpush1.bf16.msra.mxu0 %v1938
      %1963 = vmatprep.subr.bf16.mxu0 0
      %1964 = vmatpush1.bf16.msra.mxu0 0
      %1965 = vmatprep.subr.bf16.mxu0 0
      %1966 = vmatpush1.bf16.msra.mxu0 0
      %1967 = vmatprep.subr.bf16.mxu0 0
      %1968 = vmatpush1.bf16.msra.mxu0 0
      %1969 = vmatprep.subr.bf16.mxu0 0
      %1970 = vmatpush1.bf16.msra.mxu0 0
      %1971 = vmatprep.subr.bf16.mxu0 0
      %1972 = vmatpush1.bf16.msra.mxu0 0
      %1973 = vmatprep.subr.bf16.mxu0 0
      %1974 = vmatpush1.bf16.msra.mxu0 0
      %1975 = vmatprep.subr.bf16.mxu0 0
      %1976 = vmatpush1.bf16.msra.mxu0 0
      %1977 = vmatprep.subr.bf16.mxu0 0
      %1978 = vmatpush1.bf16.msra.mxu0 0
      %1979 = vmatprep.mubr.bf16.mxu0 0
      %1980 = vmatmul.mubr.bf16.gmra.mrb[0].mxu0 %v1867
      %v1981 = vpop.f32.mrb[0].mxu0
      %v1982 = vadd.f32 0.0, %v1981
      %v1983 = vpop.f32.mrb[0].mxu0
      %v1984 = vpop.f32.mrb[0].mxu0
      %v1985 = vadd.f32 0.0, %v1984
      %v1986 = vpop.f32.mrb[0].mxu0
      %1987 = vmatprep.mubr.bf16.mxu0 0
      %1988 = vmatmul.mubr.bf16.gmra.mrb[0].mxu0 %v1868
      %v1989 = vpop.f32.mrb[0].mxu0
      %v1990 = vadd.f32 0.0, %v1989
      %v1991 = vpop.f32.mrb[0].mxu0
      %v1992 = vpop.f32.mrb[0].mxu0
      %v1993 = vadd.f32 0.0, %v1992
      %v1994 = vpop.f32.mrb[0].mxu0
      %1995 = vmatprep.mubr.bf16.mxu0 0
      %1996 = vmatmul.mubr.bf16.gmra.mrb[0].mxu0 %v1869
      %v1997 = vpop.f32.mrb[0].mxu0
      %v1998 = vadd.f32 0.0, %v1997
      %v1999 = vpop.f32.mrb[0].mxu0
      %v2000 = vpop.f32.mrb[0].mxu0
      %v2001 = vadd.f32 0.0, %v2000
      %v2002 = vpop.f32.mrb[0].mxu0
      %2003 = vmatprep.mubr.bf16.mxu0 0
      %2004 = vmatmul.mubr.bf16.gmra.mrb[0].mxu0 %v1870
      %v2005 = vpop.f32.mrb[0].mxu0
      %v2006 = vadd.f32 0.0, %v2005
      %v2007 = vpop.f32.mrb[0].mxu0
      %v2008 = vpop.f32.mrb[0].mxu0
      %v2009 = vadd.f32 0.0, %v2008
      %v2010 = vpop.f32.mrb[0].mxu0
      %2011 = vmatprep.mubr.bf16.mxu0 0
      %2012 = vmatmul.mubr.bf16.gmra.mrb[0].mxu0 %v1871
      %v2013 = vpop.f32.mrb[0].mxu0
      %v2014 = vadd.f32 0.0, %v2013
      %v2015 = vpop.f32.mrb[0].mxu0
      %v2016 = vpop.f32.mrb[0].mxu0
      %v2017 = vadd.f32 0.0, %v2016
      %v2018 = vpop.f32.mrb[0].mxu0
      %2019 = vmatprep.mubr.bf16.mxu0 0
      %2020 = vmatmul.mubr.bf16.gmra.mrb[0].mxu0 %v1872
      %v2021 = vpop.f32.mrb[0].mxu0
      %v2022 = vadd.f32 0.0, %v2021
      %v2023 = vpop.f32.mrb[0].mxu0
      %v2024 = vpop.f32.mrb[0].mxu0
      %v2025 = vadd.f32 0.0, %v2024
      %v2026 = vpop.f32.mrb[0].mxu0
      %2027 = vmatprep.mubr.bf16.mxu0 0
      %2028 = vmatmul.mubr.bf16.gmra.mrb[0].mxu0 %v1873
      %v2029 = vpop.f32.mrb[0].mxu0
      %v2030 = vadd.f32 0.0, %v2029
      %v2031 = vpop.f32.mrb[0].mxu0
      %v2032 = vpop.f32.mrb[0].mxu0
      %v2033 = vadd.f32 0.0, %v2032
      %v2034 = vpop.f32.mrb[0].mxu0
      %2035 = vmatprep.mubr.bf16.mxu0 0
      %2036 = vmatmul.mubr.bf16.gmra.mrb[0].mxu0 %v1874
      %v2037 = vpop.f32.mrb[0].mxu0
      %v2038 = vadd.f32 0.0, %v2037
      %v2039 = vpop.f32.mrb[0].mxu0
      %v2040 = vpop.f32.mrb[0].mxu0
      %v2041 = vadd.f32 0.0, %v2040
      %v2042 = vpop.f32.mrb[0].mxu0
      %2043 = vmatprep.mubr.bf16.mxu0 0
      %2044 = vmatmul.mubr.bf16.gmra.mrb[0].mxu0 %v1875
      %v2045 = vpop.f32.mrb[0].mxu0
      %v2046 = vadd.f32 0.0, %v2045
      %v2047 = vpop.f32.mrb[0].mxu0
      %v2048 = vpop.f32.mrb[0].mxu0
      %v2049 = vadd.f32 0.0, %v2048
      %v2050 = vpop.f32.mrb[0].mxu0
      %2051 = vmatprep.mubr.bf16.mxu0 0
      %2052 = vmatmul.mubr.bf16.gmra.mrb[0].mxu0 %v1876
      %v2053 = vpop.f32.mrb[0].mxu0
      %v2054 = vadd.f32 0.0, %v2053
      %v2055 = vpop.f32.mrb[0].mxu0
      %v2056 = vpop.f32.mrb[0].mxu0
      %v2057 = vadd.f32 0.0, %v2056
      %v2058 = vpop.f32.mrb[0].mxu0
      %2059 = vmatprep.mubr.bf16.mxu0 0
      %2060 = vmatmul.mubr.bf16.gmra.mrb[0].mxu0 %v1877
      %v2061 = vpop.f32.mrb[0].mxu0
      %v2062 = vadd.f32 0.0, %v2061
      %v2063 = vpop.f32.mrb[0].mxu0
      %v2064 = vpop.f32.mrb[0].mxu0
      %v2065 = vadd.f32 0.0, %v2064
      %v2066 = vpop.f32.mrb[0].mxu0
      %2067 = vmatprep.mubr.bf16.mxu0 0
      %2068 = vmatmul.mubr.bf16.gmra.mrb[0].mxu0 %v1878
      %v2069 = vpop.f32.mrb[0].mxu0
      %v2070 = vadd.f32 0.0, %v2069
      %v2071 = vpop.f32.mrb[0].mxu0
      %v2072 = vpop.f32.mrb[0].mxu0
      %v2073 = vadd.f32 0.0, %v2072
      %v2074 = vpop.f32.mrb[0].mxu0
      %2075 = vmatprep.mubr.bf16.mxu0 0
      %2076 = vmatmul.mubr.bf16.gmra.mrb[0].mxu0 %v1879
      %v2077 = vpop.f32.mrb[0].mxu0
      %v2078 = vadd.f32 0.0, %v2077
      %v2079 = vpop.f32.mrb[0].mxu0
      %v2080 = vpop.f32.mrb[0].mxu0
      %v2081 = vadd.f32 0.0, %v2080
      %v2082 = vpop.f32.mrb[0].mxu0
      %2083 = vmatprep.mubr.bf16.mxu0 0
      %2084 = vmatmul.mubr.bf16.gmra.mrb[0].mxu0 %v1880
      %v2085 = vpop.f32.mrb[0].mxu0
      %v2086 = vadd.f32 0.0, %v2085
      %v2087 = vpop.f32.mrb[0].mxu0
      %v2088 = vpop.f32.mrb[0].mxu0
      %v2089 = vadd.f32 0.0, %v2088
      %v2090 = vpop.f32.mrb[0].mxu0
      %2091 = vmatprep.mubr.bf16.mxu0 0
      %2092 = vmatmul.mubr.bf16.gmra.mrb[0].mxu0 %v1881
      %v2093 = vpop.f32.mrb[0].mxu0
      %v2094 = vadd.f32 0.0, %v2093
      %v2095 = vpop.f32.mrb[0].mxu0
      %v2096 = vpop.f32.mrb[0].mxu0
      %v2097 = vadd.f32 0.0, %v2096
      %v2098 = vpop.f32.mrb[0].mxu0
      %2099 = vmatprep.mubr.bf16.mxu0 0
      %2100 = vmatmul.mubr.bf16.gmra.mrb[0].mxu0 %v1882
      %v2101 = vpop.f32.mrb[0].mxu0
      %v2102 = vadd.f32 0.0, %v2101
      %v2103 = vpop.f32.mrb[0].mxu0
      %v2104 = vpop.f32.mrb[0].mxu0
      %v2105 = vadd.f32 0.0, %v2104
      %v2106 = vpop.f32.mrb[0].mxu0
      %2107 = vdwg.mxu0
      %v2108 = vunpack.c.l.b16 %v1398
      %v2109 = vunpack.c.l.b16 %v1408
      %v2110 = vunpack.c.l.b16 %v1422
      %v2111 = vunpack.c.l.b16 %v1432
      %v2112 = vunpack.c.l.b16 %v1446
      %v2113 = vunpack.c.l.b16 %v1456
      %v2114 = vunpack.c.l.b16 %v1470
      %v2115 = vunpack.c.l.b16 %v1480
      %v2116 = vunpack.c.l.b16 %v1494
      %v2117 = vunpack.c.l.b16 %v1504
      %v2118 = vunpack.c.l.b16 %v1518
      %v2119 = vunpack.c.l.b16 %v1528
      %v2120 = vunpack.c.l.b16 %v1542
      %v2121 = vunpack.c.l.b16 %v1552
      %v2122 = vunpack.c.l.b16 %v1566
      %v2123 = vunpack.c.l.b16 %v1576
      %v2124 = vunpack.c.l.b16 %v1590
      %v2125 = vunpack.c.l.b16 %v1600
      %v2126 = vunpack.c.l.b16 %v1614
      %v2127 = vunpack.c.l.b16 %v1624
      %v2128 = vunpack.c.l.b16 %v1638
      %v2129 = vunpack.c.l.b16 %v1648
      %v2130 = vunpack.c.l.b16 %v1662
      %v2131 = vunpack.c.l.b16 %v1672
      %v2132 = vunpack.c.l.b16 %v1686
      %v2133 = vunpack.c.l.b16 %v1696
      %v2134 = vunpack.c.l.b16 %v1710
      %v2135 = vunpack.c.l.b16 %v1720
      %v2136 = vunpack.c.l.b16 %v1734
      %v2137 = vunpack.c.l.b16 %v1744
      %v2138 = vunpack.c.l.b16 %v1758
      %v2139 = vunpack.c.l.b16 %v1768
      %v2140 = vpack.c.b16 %v2109, %v2108
      %v2141 = vpack.c.b16 %v2111, %v2110
      %v2142 = vpack.c.b16 %v2113, %v2112
      %v2143 = vpack.c.b16 %v2115, %v2114
      %v2144 = vpack.c.b16 %v2117, %v2116
      %v2145 = vpack.c.b16 %v2119, %v2118
      %v2146 = vpack.c.b16 %v2121, %v2120
      %v2147 = vpack.c.b16 %v2123, %v2122
      %v2148 = vpack.c.b16 %v2125, %v2124
      %v2149 = vpack.c.b16 %v2127, %v2126
      %v2150 = vpack.c.b16 %v2129, %v2128
      %v2151 = vpack.c.b16 %v2131, %v2130
      %v2152 = vpack.c.b16 %v2133, %v2132
      %v2153 = vpack.c.b16 %v2135, %v2134
      %v2154 = vpack.c.b16 %v2137, %v2136
      %v2155 = vpack.c.b16 %v2139, %v2138
      %v2188 = vunpack.c.l.b16 %v1770
      %v2189 = vunpack.c.l.b16 %v1771
      %v2190 = vunpack.c.l.b16 %v1772
      %v2191 = vunpack.c.l.b16 %v1773
      %v2192 = vunpack.c.l.b16 %v1774
      %v2193 = vunpack.c.l.b16 %v1775
      %v2194 = vunpack.c.l.b16 %v1776
      %v2195 = vunpack.c.l.b16 %v1777
      %v2196 = vunpack.c.l.b16 %v1778
      %v2197 = vunpack.c.l.b16 %v1779
      %v2198 = vunpack.c.l.b16 %v1780
      %v2199 = vunpack.c.l.b16 %v1781
      %v2200 = vunpack.c.l.b16 %v1782
      %v2201 = vunpack.c.l.b16 %v1783
      %v2202 = vunpack.c.l.b16 %v1784
      %v2203 = vunpack.c.l.b16 %v1785
      %v2204 = vpack.c.b16 %v2189, %v2188
      %v2205 = vpack.c.b16 %v2191, %v2190
      %v2206 = vpack.c.b16 %v2193, %v2192
      %v2207 = vpack.c.b16 %v2195, %v2194
      %v2208 = vpack.c.b16 %v2197, %v2196
      %v2209 = vpack.c.b16 %v2199, %v2198
      %v2210 = vpack.c.b16 %v2201, %v2200
      %v2211 = vpack.c.b16 %v2203, %v2202
      %2220 = vmatprep.subr.bf16.mxu0 0
      %2221 = vmatpush1.bf16.msra.mxu0 %v2204
      %2222 = vmatprep.subr.bf16.mxu0 0
      %2223 = vmatpush1.bf16.msra.mxu0 %v2205
      %2224 = vmatprep.subr.bf16.mxu0 0
      %2225 = vmatpush1.bf16.msra.mxu0 %v2206
      %2226 = vmatprep.subr.bf16.mxu0 0
      %2227 = vmatpush1.bf16.msra.mxu0 %v2207
      %2228 = vmatprep.subr.bf16.mxu0 0
      %2229 = vmatpush1.bf16.msra.mxu0 %v2208
      %2230 = vmatprep.subr.bf16.mxu0 0
      %2231 = vmatpush1.bf16.msra.mxu0 %v2209
      %2232 = vmatprep.subr.bf16.mxu0 0
      %2233 = vmatpush1.bf16.msra.mxu0 %v2210
      %2234 = vmatprep.subr.bf16.mxu0 0
      %2235 = vmatpush1.bf16.msra.mxu0 %v2211
      %2236 = vmatprep.subr.bf16.mxu0 0
      %2237 = vmatpush1.bf16.msra.mxu0 0
      %2238 = vmatprep.subr.bf16.mxu0 0
      %2239 = vmatpush1.bf16.msra.mxu0 0
      %2240 = vmatprep.subr.bf16.mxu0 0
      %2241 = vmatpush1.bf16.msra.mxu0 0
      %2242 = vmatprep.subr.bf16.mxu0 0
      %2243 = vmatpush1.bf16.msra.mxu0 0
      %2244 = vmatprep.subr.bf16.mxu0 0
      %2245 = vmatpush1.bf16.msra.mxu0 0
      %2246 = vmatprep.subr.bf16.mxu0 0
      %2247 = vmatpush1.bf16.msra.mxu0 0
      %2248 = vmatprep.subr.bf16.mxu0 0
      %2249 = vmatpush1.bf16.msra.mxu0 0
      %2250 = vmatprep.subr.bf16.mxu0 0
      %2251 = vmatpush1.bf16.msra.mxu0 0
      %2252 = vmatprep.mubr.bf16.mxu0 0
      %2253 = vmatmul.mubr.bf16.gmra.mrb[0].mxu0 %v2140
      %v2254 = vpop.f32.mrb[0].mxu0
      %v2255 = vadd.f32 %v1982, %v2254
      %v2256 = vpop.f32.mrb[0].mxu0
      %v2257 = vpop.f32.mrb[0].mxu0
      %v2258 = vadd.f32 %v1985, %v2257
      %v2259 = vpop.f32.mrb[0].mxu0
      %2260 = vmatprep.mubr.bf16.mxu0 0
      %2261 = vmatmul.mubr.bf16.gmra.mrb[0].mxu0 %v2141
      %v2262 = vpop.f32.mrb[0].mxu0
      %v2263 = vadd.f32 %v1990, %v2262
      %v2264 = vpop.f32.mrb[0].mxu0
      %v2265 = vpop.f32.mrb[0].mxu0
      %v2266 = vadd.f32 %v1993, %v2265
      %v2267 = vpop.f32.mrb[0].mxu0
      %2268 = vmatprep.mubr.bf16.mxu0 0
      %2269 = vmatmul.mubr.bf16.gmra.mrb[0].mxu0 %v2142
      %v2270 = vpop.f32.mrb[0].mxu0
      %v2271 = vadd.f32 %v1998, %v2270
      %v2272 = vpop.f32.mrb[0].mxu0
      %v2273 = vpop.f32.mrb[0].mxu0
      %v2274 = vadd.f32 %v2001, %v2273
      %v2275 = vpop.f32.mrb[0].mxu0
      %2276 = vmatprep.mubr.bf16.mxu0 0
      %2277 = vmatmul.mubr.bf16.gmra.mrb[0].mxu0 %v2143
      %v2278 = vpop.f32.mrb[0].mxu0
      %v2279 = vadd.f32 %v2006, %v2278
      %v2280 = vpop.f32.mrb[0].mxu0
      %v2281 = vpop.f32.mrb[0].mxu0
      %v2282 = vadd.f32 %v2009, %v2281
      %v2283 = vpop.f32.mrb[0].mxu0
      %2284 = vmatprep.mubr.bf16.mxu0 0
      %2285 = vmatmul.mubr.bf16.gmra.mrb[0].mxu0 %v2144
      %v2286 = vpop.f32.mrb[0].mxu0
      %v2287 = vadd.f32 %v2014, %v2286
      %v2288 = vpop.f32.mrb[0].mxu0
      %v2289 = vpop.f32.mrb[0].mxu0
      %v2290 = vadd.f32 %v2017, %v2289
      %v2291 = vpop.f32.mrb[0].mxu0
      %2292 = vmatprep.mubr.bf16.mxu0 0
      %2293 = vmatmul.mubr.bf16.gmra.mrb[0].mxu0 %v2145
      %v2294 = vpop.f32.mrb[0].mxu0
      %v2295 = vadd.f32 %v2022, %v2294
      %v2296 = vpop.f32.mrb[0].mxu0
      %v2297 = vpop.f32.mrb[0].mxu0
      %v2298 = vadd.f32 %v2025, %v2297
      %v2299 = vpop.f32.mrb[0].mxu0
      %2300 = vmatprep.mubr.bf16.mxu0 0
      %2301 = vmatmul.mubr.bf16.gmra.mrb[0].mxu0 %v2146
      %v2302 = vpop.f32.mrb[0].mxu0
      %v2303 = vadd.f32 %v2030, %v2302
      %v2304 = vpop.f32.mrb[0].mxu0
      %v2305 = vpop.f32.mrb[0].mxu0
      %v2306 = vadd.f32 %v2033, %v2305
      %v2307 = vpop.f32.mrb[0].mxu0
      %2308 = vmatprep.mubr.bf16.mxu0 0
      %2309 = vmatmul.mubr.bf16.gmra.mrb[0].mxu0 %v2147
      %v2310 = vpop.f32.mrb[0].mxu0
      %v2311 = vadd.f32 %v2038, %v2310
      %v2312 = vpop.f32.mrb[0].mxu0
      %v2313 = vpop.f32.mrb[0].mxu0
      %v2314 = vadd.f32 %v2041, %v2313
      %v2315 = vpop.f32.mrb[0].mxu0
      %2316 = vmatprep.mubr.bf16.mxu0 0
      %2317 = vmatmul.mubr.bf16.gmra.mrb[0].mxu0 %v2148
      %v2318 = vpop.f32.mrb[0].mxu0
      %v2319 = vadd.f32 %v2046, %v2318
      %v2320 = vpop.f32.mrb[0].mxu0
      %v2321 = vpop.f32.mrb[0].mxu0
      %v2322 = vadd.f32 %v2049, %v2321
      %v2323 = vpop.f32.mrb[0].mxu0
      %2324 = vmatprep.mubr.bf16.mxu0 0
      %2325 = vmatmul.mubr.bf16.gmra.mrb[0].mxu0 %v2149
      %v2326 = vpop.f32.mrb[0].mxu0
      %v2327 = vadd.f32 %v2054, %v2326
      %v2328 = vpop.f32.mrb[0].mxu0
      %v2329 = vpop.f32.mrb[0].mxu0
      %v2330 = vadd.f32 %v2057, %v2329
      %v2331 = vpop.f32.mrb[0].mxu0
      %2332 = vmatprep.mubr.bf16.mxu0 0
      %2333 = vmatmul.mubr.bf16.gmra.mrb[0].mxu0 %v2150
      %v2334 = vpop.f32.mrb[0].mxu0
      %v2335 = vadd.f32 %v2062, %v2334
      %v2336 = vpop.f32.mrb[0].mxu0
      %v2337 = vpop.f32.mrb[0].mxu0
      %v2338 = vadd.f32 %v2065, %v2337
      %v2339 = vpop.f32.mrb[0].mxu0
      %2340 = vmatprep.mubr.bf16.mxu0 0
      %2341 = vmatmul.mubr.bf16.gmra.mrb[0].mxu0 %v2151
      %v2342 = vpop.f32.mrb[0].mxu0
      %v2343 = vadd.f32 %v2070, %v2342
      %v2344 = vpop.f32.mrb[0].mxu0
      %v2345 = vpop.f32.mrb[0].mxu0
      %v2346 = vadd.f32 %v2073, %v2345
      %v2347 = vpop.f32.mrb[0].mxu0
      %2348 = vmatprep.mubr.bf16.mxu0 0
      %2349 = vmatmul.mubr.bf16.gmra.mrb[0].mxu0 %v2152
      %v2350 = vpop.f32.mrb[0].mxu0
      %v2351 = vadd.f32 %v2078, %v2350
      %v2352 = vpop.f32.mrb[0].mxu0
      %v2353 = vpop.f32.mrb[0].mxu0
      %v2354 = vadd.f32 %v2081, %v2353
      %v2355 = vpop.f32.mrb[0].mxu0
      %2356 = vmatprep.mubr.bf16.mxu0 0
      %2357 = vmatmul.mubr.bf16.gmra.mrb[0].mxu0 %v2153
      %v2358 = vpop.f32.mrb[0].mxu0
      %v2359 = vadd.f32 %v2086, %v2358
      %v2360 = vpop.f32.mrb[0].mxu0
      %v2361 = vpop.f32.mrb[0].mxu0
      %v2362 = vadd.f32 %v2089, %v2361
      %v2363 = vpop.f32.mrb[0].mxu0
      %2364 = vmatprep.mubr.bf16.mxu0 0
      %2365 = vmatmul.mubr.bf16.gmra.mrb[0].mxu0 %v2154
      %v2366 = vpop.f32.mrb[0].mxu0
      %v2367 = vadd.f32 %v2094, %v2366
      %v2368 = vpop.f32.mrb[0].mxu0
      %v2369 = vpop.f32.mrb[0].mxu0
      %v2370 = vadd.f32 %v2097, %v2369
      %v2371 = vpop.f32.mrb[0].mxu0
      %2372 = vmatprep.mubr.bf16.mxu0 0
      %2373 = vmatmul.mubr.bf16.gmra.mrb[0].mxu0 %v2155
      %v2374 = vpop.f32.mrb[0].mxu0
      %v2375 = vadd.f32 %v2102, %v2374
      %v2376 = vpop.f32.mrb[0].mxu0
      %v2377 = vpop.f32.mrb[0].mxu0
      %v2378 = vadd.f32 %v2105, %v2377
      %v2379 = vpop.f32.mrb[0].mxu0
      %2380 = vdwg.mxu0
      %s2381 = scalar_lea.vmem %s231, 256
      %2382 = vst [vmem:[%s2381] sm:$0xff] %v2255
      %2383 = vst [vmem:[%s2381 + $0x8] sm:$0xff] %v2258
      %2384 = vst [vmem:[%s2381 + $0x10] sm:$0xff] %v2263
      %2385 = vst [vmem:[%s2381 + $0x18] sm:$0xff] %v2266
      %2386 = vst [vmem:[%s2381 + $0x20] sm:$0xff] %v2271
      %2387 = vst [vmem:[%s2381 + $0x28] sm:$0xff] %v2274
      %2388 = vst [vmem:[%s2381 + $0x30] sm:$0xff] %v2279
      %2389 = vst [vmem:[%s2381 + $0x38] sm:$0xff] %v2282
      %2390 = vst [vmem:[%s2381 + $0x40] sm:$0xff] %v2287
      %2391 = vst [vmem:[%s2381 + $0x48] sm:$0xff] %v2290
      %2392 = vst [vmem:[%s2381 + $0x50] sm:$0xff] %v2295
      %2393 = vst [vmem:[%s2381 + $0x58] sm:$0xff] %v2298
      %2394 = vst [vmem:[%s2381 + $0x60] sm:$0xff] %v2303
      %2395 = vst [vmem:[%s2381 + $0x68] sm:$0xff] %v2306
      %2396 = vst [vmem:[%s2381 + $0x70] sm:$0xff] %v2311
      %2397 = vst [vmem:[%s2381 + $0x78] sm:$0xff] %v2314
      %2398 = vst [vmem:[%s2381 + $0x80] sm:$0xff] %v2319
      %2399 = vst [vmem:[%s2381 + $0x88] sm:$0xff] %v2322
      %2400 = vst [vmem:[%s2381 + $0x90] sm:$0xff] %v2327
      %2401 = vst [vmem:[%s2381 + $0x98] sm:$0xff] %v2330
      %2402 = vst [vmem:[%s2381 + $0xa0] sm:$0xff] %v2335
      %2403 = vst [vmem:[%s2381 + $0xa8] sm:$0xff] %v2338
      %2404 = vst [vmem:[%s2381 + $0xb0] sm:$0xff] %v2343
      %2405 = vst [vmem:[%s2381 + $0xb8] sm:$0xff] %v2346
      %2406 = vst [vmem:[%s2381 + $0xc0] sm:$0xff] %v2351
      %2407 = vst [vmem:[%s2381 + $0xc8] sm:$0xff] %v2354
      %2408 = vst [vmem:[%s2381 + $0xd0] sm:$0xff] %v2359
      %2409 = vst [vmem:[%s2381 + $0xd8] sm:$0xff] %v2362
      %2410 = vst [vmem:[%s2381 + $0xe0] sm:$0xff] %v2367
      %2411 = vst [vmem:[%s2381 + $0xe8] sm:$0xff] %v2370
      %2412 = vst [vmem:[%s2381 + $0xf0] sm:$0xff] %v2375
      %2413 = vst [vmem:[%s2381 + $0xf8] sm:$0xff] %v2378
      %v2414 = vadd.f32 %v2255, %v2258
      %v2415 = vadd.f32 %v2414, %v2263
      %v2416 = vadd.f32 %v2415, %v2266
      %v2417 = vadd.f32 %v2416, %v2271
      %v2418 = vadd.f32 %v2417, %v2274
      %v2419 = vadd.f32 %v2418, %v2279
      %v2420 = vadd.f32 %v2419, %v2282
      %v2421 = vadd.f32 %v2420, %v2287
      %v2422 = vadd.f32 %v2421, %v2290
      %v2423 = vadd.f32 %v2422, %v2295
      %v2424 = vadd.f32 %v2423, %v2298
      %v2425 = vadd.f32 %v2424, %v2303
      %v2426 = vadd.f32 %v2425, %v2306
      %v2427 = vadd.f32 %v2426, %v2311
      %v2428 = vadd.f32 %v2427, %v2314
      %v2429 = vadd.f32 %v2428, %v2319
      %v2430 = vadd.f32 %v2429, %v2322
      %v2431 = vadd.f32 %v2430, %v2327
      %v2432 = vadd.f32 %v2431, %v2330
      %v2433 = vadd.f32 %v2432, %v2335
      %v2434 = vadd.f32 %v2433, %v2338
      %v2435 = vadd.f32 %v2434, %v2343
      %v2436 = vadd.f32 %v2435, %v2346
      %v2437 = vadd.f32 %v2436, %v2351
      %v2438 = vadd.f32 %v2437, %v2354
      %v2439 = vadd.f32 %v2438, %v2359
      %v2440 = vadd.f32 %v2439, %v2362
      %v2441 = vadd.f32 %v2440, %v2367
      %v2442 = vadd.f32 %v2441, %v2370
      %v2443 = vadd.f32 %v2442, %v2375
      %v2444 = vadd.f32 %v2443, %v2378
      %v2445 = vrot.slane %v2444, 4
      %v2446 = vadd.f32 %v2444, %v2445
      %v2447 = vrot.slane %v2446, 2
      %v2448 = vadd.f32 %v2446, %v2447
      %v2449 = vrot.slane %v2448, 1
      %v2450 = vadd.f32 %v2448, %v2449
      %v2451 = vadd.f32 %v1263, %v2450
      %v2452 = vmul.f32 %v2255, %v2255
      %v2453 = vmul.f32 %v2258, %v2258
      %v2454 = vmul.f32 %v2263, %v2263
      %v2455 = vmul.f32 %v2266, %v2266
      %v2456 = vmul.f32 %v2271, %v2271
      %v2457 = vmul.f32 %v2274, %v2274
      %v2458 = vmul.f32 %v2279, %v2279
      %v2459 = vmul.f32 %v2282, %v2282
      %v2460 = vmul.f32 %v2287, %v2287
      %v2461 = vmul.f32 %v2290, %v2290
      %v2462 = vmul.f32 %v2295, %v2295
      %v2463 = vmul.f32 %v2298, %v2298
      %v2464 = vmul.f32 %v2303, %v2303
      %v2465 = vmul.f32 %v2306, %v2306
      %v2466 = vmul.f32 %v2311, %v2311
      %v2467 = vmul.f32 %v2314, %v2314
      %v2468 = vmul.f32 %v2319, %v2319
      %v2469 = vmul.f32 %v2322, %v2322
      %v2470 = vmul.f32 %v2327, %v2327
      %v2471 = vmul.f32 %v2330, %v2330
      %v2472 = vmul.f32 %v2335, %v2335
      %v2473 = vmul.f32 %v2338, %v2338
      %v2474 = vmul.f32 %v2343, %v2343
      %v2475 = vmul.f32 %v2346, %v2346
      %v2476 = vmul.f32 %v2351, %v2351
      %v2477 = vmul.f32 %v2354, %v2354
      %v2478 = vmul.f32 %v2359, %v2359
      %v2479 = vmul.f32 %v2362, %v2362
      %v2480 = vmul.f32 %v2367, %v2367
      %v2481 = vmul.f32 %v2370, %v2370
      %v2482 = vmul.f32 %v2375, %v2375
      %v2483 = vmul.f32 %v2378, %v2378
      %v2484 = vadd.f32 %v2452, %v2453
      %v2485 = vadd.f32 %v2484, %v2454
      %v2486 = vadd.f32 %v2485, %v2455
      %v2487 = vadd.f32 %v2486, %v2456
      %v2488 = vadd.f32 %v2487, %v2457
      %v2489 = vadd.f32 %v2488, %v2458
      %v2490 = vadd.f32 %v2489, %v2459
      %v2491 = vadd.f32 %v2490, %v2460
      %v2492 = vadd.f32 %v2491, %v2461
      %v2493 = vadd.f32 %v2492, %v2462
      %v2494 = vadd.f32 %v2493, %v2463
      %v2495 = vadd.f32 %v2494, %v2464
      %v2496 = vadd.f32 %v2495, %v2465
      %v2497 = vadd.f32 %v2496, %v2466
      %v2498 = vadd.f32 %v2497, %v2467
      %v2499 = vadd.f32 %v2498, %v2468
      %v2500 = vadd.f32 %v2499, %v2469
      %v2501 = vadd.f32 %v2500, %v2470
      %v2502 = vadd.f32 %v2501, %v2471
      %v2503 = vadd.f32 %v2502, %v2472
      %v2504 = vadd.f32 %v2503, %v2473
      %v2505 = vadd.f32 %v2504, %v2474
      %v2506 = vadd.f32 %v2505, %v2475
      %v2507 = vadd.f32 %v2506, %v2476
      %v2508 = vadd.f32 %v2507, %v2477
      %v2509 = vadd.f32 %v2508, %v2478
      %v2510 = vadd.f32 %v2509, %v2479
      %v2511 = vadd.f32 %v2510, %v2480
      %v2512 = vadd.f32 %v2511, %v2481
      %v2513 = vadd.f32 %v2512, %v2482
      %v2514 = vadd.f32 %v2513, %v2483
      %v2515 = vrot.slane %v2514, 4
      %v2516 = vadd.f32 %v2514, %v2515
      %v2517 = vrot.slane %v2516, 2
      %v2518 = vadd.f32 %v2516, %v2517
      %v2519 = vrot.slane %v2518, 1
      %v2520 = vadd.f32 %v2518, %v2519
      %v2521 = vadd.f32 %v1333, %v2520
      %s2522 = scalar_lea.vmem [#allocation2], 12
      %v2523 = vld [vmem:[%s2522] sm:$0xf]
      %v2524 = vld [vmem:[%s2522 + $0x4] sm:$0xf]
      %v2525 = vld [vmem:[%s2522 + $0xc] sm:$0xf]
      %v2526 = vld [vmem:[%s2522 + $0x10] sm:$0xf]
      %v2527 = vld [vmem:[%s2522 + $0x18] sm:$0xf]
      %v2528 = vld [vmem:[%s2522 + $0x1c] sm:$0xf]
      %v2529 = vld [vmem:[%s2522 + $0x24] sm:$0xf]
      %v2530 = vld [vmem:[%s2522 + $0x28] sm:$0xf]
      %v2531 = vld [vmem:[%s2522 + $0x30] sm:$0xf]
      %v2532 = vld [vmem:[%s2522 + $0x34] sm:$0xf]
      %v2533 = vld [vmem:[%s2522 + $0x3c] sm:$0xf]
      %v2534 = vld [vmem:[%s2522 + $0x40] sm:$0xf]
      %v2535 = vld [vmem:[%s2522 + $0x48] sm:$0xf]
      %v2536 = vld [vmem:[%s2522 + $0x4c] sm:$0xf]
      %v2537 = vld [vmem:[%s2522 + $0x54] sm:$0xf]
      %v2538 = vld [vmem:[%s2522 + $0x58] sm:$0xf]
      %v2539 = vld [vmem:[%s2522 + $0x60] sm:$0xf]
      %v2540 = vld [vmem:[%s2522 + $0x64] sm:$0xf]
      %v2541 = vld [vmem:[%s2522 + $0x6c] sm:$0xf]
      %v2542 = vld [vmem:[%s2522 + $0x70] sm:$0xf]
      %v2543 = vld [vmem:[%s2522 + $0x78] sm:$0xf]
      %v2544 = vld [vmem:[%s2522 + $0x7c] sm:$0xf]
      %v2545 = vld [vmem:[%s2522 + $0x84] sm:$0xf]
      %v2546 = vld [vmem:[%s2522 + $0x88] sm:$0xf]
      %v2547 = vld [vmem:[%s2522 + $0x90] sm:$0xf]
      %v2548 = vld [vmem:[%s2522 + $0x94] sm:$0xf]
      %v2549 = vld [vmem:[%s2522 + $0x9c] sm:$0xf]
      %v2550 = vld [vmem:[%s2522 + $0xa0] sm:$0xf]
      %v2551 = vld [vmem:[%s2522 + $0xa8] sm:$0xf]
      %v2552 = vld [vmem:[%s2522 + $0xac] sm:$0xf]
      %v2553 = vld [vmem:[%s2522 + $0xb4] sm:$0xf]
      %v2554 = vld [vmem:[%s2522 + $0xb8] sm:$0xf]
      %s2555 = scalar_lea.vmem %s3, 64
      %v2556 = vld [vmem:[%s2555] sm:$0xf]
      %v2557 = vld [vmem:[%s2555 + $0x4] sm:$0xf]
      %v2558 = vld [vmem:[%s2555 + $0x8] sm:$0xf]
      %v2559 = vld [vmem:[%s2555 + $0xc] sm:$0xf]
      %v2560 = vld [vmem:[%s2555 + $0x10] sm:$0xf]
      %v2561 = vld [vmem:[%s2555 + $0x14] sm:$0xf]
      %v2562 = vld [vmem:[%s2555 + $0x18] sm:$0xf]
      %v2563 = vld [vmem:[%s2555 + $0x1c] sm:$0xf]
      %v2564 = vld [vmem:[%s2555 + $0x20] sm:$0xf]
      %v2565 = vld [vmem:[%s2555 + $0x24] sm:$0xf]
      %v2566 = vld [vmem:[%s2555 + $0x28] sm:$0xf]
      %v2567 = vld [vmem:[%s2555 + $0x2c] sm:$0xf]
      %v2568 = vld [vmem:[%s2555 + $0x30] sm:$0xf]
      %v2569 = vld [vmem:[%s2555 + $0x34] sm:$0xf]
      %v2570 = vld [vmem:[%s2555 + $0x38] sm:$0xf]
      %v2571 = vld [vmem:[%s2555 + $0x3c] sm:$0xf]
      %v2572 = vld [vmem:[#allocation2] sm:$0xf]
      %v2573 = vld [vmem:[#allocation2 + $0x4] sm:$0xf]
      %v2574 = vld [vmem:[#allocation2 + $0xc] sm:$0xf]
      %v2575 = vld [vmem:[#allocation2 + $0x10] sm:$0xf]
      %v2576 = vld [vmem:[#allocation2 + $0x18] sm:$0xf]
      %v2577 = vld [vmem:[#allocation2 + $0x1c] sm:$0xf]
      %v2578 = vld [vmem:[#allocation2 + $0x24] sm:$0xf]
      %v2579 = vld [vmem:[#allocation2 + $0x28] sm:$0xf]
      %v2580 = vld [vmem:[#allocation2 + $0x30] sm:$0xf]
      %v2581 = vld [vmem:[#allocation2 + $0x34] sm:$0xf]
      %v2582 = vld [vmem:[#allocation2 + $0x3c] sm:$0xf]
      %v2583 = vld [vmem:[#allocation2 + $0x40] sm:$0xf]
      %v2584 = vld [vmem:[#allocation2 + $0x48] sm:$0xf]
      %v2585 = vld [vmem:[#allocation2 + $0x4c] sm:$0xf]
      %v2586 = vld [vmem:[#allocation2 + $0x54] sm:$0xf]
      %v2587 = vld [vmem:[#allocation2 + $0x58] sm:$0xf]
      %v2588 = vld [vmem:[#allocation2 + $0x60] sm:$0xf]
      %v2589 = vld [vmem:[#allocation2 + $0x64] sm:$0xf]
      %v2590 = vld [vmem:[#allocation2 + $0x6c] sm:$0xf]
      %v2591 = vld [vmem:[#allocation2 + $0x70] sm:$0xf]
      %v2592 = vld [vmem:[#allocation2 + $0x78] sm:$0xf]
      %v2593 = vld [vmem:[#allocation2 + $0x7c] sm:$0xf]
      %v2594 = vld [vmem:[#allocation2 + $0x84] sm:$0xf]
      %v2595 = vld [vmem:[#allocation2 + $0x88] sm:$0xf]
      %v2596 = vld [vmem:[#allocation2 + $0x90] sm:$0xf]
      %v2597 = vld [vmem:[#allocation2 + $0x94] sm:$0xf]
      %v2598 = vld [vmem:[#allocation2 + $0x9c] sm:$0xf]
      %v2599 = vld [vmem:[#allocation2 + $0xa0] sm:$0xf]
      %v2600 = vld [vmem:[#allocation2 + $0xa8] sm:$0xf]
      %v2601 = vld [vmem:[#allocation2 + $0xac] sm:$0xf]
      %v2602 = vld [vmem:[#allocation2 + $0xb4] sm:$0xf]
      %v2603 = vld [vmem:[#allocation2 + $0xb8] sm:$0xf]
      %s2604 = scalar_lea.vmem %s3, 448
      %v2605 = vld [vmem:[%s2604] sm:$0xf]
      %v2606 = vld [vmem:[%s2604 + $0x4] sm:$0xf]
      %v2607 = vld [vmem:[%s2604 + $0x8] sm:$0xf]
      %v2608 = vld [vmem:[%s2604 + $0xc] sm:$0xf]
      %v2609 = vld [vmem:[%s2604 + $0x10] sm:$0xf]
      %v2610 = vld [vmem:[%s2604 + $0x14] sm:$0xf]
      %v2611 = vld [vmem:[%s2604 + $0x18] sm:$0xf]
      %v2612 = vld [vmem:[%s2604 + $0x1c] sm:$0xf]
      %v2613 = vld [vmem:[%s2604 + $0x20] sm:$0xf]
      %v2614 = vld [vmem:[%s2604 + $0x24] sm:$0xf]
      %v2615 = vld [vmem:[%s2604 + $0x28] sm:$0xf]
      %v2616 = vld [vmem:[%s2604 + $0x2c] sm:$0xf]
      %v2617 = vld [vmem:[%s2604 + $0x30] sm:$0xf]
      %v2618 = vld [vmem:[%s2604 + $0x34] sm:$0xf]
      %v2619 = vld [vmem:[%s2604 + $0x38] sm:$0xf]
      %v2620 = vld [vmem:[%s2604 + $0x3c] sm:$0xf]
      %v2653 = vunpack.c.l.b16 %v2572
      %v2654 = vunpack.c.l.b16 %v2573
      %v2655 = vunpack.c.l.b16 %v2574
      %v2656 = vunpack.c.l.b16 %v2575
      %v2657 = vunpack.c.l.b16 %v2576
      %v2658 = vunpack.c.l.b16 %v2577
      %v2659 = vunpack.c.l.b16 %v2578
      %v2660 = vunpack.c.l.b16 %v2579
      %v2661 = vunpack.c.l.b16 %v2580
      %v2662 = vunpack.c.l.b16 %v2581
      %v2663 = vunpack.c.l.b16 %v2582
      %v2664 = vunpack.c.l.b16 %v2583
      %v2665 = vunpack.c.l.b16 %v2584
      %v2666 = vunpack.c.l.b16 %v2585
      %v2667 = vunpack.c.l.b16 %v2586
      %v2668 = vunpack.c.l.b16 %v2587
      %v2669 = vunpack.c.l.b16 %v2588
      %v2670 = vunpack.c.l.b16 %v2589
      %v2671 = vunpack.c.l.b16 %v2590
      %v2672 = vunpack.c.l.b16 %v2591
      %v2673 = vunpack.c.l.b16 %v2592
      %v2674 = vunpack.c.l.b16 %v2593
      %v2675 = vunpack.c.l.b16 %v2594
      %v2676 = vunpack.c.l.b16 %v2595
      %v2677 = vunpack.c.l.b16 %v2596
      %v2678 = vunpack.c.l.b16 %v2597
      %v2679 = vunpack.c.l.b16 %v2598
      %v2680 = vunpack.c.l.b16 %v2599
      %v2681 = vunpack.c.l.b16 %v2600
      %v2682 = vunpack.c.l.b16 %v2601
      %v2683 = vunpack.c.l.b16 %v2602
      %v2684 = vunpack.c.l.b16 %v2603
      %v2685 = vpack.c.b16 %v2654, %v2653
      %v2686 = vpack.c.b16 %v2656, %v2655
      %v2687 = vpack.c.b16 %v2658, %v2657
      %v2688 = vpack.c.b16 %v2660, %v2659
      %v2689 = vpack.c.b16 %v2662, %v2661
      %v2690 = vpack.c.b16 %v2664, %v2663
      %v2691 = vpack.c.b16 %v2666, %v2665
      %v2692 = vpack.c.b16 %v2668, %v2667
      %v2693 = vpack.c.b16 %v2670, %v2669
      %v2694 = vpack.c.b16 %v2672, %v2671
      %v2695 = vpack.c.b16 %v2674, %v2673
      %v2696 = vpack.c.b16 %v2676, %v2675
      %v2697 = vpack.c.b16 %v2678, %v2677
      %v2698 = vpack.c.b16 %v2680, %v2679
      %v2699 = vpack.c.b16 %v2682, %v2681
      %v2700 = vpack.c.b16 %v2684, %v2683
      %v2733 = vunpack.c.l.b16 %v2605
      %v2734 = vunpack.c.l.b16 %v2606
      %v2735 = vunpack.c.l.b16 %v2607
      %v2736 = vunpack.c.l.b16 %v2608
      %v2737 = vunpack.c.l.b16 %v2609
      %v2738 = vunpack.c.l.b16 %v2610
      %v2739 = vunpack.c.l.b16 %v2611
      %v2740 = vunpack.c.l.b16 %v2612
      %v2741 = vunpack.c.l.b16 %v2613
      %v2742 = vunpack.c.l.b16 %v2614
      %v2743 = vunpack.c.l.b16 %v2615
      %v2744 = vunpack.c.l.b16 %v2616
      %v2745 = vunpack.c.l.b16 %v2617
      %v2746 = vunpack.c.l.b16 %v2618
      %v2747 = vunpack.c.l.b16 %v2619
      %v2748 = vunpack.c.l.b16 %v2620
      %v2749 = vpack.c.b16 %v2734, %v2733
      %v2750 = vpack.c.b16 %v2736, %v2735
      %v2751 = vpack.c.b16 %v2738, %v2737
      %v2752 = vpack.c.b16 %v2740, %v2739
      %v2753 = vpack.c.b16 %v2742, %v2741
      %v2754 = vpack.c.b16 %v2744, %v2743
      %v2755 = vpack.c.b16 %v2746, %v2745
      %v2756 = vpack.c.b16 %v2748, %v2747
      %2765 = vmatprep.subr.bf16.mxu0 0
      %2766 = vmatpush1.bf16.msra.mxu0 %v2749
      %2767 = vmatprep.subr.bf16.mxu0 0
      %2768 = vmatpush1.bf16.msra.mxu0 %v2750
      %2769 = vmatprep.subr.bf16.mxu0 0
      %2770 = vmatpush1.bf16.msra.mxu0 %v2751
      %2771 = vmatprep.subr.bf16.mxu0 0
      %2772 = vmatpush1.bf16.msra.mxu0 %v2752
      %2773 = vmatprep.subr.bf16.mxu0 0
      %2774 = vmatpush1.bf16.msra.mxu0 %v2753
      %2775 = vmatprep.subr.bf16.mxu0 0
      %2776 = vmatpush1.bf16.msra.mxu0 %v2754
      %2777 = vmatprep.subr.bf16.mxu0 0
      %2778 = vmatpush1.bf16.msra.mxu0 %v2755
      %2779 = vmatprep.subr.bf16.mxu0 0
      %2780 = vmatpush1.bf16.msra.mxu0 %v2756
      %2781 = vmatprep.subr.bf16.mxu0 0
      %2782 = vmatpush1.bf16.msra.mxu0 0
      %2783 = vmatprep.subr.bf16.mxu0 0
      %2784 = vmatpush1.bf16.msra.mxu0 0
      %2785 = vmatprep.subr.bf16.mxu0 0
      %2786 = vmatpush1.bf16.msra.mxu0 0
      %2787 = vmatprep.subr.bf16.mxu0 0
      %2788 = vmatpush1.bf16.msra.mxu0 0
      %2789 = vmatprep.subr.bf16.mxu0 0
      %2790 = vmatpush1.bf16.msra.mxu0 0
      %2791 = vmatprep.subr.bf16.mxu0 0
      %2792 = vmatpush1.bf16.msra.mxu0 0
      %2793 = vmatprep.subr.bf16.mxu0 0
      %2794 = vmatpush1.bf16.msra.mxu0 0
      %2795 = vmatprep.subr.bf16.mxu0 0
      %2796 = vmatpush1.bf16.msra.mxu0 0
      %2797 = vmatprep.mubr.bf16.mxu0 0
      %2798 = vmatmul.mubr.bf16.gmra.mrb[0].mxu0 %v2685
      %v2799 = vpop.f32.mrb[0].mxu0
      %v2800 = vadd.f32 0.0, %v2799
      %v2801 = vpop.f32.mrb[0].mxu0
      %v2802 = vpop.f32.mrb[0].mxu0
      %v2803 = vadd.f32 0.0, %v2802
      %v2804 = vpop.f32.mrb[0].mxu0
      %2805 = vmatprep.mubr.bf16.mxu0 0
      %2806 = vmatmul.mubr.bf16.gmra.mrb[0].mxu0 %v2686
      %v2807 = vpop.f32.mrb[0].mxu0
      %v2808 = vadd.f32 0.0, %v2807
      %v2809 = vpop.f32.mrb[0].mxu0
      %v2810 = vpop.f32.mrb[0].mxu0
      %v2811 = vadd.f32 0.0, %v2810
      %v2812 = vpop.f32.mrb[0].mxu0
      %2813 = vmatprep.mubr.bf16.mxu0 0
      %2814 = vmatmul.mubr.bf16.gmra.mrb[0].mxu0 %v2687
      %v2815 = vpop.f32.mrb[0].mxu0
      %v2816 = vadd.f32 0.0, %v2815
      %v2817 = vpop.f32.mrb[0].mxu0
      %v2818 = vpop.f32.mrb[0].mxu0
      %v2819 = vadd.f32 0.0, %v2818
      %v2820 = vpop.f32.mrb[0].mxu0
      %2821 = vmatprep.mubr.bf16.mxu0 0
      %2822 = vmatmul.mubr.bf16.gmra.mrb[0].mxu0 %v2688
      %v2823 = vpop.f32.mrb[0].mxu0
      %v2824 = vadd.f32 0.0, %v2823
      %v2825 = vpop.f32.mrb[0].mxu0
      %v2826 = vpop.f32.mrb[0].mxu0
      %v2827 = vadd.f32 0.0, %v2826
      %v2828 = vpop.f32.mrb[0].mxu0
      %2829 = vmatprep.mubr.bf16.mxu0 0
      %2830 = vmatmul.mubr.bf16.gmra.mrb[0].mxu0 %v2689
      %v2831 = vpop.f32.mrb[0].mxu0
      %v2832 = vadd.f32 0.0, %v2831
      %v2833 = vpop.f32.mrb[0].mxu0
      %v2834 = vpop.f32.mrb[0].mxu0
      %v2835 = vadd.f32 0.0, %v2834
      %v2836 = vpop.f32.mrb[0].mxu0
      %2837 = vmatprep.mubr.bf16.mxu0 0
      %2838 = vmatmul.mubr.bf16.gmra.mrb[0].mxu0 %v2690
      %v2839 = vpop.f32.mrb[0].mxu0
      %v2840 = vadd.f32 0.0, %v2839
      %v2841 = vpop.f32.mrb[0].mxu0
      %v2842 = vpop.f32.mrb[0].mxu0
      %v2843 = vadd.f32 0.0, %v2842
      %v2844 = vpop.f32.mrb[0].mxu0
      %2845 = vmatprep.mubr.bf16.mxu0 0
      %2846 = vmatmul.mubr.bf16.gmra.mrb[0].mxu0 %v2691
      %v2847 = vpop.f32.mrb[0].mxu0
      %v2848 = vadd.f32 0.0, %v2847
      %v2849 = vpop.f32.mrb[0].mxu0
      %v2850 = vpop.f32.mrb[0].mxu0
      %v2851 = vadd.f32 0.0, %v2850
      %v2852 = vpop.f32.mrb[0].mxu0
      %2853 = vmatprep.mubr.bf16.mxu0 0
      %2854 = vmatmul.mubr.bf16.gmra.mrb[0].mxu0 %v2692
      %v2855 = vpop.f32.mrb[0].mxu0
      %v2856 = vadd.f32 0.0, %v2855
      %v2857 = vpop.f32.mrb[0].mxu0
      %v2858 = vpop.f32.mrb[0].mxu0
      %v2859 = vadd.f32 0.0, %v2858
      %v2860 = vpop.f32.mrb[0].mxu0
      %2861 = vmatprep.mubr.bf16.mxu0 0
      %2862 = vmatmul.mubr.bf16.gmra.mrb[0].mxu0 %v2693
      %v2863 = vpop.f32.mrb[0].mxu0
      %v2864 = vadd.f32 0.0, %v2863
      %v2865 = vpop.f32.mrb[0].mxu0
      %v2866 = vpop.f32.mrb[0].mxu0
      %v2867 = vadd.f32 0.0, %v2866
      %v2868 = vpop.f32.mrb[0].mxu0
      %2869 = vmatprep.mubr.bf16.mxu0 0
      %2870 = vmatmul.mubr.bf16.gmra.mrb[0].mxu0 %v2694
      %v2871 = vpop.f32.mrb[0].mxu0
      %v2872 = vadd.f32 0.0, %v2871
      %v2873 = vpop.f32.mrb[0].mxu0
      %v2874 = vpop.f32.mrb[0].mxu0
      %v2875 = vadd.f32 0.0, %v2874
      %v2876 = vpop.f32.mrb[0].mxu0
      %2877 = vmatprep.mubr.bf16.mxu0 0
      %2878 = vmatmul.mubr.bf16.gmra.mrb[0].mxu0 %v2695
      %v2879 = vpop.f32.mrb[0].mxu0
      %v2880 = vadd.f32 0.0, %v2879
      %v2881 = vpop.f32.mrb[0].mxu0
      %v2882 = vpop.f32.mrb[0].mxu0
      %v2883 = vadd.f32 0.0, %v2882
      %v2884 = vpop.f32.mrb[0].mxu0
      %2885 = vmatprep.mubr.bf16.mxu0 0
      %2886 = vmatmul.mubr.bf16.gmra.mrb[0].mxu0 %v2696
      %v2887 = vpop.f32.mrb[0].mxu0
      %v2888 = vadd.f32 0.0, %v2887
      %v2889 = vpop.f32.mrb[0].mxu0
      %v2890 = vpop.f32.mrb[0].mxu0
      %v2891 = vadd.f32 0.0, %v2890
      %v2892 = vpop.f32.mrb[0].mxu0
      %2893 = vmatprep.mubr.bf16.mxu0 0
      %2894 = vmatmul.mubr.bf16.gmra.mrb[0].mxu0 %v2697
      %v2895 = vpop.f32.mrb[0].mxu0
      %v2896 = vadd.f32 0.0, %v2895
      %v2897 = vpop.f32.mrb[0].mxu0
      %v2898 = vpop.f32.mrb[0].mxu0
      %v2899 = vadd.f32 0.0, %v2898
      %v2900 = vpop.f32.mrb[0].mxu0
      %2901 = vmatprep.mubr.bf16.mxu0 0
      %2902 = vmatmul.mubr.bf16.gmra.mrb[0].mxu0 %v2698
      %v2903 = vpop.f32.mrb[0].mxu0
      %v2904 = vadd.f32 0.0, %v2903
      %v2905 = vpop.f32.mrb[0].mxu0
      %v2906 = vpop.f32.mrb[0].mxu0
      %v2907 = vadd.f32 0.0, %v2906
      %v2908 = vpop.f32.mrb[0].mxu0
      %2909 = vmatprep.mubr.bf16.mxu0 0
      %2910 = vmatmul.mubr.bf16.gmra.mrb[0].mxu0 %v2699
      %v2911 = vpop.f32.mrb[0].mxu0
      %v2912 = vadd.f32 0.0, %v2911
      %v2913 = vpop.f32.mrb[0].mxu0
      %v2914 = vpop.f32.mrb[0].mxu0
      %v2915 = vadd.f32 0.0, %v2914
      %v2916 = vpop.f32.mrb[0].mxu0
      %2917 = vmatprep.mubr.bf16.mxu0 0
      %2918 = vmatmul.mubr.bf16.gmra.mrb[0].mxu0 %v2700
      %v2919 = vpop.f32.mrb[0].mxu0
      %v2920 = vadd.f32 0.0, %v2919
      %v2921 = vpop.f32.mrb[0].mxu0
      %v2922 = vpop.f32.mrb[0].mxu0
      %v2923 = vadd.f32 0.0, %v2922
      %v2924 = vpop.f32.mrb[0].mxu0
      %2925 = vdwg.mxu0
      %v2958 = vunpack.c.l.b16 %v2523
      %v2959 = vunpack.c.l.b16 %v2524
      %v2960 = vunpack.c.l.b16 %v2525
      %v2961 = vunpack.c.l.b16 %v2526
      %v2962 = vunpack.c.l.b16 %v2527
      %v2963 = vunpack.c.l.b16 %v2528
      %v2964 = vunpack.c.l.b16 %v2529
      %v2965 = vunpack.c.l.b16 %v2530
      %v2966 = vunpack.c.l.b16 %v2531
      %v2967 = vunpack.c.l.b16 %v2532
      %v2968 = vunpack.c.l.b16 %v2533
      %v2969 = vunpack.c.l.b16 %v2534
      %v2970 = vunpack.c.l.b16 %v2535
      %v2971 = vunpack.c.l.b16 %v2536
      %v2972 = vunpack.c.l.b16 %v2537
      %v2973 = vunpack.c.l.b16 %v2538
      %v2974 = vunpack.c.l.b16 %v2539
      %v2975 = vunpack.c.l.b16 %v2540
      %v2976 = vunpack.c.l.b16 %v2541
      %v2977 = vunpack.c.l.b16 %v2542
      %v2978 = vunpack.c.l.b16 %v2543
      %v2979 = vunpack.c.l.b16 %v2544
      %v2980 = vunpack.c.l.b16 %v2545
      %v2981 = vunpack.c.l.b16 %v2546
      %v2982 = vunpack.c.l.b16 %v2547
      %v2983 = vunpack.c.l.b16 %v2548
      %v2984 = vunpack.c.l.b16 %v2549
      %v2985 = vunpack.c.l.b16 %v2550
      %v2986 = vunpack.c.l.b16 %v2551
      %v2987 = vunpack.c.l.b16 %v2552
      %v2988 = vunpack.c.l.b16 %v2553
      %v2989 = vunpack.c.l.b16 %v2554
      %v2990 = vpack.c.b16 %v2959, %v2958
      %v2991 = vpack.c.b16 %v2961, %v2960
      %v2992 = vpack.c.b16 %v2963, %v2962
      %v2993 = vpack.c.b16 %v2965, %v2964
      %v2994 = vpack.c.b16 %v2967, %v2966
      %v2995 = vpack.c.b16 %v2969, %v2968
      %v2996 = vpack.c.b16 %v2971, %v2970
      %v2997 = vpack.c.b16 %v2973, %v2972
      %v2998 = vpack.c.b16 %v2975, %v2974
      %v2999 = vpack.c.b16 %v2977, %v2976
      %v3000 = vpack.c.b16 %v2979, %v2978
      %v3001 = vpack.c.b16 %v2981, %v2980
      %v3002 = vpack.c.b16 %v2983, %v2982
      %v3003 = vpack.c.b16 %v2985, %v2984
      %v3004 = vpack.c.b16 %v2987, %v2986
      %v3005 = vpack.c.b16 %v2989, %v2988
      %v3038 = vunpack.c.l.b16 %v2556
      %v3039 = vunpack.c.l.b16 %v2557
      %v3040 = vunpack.c.l.b16 %v2558
      %v3041 = vunpack.c.l.b16 %v2559
      %v3042 = vunpack.c.l.b16 %v2560
      %v3043 = vunpack.c.l.b16 %v2561
      %v3044 = vunpack.c.l.b16 %v2562
      %v3045 = vunpack.c.l.b16 %v2563
      %v3046 = vunpack.c.l.b16 %v2564
      %v3047 = vunpack.c.l.b16 %v2565
      %v3048 = vunpack.c.l.b16 %v2566
      %v3049 = vunpack.c.l.b16 %v2567
      %v3050 = vunpack.c.l.b16 %v2568
      %v3051 = vunpack.c.l.b16 %v2569
      %v3052 = vunpack.c.l.b16 %v2570
      %v3053 = vunpack.c.l.b16 %v2571
      %v3054 = vpack.c.b16 %v3039, %v3038
      %v3055 = vpack.c.b16 %v3041, %v3040
      %v3056 = vpack.c.b16 %v3043, %v3042
      %v3057 = vpack.c.b16 %v3045, %v3044
      %v3058 = vpack.c.b16 %v3047, %v3046
      %v3059 = vpack.c.b16 %v3049, %v3048
      %v3060 = vpack.c.b16 %v3051, %v3050
      %v3061 = vpack.c.b16 %v3053, %v3052
      %3070 = vmatprep.subr.bf16.mxu0 0
      %3071 = vmatpush1.bf16.msra.mxu0 %v3054
      %3072 = vmatprep.subr.bf16.mxu0 0
      %3073 = vmatpush1.bf16.msra.mxu0 %v3055
      %3074 = vmatprep.subr.bf16.mxu0 0
      %3075 = vmatpush1.bf16.msra.mxu0 %v3056
      %3076 = vmatprep.subr.bf16.mxu0 0
      %3077 = vmatpush1.bf16.msra.mxu0 %v3057
      %3078 = vmatprep.subr.bf16.mxu0 0
      %3079 = vmatpush1.bf16.msra.mxu0 %v3058
      %3080 = vmatprep.subr.bf16.mxu0 0
      %3081 = vmatpush1.bf16.msra.mxu0 %v3059
      %3082 = vmatprep.subr.bf16.mxu0 0
      %3083 = vmatpush1.bf16.msra.mxu0 %v3060
      %3084 = vmatprep.subr.bf16.mxu0 0
      %3085 = vmatpush1.bf16.msra.mxu0 %v3061
      %3086 = vmatprep.subr.bf16.mxu0 0
      %3087 = vmatpush1.bf16.msra.mxu0 0
      %3088 = vmatprep.subr.bf16.mxu0 0
      %3089 = vmatpush1.bf16.msra.mxu0 0
      %3090 = vmatprep.subr.bf16.mxu0 0
      %3091 = vmatpush1.bf16.msra.mxu0 0
      %3092 = vmatprep.subr.bf16.mxu0 0
      %3093 = vmatpush1.bf16.msra.mxu0 0
      %3094 = vmatprep.subr.bf16.mxu0 0
      %3095 = vmatpush1.bf16.msra.mxu0 0
      %3096 = vmatprep.subr.bf16.mxu0 0
      %3097 = vmatpush1.bf16.msra.mxu0 0
      %3098 = vmatprep.subr.bf16.mxu0 0
      %3099 = vmatpush1.bf16.msra.mxu0 0
      %3100 = vmatprep.subr.bf16.mxu0 0
      %3101 = vmatpush1.bf16.msra.mxu0 0
      %3102 = vmatprep.mubr.bf16.mxu0 0
      %3103 = vmatmul.mubr.bf16.gmra.mrb[0].mxu0 %v2990
      %v3104 = vpop.f32.mrb[0].mxu0
      %v3105 = vadd.f32 %v2800, %v3104
      %v3106 = vpop.f32.mrb[0].mxu0
      %v3107 = vpop.f32.mrb[0].mxu0
      %v3108 = vadd.f32 %v2803, %v3107
      %v3109 = vpop.f32.mrb[0].mxu0
      %3110 = vmatprep.mubr.bf16.mxu0 0
      %3111 = vmatmul.mubr.bf16.gmra.mrb[0].mxu0 %v2991
      %v3112 = vpop.f32.mrb[0].mxu0
      %v3113 = vadd.f32 %v2808, %v3112
      %v3114 = vpop.f32.mrb[0].mxu0
      %v3115 = vpop.f32.mrb[0].mxu0
      %v3116 = vadd.f32 %v2811, %v3115
      %v3117 = vpop.f32.mrb[0].mxu0
      %3118 = vmatprep.mubr.bf16.mxu0 0
      %3119 = vmatmul.mubr.bf16.gmra.mrb[0].mxu0 %v2992
      %v3120 = vpop.f32.mrb[0].mxu0
      %v3121 = vadd.f32 %v2816, %v3120
      %v3122 = vpop.f32.mrb[0].mxu0
      %v3123 = vpop.f32.mrb[0].mxu0
      %v3124 = vadd.f32 %v2819, %v3123
      %v3125 = vpop.f32.mrb[0].mxu0
      %3126 = vmatprep.mubr.bf16.mxu0 0
      %3127 = vmatmul.mubr.bf16.gmra.mrb[0].mxu0 %v2993
      %v3128 = vpop.f32.mrb[0].mxu0
      %v3129 = vadd.f32 %v2824, %v3128
      %v3130 = vpop.f32.mrb[0].mxu0
      %v3131 = vpop.f32.mrb[0].mxu0
      %v3132 = vadd.f32 %v2827, %v3131
      %v3133 = vpop.f32.mrb[0].mxu0
      %3134 = vmatprep.mubr.bf16.mxu0 0
      %3135 = vmatmul.mubr.bf16.gmra.mrb[0].mxu0 %v2994
      %v3136 = vpop.f32.mrb[0].mxu0
      %v3137 = vadd.f32 %v2832, %v3136
      %v3138 = vpop.f32.mrb[0].mxu0
      %v3139 = vpop.f32.mrb[0].mxu0
      %v3140 = vadd.f32 %v2835, %v3139
      %v3141 = vpop.f32.mrb[0].mxu0
      %3142 = vmatprep.mubr.bf16.mxu0 0
      %3143 = vmatmul.mubr.bf16.gmra.mrb[0].mxu0 %v2995
      %v3144 = vpop.f32.mrb[0].mxu0
      %v3145 = vadd.f32 %v2840, %v3144
      %v3146 = vpop.f32.mrb[0].mxu0
      %v3147 = vpop.f32.mrb[0].mxu0
      %v3148 = vadd.f32 %v2843, %v3147
      %v3149 = vpop.f32.mrb[0].mxu0
      %3150 = vmatprep.mubr.bf16.mxu0 0
      %3151 = vmatmul.mubr.bf16.gmra.mrb[0].mxu0 %v2996
      %v3152 = vpop.f32.mrb[0].mxu0
      %v3153 = vadd.f32 %v2848, %v3152
      %v3154 = vpop.f32.mrb[0].mxu0
      %v3155 = vpop.f32.mrb[0].mxu0
      %v3156 = vadd.f32 %v2851, %v3155
      %v3157 = vpop.f32.mrb[0].mxu0
      %3158 = vmatprep.mubr.bf16.mxu0 0
      %3159 = vmatmul.mubr.bf16.gmra.mrb[0].mxu0 %v2997
      %v3160 = vpop.f32.mrb[0].mxu0
      %v3161 = vadd.f32 %v2856, %v3160
      %v3162 = vpop.f32.mrb[0].mxu0
      %v3163 = vpop.f32.mrb[0].mxu0
      %v3164 = vadd.f32 %v2859, %v3163
      %v3165 = vpop.f32.mrb[0].mxu0
      %3166 = vmatprep.mubr.bf16.mxu0 0
      %3167 = vmatmul.mubr.bf16.gmra.mrb[0].mxu0 %v2998
      %v3168 = vpop.f32.mrb[0].mxu0
      %v3169 = vadd.f32 %v2864, %v3168
      %v3170 = vpop.f32.mrb[0].mxu0
      %v3171 = vpop.f32.mrb[0].mxu0
      %v3172 = vadd.f32 %v2867, %v3171
      %v3173 = vpop.f32.mrb[0].mxu0
      %3174 = vmatprep.mubr.bf16.mxu0 0
      %3175 = vmatmul.mubr.bf16.gmra.mrb[0].mxu0 %v2999
      %v3176 = vpop.f32.mrb[0].mxu0
      %v3177 = vadd.f32 %v2872, %v3176
      %v3178 = vpop.f32.mrb[0].mxu0
      %v3179 = vpop.f32.mrb[0].mxu0
      %v3180 = vadd.f32 %v2875, %v3179
      %v3181 = vpop.f32.mrb[0].mxu0
      %3182 = vmatprep.mubr.bf16.mxu0 0
      %3183 = vmatmul.mubr.bf16.gmra.mrb[0].mxu0 %v3000
      %v3184 = vpop.f32.mrb[0].mxu0
      %v3185 = vadd.f32 %v2880, %v3184
      %v3186 = vpop.f32.mrb[0].mxu0
      %v3187 = vpop.f32.mrb[0].mxu0
      %v3188 = vadd.f32 %v2883, %v3187
      %v3189 = vpop.f32.mrb[0].mxu0
      %3190 = vmatprep.mubr.bf16.mxu0 0
      %3191 = vmatmul.mubr.bf16.gmra.mrb[0].mxu0 %v3001
      %v3192 = vpop.f32.mrb[0].mxu0
      %v3193 = vadd.f32 %v2888, %v3192
      %v3194 = vpop.f32.mrb[0].mxu0
      %v3195 = vpop.f32.mrb[0].mxu0
      %v3196 = vadd.f32 %v2891, %v3195
      %v3197 = vpop.f32.mrb[0].mxu0
      %3198 = vmatprep.mubr.bf16.mxu0 0
      %3199 = vmatmul.mubr.bf16.gmra.mrb[0].mxu0 %v3002
      %v3200 = vpop.f32.mrb[0].mxu0
      %v3201 = vadd.f32 %v2896, %v3200
      %v3202 = vpop.f32.mrb[0].mxu0
      %v3203 = vpop.f32.mrb[0].mxu0
      %v3204 = vadd.f32 %v2899, %v3203
      %v3205 = vpop.f32.mrb[0].mxu0
      %3206 = vmatprep.mubr.bf16.mxu0 0
      %3207 = vmatmul.mubr.bf16.gmra.mrb[0].mxu0 %v3003
      %v3208 = vpop.f32.mrb[0].mxu0
      %v3209 = vadd.f32 %v2904, %v3208
      %v3210 = vpop.f32.mrb[0].mxu0
      %v3211 = vpop.f32.mrb[0].mxu0
      %v3212 = vadd.f32 %v2907, %v3211
      %v3213 = vpop.f32.mrb[0].mxu0
      %3214 = vmatprep.mubr.bf16.mxu0 0
      %3215 = vmatmul.mubr.bf16.gmra.mrb[0].mxu0 %v3004
      %v3216 = vpop.f32.mrb[0].mxu0
      %v3217 = vadd.f32 %v2912, %v3216
      %v3218 = vpop.f32.mrb[0].mxu0
      %v3219 = vpop.f32.mrb[0].mxu0
      %v3220 = vadd.f32 %v2915, %v3219
      %v3221 = vpop.f32.mrb[0].mxu0
      %3222 = vmatprep.mubr.bf16.mxu0 0
      %3223 = vmatmul.mubr.bf16.gmra.mrb[0].mxu0 %v3005
      %v3224 = vpop.f32.mrb[0].mxu0
      %v3225 = vadd.f32 %v2920, %v3224
      %v3226 = vpop.f32.mrb[0].mxu0
      %v3227 = vpop.f32.mrb[0].mxu0
      %v3228 = vadd.f32 %v2923, %v3227
      %v3229 = vpop.f32.mrb[0].mxu0
      %3230 = vdwg.mxu0
      %s3231 = scalar_lea.vmem %s231, 512
      %3232 = vst [vmem:[%s3231] sm:$0xff] %v3105
      %3233 = vst [vmem:[%s3231 + $0x8] sm:$0xff] %v3108
      %3234 = vst [vmem:[%s3231 + $0x10] sm:$0xff] %v3113
      %3235 = vst [vmem:[%s3231 + $0x18] sm:$0xff] %v3116
      %3236 = vst [vmem:[%s3231 + $0x20] sm:$0xff] %v3121
      %3237 = vst [vmem:[%s3231 + $0x28] sm:$0xff] %v3124
      %3238 = vst [vmem:[%s3231 + $0x30] sm:$0xff] %v3129
      %3239 = vst [vmem:[%s3231 + $0x38] sm:$0xff] %v3132
      %3240 = vst [vmem:[%s3231 + $0x40] sm:$0xff] %v3137
      %3241 = vst [vmem:[%s3231 + $0x48] sm:$0xff] %v3140
      %3242 = vst [vmem:[%s3231 + $0x50] sm:$0xff] %v3145
      %3243 = vst [vmem:[%s3231 + $0x58] sm:$0xff] %v3148
      %3244 = vst [vmem:[%s3231 + $0x60] sm:$0xff] %v3153
      %3245 = vst [vmem:[%s3231 + $0x68] sm:$0xff] %v3156
      %3246 = vst [vmem:[%s3231 + $0x70] sm:$0xff] %v3161
      %3247 = vst [vmem:[%s3231 + $0x78] sm:$0xff] %v3164
      %3248 = vst [vmem:[%s3231 + $0x80] sm:$0xff] %v3169
      %3249 = vst [vmem:[%s3231 + $0x88] sm:$0xff] %v3172
      %3250 = vst [vmem:[%s3231 + $0x90] sm:$0xff] %v3177
      %3251 = vst [vmem:[%s3231 + $0x98] sm:$0xff] %v3180
      %3252 = vst [vmem:[%s3231 + $0xa0] sm:$0xff] %v3185
      %3253 = vst [vmem:[%s3231 + $0xa8] sm:$0xff] %v3188
      %3254 = vst [vmem:[%s3231 + $0xb0] sm:$0xff] %v3193
      %3255 = vst [vmem:[%s3231 + $0xb8] sm:$0xff] %v3196
      %3256 = vst [vmem:[%s3231 + $0xc0] sm:$0xff] %v3201
      %3257 = vst [vmem:[%s3231 + $0xc8] sm:$0xff] %v3204
      %3258 = vst [vmem:[%s3231 + $0xd0] sm:$0xff] %v3209
      %3259 = vst [vmem:[%s3231 + $0xd8] sm:$0xff] %v3212
      %3260 = vst [vmem:[%s3231 + $0xe0] sm:$0xff] %v3217
      %3261 = vst [vmem:[%s3231 + $0xe8] sm:$0xff] %v3220
      %3262 = vst [vmem:[%s3231 + $0xf0] sm:$0xff] %v3225
      %3263 = vst [vmem:[%s3231 + $0xf8] sm:$0xff] %v3228
      %v3264 = vadd.f32 %v3105, %v3108
      %v3265 = vadd.f32 %v3264, %v3113
      %v3266 = vadd.f32 %v3265, %v3116
      %v3267 = vadd.f32 %v3266, %v3121
      %v3268 = vadd.f32 %v3267, %v3124
      %v3269 = vadd.f32 %v3268, %v3129
      %v3270 = vadd.f32 %v3269, %v3132
      %v3271 = vadd.f32 %v3270, %v3137
      %v3272 = vadd.f32 %v3271, %v3140
      %v3273 = vadd.f32 %v3272, %v3145
      %v3274 = vadd.f32 %v3273, %v3148
      %v3275 = vadd.f32 %v3274, %v3153
      %v3276 = vadd.f32 %v3275, %v3156
      %v3277 = vadd.f32 %v3276, %v3161
      %v3278 = vadd.f32 %v3277, %v3164
      %v3279 = vadd.f32 %v3278, %v3169
      %v3280 = vadd.f32 %v3279, %v3172
      %v3281 = vadd.f32 %v3280, %v3177
      %v3282 = vadd.f32 %v3281, %v3180
      %v3283 = vadd.f32 %v3282, %v3185
      %v3284 = vadd.f32 %v3283, %v3188
      %v3285 = vadd.f32 %v3284, %v3193
      %v3286 = vadd.f32 %v3285, %v3196
      %v3287 = vadd.f32 %v3286, %v3201
      %v3288 = vadd.f32 %v3287, %v3204
      %v3289 = vadd.f32 %v3288, %v3209
      %v3290 = vadd.f32 %v3289, %v3212
      %v3291 = vadd.f32 %v3290, %v3217
      %v3292 = vadd.f32 %v3291, %v3220
      %v3293 = vadd.f32 %v3292, %v3225
      %v3294 = vadd.f32 %v3293, %v3228
      %v3295 = vrot.slane %v3294, 4
      %v3296 = vadd.f32 %v3294, %v3295
      %v3297 = vrot.slane %v3296, 2
      %v3298 = vadd.f32 %v3296, %v3297
      %v3299 = vrot.slane %v3298, 1
      %v3300 = vadd.f32 %v3298, %v3299
      %v3301 = vadd.f32 %v2451, %v3300
      %v3302 = vmul.f32 %v3105, %v3105
      %v3303 = vmul.f32 %v3108, %v3108
      %v3304 = vmul.f32 %v3113, %v3113
      %v3305 = vmul.f32 %v3116, %v3116
      %v3306 = vmul.f32 %v3121, %v3121
      %v3307 = vmul.f32 %v3124, %v3124
      %v3308 = vmul.f32 %v3129, %v3129
      %v3309 = vmul.f32 %v3132, %v3132
      %v3310 = vmul.f32 %v3137, %v3137
      %v3311 = vmul.f32 %v3140, %v3140
      %v3312 = vmul.f32 %v3145, %v3145
      %v3313 = vmul.f32 %v3148, %v3148
      %v3314 = vmul.f32 %v3153, %v3153
      %v3315 = vmul.f32 %v3156, %v3156
      %v3316 = vmul.f32 %v3161, %v3161
      %v3317 = vmul.f32 %v3164, %v3164
      %v3318 = vmul.f32 %v3169, %v3169
      %v3319 = vmul.f32 %v3172, %v3172
      %v3320 = vmul.f32 %v3177, %v3177
      %v3321 = vmul.f32 %v3180, %v3180
      %v3322 = vmul.f32 %v3185, %v3185
      %v3323 = vmul.f32 %v3188, %v3188
      %v3324 = vmul.f32 %v3193, %v3193
      %v3325 = vmul.f32 %v3196, %v3196
      %v3326 = vmul.f32 %v3201, %v3201
      %v3327 = vmul.f32 %v3204, %v3204
      %v3328 = vmul.f32 %v3209, %v3209
      %v3329 = vmul.f32 %v3212, %v3212
      %v3330 = vmul.f32 %v3217, %v3217
      %v3331 = vmul.f32 %v3220, %v3220
      %v3332 = vmul.f32 %v3225, %v3225
      %v3333 = vmul.f32 %v3228, %v3228
      %v3334 = vadd.f32 %v3302, %v3303
      %v3335 = vadd.f32 %v3334, %v3304
      %v3336 = vadd.f32 %v3335, %v3305
      %v3337 = vadd.f32 %v3336, %v3306
      %v3338 = vadd.f32 %v3337, %v3307
      %v3339 = vadd.f32 %v3338, %v3308
      %v3340 = vadd.f32 %v3339, %v3309
      %v3341 = vadd.f32 %v3340, %v3310
      %v3342 = vadd.f32 %v3341, %v3311
      %v3343 = vadd.f32 %v3342, %v3312
      %v3344 = vadd.f32 %v3343, %v3313
      %v3345 = vadd.f32 %v3344, %v3314
      %v3346 = vadd.f32 %v3345, %v3315
      %v3347 = vadd.f32 %v3346, %v3316
      %v3348 = vadd.f32 %v3347, %v3317
      %v3349 = vadd.f32 %v3348, %v3318
      %v3350 = vadd.f32 %v3349, %v3319
      %v3351 = vadd.f32 %v3350, %v3320
      %v3352 = vadd.f32 %v3351, %v3321
      %v3353 = vadd.f32 %v3352, %v3322
      %v3354 = vadd.f32 %v3353, %v3323
      %v3355 = vadd.f32 %v3354, %v3324
      %v3356 = vadd.f32 %v3355, %v3325
      %v3357 = vadd.f32 %v3356, %v3326
      %v3358 = vadd.f32 %v3357, %v3327
      %v3359 = vadd.f32 %v3358, %v3328
      %v3360 = vadd.f32 %v3359, %v3329
      %v3361 = vadd.f32 %v3360, %v3330
      %v3362 = vadd.f32 %v3361, %v3331
      %v3363 = vadd.f32 %v3362, %v3332
      %v3364 = vadd.f32 %v3363, %v3333
      %v3365 = vrot.slane %v3364, 4
      %v3366 = vadd.f32 %v3364, %v3365
      %v3367 = vrot.slane %v3366, 2
      %v3368 = vadd.f32 %v3366, %v3367
      %v3369 = vrot.slane %v3368, 1
      %v3370 = vadd.f32 %v3368, %v3369
      %v3371 = vadd.f32 %v2521, %v3370
      %v3372 = vld [vmem:[%s2522] sm:$0xf]
      %v3373 = vld [vmem:[%s2522 + $0x4] sm:$0xf]
      %v3374 = vld [vmem:[%s2522 + $0x8] sm:$0x1]
      %v3375 = vld [vmem:[%s2522 + $0xc] sm:$0xf]
      %v3376 = vld [vmem:[%s2522 + $0x10] sm:$0xf]
      %v3377 = vld [vmem:[%s2522 + $0x14] sm:$0x1]
      %v3378 = vld [vmem:[%s2522 + $0x18] sm:$0xf]
      %v3379 = vld [vmem:[%s2522 + $0x1c] sm:$0xf]
      %v3380 = vld [vmem:[%s2522 + $0x20] sm:$0x1]
      %v3381 = vld [vmem:[%s2522 + $0x24] sm:$0xf]
      %v3382 = vld [vmem:[%s2522 + $0x28] sm:$0xf]
      %v3383 = vld [vmem:[%s2522 + $0x2c] sm:$0x1]
      %v3384 = vld [vmem:[%s2522 + $0x30] sm:$0xf]
      %v3385 = vld [vmem:[%s2522 + $0x34] sm:$0xf]
      %v3386 = vld [vmem:[%s2522 + $0x38] sm:$0x1]
      %v3387 = vld [vmem:[%s2522 + $0x3c] sm:$0xf]
      %v3388 = vld [vmem:[%s2522 + $0x40] sm:$0xf]
      %v3389 = vld [vmem:[%s2522 + $0x44] sm:$0x1]
      %v3390 = vld [vmem:[%s2522 + $0x48] sm:$0xf]
      %v3391 = vld [vmem:[%s2522 + $0x4c] sm:$0xf]
      %v3392 = vld [vmem:[%s2522 + $0x50] sm:$0x1]
      %v3393 = vld [vmem:[%s2522 + $0x54] sm:$0xf]
      %v3394 = vld [vmem:[%s2522 + $0x58] sm:$0xf]
      %v3395 = vld [vmem:[%s2522 + $0x5c] sm:$0x1]
      %v3396 = vld [vmem:[%s2522 + $0x60] sm:$0xf]
      %v3397 = vld [vmem:[%s2522 + $0x64] sm:$0xf]
      %v3398 = vld [vmem:[%s2522 + $0x68] sm:$0x1]
      %v3399 = vld [vmem:[%s2522 + $0x6c] sm:$0xf]
      %v3400 = vld [vmem:[%s2522 + $0x70] sm:$0xf]
      %v3401 = vld [vmem:[%s2522 + $0x74] sm:$0x1]
      %v3402 = vld [vmem:[%s2522 + $0x78] sm:$0xf]
      %v3403 = vld [vmem:[%s2522 + $0x7c] sm:$0xf]
      %v3404 = vld [vmem:[%s2522 + $0x80] sm:$0x1]
      %v3405 = vld [vmem:[%s2522 + $0x84] sm:$0xf]
      %v3406 = vld [vmem:[%s2522 + $0x88] sm:$0xf]
      %v3407 = vld [vmem:[%s2522 + $0x8c] sm:$0x1]
      %v3408 = vld [vmem:[%s2522 + $0x90] sm:$0xf]
      %v3409 = vld [vmem:[%s2522 + $0x94] sm:$0xf]
      %v3410 = vld [vmem:[%s2522 + $0x98] sm:$0x1]
      %v3411 = vld [vmem:[%s2522 + $0x9c] sm:$0xf]
      %v3412 = vld [vmem:[%s2522 + $0xa0] sm:$0xf]
      %v3413 = vld [vmem:[%s2522 + $0xa4] sm:$0x1]
      %v3414 = vld [vmem:[%s2522 + $0xa8] sm:$0xf]
      %v3415 = vld [vmem:[%s2522 + $0xac] sm:$0xf]
      %v3416 = vld [vmem:[%s2522 + $0xb0] sm:$0x1]
      %v3417 = vld [vmem:[%s2522 + $0xb4] sm:$0xf]
      %v3418 = vld [vmem:[%s2522 + $0xb8] sm:$0xf]
      %v3419 = vld [vmem:[%s2522 + $0xbc] sm:$0x1]
      %v3421 = vshrl.u32 %v3372, 16
      %v3423 = vrot.slane %v3421, 4
      %v3424 = vshll.u32 %v3372, 16
      %v3426 = vrot.slane %v3424, 5
      %v3427 = vor.u32 %v3423, %v3426
      %v3428 = vrot.slane %v3427, 4
      %v3430 = vshll.u32 %v3373, 16
      %v3432 = vrot.slane %v3430, 5
      %v3433 = vsel %vm1384, %v3428, %v3432
      %v3434 = vshrl.u32 %v3373, 16
      %v3436 = vrot.slane %v3434, 4
      %v3437 = vor.u32 %v3436, %v3432
      %v3438 = vrot.slane %v3437, 4
      %v3440 = vshll.u32 %v3374, 16
      %v3442 = vrot.slane %v3440, 5
      %v3443 = vsel %vm1384, %v3438, %v3442
      %v3445 = vshrl.u32 %v3375, 16
      %v3447 = vrot.slane %v3445, 4
      %v3448 = vshll.u32 %v3375, 16
      %v3450 = vrot.slane %v3448, 5
      %v3451 = vor.u32 %v3447, %v3450
      %v3452 = vrot.slane %v3451, 4
      %v3454 = vshll.u32 %v3376, 16
      %v3456 = vrot.slane %v3454, 5
      %v3457 = vsel %vm1384, %v3452, %v3456
      %v3458 = vshrl.u32 %v3376, 16
      %v3460 = vrot.slane %v3458, 4
      %v3461 = vor.u32 %v3460, %v3456
      %v3462 = vrot.slane %v3461, 4
      %v3464 = vshll.u32 %v3377, 16
      %v3466 = vrot.slane %v3464, 5
      %v3467 = vsel %vm1384, %v3462, %v3466
      %v3469 = vshrl.u32 %v3378, 16
      %v3471 = vrot.slane %v3469, 4
      %v3472 = vshll.u32 %v3378, 16
      %v3474 = vrot.slane %v3472, 5
      %v3475 = vor.u32 %v3471, %v3474
      %v3476 = vrot.slane %v3475, 4
      %v3478 = vshll.u32 %v3379, 16
      %v3480 = vrot.slane %v3478, 5
      %v3481 = vsel %vm1384, %v3476, %v3480
      %v3482 = vshrl.u32 %v3379, 16
      %v3484 = vrot.slane %v3482, 4
      %v3485 = vor.u32 %v3484, %v3480
      %v3486 = vrot.slane %v3485, 4
      %v3488 = vshll.u32 %v3380, 16
      %v3490 = vrot.slane %v3488, 5
      %v3491 = vsel %vm1384, %v3486, %v3490
      %v3493 = vshrl.u32 %v3381, 16
      %v3495 = vrot.slane %v3493, 4
      %v3496 = vshll.u32 %v3381, 16
      %v3498 = vrot.slane %v3496, 5
      %v3499 = vor.u32 %v3495, %v3498
      %v3500 = vrot.slane %v3499, 4
      %v3502 = vshll.u32 %v3382, 16
      %v3504 = vrot.slane %v3502, 5
      %v3505 = vsel %vm1384, %v3500, %v3504
      %v3506 = vshrl.u32 %v3382, 16
      %v3508 = vrot.slane %v3506, 4
      %v3509 = vor.u32 %v3508, %v3504
      %v3510 = vrot.slane %v3509, 4
      %v3512 = vshll.u32 %v3383, 16
      %v3514 = vrot.slane %v3512, 5
      %v3515 = vsel %vm1384, %v3510, %v3514
      %v3517 = vshrl.u32 %v3384, 16
      %v3519 = vrot.slane %v3517, 4
      %v3520 = vshll.u32 %v3384, 16
      %v3522 = vrot.slane %v3520, 5
      %v3523 = vor.u32 %v3519, %v3522
      %v3524 = vrot.slane %v3523, 4
      %v3526 = vshll.u32 %v3385, 16
      %v3528 = vrot.slane %v3526, 5
      %v3529 = vsel %vm1384, %v3524, %v3528
      %v3530 = vshrl.u32 %v3385, 16
      %v3532 = vrot.slane %v3530, 4
      %v3533 = vor.u32 %v3532, %v3528
      %v3534 = vrot.slane %v3533, 4
      %v3536 = vshll.u32 %v3386, 16
      %v3538 = vrot.slane %v3536, 5
      %v3539 = vsel %vm1384, %v3534, %v3538
      %v3541 = vshrl.u32 %v3387, 16
      %v3543 = vrot.slane %v3541, 4
      %v3544 = vshll.u32 %v3387, 16
      %v3546 = vrot.slane %v3544, 5
      %v3547 = vor.u32 %v3543, %v3546
      %v3548 = vrot.slane %v3547, 4
      %v3550 = vshll.u32 %v3388, 16
      %v3552 = vrot.slane %v3550, 5
      %v3553 = vsel %vm1384, %v3548, %v3552
      %v3554 = vshrl.u32 %v3388, 16
      %v3556 = vrot.slane %v3554, 4
      %v3557 = vor.u32 %v3556, %v3552
      %v3558 = vrot.slane %v3557, 4
      %v3560 = vshll.u32 %v3389, 16
      %v3562 = vrot.slane %v3560, 5
      %v3563 = vsel %vm1384, %v3558, %v3562
      %v3565 = vshrl.u32 %v3390, 16
      %v3567 = vrot.slane %v3565, 4
      %v3568 = vshll.u32 %v3390, 16
      %v3570 = vrot.slane %v3568, 5
      %v3571 = vor.u32 %v3567, %v3570
      %v3572 = vrot.slane %v3571, 4
      %v3574 = vshll.u32 %v3391, 16
      %v3576 = vrot.slane %v3574, 5
      %v3577 = vsel %vm1384, %v3572, %v3576
      %v3578 = vshrl.u32 %v3391, 16
      %v3580 = vrot.slane %v3578, 4
      %v3581 = vor.u32 %v3580, %v3576
      %v3582 = vrot.slane %v3581, 4
      %v3584 = vshll.u32 %v3392, 16
      %v3586 = vrot.slane %v3584, 5
      %v3587 = vsel %vm1384, %v3582, %v3586
      %v3589 = vshrl.u32 %v3393, 16
      %v3591 = vrot.slane %v3589, 4
      %v3592 = vshll.u32 %v3393, 16
      %v3594 = vrot.slane %v3592, 5
      %v3595 = vor.u32 %v3591, %v3594
      %v3596 = vrot.slane %v3595, 4
      %v3598 = vshll.u32 %v3394, 16
      %v3600 = vrot.slane %v3598, 5
      %v3601 = vsel %vm1384, %v3596, %v3600
      %v3602 = vshrl.u32 %v3394, 16
      %v3604 = vrot.slane %v3602, 4
      %v3605 = vor.u32 %v3604, %v3600
      %v3606 = vrot.slane %v3605, 4
      %v3608 = vshll.u32 %v3395, 16
      %v3610 = vrot.slane %v3608, 5
      %v3611 = vsel %vm1384, %v3606, %v3610
      %v3613 = vshrl.u32 %v3396, 16
      %v3615 = vrot.slane %v3613, 4
      %v3616 = vshll.u32 %v3396, 16
      %v3618 = vrot.slane %v3616, 5
      %v3619 = vor.u32 %v3615, %v3618
      %v3620 = vrot.slane %v3619, 4
      %v3622 = vshll.u32 %v3397, 16
      %v3624 = vrot.slane %v3622, 5
      %v3625 = vsel %vm1384, %v3620, %v3624
      %v3626 = vshrl.u32 %v3397, 16
      %v3628 = vrot.slane %v3626, 4
      %v3629 = vor.u32 %v3628, %v3624
      %v3630 = vrot.slane %v3629, 4
      %v3632 = vshll.u32 %v3398, 16
      %v3634 = vrot.slane %v3632, 5
      %v3635 = vsel %vm1384, %v3630, %v3634
      %v3637 = vshrl.u32 %v3399, 16
      %v3639 = vrot.slane %v3637, 4
      %v3640 = vshll.u32 %v3399, 16
      %v3642 = vrot.slane %v3640, 5
      %v3643 = vor.u32 %v3639, %v3642
      %v3644 = vrot.slane %v3643, 4
      %v3646 = vshll.u32 %v3400, 16
      %v3648 = vrot.slane %v3646, 5
      %v3649 = vsel %vm1384, %v3644, %v3648
      %v3650 = vshrl.u32 %v3400, 16
      %v3652 = vrot.slane %v3650, 4
      %v3653 = vor.u32 %v3652, %v3648
      %v3654 = vrot.slane %v3653, 4
      %v3656 = vshll.u32 %v3401, 16
      %v3658 = vrot.slane %v3656, 5
      %v3659 = vsel %vm1384, %v3654, %v3658
      %v3661 = vshrl.u32 %v3402, 16
      %v3663 = vrot.slane %v3661, 4
      %v3664 = vshll.u32 %v3402, 16
      %v3666 = vrot.slane %v3664, 5
      %v3667 = vor.u32 %v3663, %v3666
      %v3668 = vrot.slane %v3667, 4
      %v3670 = vshll.u32 %v3403, 16
      %v3672 = vrot.slane %v3670, 5
      %v3673 = vsel %vm1384, %v3668, %v3672
      %v3674 = vshrl.u32 %v3403, 16
      %v3676 = vrot.slane %v3674, 4
      %v3677 = vor.u32 %v3676, %v3672
      %v3678 = vrot.slane %v3677, 4
      %v3680 = vshll.u32 %v3404, 16
      %v3682 = vrot.slane %v3680, 5
      %v3683 = vsel %vm1384, %v3678, %v3682
      %v3685 = vshrl.u32 %v3405, 16
      %v3687 = vrot.slane %v3685, 4
      %v3688 = vshll.u32 %v3405, 16
      %v3690 = vrot.slane %v3688, 5
      %v3691 = vor.u32 %v3687, %v3690
      %v3692 = vrot.slane %v3691, 4
      %v3694 = vshll.u32 %v3406, 16
      %v3696 = vrot.slane %v3694, 5
      %v3697 = vsel %vm1384, %v3692, %v3696
      %v3698 = vshrl.u32 %v3406, 16
      %v3700 = vrot.slane %v3698, 4
      %v3701 = vor.u32 %v3700, %v3696
      %v3702 = vrot.slane %v3701, 4
      %v3704 = vshll.u32 %v3407, 16
      %v3706 = vrot.slane %v3704, 5
      %v3707 = vsel %vm1384, %v3702, %v3706
      %v3709 = vshrl.u32 %v3408, 16
      %v3711 = vrot.slane %v3709, 4
      %v3712 = vshll.u32 %v3408, 16
      %v3714 = vrot.slane %v3712, 5
      %v3715 = vor.u32 %v3711, %v3714
      %v3716 = vrot.slane %v3715, 4
      %v3718 = vshll.u32 %v3409, 16
      %v3720 = vrot.slane %v3718, 5
      %v3721 = vsel %vm1384, %v3716, %v3720
      %v3722 = vshrl.u32 %v3409, 16
      %v3724 = vrot.slane %v3722, 4
      %v3725 = vor.u32 %v3724, %v3720
      %v3726 = vrot.slane %v3725, 4
      %v3728 = vshll.u32 %v3410, 16
      %v3730 = vrot.slane %v3728, 5
      %v3731 = vsel %vm1384, %v3726, %v3730
      %v3733 = vshrl.u32 %v3411, 16
      %v3735 = vrot.slane %v3733, 4
      %v3736 = vshll.u32 %v3411, 16
      %v3738 = vrot.slane %v3736, 5
      %v3739 = vor.u32 %v3735, %v3738
      %v3740 = vrot.slane %v3739, 4
      %v3742 = vshll.u32 %v3412, 16
      %v3744 = vrot.slane %v3742, 5
      %v3745 = vsel %vm1384, %v3740, %v3744
      %v3746 = vshrl.u32 %v3412, 16
      %v3748 = vrot.slane %v3746, 4
      %v3749 = vor.u32 %v3748, %v3744
      %v3750 = vrot.slane %v3749, 4
      %v3752 = vshll.u32 %v3413, 16
      %v3754 = vrot.slane %v3752, 5
      %v3755 = vsel %vm1384, %v3750, %v3754
      %v3757 = vshrl.u32 %v3414, 16
      %v3759 = vrot.slane %v3757, 4
      %v3760 = vshll.u32 %v3414, 16
      %v3762 = vrot.slane %v3760, 5
      %v3763 = vor.u32 %v3759, %v3762
      %v3764 = vrot.slane %v3763, 4
      %v3766 = vshll.u32 %v3415, 16
      %v3768 = vrot.slane %v3766, 5
      %v3769 = vsel %vm1384, %v3764, %v3768
      %v3770 = vshrl.u32 %v3415, 16
      %v3772 = vrot.slane %v3770, 4
      %v3773 = vor.u32 %v3772, %v3768
      %v3774 = vrot.slane %v3773, 4
      %v3776 = vshll.u32 %v3416, 16
      %v3778 = vrot.slane %v3776, 5
      %v3779 = vsel %vm1384, %v3774, %v3778
      %v3781 = vshrl.u32 %v3417, 16
      %v3783 = vrot.slane %v3781, 4
      %v3784 = vshll.u32 %v3417, 16
      %v3786 = vrot.slane %v3784, 5
      %v3787 = vor.u32 %v3783, %v3786
      %v3788 = vrot.slane %v3787, 4
      %v3790 = vshll.u32 %v3418, 16
      %v3792 = vrot.slane %v3790, 5
      %v3793 = vsel %vm1384, %v3788, %v3792
      %v3794 = vshrl.u32 %v3418, 16
      %v3796 = vrot.slane %v3794, 4
      %v3797 = vor.u32 %v3796, %v3792
      %v3798 = vrot.slane %v3797, 4
      %v3800 = vshll.u32 %v3419, 16
      %v3802 = vrot.slane %v3800, 5
      %v3803 = vsel %vm1384, %v3798, %v3802
      %v3804 = vld [vmem:[%s3] sm:$0xf]
      %v3805 = vld [vmem:[%s3 + $0x4] sm:$0xf]
      %v3806 = vld [vmem:[%s3 + $0x8] sm:$0xf]
      %v3807 = vld [vmem:[%s3 + $0xc] sm:$0xf]
      %v3808 = vld [vmem:[%s3 + $0x10] sm:$0xf]
      %v3809 = vld [vmem:[%s3 + $0x14] sm:$0xf]
      %v3810 = vld [vmem:[%s3 + $0x18] sm:$0xf]
      %v3811 = vld [vmem:[%s3 + $0x1c] sm:$0xf]
      %v3812 = vld [vmem:[%s3 + $0x20] sm:$0xf]
      %v3813 = vld [vmem:[%s3 + $0x24] sm:$0xf]
      %v3814 = vld [vmem:[%s3 + $0x28] sm:$0xf]
      %v3815 = vld [vmem:[%s3 + $0x2c] sm:$0xf]
      %v3816 = vld [vmem:[%s3 + $0x30] sm:$0xf]
      %v3817 = vld [vmem:[%s3 + $0x34] sm:$0xf]
      %v3818 = vld [vmem:[%s3 + $0x38] sm:$0xf]
      %v3819 = vld [vmem:[%s3 + $0x3c] sm:$0xf]
      %s3820 = scalar_lea.vmem %s3, 128
      %v3821 = vld [vmem:[%s3820] sm:$0xf]
      %v3822 = vld [vmem:[%s3820 + $0x4] sm:$0xf]
      %v3823 = vld [vmem:[%s3820 + $0x8] sm:$0xf]
      %v3824 = vld [vmem:[%s3820 + $0xc] sm:$0xf]
      %v3825 = vld [vmem:[%s3820 + $0x10] sm:$0xf]
      %v3826 = vld [vmem:[%s3820 + $0x14] sm:$0xf]
      %v3827 = vld [vmem:[%s3820 + $0x18] sm:$0xf]
      %v3828 = vld [vmem:[%s3820 + $0x1c] sm:$0xf]
      %v3829 = vld [vmem:[%s3820 + $0x20] sm:$0xf]
      %v3830 = vld [vmem:[%s3820 + $0x24] sm:$0xf]
      %v3831 = vld [vmem:[%s3820 + $0x28] sm:$0xf]
      %v3832 = vld [vmem:[%s3820 + $0x2c] sm:$0xf]
      %v3833 = vld [vmem:[%s3820 + $0x30] sm:$0xf]
      %v3834 = vld [vmem:[%s3820 + $0x34] sm:$0xf]
      %v3835 = vld [vmem:[%s3820 + $0x38] sm:$0xf]
      %v3836 = vld [vmem:[%s3820 + $0x3c] sm:$0xf]
      %v3869 = vunpack.c.l.b16 %v3372
      %v3870 = vunpack.c.l.b16 %v3373
      %v3871 = vunpack.c.l.b16 %v3375
      %v3872 = vunpack.c.l.b16 %v3376
      %v3873 = vunpack.c.l.b16 %v3378
      %v3874 = vunpack.c.l.b16 %v3379
      %v3875 = vunpack.c.l.b16 %v3381
      %v3876 = vunpack.c.l.b16 %v3382
      %v3877 = vunpack.c.l.b16 %v3384
      %v3878 = vunpack.c.l.b16 %v3385
      %v3879 = vunpack.c.l.b16 %v3387
      %v3880 = vunpack.c.l.b16 %v3388
      %v3881 = vunpack.c.l.b16 %v3390
      %v3882 = vunpack.c.l.b16 %v3391
      %v3883 = vunpack.c.l.b16 %v3393
      %v3884 = vunpack.c.l.b16 %v3394
      %v3885 = vunpack.c.l.b16 %v3396
      %v3886 = vunpack.c.l.b16 %v3397
      %v3887 = vunpack.c.l.b16 %v3399
      %v3888 = vunpack.c.l.b16 %v3400
      %v3889 = vunpack.c.l.b16 %v3402
      %v3890 = vunpack.c.l.b16 %v3403
      %v3891 = vunpack.c.l.b16 %v3405
      %v3892 = vunpack.c.l.b16 %v3406
      %v3893 = vunpack.c.l.b16 %v3408
      %v3894 = vunpack.c.l.b16 %v3409
      %v3895 = vunpack.c.l.b16 %v3411
      %v3896 = vunpack.c.l.b16 %v3412
      %v3897 = vunpack.c.l.b16 %v3414
      %v3898 = vunpack.c.l.b16 %v3415
      %v3899 = vunpack.c.l.b16 %v3417
      %v3900 = vunpack.c.l.b16 %v3418
      %v3901 = vpack.c.b16 %v3870, %v3869
      %v3902 = vpack.c.b16 %v3872, %v3871
      %v3903 = vpack.c.b16 %v3874, %v3873
      %v3904 = vpack.c.b16 %v3876, %v3875
      %v3905 = vpack.c.b16 %v3878, %v3877
      %v3906 = vpack.c.b16 %v3880, %v3879
      %v3907 = vpack.c.b16 %v3882, %v3881
      %v3908 = vpack.c.b16 %v3884, %v3883
      %v3909 = vpack.c.b16 %v3886, %v3885
      %v3910 = vpack.c.b16 %v3888, %v3887
      %v3911 = vpack.c.b16 %v3890, %v3889
      %v3912 = vpack.c.b16 %v3892, %v3891
      %v3913 = vpack.c.b16 %v3894, %v3893
      %v3914 = vpack.c.b16 %v3896, %v3895
      %v3915 = vpack.c.b16 %v3898, %v3897
      %v3916 = vpack.c.b16 %v3900, %v3899
      %v3949 = vunpack.c.l.b16 %v3821
      %v3950 = vunpack.c.l.b16 %v3822
      %v3951 = vunpack.c.l.b16 %v3823
      %v3952 = vunpack.c.l.b16 %v3824
      %v3953 = vunpack.c.l.b16 %v3825
      %v3954 = vunpack.c.l.b16 %v3826
      %v3955 = vunpack.c.l.b16 %v3827
      %v3956 = vunpack.c.l.b16 %v3828
      %v3957 = vunpack.c.l.b16 %v3829
      %v3958 = vunpack.c.l.b16 %v3830
      %v3959 = vunpack.c.l.b16 %v3831
      %v3960 = vunpack.c.l.b16 %v3832
      %v3961 = vunpack.c.l.b16 %v3833
      %v3962 = vunpack.c.l.b16 %v3834
      %v3963 = vunpack.c.l.b16 %v3835
      %v3964 = vunpack.c.l.b16 %v3836
      %v3965 = vpack.c.b16 %v3950, %v3949
      %v3966 = vpack.c.b16 %v3952, %v3951
      %v3967 = vpack.c.b16 %v3954, %v3953
      %v3968 = vpack.c.b16 %v3956, %v3955
      %v3969 = vpack.c.b16 %v3958, %v3957
      %v3970 = vpack.c.b16 %v3960, %v3959
      %v3971 = vpack.c.b16 %v3962, %v3961
      %v3972 = vpack.c.b16 %v3964, %v3963
      %3981 = vmatprep.subr.bf16.mxu0 0
      %3982 = vmatpush1.bf16.msra.mxu0 %v3965
      %3983 = vmatprep.subr.bf16.mxu0 0
      %3984 = vmatpush1.bf16.msra.mxu0 %v3966
      %3985 = vmatprep.subr.bf16.mxu0 0
      %3986 = vmatpush1.bf16.msra.mxu0 %v3967
      %3987 = vmatprep.subr.bf16.mxu0 0
      %3988 = vmatpush1.bf16.msra.mxu0 %v3968
      %3989 = vmatprep.subr.bf16.mxu0 0
      %3990 = vmatpush1.bf16.msra.mxu0 %v3969
      %3991 = vmatprep.subr.bf16.mxu0 0
      %3992 = vmatpush1.bf16.msra.mxu0 %v3970
      %3993 = vmatprep.subr.bf16.mxu0 0
      %3994 = vmatpush1.bf16.msra.mxu0 %v3971
      %3995 = vmatprep.subr.bf16.mxu0 0
      %3996 = vmatpush1.bf16.msra.mxu0 %v3972
      %3997 = vmatprep.subr.bf16.mxu0 0
      %3998 = vmatpush1.bf16.msra.mxu0 0
      %3999 = vmatprep.subr.bf16.mxu0 0
      %4000 = vmatpush1.bf16.msra.mxu0 0
      %4001 = vmatprep.subr.bf16.mxu0 0
      %4002 = vmatpush1.bf16.msra.mxu0 0
      %4003 = vmatprep.subr.bf16.mxu0 0
      %4004 = vmatpush1.bf16.msra.mxu0 0
      %4005 = vmatprep.subr.bf16.mxu0 0
      %4006 = vmatpush1.bf16.msra.mxu0 0
      %4007 = vmatprep.subr.bf16.mxu0 0
      %4008 = vmatpush1.bf16.msra.mxu0 0
      %4009 = vmatprep.subr.bf16.mxu0 0
      %4010 = vmatpush1.bf16.msra.mxu0 0
      %4011 = vmatprep.subr.bf16.mxu0 0
      %4012 = vmatpush1.bf16.msra.mxu0 0
      %4013 = vmatprep.mubr.bf16.mxu0 0
      %4014 = vmatmul.mubr.bf16.gmra.mrb[0].mxu0 %v3901
      %v4015 = vpop.f32.mrb[0].mxu0
      %v4016 = vadd.f32 0.0, %v4015
      %v4017 = vpop.f32.mrb[0].mxu0
      %v4018 = vpop.f32.mrb[0].mxu0
      %v4019 = vadd.f32 0.0, %v4018
      %v4020 = vpop.f32.mrb[0].mxu0
      %4021 = vmatprep.mubr.bf16.mxu0 0
      %4022 = vmatmul.mubr.bf16.gmra.mrb[0].mxu0 %v3902
      %v4023 = vpop.f32.mrb[0].mxu0
      %v4024 = vadd.f32 0.0, %v4023
      %v4025 = vpop.f32.mrb[0].mxu0
      %v4026 = vpop.f32.mrb[0].mxu0
      %v4027 = vadd.f32 0.0, %v4026
      %v4028 = vpop.f32.mrb[0].mxu0
      %4029 = vmatprep.mubr.bf16.mxu0 0
      %4030 = vmatmul.mubr.bf16.gmra.mrb[0].mxu0 %v3903
      %v4031 = vpop.f32.mrb[0].mxu0
      %v4032 = vadd.f32 0.0, %v4031
      %v4033 = vpop.f32.mrb[0].mxu0
      %v4034 = vpop.f32.mrb[0].mxu0
      %v4035 = vadd.f32 0.0, %v4034
      %v4036 = vpop.f32.mrb[0].mxu0
      %4037 = vmatprep.mubr.bf16.mxu0 0
      %4038 = vmatmul.mubr.bf16.gmra.mrb[0].mxu0 %v3904
      %v4039 = vpop.f32.mrb[0].mxu0
      %v4040 = vadd.f32 0.0, %v4039
      %v4041 = vpop.f32.mrb[0].mxu0
      %v4042 = vpop.f32.mrb[0].mxu0
      %v4043 = vadd.f32 0.0, %v4042
      %v4044 = vpop.f32.mrb[0].mxu0
      %4045 = vmatprep.mubr.bf16.mxu0 0
      %4046 = vmatmul.mubr.bf16.gmra.mrb[0].mxu0 %v3905
      %v4047 = vpop.f32.mrb[0].mxu0
      %v4048 = vadd.f32 0.0, %v4047
      %v4049 = vpop.f32.mrb[0].mxu0
      %v4050 = vpop.f32.mrb[0].mxu0
      %v4051 = vadd.f32 0.0, %v4050
      %v4052 = vpop.f32.mrb[0].mxu0
      %4053 = vmatprep.mubr.bf16.mxu0 0
      %4054 = vmatmul.mubr.bf16.gmra.mrb[0].mxu0 %v3906
      %v4055 = vpop.f32.mrb[0].mxu0
      %v4056 = vadd.f32 0.0, %v4055
      %v4057 = vpop.f32.mrb[0].mxu0
      %v4058 = vpop.f32.mrb[0].mxu0
      %v4059 = vadd.f32 0.0, %v4058
      %v4060 = vpop.f32.mrb[0].mxu0
      %4061 = vmatprep.mubr.bf16.mxu0 0
      %4062 = vmatmul.mubr.bf16.gmra.mrb[0].mxu0 %v3907
      %v4063 = vpop.f32.mrb[0].mxu0
      %v4064 = vadd.f32 0.0, %v4063
      %v4065 = vpop.f32.mrb[0].mxu0
      %v4066 = vpop.f32.mrb[0].mxu0
      %v4067 = vadd.f32 0.0, %v4066
      %v4068 = vpop.f32.mrb[0].mxu0
      %4069 = vmatprep.mubr.bf16.mxu0 0
      %4070 = vmatmul.mubr.bf16.gmra.mrb[0].mxu0 %v3908
      %v4071 = vpop.f32.mrb[0].mxu0
      %v4072 = vadd.f32 0.0, %v4071
      %v4073 = vpop.f32.mrb[0].mxu0
      %v4074 = vpop.f32.mrb[0].mxu0
      %v4075 = vadd.f32 0.0, %v4074
      %v4076 = vpop.f32.mrb[0].mxu0
      %4077 = vmatprep.mubr.bf16.mxu0 0
      %4078 = vmatmul.mubr.bf16.gmra.mrb[0].mxu0 %v3909
      %v4079 = vpop.f32.mrb[0].mxu0
      %v4080 = vadd.f32 0.0, %v4079
      %v4081 = vpop.f32.mrb[0].mxu0
      %v4082 = vpop.f32.mrb[0].mxu0
      %v4083 = vadd.f32 0.0, %v4082
      %v4084 = vpop.f32.mrb[0].mxu0
      %4085 = vmatprep.mubr.bf16.mxu0 0
      %4086 = vmatmul.mubr.bf16.gmra.mrb[0].mxu0 %v3910
      %v4087 = vpop.f32.mrb[0].mxu0
      %v4088 = vadd.f32 0.0, %v4087
      %v4089 = vpop.f32.mrb[0].mxu0
      %v4090 = vpop.f32.mrb[0].mxu0
      %v4091 = vadd.f32 0.0, %v4090
      %v4092 = vpop.f32.mrb[0].mxu0
      %4093 = vmatprep.mubr.bf16.mxu0 0
      %4094 = vmatmul.mubr.bf16.gmra.mrb[0].mxu0 %v3911
      %v4095 = vpop.f32.mrb[0].mxu0
      %v4096 = vadd.f32 0.0, %v4095
      %v4097 = vpop.f32.mrb[0].mxu0
      %v4098 = vpop.f32.mrb[0].mxu0
      %v4099 = vadd.f32 0.0, %v4098
      %v4100 = vpop.f32.mrb[0].mxu0
      %4101 = vmatprep.mubr.bf16.mxu0 0
      %4102 = vmatmul.mubr.bf16.gmra.mrb[0].mxu0 %v3912
      %v4103 = vpop.f32.mrb[0].mxu0
      %v4104 = vadd.f32 0.0, %v4103
      %v4105 = vpop.f32.mrb[0].mxu0
      %v4106 = vpop.f32.mrb[0].mxu0
      %v4107 = vadd.f32 0.0, %v4106
      %v4108 = vpop.f32.mrb[0].mxu0
      %4109 = vmatprep.mubr.bf16.mxu0 0
      %4110 = vmatmul.mubr.bf16.gmra.mrb[0].mxu0 %v3913
      %v4111 = vpop.f32.mrb[0].mxu0
      %v4112 = vadd.f32 0.0, %v4111
      %v4113 = vpop.f32.mrb[0].mxu0
      %v4114 = vpop.f32.mrb[0].mxu0
      %v4115 = vadd.f32 0.0, %v4114
      %v4116 = vpop.f32.mrb[0].mxu0
      %4117 = vmatprep.mubr.bf16.mxu0 0
      %4118 = vmatmul.mubr.bf16.gmra.mrb[0].mxu0 %v3914
      %v4119 = vpop.f32.mrb[0].mxu0
      %v4120 = vadd.f32 0.0, %v4119
      %v4121 = vpop.f32.mrb[0].mxu0
      %v4122 = vpop.f32.mrb[0].mxu0
      %v4123 = vadd.f32 0.0, %v4122
      %v4124 = vpop.f32.mrb[0].mxu0
      %4125 = vmatprep.mubr.bf16.mxu0 0
      %4126 = vmatmul.mubr.bf16.gmra.mrb[0].mxu0 %v3915
      %v4127 = vpop.f32.mrb[0].mxu0
      %v4128 = vadd.f32 0.0, %v4127
      %v4129 = vpop.f32.mrb[0].mxu0
      %v4130 = vpop.f32.mrb[0].mxu0
      %v4131 = vadd.f32 0.0, %v4130
      %v4132 = vpop.f32.mrb[0].mxu0
      %4133 = vmatprep.mubr.bf16.mxu0 0
      %4134 = vmatmul.mubr.bf16.gmra.mrb[0].mxu0 %v3916
      %v4135 = vpop.f32.mrb[0].mxu0
      %v4136 = vadd.f32 0.0, %v4135
      %v4137 = vpop.f32.mrb[0].mxu0
      %v4138 = vpop.f32.mrb[0].mxu0
      %v4139 = vadd.f32 0.0, %v4138
      %v4140 = vpop.f32.mrb[0].mxu0
      %4141 = vdwg.mxu0
      %v4142 = vunpack.c.l.b16 %v3433
      %v4143 = vunpack.c.l.b16 %v3443
      %v4144 = vunpack.c.l.b16 %v3457
      %v4145 = vunpack.c.l.b16 %v3467
      %v4146 = vunpack.c.l.b16 %v3481
      %v4147 = vunpack.c.l.b16 %v3491
      %v4148 = vunpack.c.l.b16 %v3505
      %v4149 = vunpack.c.l.b16 %v3515
      %v4150 = vunpack.c.l.b16 %v3529
      %v4151 = vunpack.c.l.b16 %v3539
      %v4152 = vunpack.c.l.b16 %v3553
      %v4153 = vunpack.c.l.b16 %v3563
      %v4154 = vunpack.c.l.b16 %v3577
      %v4155 = vunpack.c.l.b16 %v3587
      %v4156 = vunpack.c.l.b16 %v3601
      %v4157 = vunpack.c.l.b16 %v3611
      %v4158 = vunpack.c.l.b16 %v3625
      %v4159 = vunpack.c.l.b16 %v3635
      %v4160 = vunpack.c.l.b16 %v3649
      %v4161 = vunpack.c.l.b16 %v3659
      %v4162 = vunpack.c.l.b16 %v3673
      %v4163 = vunpack.c.l.b16 %v3683
      %v4164 = vunpack.c.l.b16 %v3697
      %v4165 = vunpack.c.l.b16 %v3707
      %v4166 = vunpack.c.l.b16 %v3721
      %v4167 = vunpack.c.l.b16 %v3731
      %v4168 = vunpack.c.l.b16 %v3745
      %v4169 = vunpack.c.l.b16 %v3755
      %v4170 = vunpack.c.l.b16 %v3769
      %v4171 = vunpack.c.l.b16 %v3779
      %v4172 = vunpack.c.l.b16 %v3793
      %v4173 = vunpack.c.l.b16 %v3803
      %v4174 = vpack.c.b16 %v4143, %v4142
      %v4175 = vpack.c.b16 %v4145, %v4144
      %v4176 = vpack.c.b16 %v4147, %v4146
      %v4177 = vpack.c.b16 %v4149, %v4148
      %v4178 = vpack.c.b16 %v4151, %v4150
      %v4179 = vpack.c.b16 %v4153, %v4152
      %v4180 = vpack.c.b16 %v4155, %v4154
      %v4181 = vpack.c.b16 %v4157, %v4156
      %v4182 = vpack.c.b16 %v4159, %v4158
      %v4183 = vpack.c.b16 %v4161, %v4160
      %v4184 = vpack.c.b16 %v4163, %v4162
      %v4185 = vpack.c.b16 %v4165, %v4164
      %v4186 = vpack.c.b16 %v4167, %v4166
      %v4187 = vpack.c.b16 %v4169, %v4168
      %v4188 = vpack.c.b16 %v4171, %v4170
      %v4189 = vpack.c.b16 %v4173, %v4172
      %v4222 = vunpack.c.l.b16 %v3804
      %v4223 = vunpack.c.l.b16 %v3805
      %v4224 = vunpack.c.l.b16 %v3806
      %v4225 = vunpack.c.l.b16 %v3807
      %v4226 = vunpack.c.l.b16 %v3808
      %v4227 = vunpack.c.l.b16 %v3809
      %v4228 = vunpack.c.l.b16 %v3810
      %v4229 = vunpack.c.l.b16 %v3811
      %v4230 = vunpack.c.l.b16 %v3812
      %v4231 = vunpack.c.l.b16 %v3813
      %v4232 = vunpack.c.l.b16 %v3814
      %v4233 = vunpack.c.l.b16 %v3815
      %v4234 = vunpack.c.l.b16 %v3816
      %v4235 = vunpack.c.l.b16 %v3817
      %v4236 = vunpack.c.l.b16 %v3818
      %v4237 = vunpack.c.l.b16 %v3819
      %v4238 = vpack.c.b16 %v4223, %v4222
      %v4239 = vpack.c.b16 %v4225, %v4224
      %v4240 = vpack.c.b16 %v4227, %v4226
      %v4241 = vpack.c.b16 %v4229, %v4228
      %v4242 = vpack.c.b16 %v4231, %v4230
      %v4243 = vpack.c.b16 %v4233, %v4232
      %v4244 = vpack.c.b16 %v4235, %v4234
      %v4245 = vpack.c.b16 %v4237, %v4236
      %4254 = vmatprep.subr.bf16.mxu0 0
      %4255 = vmatpush1.bf16.msra.mxu0 %v4238
      %4256 = vmatprep.subr.bf16.mxu0 0
      %4257 = vmatpush1.bf16.msra.mxu0 %v4239
      %4258 = vmatprep.subr.bf16.mxu0 0
      %4259 = vmatpush1.bf16.msra.mxu0 %v4240
      %4260 = vmatprep.subr.bf16.mxu0 0
      %4261 = vmatpush1.bf16.msra.mxu0 %v4241
      %4262 = vmatprep.subr.bf16.mxu0 0
      %4263 = vmatpush1.bf16.msra.mxu0 %v4242
      %4264 = vmatprep.subr.bf16.mxu0 0
      %4265 = vmatpush1.bf16.msra.mxu0 %v4243
      %4266 = vmatprep.subr.bf16.mxu0 0
      %4267 = vmatpush1.bf16.msra.mxu0 %v4244
      %4268 = vmatprep.subr.bf16.mxu0 0
      %4269 = vmatpush1.bf16.msra.mxu0 %v4245
      %4270 = vmatprep.subr.bf16.mxu0 0
      %4271 = vmatpush1.bf16.msra.mxu0 0
      %4272 = vmatprep.subr.bf16.mxu0 0
      %4273 = vmatpush1.bf16.msra.mxu0 0
      %4274 = vmatprep.subr.bf16.mxu0 0
      %4275 = vmatpush1.bf16.msra.mxu0 0
      %4276 = vmatprep.subr.bf16.mxu0 0
      %4277 = vmatpush1.bf16.msra.mxu0 0
      %4278 = vmatprep.subr.bf16.mxu0 0
      %4279 = vmatpush1.bf16.msra.mxu0 0
      %4280 = vmatprep.subr.bf16.mxu0 0
      %4281 = vmatpush1.bf16.msra.mxu0 0
      %4282 = vmatprep.subr.bf16.mxu0 0
      %4283 = vmatpush1.bf16.msra.mxu0 0
      %4284 = vmatprep.subr.bf16.mxu0 0
      %4285 = vmatpush1.bf16.msra.mxu0 0
      %4286 = vmatprep.mubr.bf16.mxu0 0
      %4287 = vmatmul.mubr.bf16.gmra.mrb[0].mxu0 %v4174
      %v4288 = vpop.f32.mrb[0].mxu0
      %v4289 = vadd.f32 %v4016, %v4288
      %v4290 = vpop.f32.mrb[0].mxu0
      %v4291 = vpop.f32.mrb[0].mxu0
      %v4292 = vadd.f32 %v4019, %v4291
      %v4293 = vpop.f32.mrb[0].mxu0
      %4294 = vmatprep.mubr.bf16.mxu0 0
      %4295 = vmatmul.mubr.bf16.gmra.mrb[0].mxu0 %v4175
      %v4296 = vpop.f32.mrb[0].mxu0
      %v4297 = vadd.f32 %v4024, %v4296
      %v4298 = vpop.f32.mrb[0].mxu0
      %v4299 = vpop.f32.mrb[0].mxu0
      %v4300 = vadd.f32 %v4027, %v4299
      %v4301 = vpop.f32.mrb[0].mxu0
      %4302 = vmatprep.mubr.bf16.mxu0 0
      %4303 = vmatmul.mubr.bf16.gmra.mrb[0].mxu0 %v4176
      %v4304 = vpop.f32.mrb[0].mxu0
      %v4305 = vadd.f32 %v4032, %v4304
      %v4306 = vpop.f32.mrb[0].mxu0
      %v4307 = vpop.f32.mrb[0].mxu0
      %v4308 = vadd.f32 %v4035, %v4307
      %v4309 = vpop.f32.mrb[0].mxu0
      %4310 = vmatprep.mubr.bf16.mxu0 0
      %4311 = vmatmul.mubr.bf16.gmra.mrb[0].mxu0 %v4177
      %v4312 = vpop.f32.mrb[0].mxu0
      %v4313 = vadd.f32 %v4040, %v4312
      %v4314 = vpop.f32.mrb[0].mxu0
      %v4315 = vpop.f32.mrb[0].mxu0
      %v4316 = vadd.f32 %v4043, %v4315
      %v4317 = vpop.f32.mrb[0].mxu0
      %4318 = vmatprep.mubr.bf16.mxu0 0
      %4319 = vmatmul.mubr.bf16.gmra.mrb[0].mxu0 %v4178
      %v4320 = vpop.f32.mrb[0].mxu0
      %v4321 = vadd.f32 %v4048, %v4320
      %v4322 = vpop.f32.mrb[0].mxu0
      %v4323 = vpop.f32.mrb[0].mxu0
      %v4324 = vadd.f32 %v4051, %v4323
      %v4325 = vpop.f32.mrb[0].mxu0
      %4326 = vmatprep.mubr.bf16.mxu0 0
      %4327 = vmatmul.mubr.bf16.gmra.mrb[0].mxu0 %v4179
      %v4328 = vpop.f32.mrb[0].mxu0
      %v4329 = vadd.f32 %v4056, %v4328
      %v4330 = vpop.f32.mrb[0].mxu0
      %v4331 = vpop.f32.mrb[0].mxu0
      %v4332 = vadd.f32 %v4059, %v4331
      %v4333 = vpop.f32.mrb[0].mxu0
      %4334 = vmatprep.mubr.bf16.mxu0 0
      %4335 = vmatmul.mubr.bf16.gmra.mrb[0].mxu0 %v4180
      %v4336 = vpop.f32.mrb[0].mxu0
      %v4337 = vadd.f32 %v4064, %v4336
      %v4338 = vpop.f32.mrb[0].mxu0
      %v4339 = vpop.f32.mrb[0].mxu0
      %v4340 = vadd.f32 %v4067, %v4339
      %v4341 = vpop.f32.mrb[0].mxu0
      %4342 = vmatprep.mubr.bf16.mxu0 0
      %4343 = vmatmul.mubr.bf16.gmra.mrb[0].mxu0 %v4181
      %v4344 = vpop.f32.mrb[0].mxu0
      %v4345 = vadd.f32 %v4072, %v4344
      %v4346 = vpop.f32.mrb[0].mxu0
      %v4347 = vpop.f32.mrb[0].mxu0
      %v4348 = vadd.f32 %v4075, %v4347
      %v4349 = vpop.f32.mrb[0].mxu0
      %4350 = vmatprep.mubr.bf16.mxu0 0
      %4351 = vmatmul.mubr.bf16.gmra.mrb[0].mxu0 %v4182
      %v4352 = vpop.f32.mrb[0].mxu0
      %v4353 = vadd.f32 %v4080, %v4352
      %v4354 = vpop.f32.mrb[0].mxu0
      %v4355 = vpop.f32.mrb[0].mxu0
      %v4356 = vadd.f32 %v4083, %v4355
      %v4357 = vpop.f32.mrb[0].mxu0
      %4358 = vmatprep.mubr.bf16.mxu0 0
      %4359 = vmatmul.mubr.bf16.gmra.mrb[0].mxu0 %v4183
      %v4360 = vpop.f32.mrb[0].mxu0
      %v4361 = vadd.f32 %v4088, %v4360
      %v4362 = vpop.f32.mrb[0].mxu0
      %v4363 = vpop.f32.mrb[0].mxu0
      %v4364 = vadd.f32 %v4091, %v4363
      %v4365 = vpop.f32.mrb[0].mxu0
      %4366 = vmatprep.mubr.bf16.mxu0 0
      %4367 = vmatmul.mubr.bf16.gmra.mrb[0].mxu0 %v4184
      %v4368 = vpop.f32.mrb[0].mxu0
      %v4369 = vadd.f32 %v4096, %v4368
      %v4370 = vpop.f32.mrb[0].mxu0
      %v4371 = vpop.f32.mrb[0].mxu0
      %v4372 = vadd.f32 %v4099, %v4371
      %v4373 = vpop.f32.mrb[0].mxu0
      %4374 = vmatprep.mubr.bf16.mxu0 0
      %4375 = vmatmul.mubr.bf16.gmra.mrb[0].mxu0 %v4185
      %v4376 = vpop.f32.mrb[0].mxu0
      %v4377 = vadd.f32 %v4104, %v4376
      %v4378 = vpop.f32.mrb[0].mxu0
      %v4379 = vpop.f32.mrb[0].mxu0
      %v4380 = vadd.f32 %v4107, %v4379
      %v4381 = vpop.f32.mrb[0].mxu0
      %4382 = vmatprep.mubr.bf16.mxu0 0
      %4383 = vmatmul.mubr.bf16.gmra.mrb[0].mxu0 %v4186
      %v4384 = vpop.f32.mrb[0].mxu0
      %v4385 = vadd.f32 %v4112, %v4384
      %v4386 = vpop.f32.mrb[0].mxu0
      %v4387 = vpop.f32.mrb[0].mxu0
      %v4388 = vadd.f32 %v4115, %v4387
      %v4389 = vpop.f32.mrb[0].mxu0
      %4390 = vmatprep.mubr.bf16.mxu0 0
      %4391 = vmatmul.mubr.bf16.gmra.mrb[0].mxu0 %v4187
      %v4392 = vpop.f32.mrb[0].mxu0
      %v4393 = vadd.f32 %v4120, %v4392
      %v4394 = vpop.f32.mrb[0].mxu0
      %v4395 = vpop.f32.mrb[0].mxu0
      %v4396 = vadd.f32 %v4123, %v4395
      %v4397 = vpop.f32.mrb[0].mxu0
      %4398 = vmatprep.mubr.bf16.mxu0 0
      %4399 = vmatmul.mubr.bf16.gmra.mrb[0].mxu0 %v4188
      %v4400 = vpop.f32.mrb[0].mxu0
      %v4401 = vadd.f32 %v4128, %v4400
      %v4402 = vpop.f32.mrb[0].mxu0
      %v4403 = vpop.f32.mrb[0].mxu0
      %v4404 = vadd.f32 %v4131, %v4403
      %v4405 = vpop.f32.mrb[0].mxu0
      %4406 = vmatprep.mubr.bf16.mxu0 0
      %4407 = vmatmul.mubr.bf16.gmra.mrb[0].mxu0 %v4189
      %v4408 = vpop.f32.mrb[0].mxu0
      %v4409 = vadd.f32 %v4136, %v4408
      %v4410 = vpop.f32.mrb[0].mxu0
      %v4411 = vpop.f32.mrb[0].mxu0
      %v4412 = vadd.f32 %v4139, %v4411
      %v4413 = vpop.f32.mrb[0].mxu0
      %4414 = vdwg.mxu0
      %v4415 = vld [vmem:[#allocation2] sm:$0xf]
      %v4416 = vld [vmem:[#allocation2 + $0x4] sm:$0xf]
      %v4417 = vld [vmem:[#allocation2 + $0x8] sm:$0x1]
      %v4418 = vld [vmem:[#allocation2 + $0xc] sm:$0xf]
      %v4419 = vld [vmem:[#allocation2 + $0x10] sm:$0xf]
      %v4420 = vld [vmem:[#allocation2 + $0x14] sm:$0x1]
      %v4421 = vld [vmem:[#allocation2 + $0x18] sm:$0xf]
      %v4422 = vld [vmem:[#allocation2 + $0x1c] sm:$0xf]
      %v4423 = vld [vmem:[#allocation2 + $0x20] sm:$0x1]
      %v4424 = vld [vmem:[#allocation2 + $0x24] sm:$0xf]
      %v4425 = vld [vmem:[#allocation2 + $0x28] sm:$0xf]
      %v4426 = vld [vmem:[#allocation2 + $0x2c] sm:$0x1]
      %v4427 = vld [vmem:[#allocation2 + $0x30] sm:$0xf]
      %v4428 = vld [vmem:[#allocation2 + $0x34] sm:$0xf]
      %v4429 = vld [vmem:[#allocation2 + $0x38] sm:$0x1]
      %v4430 = vld [vmem:[#allocation2 + $0x3c] sm:$0xf]
      %v4431 = vld [vmem:[#allocation2 + $0x40] sm:$0xf]
      %v4432 = vld [vmem:[#allocation2 + $0x44] sm:$0x1]
      %v4433 = vld [vmem:[#allocation2 + $0x48] sm:$0xf]
      %v4434 = vld [vmem:[#allocation2 + $0x4c] sm:$0xf]
      %v4435 = vld [vmem:[#allocation2 + $0x50] sm:$0x1]
      %v4436 = vld [vmem:[#allocation2 + $0x54] sm:$0xf]
      %v4437 = vld [vmem:[#allocation2 + $0x58] sm:$0xf]
      %v4438 = vld [vmem:[#allocation2 + $0x5c] sm:$0x1]
      %v4439 = vld [vmem:[#allocation2 + $0x60] sm:$0xf]
      %v4440 = vld [vmem:[#allocation2 + $0x64] sm:$0xf]
      %v4441 = vld [vmem:[#allocation2 + $0x68] sm:$0x1]
      %v4442 = vld [vmem:[#allocation2 + $0x6c] sm:$0xf]
      %v4443 = vld [vmem:[#allocation2 + $0x70] sm:$0xf]
      %v4444 = vld [vmem:[#allocation2 + $0x74] sm:$0x1]
      %v4445 = vld [vmem:[#allocation2 + $0x78] sm:$0xf]
      %v4446 = vld [vmem:[#allocation2 + $0x7c] sm:$0xf]
      %v4447 = vld [vmem:[#allocation2 + $0x80] sm:$0x1]
      %v4448 = vld [vmem:[#allocation2 + $0x84] sm:$0xf]
      %v4449 = vld [vmem:[#allocation2 + $0x88] sm:$0xf]
      %v4450 = vld [vmem:[#allocation2 + $0x8c] sm:$0x1]
      %v4451 = vld [vmem:[#allocation2 + $0x90] sm:$0xf]
      %v4452 = vld [vmem:[#allocation2 + $0x94] sm:$0xf]
      %v4453 = vld [vmem:[#allocation2 + $0x98] sm:$0x1]
      %v4454 = vld [vmem:[#allocation2 + $0x9c] sm:$0xf]
      %v4455 = vld [vmem:[#allocation2 + $0xa0] sm:$0xf]
      %v4456 = vld [vmem:[#allocation2 + $0xa4] sm:$0x1]
      %v4457 = vld [vmem:[#allocation2 + $0xa8] sm:$0xf]
      %v4458 = vld [vmem:[#allocation2 + $0xac] sm:$0xf]
      %v4459 = vld [vmem:[#allocation2 + $0xb0] sm:$0x1]
      %v4460 = vld [vmem:[#allocation2 + $0xb4] sm:$0xf]
      %v4461 = vld [vmem:[#allocation2 + $0xb8] sm:$0xf]
      %v4462 = vld [vmem:[#allocation2 + $0xbc] sm:$0x1]
      %v4464 = vshrl.u32 %v4415, 16
      %v4466 = vrot.slane %v4464, 4
      %v4467 = vshll.u32 %v4415, 16
      %v4469 = vrot.slane %v4467, 5
      %v4470 = vor.u32 %v4466, %v4469
      %v4471 = vrot.slane %v4470, 4
      %v4473 = vshll.u32 %v4416, 16
      %v4475 = vrot.slane %v4473, 5
      %v4476 = vsel %vm1384, %v4471, %v4475
      %v4477 = vshrl.u32 %v4416, 16
      %v4479 = vrot.slane %v4477, 4
      %v4480 = vor.u32 %v4479, %v4475
      %v4481 = vrot.slane %v4480, 4
      %v4483 = vshll.u32 %v4417, 16
      %v4485 = vrot.slane %v4483, 5
      %v4486 = vsel %vm1384, %v4481, %v4485
      %v4488 = vshrl.u32 %v4418, 16
      %v4490 = vrot.slane %v4488, 4
      %v4491 = vshll.u32 %v4418, 16
      %v4493 = vrot.slane %v4491, 5
      %v4494 = vor.u32 %v4490, %v4493
      %v4495 = vrot.slane %v4494, 4
      %v4497 = vshll.u32 %v4419, 16
      %v4499 = vrot.slane %v4497, 5
      %v4500 = vsel %vm1384, %v4495, %v4499
      %v4501 = vshrl.u32 %v4419, 16
      %v4503 = vrot.slane %v4501, 4
      %v4504 = vor.u32 %v4503, %v4499
      %v4505 = vrot.slane %v4504, 4
      %v4507 = vshll.u32 %v4420, 16
      %v4509 = vrot.slane %v4507, 5
      %v4510 = vsel %vm1384, %v4505, %v4509
      %v4512 = vshrl.u32 %v4421, 16
      %v4514 = vrot.slane %v4512, 4
      %v4515 = vshll.u32 %v4421, 16
      %v4517 = vrot.slane %v4515, 5
      %v4518 = vor.u32 %v4514, %v4517
      %v4519 = vrot.slane %v4518, 4
      %v4521 = vshll.u32 %v4422, 16
      %v4523 = vrot.slane %v4521, 5
      %v4524 = vsel %vm1384, %v4519, %v4523
      %v4525 = vshrl.u32 %v4422, 16
      %v4527 = vrot.slane %v4525, 4
      %v4528 = vor.u32 %v4527, %v4523
      %v4529 = vrot.slane %v4528, 4
      %v4531 = vshll.u32 %v4423, 16
      %v4533 = vrot.slane %v4531, 5
      %v4534 = vsel %vm1384, %v4529, %v4533
      %v4536 = vshrl.u32 %v4424, 16
      %v4538 = vrot.slane %v4536, 4
      %v4539 = vshll.u32 %v4424, 16
      %v4541 = vrot.slane %v4539, 5
      %v4542 = vor.u32 %v4538, %v4541
      %v4543 = vrot.slane %v4542, 4
      %v4545 = vshll.u32 %v4425, 16
      %v4547 = vrot.slane %v4545, 5
      %v4548 = vsel %vm1384, %v4543, %v4547
      %v4549 = vshrl.u32 %v4425, 16
      %v4551 = vrot.slane %v4549, 4
      %v4552 = vor.u32 %v4551, %v4547
      %v4553 = vrot.slane %v4552, 4
      %v4555 = vshll.u32 %v4426, 16
      %v4557 = vrot.slane %v4555, 5
      %v4558 = vsel %vm1384, %v4553, %v4557
      %v4560 = vshrl.u32 %v4427, 16
      %v4562 = vrot.slane %v4560, 4
      %v4563 = vshll.u32 %v4427, 16
      %v4565 = vrot.slane %v4563, 5
      %v4566 = vor.u32 %v4562, %v4565
      %v4567 = vrot.slane %v4566, 4
      %v4569 = vshll.u32 %v4428, 16
      %v4571 = vrot.slane %v4569, 5
      %v4572 = vsel %vm1384, %v4567, %v4571
      %v4573 = vshrl.u32 %v4428, 16
      %v4575 = vrot.slane %v4573, 4
      %v4576 = vor.u32 %v4575, %v4571
      %v4577 = vrot.slane %v4576, 4
      %v4579 = vshll.u32 %v4429, 16
      %v4581 = vrot.slane %v4579, 5
      %v4582 = vsel %vm1384, %v4577, %v4581
      %v4584 = vshrl.u32 %v4430, 16
      %v4586 = vrot.slane %v4584, 4
      %v4587 = vshll.u32 %v4430, 16
      %v4589 = vrot.slane %v4587, 5
      %v4590 = vor.u32 %v4586, %v4589
      %v4591 = vrot.slane %v4590, 4
      %v4593 = vshll.u32 %v4431, 16
      %v4595 = vrot.slane %v4593, 5
      %v4596 = vsel %vm1384, %v4591, %v4595
      %v4597 = vshrl.u32 %v4431, 16
      %v4599 = vrot.slane %v4597, 4
      %v4600 = vor.u32 %v4599, %v4595
      %v4601 = vrot.slane %v4600, 4
      %v4603 = vshll.u32 %v4432, 16
      %v4605 = vrot.slane %v4603, 5
      %v4606 = vsel %vm1384, %v4601, %v4605
      %v4608 = vshrl.u32 %v4433, 16
      %v4610 = vrot.slane %v4608, 4
      %v4611 = vshll.u32 %v4433, 16
      %v4613 = vrot.slane %v4611, 5
      %v4614 = vor.u32 %v4610, %v4613
      %v4615 = vrot.slane %v4614, 4
      %v4617 = vshll.u32 %v4434, 16
      %v4619 = vrot.slane %v4617, 5
      %v4620 = vsel %vm1384, %v4615, %v4619
      %v4621 = vshrl.u32 %v4434, 16
      %v4623 = vrot.slane %v4621, 4
      %v4624 = vor.u32 %v4623, %v4619
      %v4625 = vrot.slane %v4624, 4
      %v4627 = vshll.u32 %v4435, 16
      %v4629 = vrot.slane %v4627, 5
      %v4630 = vsel %vm1384, %v4625, %v4629
      %v4632 = vshrl.u32 %v4436, 16
      %v4634 = vrot.slane %v4632, 4
      %v4635 = vshll.u32 %v4436, 16
      %v4637 = vrot.slane %v4635, 5
      %v4638 = vor.u32 %v4634, %v4637
      %v4639 = vrot.slane %v4638, 4
      %v4641 = vshll.u32 %v4437, 16
      %v4643 = vrot.slane %v4641, 5
      %v4644 = vsel %vm1384, %v4639, %v4643
      %v4645 = vshrl.u32 %v4437, 16
      %v4647 = vrot.slane %v4645, 4
      %v4648 = vor.u32 %v4647, %v4643
      %v4649 = vrot.slane %v4648, 4
      %v4651 = vshll.u32 %v4438, 16
      %v4653 = vrot.slane %v4651, 5
      %v4654 = vsel %vm1384, %v4649, %v4653
      %v4656 = vshrl.u32 %v4439, 16
      %v4658 = vrot.slane %v4656, 4
      %v4659 = vshll.u32 %v4439, 16
      %v4661 = vrot.slane %v4659, 5
      %v4662 = vor.u32 %v4658, %v4661
      %v4663 = vrot.slane %v4662, 4
      %v4665 = vshll.u32 %v4440, 16
      %v4667 = vrot.slane %v4665, 5
      %v4668 = vsel %vm1384, %v4663, %v4667
      %v4669 = vshrl.u32 %v4440, 16
      %v4671 = vrot.slane %v4669, 4
      %v4672 = vor.u32 %v4671, %v4667
      %v4673 = vrot.slane %v4672, 4
      %v4675 = vshll.u32 %v4441, 16
      %v4677 = vrot.slane %v4675, 5
      %v4678 = vsel %vm1384, %v4673, %v4677
      %v4680 = vshrl.u32 %v4442, 16
      %v4682 = vrot.slane %v4680, 4
      %v4683 = vshll.u32 %v4442, 16
      %v4685 = vrot.slane %v4683, 5
      %v4686 = vor.u32 %v4682, %v4685
      %v4687 = vrot.slane %v4686, 4
      %v4689 = vshll.u32 %v4443, 16
      %v4691 = vrot.slane %v4689, 5
      %v4692 = vsel %vm1384, %v4687, %v4691
      %v4693 = vshrl.u32 %v4443, 16
      %v4695 = vrot.slane %v4693, 4
      %v4696 = vor.u32 %v4695, %v4691
      %v4697 = vrot.slane %v4696, 4
      %v4699 = vshll.u32 %v4444, 16
      %v4701 = vrot.slane %v4699, 5
      %v4702 = vsel %vm1384, %v4697, %v4701
      %v4704 = vshrl.u32 %v4445, 16
      %v4706 = vrot.slane %v4704, 4
      %v4707 = vshll.u32 %v4445, 16
      %v4709 = vrot.slane %v4707, 5
      %v4710 = vor.u32 %v4706, %v4709
      %v4711 = vrot.slane %v4710, 4
      %v4713 = vshll.u32 %v4446, 16
      %v4715 = vrot.slane %v4713, 5
      %v4716 = vsel %vm1384, %v4711, %v4715
      %v4717 = vshrl.u32 %v4446, 16
      %v4719 = vrot.slane %v4717, 4
      %v4720 = vor.u32 %v4719, %v4715
      %v4721 = vrot.slane %v4720, 4
      %v4723 = vshll.u32 %v4447, 16
      %v4725 = vrot.slane %v4723, 5
      %v4726 = vsel %vm1384, %v4721, %v4725
      %v4728 = vshrl.u32 %v4448, 16
      %v4730 = vrot.slane %v4728, 4
      %v4731 = vshll.u32 %v4448, 16
      %v4733 = vrot.slane %v4731, 5
      %v4734 = vor.u32 %v4730, %v4733
      %v4735 = vrot.slane %v4734, 4
      %v4737 = vshll.u32 %v4449, 16
      %v4739 = vrot.slane %v4737, 5
      %v4740 = vsel %vm1384, %v4735, %v4739
      %v4741 = vshrl.u32 %v4449, 16
      %v4743 = vrot.slane %v4741, 4
      %v4744 = vor.u32 %v4743, %v4739
      %v4745 = vrot.slane %v4744, 4
      %v4747 = vshll.u32 %v4450, 16
      %v4749 = vrot.slane %v4747, 5
      %v4750 = vsel %vm1384, %v4745, %v4749
      %v4752 = vshrl.u32 %v4451, 16
      %v4754 = vrot.slane %v4752, 4
      %v4755 = vshll.u32 %v4451, 16
      %v4757 = vrot.slane %v4755, 5
      %v4758 = vor.u32 %v4754, %v4757
      %v4759 = vrot.slane %v4758, 4
      %v4761 = vshll.u32 %v4452, 16
      %v4763 = vrot.slane %v4761, 5
      %v4764 = vsel %vm1384, %v4759, %v4763
      %v4765 = vshrl.u32 %v4452, 16
      %v4767 = vrot.slane %v4765, 4
      %v4768 = vor.u32 %v4767, %v4763
      %v4769 = vrot.slane %v4768, 4
      %v4771 = vshll.u32 %v4453, 16
      %v4773 = vrot.slane %v4771, 5
      %v4774 = vsel %vm1384, %v4769, %v4773
      %v4776 = vshrl.u32 %v4454, 16
      %v4778 = vrot.slane %v4776, 4
      %v4779 = vshll.u32 %v4454, 16
      %v4781 = vrot.slane %v4779, 5
      %v4782 = vor.u32 %v4778, %v4781
      %v4783 = vrot.slane %v4782, 4
      %v4785 = vshll.u32 %v4455, 16
      %v4787 = vrot.slane %v4785, 5
      %v4788 = vsel %vm1384, %v4783, %v4787
      %v4789 = vshrl.u32 %v4455, 16
      %v4791 = vrot.slane %v4789, 4
      %v4792 = vor.u32 %v4791, %v4787
      %v4793 = vrot.slane %v4792, 4
      %v4795 = vshll.u32 %v4456, 16
      %v4797 = vrot.slane %v4795, 5
      %v4798 = vsel %vm1384, %v4793, %v4797
      %v4800 = vshrl.u32 %v4457, 16
      %v4802 = vrot.slane %v4800, 4
      %v4803 = vshll.u32 %v4457, 16
      %v4805 = vrot.slane %v4803, 5
      %v4806 = vor.u32 %v4802, %v4805
      %v4807 = vrot.slane %v4806, 4
      %v4809 = vshll.u32 %v4458, 16
      %v4811 = vrot.slane %v4809, 5
      %v4812 = vsel %vm1384, %v4807, %v4811
      %v4813 = vshrl.u32 %v4458, 16
      %v4815 = vrot.slane %v4813, 4
      %v4816 = vor.u32 %v4815, %v4811
      %v4817 = vrot.slane %v4816, 4
      %v4819 = vshll.u32 %v4459, 16
      %v4821 = vrot.slane %v4819, 5
      %v4822 = vsel %vm1384, %v4817, %v4821
      %v4824 = vshrl.u32 %v4460, 16
      %v4826 = vrot.slane %v4824, 4
      %v4827 = vshll.u32 %v4460, 16
      %v4829 = vrot.slane %v4827, 5
      %v4830 = vor.u32 %v4826, %v4829
      %v4831 = vrot.slane %v4830, 4
      %v4833 = vshll.u32 %v4461, 16
      %v4835 = vrot.slane %v4833, 5
      %v4836 = vsel %vm1384, %v4831, %v4835
      %v4837 = vshrl.u32 %v4461, 16
      %v4839 = vrot.slane %v4837, 4
      %v4840 = vor.u32 %v4839, %v4835
      %v4841 = vrot.slane %v4840, 4
      %v4843 = vshll.u32 %v4462, 16
      %v4845 = vrot.slane %v4843, 5
      %v4846 = vsel %vm1384, %v4841, %v4845
      %s4847 = scalar_lea.vmem %s3, 384
      %v4848 = vld [vmem:[%s4847] sm:$0xf]
      %v4849 = vld [vmem:[%s4847 + $0x4] sm:$0xf]
      %v4850 = vld [vmem:[%s4847 + $0x8] sm:$0xf]
      %v4851 = vld [vmem:[%s4847 + $0xc] sm:$0xf]
      %v4852 = vld [vmem:[%s4847 + $0x10] sm:$0xf]
      %v4853 = vld [vmem:[%s4847 + $0x14] sm:$0xf]
      %v4854 = vld [vmem:[%s4847 + $0x18] sm:$0xf]
      %v4855 = vld [vmem:[%s4847 + $0x1c] sm:$0xf]
      %v4856 = vld [vmem:[%s4847 + $0x20] sm:$0xf]
      %v4857 = vld [vmem:[%s4847 + $0x24] sm:$0xf]
      %v4858 = vld [vmem:[%s4847 + $0x28] sm:$0xf]
      %v4859 = vld [vmem:[%s4847 + $0x2c] sm:$0xf]
      %v4860 = vld [vmem:[%s4847 + $0x30] sm:$0xf]
      %v4861 = vld [vmem:[%s4847 + $0x34] sm:$0xf]
      %v4862 = vld [vmem:[%s4847 + $0x38] sm:$0xf]
      %v4863 = vld [vmem:[%s4847 + $0x3c] sm:$0xf]
      %v4864 = vunpack.c.l.b16 %v4476
      %v4865 = vunpack.c.l.b16 %v4486
      %v4866 = vunpack.c.l.b16 %v4500
      %v4867 = vunpack.c.l.b16 %v4510
      %v4868 = vunpack.c.l.b16 %v4524
      %v4869 = vunpack.c.l.b16 %v4534
      %v4870 = vunpack.c.l.b16 %v4548
      %v4871 = vunpack.c.l.b16 %v4558
      %v4872 = vunpack.c.l.b16 %v4572
      %v4873 = vunpack.c.l.b16 %v4582
      %v4874 = vunpack.c.l.b16 %v4596
      %v4875 = vunpack.c.l.b16 %v4606
      %v4876 = vunpack.c.l.b16 %v4620
      %v4877 = vunpack.c.l.b16 %v4630
      %v4878 = vunpack.c.l.b16 %v4644
      %v4879 = vunpack.c.l.b16 %v4654
      %v4880 = vunpack.c.l.b16 %v4668
      %v4881 = vunpack.c.l.b16 %v4678
      %v4882 = vunpack.c.l.b16 %v4692
      %v4883 = vunpack.c.l.b16 %v4702
      %v4884 = vunpack.c.l.b16 %v4716
      %v4885 = vunpack.c.l.b16 %v4726
      %v4886 = vunpack.c.l.b16 %v4740
      %v4887 = vunpack.c.l.b16 %v4750
      %v4888 = vunpack.c.l.b16 %v4764
      %v4889 = vunpack.c.l.b16 %v4774
      %v4890 = vunpack.c.l.b16 %v4788
      %v4891 = vunpack.c.l.b16 %v4798
      %v4892 = vunpack.c.l.b16 %v4812
      %v4893 = vunpack.c.l.b16 %v4822
      %v4894 = vunpack.c.l.b16 %v4836
      %v4895 = vunpack.c.l.b16 %v4846
      %v4896 = vpack.c.b16 %v4865, %v4864
      %v4897 = vpack.c.b16 %v4867, %v4866
      %v4898 = vpack.c.b16 %v4869, %v4868
      %v4899 = vpack.c.b16 %v4871, %v4870
      %v4900 = vpack.c.b16 %v4873, %v4872
      %v4901 = vpack.c.b16 %v4875, %v4874
      %v4902 = vpack.c.b16 %v4877, %v4876
      %v4903 = vpack.c.b16 %v4879, %v4878
      %v4904 = vpack.c.b16 %v4881, %v4880
      %v4905 = vpack.c.b16 %v4883, %v4882
      %v4906 = vpack.c.b16 %v4885, %v4884
      %v4907 = vpack.c.b16 %v4887, %v4886
      %v4908 = vpack.c.b16 %v4889, %v4888
      %v4909 = vpack.c.b16 %v4891, %v4890
      %v4910 = vpack.c.b16 %v4893, %v4892
      %v4911 = vpack.c.b16 %v4895, %v4894
      %v4944 = vunpack.c.l.b16 %v4848
      %v4945 = vunpack.c.l.b16 %v4849
      %v4946 = vunpack.c.l.b16 %v4850
      %v4947 = vunpack.c.l.b16 %v4851
      %v4948 = vunpack.c.l.b16 %v4852
      %v4949 = vunpack.c.l.b16 %v4853
      %v4950 = vunpack.c.l.b16 %v4854
      %v4951 = vunpack.c.l.b16 %v4855
      %v4952 = vunpack.c.l.b16 %v4856
      %v4953 = vunpack.c.l.b16 %v4857
      %v4954 = vunpack.c.l.b16 %v4858
      %v4955 = vunpack.c.l.b16 %v4859
      %v4956 = vunpack.c.l.b16 %v4860
      %v4957 = vunpack.c.l.b16 %v4861
      %v4958 = vunpack.c.l.b16 %v4862
      %v4959 = vunpack.c.l.b16 %v4863
      %v4960 = vpack.c.b16 %v4945, %v4944
      %v4961 = vpack.c.b16 %v4947, %v4946
      %v4962 = vpack.c.b16 %v4949, %v4948
      %v4963 = vpack.c.b16 %v4951, %v4950
      %v4964 = vpack.c.b16 %v4953, %v4952
      %v4965 = vpack.c.b16 %v4955, %v4954
      %v4966 = vpack.c.b16 %v4957, %v4956
      %v4967 = vpack.c.b16 %v4959, %v4958
      %4976 = vmatprep.subr.bf16.mxu0 0
      %4977 = vmatpush1.bf16.msra.mxu0 %v4960
      %4978 = vmatprep.subr.bf16.mxu0 0
      %4979 = vmatpush1.bf16.msra.mxu0 %v4961
      %4980 = vmatprep.subr.bf16.mxu0 0
      %4981 = vmatpush1.bf16.msra.mxu0 %v4962
      %4982 = vmatprep.subr.bf16.mxu0 0
      %4983 = vmatpush1.bf16.msra.mxu0 %v4963
      %4984 = vmatprep.subr.bf16.mxu0 0
      %4985 = vmatpush1.bf16.msra.mxu0 %v4964
      %4986 = vmatprep.subr.bf16.mxu0 0
      %4987 = vmatpush1.bf16.msra.mxu0 %v4965
      %4988 = vmatprep.subr.bf16.mxu0 0
      %4989 = vmatpush1.bf16.msra.mxu0 %v4966
      %4990 = vmatprep.subr.bf16.mxu0 0
      %4991 = vmatpush1.bf16.msra.mxu0 %v4967
      %4992 = vmatprep.subr.bf16.mxu0 0
      %4993 = vmatpush1.bf16.msra.mxu0 0
      %4994 = vmatprep.subr.bf16.mxu0 0
      %4995 = vmatpush1.bf16.msra.mxu0 0
      %4996 = vmatprep.subr.bf16.mxu0 0
      %4997 = vmatpush1.bf16.msra.mxu0 0
      %4998 = vmatprep.subr.bf16.mxu0 0
      %4999 = vmatpush1.bf16.msra.mxu0 0
      %5000 = vmatprep.subr.bf16.mxu0 0
      %5001 = vmatpush1.bf16.msra.mxu0 0
      %5002 = vmatprep.subr.bf16.mxu0 0
      %5003 = vmatpush1.bf16.msra.mxu0 0
      %5004 = vmatprep.subr.bf16.mxu0 0
      %5005 = vmatpush1.bf16.msra.mxu0 0
      %5006 = vmatprep.subr.bf16.mxu0 0
      %5007 = vmatpush1.bf16.msra.mxu0 0
      %5008 = vmatprep.mubr.bf16.mxu0 0
      %5009 = vmatmul.mubr.bf16.gmra.mrb[0].mxu0 %v4896
      %v5010 = vpop.f32.mrb[0].mxu0
      %v5011 = vadd.f32 0.0, %v5010
      %v5012 = vpop.f32.mrb[0].mxu0
      %v5013 = vpop.f32.mrb[0].mxu0
      %v5014 = vadd.f32 0.0, %v5013
      %v5015 = vpop.f32.mrb[0].mxu0
      %5016 = vmatprep.mubr.bf16.mxu0 0
      %5017 = vmatmul.mubr.bf16.gmra.mrb[0].mxu0 %v4897
      %v5018 = vpop.f32.mrb[0].mxu0
      %v5019 = vadd.f32 0.0, %v5018
      %v5020 = vpop.f32.mrb[0].mxu0
      %v5021 = vpop.f32.mrb[0].mxu0
      %v5022 = vadd.f32 0.0, %v5021
      %v5023 = vpop.f32.mrb[0].mxu0
      %5024 = vmatprep.mubr.bf16.mxu0 0
      %5025 = vmatmul.mubr.bf16.gmra.mrb[0].mxu0 %v4898
      %v5026 = vpop.f32.mrb[0].mxu0
      %v5027 = vadd.f32 0.0, %v5026
      %v5028 = vpop.f32.mrb[0].mxu0
      %v5029 = vpop.f32.mrb[0].mxu0
      %v5030 = vadd.f32 0.0, %v5029
      %v5031 = vpop.f32.mrb[0].mxu0
      %5032 = vmatprep.mubr.bf16.mxu0 0
      %5033 = vmatmul.mubr.bf16.gmra.mrb[0].mxu0 %v4899
      %v5034 = vpop.f32.mrb[0].mxu0
      %v5035 = vadd.f32 0.0, %v5034
      %v5036 = vpop.f32.mrb[0].mxu0
      %v5037 = vpop.f32.mrb[0].mxu0
      %v5038 = vadd.f32 0.0, %v5037
      %v5039 = vpop.f32.mrb[0].mxu0
      %5040 = vmatprep.mubr.bf16.mxu0 0
      %5041 = vmatmul.mubr.bf16.gmra.mrb[0].mxu0 %v4900
      %v5042 = vpop.f32.mrb[0].mxu0
      %v5043 = vadd.f32 0.0, %v5042
      %v5044 = vpop.f32.mrb[0].mxu0
      %v5045 = vpop.f32.mrb[0].mxu0
      %v5046 = vadd.f32 0.0, %v5045
      %v5047 = vpop.f32.mrb[0].mxu0
      %5048 = vmatprep.mubr.bf16.mxu0 0
      %5049 = vmatmul.mubr.bf16.gmra.mrb[0].mxu0 %v4901
      %v5050 = vpop.f32.mrb[0].mxu0
      %v5051 = vadd.f32 0.0, %v5050
      %v5052 = vpop.f32.mrb[0].mxu0
      %v5053 = vpop.f32.mrb[0].mxu0
      %v5054 = vadd.f32 0.0, %v5053
      %v5055 = vpop.f32.mrb[0].mxu0
      %5056 = vmatprep.mubr.bf16.mxu0 0
      %5057 = vmatmul.mubr.bf16.gmra.mrb[0].mxu0 %v4902
      %v5058 = vpop.f32.mrb[0].mxu0
      %v5059 = vadd.f32 0.0, %v5058
      %v5060 = vpop.f32.mrb[0].mxu0
      %v5061 = vpop.f32.mrb[0].mxu0
      %v5062 = vadd.f32 0.0, %v5061
      %v5063 = vpop.f32.mrb[0].mxu0
      %5064 = vmatprep.mubr.bf16.mxu0 0
      %5065 = vmatmul.mubr.bf16.gmra.mrb[0].mxu0 %v4903
      %v5066 = vpop.f32.mrb[0].mxu0
      %v5067 = vadd.f32 0.0, %v5066
      %v5068 = vpop.f32.mrb[0].mxu0
      %v5069 = vpop.f32.mrb[0].mxu0
      %v5070 = vadd.f32 0.0, %v5069
      %v5071 = vpop.f32.mrb[0].mxu0
      %5072 = vmatprep.mubr.bf16.mxu0 0
      %5073 = vmatmul.mubr.bf16.gmra.mrb[0].mxu0 %v4904
      %v5074 = vpop.f32.mrb[0].mxu0
      %v5075 = vadd.f32 0.0, %v5074
      %v5076 = vpop.f32.mrb[0].mxu0
      %v5077 = vpop.f32.mrb[0].mxu0
      %v5078 = vadd.f32 0.0, %v5077
      %v5079 = vpop.f32.mrb[0].mxu0
      %5080 = vmatprep.mubr.bf16.mxu0 0
      %5081 = vmatmul.mubr.bf16.gmra.mrb[0].mxu0 %v4905
      %v5082 = vpop.f32.mrb[0].mxu0
      %v5083 = vadd.f32 0.0, %v5082
      %v5084 = vpop.f32.mrb[0].mxu0
      %v5085 = vpop.f32.mrb[0].mxu0
      %v5086 = vadd.f32 0.0, %v5085
      %v5087 = vpop.f32.mrb[0].mxu0
      %5088 = vmatprep.mubr.bf16.mxu0 0
      %5089 = vmatmul.mubr.bf16.gmra.mrb[0].mxu0 %v4906
      %v5090 = vpop.f32.mrb[0].mxu0
      %v5091 = vadd.f32 0.0, %v5090
      %v5092 = vpop.f32.mrb[0].mxu0
      %v5093 = vpop.f32.mrb[0].mxu0
      %v5094 = vadd.f32 0.0, %v5093
      %v5095 = vpop.f32.mrb[0].mxu0
      %5096 = vmatprep.mubr.bf16.mxu0 0
      %5097 = vmatmul.mubr.bf16.gmra.mrb[0].mxu0 %v4907
      %v5098 = vpop.f32.mrb[0].mxu0
      %v5099 = vadd.f32 0.0, %v5098
      %v5100 = vpop.f32.mrb[0].mxu0
      %v5101 = vpop.f32.mrb[0].mxu0
      %v5102 = vadd.f32 0.0, %v5101
      %v5103 = vpop.f32.mrb[0].mxu0
      %5104 = vmatprep.mubr.bf16.mxu0 0
      %5105 = vmatmul.mubr.bf16.gmra.mrb[0].mxu0 %v4908
      %v5106 = vpop.f32.mrb[0].mxu0
      %v5107 = vadd.f32 0.0, %v5106
      %v5108 = vpop.f32.mrb[0].mxu0
      %v5109 = vpop.f32.mrb[0].mxu0
      %v5110 = vadd.f32 0.0, %v5109
      %v5111 = vpop.f32.mrb[0].mxu0
      %5112 = vmatprep.mubr.bf16.mxu0 0
      %5113 = vmatmul.mubr.bf16.gmra.mrb[0].mxu0 %v4909
      %v5114 = vpop.f32.mrb[0].mxu0
      %v5115 = vadd.f32 0.0, %v5114
      %v5116 = vpop.f32.mrb[0].mxu0
      %v5117 = vpop.f32.mrb[0].mxu0
      %v5118 = vadd.f32 0.0, %v5117
      %v5119 = vpop.f32.mrb[0].mxu0
      %5120 = vmatprep.mubr.bf16.mxu0 0
      %5121 = vmatmul.mubr.bf16.gmra.mrb[0].mxu0 %v4910
      %v5122 = vpop.f32.mrb[0].mxu0
      %v5123 = vadd.f32 0.0, %v5122
      %v5124 = vpop.f32.mrb[0].mxu0
      %v5125 = vpop.f32.mrb[0].mxu0
      %v5126 = vadd.f32 0.0, %v5125
      %v5127 = vpop.f32.mrb[0].mxu0
      %5128 = vmatprep.mubr.bf16.mxu0 0
      %5129 = vmatmul.mubr.bf16.gmra.mrb[0].mxu0 %v4911
      %v5130 = vpop.f32.mrb[0].mxu0
      %v5131 = vadd.f32 0.0, %v5130
      %v5132 = vpop.f32.mrb[0].mxu0
      %v5133 = vpop.f32.mrb[0].mxu0
      %v5134 = vadd.f32 0.0, %v5133
      %v5135 = vpop.f32.mrb[0].mxu0
      %5136 = vdwg.mxu0
      %v5137 = vadd.f32 %v4289, %v5011
      %v5138 = vadd.f32 %v4292, %v5014
      %v5139 = vadd.f32 %v4297, %v5019
      %v5140 = vadd.f32 %v4300, %v5022
      %v5141 = vadd.f32 %v4305, %v5027
      %v5142 = vadd.f32 %v4308, %v5030
      %v5143 = vadd.f32 %v4313, %v5035
      %v5144 = vadd.f32 %v4316, %v5038
      %v5145 = vadd.f32 %v4321, %v5043
      %v5146 = vadd.f32 %v4324, %v5046
      %v5147 = vadd.f32 %v4329, %v5051
      %v5148 = vadd.f32 %v4332, %v5054
      %v5149 = vadd.f32 %v4337, %v5059
      %v5150 = vadd.f32 %v4340, %v5062
      %v5151 = vadd.f32 %v4345, %v5067
      %v5152 = vadd.f32 %v4348, %v5070
      %v5153 = vadd.f32 %v4353, %v5075
      %v5154 = vadd.f32 %v4356, %v5078
      %v5155 = vadd.f32 %v4361, %v5083
      %v5156 = vadd.f32 %v4364, %v5086
      %v5157 = vadd.f32 %v4369, %v5091
      %v5158 = vadd.f32 %v4372, %v5094
      %v5159 = vadd.f32 %v4377, %v5099
      %v5160 = vadd.f32 %v4380, %v5102
      %v5161 = vadd.f32 %v4385, %v5107
      %v5162 = vadd.f32 %v4388, %v5110
      %v5163 = vadd.f32 %v4393, %v5115
      %v5164 = vadd.f32 %v4396, %v5118
      %v5165 = vadd.f32 %v4401, %v5123
      %v5166 = vadd.f32 %v4404, %v5126
      %v5167 = vadd.f32 %v4409, %v5131
      %v5168 = vadd.f32 %v4412, %v5134
      %v5169 = vld [vmem:[#allocation2] sm:$0xf]
      %v5170 = vld [vmem:[#allocation2 + $0x4] sm:$0xf]
      %v5171 = vld [vmem:[#allocation2 + $0xc] sm:$0xf]
      %v5172 = vld [vmem:[#allocation2 + $0x10] sm:$0xf]
      %v5173 = vld [vmem:[#allocation2 + $0x18] sm:$0xf]
      %v5174 = vld [vmem:[#allocation2 + $0x1c] sm:$0xf]
      %v5175 = vld [vmem:[#allocation2 + $0x24] sm:$0xf]
      %v5176 = vld [vmem:[#allocation2 + $0x28] sm:$0xf]
      %v5177 = vld [vmem:[#allocation2 + $0x30] sm:$0xf]
      %v5178 = vld [vmem:[#allocation2 + $0x34] sm:$0xf]
      %v5179 = vld [vmem:[#allocation2 + $0x3c] sm:$0xf]
      %v5180 = vld [vmem:[#allocation2 + $0x40] sm:$0xf]
      %v5181 = vld [vmem:[#allocation2 + $0x48] sm:$0xf]
      %v5182 = vld [vmem:[#allocation2 + $0x4c] sm:$0xf]
      %v5183 = vld [vmem:[#allocation2 + $0x54] sm:$0xf]
      %v5184 = vld [vmem:[#allocation2 + $0x58] sm:$0xf]
      %v5185 = vld [vmem:[#allocation2 + $0x60] sm:$0xf]
      %v5186 = vld [vmem:[#allocation2 + $0x64] sm:$0xf]
      %v5187 = vld [vmem:[#allocation2 + $0x6c] sm:$0xf]
      %v5188 = vld [vmem:[#allocation2 + $0x70] sm:$0xf]
      %v5189 = vld [vmem:[#allocation2 + $0x78] sm:$0xf]
      %v5190 = vld [vmem:[#allocation2 + $0x7c] sm:$0xf]
      %v5191 = vld [vmem:[#allocation2 + $0x84] sm:$0xf]
      %v5192 = vld [vmem:[#allocation2 + $0x88] sm:$0xf]
      %v5193 = vld [vmem:[#allocation2 + $0x90] sm:$0xf]
      %v5194 = vld [vmem:[#allocation2 + $0x94] sm:$0xf]
      %v5195 = vld [vmem:[#allocation2 + $0x9c] sm:$0xf]
      %v5196 = vld [vmem:[#allocation2 + $0xa0] sm:$0xf]
      %v5197 = vld [vmem:[#allocation2 + $0xa8] sm:$0xf]
      %v5198 = vld [vmem:[#allocation2 + $0xac] sm:$0xf]
      %v5199 = vld [vmem:[#allocation2 + $0xb4] sm:$0xf]
      %v5200 = vld [vmem:[#allocation2 + $0xb8] sm:$0xf]
      %s5201 = scalar_lea.vmem %s3, 512
      %v5202 = vld [vmem:[%s5201] sm:$0xf]
      %v5203 = vld [vmem:[%s5201 + $0x4] sm:$0xf]
      %v5204 = vld [vmem:[%s5201 + $0x8] sm:$0xf]
      %v5205 = vld [vmem:[%s5201 + $0xc] sm:$0xf]
      %v5206 = vld [vmem:[%s5201 + $0x10] sm:$0xf]
      %v5207 = vld [vmem:[%s5201 + $0x14] sm:$0xf]
      %v5208 = vld [vmem:[%s5201 + $0x18] sm:$0xf]
      %v5209 = vld [vmem:[%s5201 + $0x1c] sm:$0xf]
      %v5210 = vld [vmem:[%s5201 + $0x20] sm:$0xf]
      %v5211 = vld [vmem:[%s5201 + $0x24] sm:$0xf]
      %v5212 = vld [vmem:[%s5201 + $0x28] sm:$0xf]
      %v5213 = vld [vmem:[%s5201 + $0x2c] sm:$0xf]
      %v5214 = vld [vmem:[%s5201 + $0x30] sm:$0xf]
      %v5215 = vld [vmem:[%s5201 + $0x34] sm:$0xf]
      %v5216 = vld [vmem:[%s5201 + $0x38] sm:$0xf]
      %v5217 = vld [vmem:[%s5201 + $0x3c] sm:$0xf]
      %v5250 = vunpack.c.l.b16 %v5169
      %v5251 = vunpack.c.l.b16 %v5170
      %v5252 = vunpack.c.l.b16 %v5171
      %v5253 = vunpack.c.l.b16 %v5172
      %v5254 = vunpack.c.l.b16 %v5173
      %v5255 = vunpack.c.l.b16 %v5174
      %v5256 = vunpack.c.l.b16 %v5175
      %v5257 = vunpack.c.l.b16 %v5176
      %v5258 = vunpack.c.l.b16 %v5177
      %v5259 = vunpack.c.l.b16 %v5178
      %v5260 = vunpack.c.l.b16 %v5179
      %v5261 = vunpack.c.l.b16 %v5180
      %v5262 = vunpack.c.l.b16 %v5181
      %v5263 = vunpack.c.l.b16 %v5182
      %v5264 = vunpack.c.l.b16 %v5183
      %v5265 = vunpack.c.l.b16 %v5184
      %v5266 = vunpack.c.l.b16 %v5185
      %v5267 = vunpack.c.l.b16 %v5186
      %v5268 = vunpack.c.l.b16 %v5187
      %v5269 = vunpack.c.l.b16 %v5188
      %v5270 = vunpack.c.l.b16 %v5189
      %v5271 = vunpack.c.l.b16 %v5190
      %v5272 = vunpack.c.l.b16 %v5191
      %v5273 = vunpack.c.l.b16 %v5192
      %v5274 = vunpack.c.l.b16 %v5193
      %v5275 = vunpack.c.l.b16 %v5194
      %v5276 = vunpack.c.l.b16 %v5195
      %v5277 = vunpack.c.l.b16 %v5196
      %v5278 = vunpack.c.l.b16 %v5197
      %v5279 = vunpack.c.l.b16 %v5198
      %v5280 = vunpack.c.l.b16 %v5199
      %v5281 = vunpack.c.l.b16 %v5200
      %v5282 = vpack.c.b16 %v5251, %v5250
      %v5283 = vpack.c.b16 %v5253, %v5252
      %v5284 = vpack.c.b16 %v5255, %v5254
      %v5285 = vpack.c.b16 %v5257, %v5256
      %v5286 = vpack.c.b16 %v5259, %v5258
      %v5287 = vpack.c.b16 %v5261, %v5260
      %v5288 = vpack.c.b16 %v5263, %v5262
      %v5289 = vpack.c.b16 %v5265, %v5264
      %v5290 = vpack.c.b16 %v5267, %v5266
      %v5291 = vpack.c.b16 %v5269, %v5268
      %v5292 = vpack.c.b16 %v5271, %v5270
      %v5293 = vpack.c.b16 %v5273, %v5272
      %v5294 = vpack.c.b16 %v5275, %v5274
      %v5295 = vpack.c.b16 %v5277, %v5276
      %v5296 = vpack.c.b16 %v5279, %v5278
      %v5297 = vpack.c.b16 %v5281, %v5280
      %v5330 = vunpack.c.l.b16 %v5202
      %v5331 = vunpack.c.l.b16 %v5203
      %v5332 = vunpack.c.l.b16 %v5204
      %v5333 = vunpack.c.l.b16 %v5205
      %v5334 = vunpack.c.l.b16 %v5206
      %v5335 = vunpack.c.l.b16 %v5207
      %v5336 = vunpack.c.l.b16 %v5208
      %v5337 = vunpack.c.l.b16 %v5209
      %v5338 = vunpack.c.l.b16 %v5210
      %v5339 = vunpack.c.l.b16 %v5211
      %v5340 = vunpack.c.l.b16 %v5212
      %v5341 = vunpack.c.l.b16 %v5213
      %v5342 = vunpack.c.l.b16 %v5214
      %v5343 = vunpack.c.l.b16 %v5215
      %v5344 = vunpack.c.l.b16 %v5216
      %v5345 = vunpack.c.l.b16 %v5217
      %v5346 = vpack.c.b16 %v5331, %v5330
      %v5347 = vpack.c.b16 %v5333, %v5332
      %v5348 = vpack.c.b16 %v5335, %v5334
      %v5349 = vpack.c.b16 %v5337, %v5336
      %v5350 = vpack.c.b16 %v5339, %v5338
      %v5351 = vpack.c.b16 %v5341, %v5340
      %v5352 = vpack.c.b16 %v5343, %v5342
      %v5353 = vpack.c.b16 %v5345, %v5344
      %5362 = vmatprep.subr.bf16.mxu0 0
      %5363 = vmatpush1.bf16.msra.mxu0 %v5346
      %5364 = vmatprep.subr.bf16.mxu0 0
      %5365 = vmatpush1.bf16.msra.mxu0 %v5347
      %5366 = vmatprep.subr.bf16.mxu0 0
      %5367 = vmatpush1.bf16.msra.mxu0 %v5348
      %5368 = vmatprep.subr.bf16.mxu0 0
      %5369 = vmatpush1.bf16.msra.mxu0 %v5349
      %5370 = vmatprep.subr.bf16.mxu0 0
      %5371 = vmatpush1.bf16.msra.mxu0 %v5350
      %5372 = vmatprep.subr.bf16.mxu0 0
      %5373 = vmatpush1.bf16.msra.mxu0 %v5351
      %5374 = vmatprep.subr.bf16.mxu0 0
      %5375 = vmatpush1.bf16.msra.mxu0 %v5352
      %5376 = vmatprep.subr.bf16.mxu0 0
      %5377 = vmatpush1.bf16.msra.mxu0 %v5353
      %5378 = vmatprep.subr.bf16.mxu0 0
      %5379 = vmatpush1.bf16.msra.mxu0 0
      %5380 = vmatprep.subr.bf16.mxu0 0
      %5381 = vmatpush1.bf16.msra.mxu0 0
      %5382 = vmatprep.subr.bf16.mxu0 0
      %5383 = vmatpush1.bf16.msra.mxu0 0
      %5384 = vmatprep.subr.bf16.mxu0 0
      %5385 = vmatpush1.bf16.msra.mxu0 0
      %5386 = vmatprep.subr.bf16.mxu0 0
      %5387 = vmatpush1.bf16.msra.mxu0 0
      %5388 = vmatprep.subr.bf16.mxu0 0
      %5389 = vmatpush1.bf16.msra.mxu0 0
      %5390 = vmatprep.subr.bf16.mxu0 0
      %5391 = vmatpush1.bf16.msra.mxu0 0
      %5392 = vmatprep.subr.bf16.mxu0 0
      %5393 = vmatpush1.bf16.msra.mxu0 0
      %5394 = vmatprep.mubr.bf16.mxu0 0
      %5395 = vmatmul.mubr.bf16.gmra.mrb[0].mxu0 %v5282
      %v5396 = vpop.f32.mrb[0].mxu0
      %v5397 = vadd.f32 0.0, %v5396
      %v5398 = vpop.f32.mrb[0].mxu0
      %v5399 = vpop.f32.mrb[0].mxu0
      %v5400 = vadd.f32 0.0, %v5399
      %v5401 = vpop.f32.mrb[0].mxu0
      %5402 = vmatprep.mubr.bf16.mxu0 0
      %5403 = vmatmul.mubr.bf16.gmra.mrb[0].mxu0 %v5283
      %v5404 = vpop.f32.mrb[0].mxu0
      %v5405 = vadd.f32 0.0, %v5404
      %v5406 = vpop.f32.mrb[0].mxu0
      %v5407 = vpop.f32.mrb[0].mxu0
      %v5408 = vadd.f32 0.0, %v5407
      %v5409 = vpop.f32.mrb[0].mxu0
      %5410 = vmatprep.mubr.bf16.mxu0 0
      %5411 = vmatmul.mubr.bf16.gmra.mrb[0].mxu0 %v5284
      %v5412 = vpop.f32.mrb[0].mxu0
      %v5413 = vadd.f32 0.0, %v5412
      %v5414 = vpop.f32.mrb[0].mxu0
      %v5415 = vpop.f32.mrb[0].mxu0
      %v5416 = vadd.f32 0.0, %v5415
      %v5417 = vpop.f32.mrb[0].mxu0
      %5418 = vmatprep.mubr.bf16.mxu0 0
      %5419 = vmatmul.mubr.bf16.gmra.mrb[0].mxu0 %v5285
      %v5420 = vpop.f32.mrb[0].mxu0
      %v5421 = vadd.f32 0.0, %v5420
      %v5422 = vpop.f32.mrb[0].mxu0
      %v5423 = vpop.f32.mrb[0].mxu0
      %v5424 = vadd.f32 0.0, %v5423
      %v5425 = vpop.f32.mrb[0].mxu0
      %5426 = vmatprep.mubr.bf16.mxu0 0
      %5427 = vmatmul.mubr.bf16.gmra.mrb[0].mxu0 %v5286
      %v5428 = vpop.f32.mrb[0].mxu0
      %v5429 = vadd.f32 0.0, %v5428
      %v5430 = vpop.f32.mrb[0].mxu0
      %v5431 = vpop.f32.mrb[0].mxu0
      %v5432 = vadd.f32 0.0, %v5431
      %v5433 = vpop.f32.mrb[0].mxu0
      %5434 = vmatprep.mubr.bf16.mxu0 0
      %5435 = vmatmul.mubr.bf16.gmra.mrb[0].mxu0 %v5287
      %v5436 = vpop.f32.mrb[0].mxu0
      %v5437 = vadd.f32 0.0, %v5436
      %v5438 = vpop.f32.mrb[0].mxu0
      %v5439 = vpop.f32.mrb[0].mxu0
      %v5440 = vadd.f32 0.0, %v5439
      %v5441 = vpop.f32.mrb[0].mxu0
      %5442 = vmatprep.mubr.bf16.mxu0 0
      %5443 = vmatmul.mubr.bf16.gmra.mrb[0].mxu0 %v5288
      %v5444 = vpop.f32.mrb[0].mxu0
      %v5445 = vadd.f32 0.0, %v5444
      %v5446 = vpop.f32.mrb[0].mxu0
      %v5447 = vpop.f32.mrb[0].mxu0
      %v5448 = vadd.f32 0.0, %v5447
      %v5449 = vpop.f32.mrb[0].mxu0
      %5450 = vmatprep.mubr.bf16.mxu0 0
      %5451 = vmatmul.mubr.bf16.gmra.mrb[0].mxu0 %v5289
      %v5452 = vpop.f32.mrb[0].mxu0
      %v5453 = vadd.f32 0.0, %v5452
      %v5454 = vpop.f32.mrb[0].mxu0
      %v5455 = vpop.f32.mrb[0].mxu0
      %v5456 = vadd.f32 0.0, %v5455
      %v5457 = vpop.f32.mrb[0].mxu0
      %5458 = vmatprep.mubr.bf16.mxu0 0
      %5459 = vmatmul.mubr.bf16.gmra.mrb[0].mxu0 %v5290
      %v5460 = vpop.f32.mrb[0].mxu0
      %v5461 = vadd.f32 0.0, %v5460
      %v5462 = vpop.f32.mrb[0].mxu0
      %v5463 = vpop.f32.mrb[0].mxu0
      %v5464 = vadd.f32 0.0, %v5463
      %v5465 = vpop.f32.mrb[0].mxu0
      %5466 = vmatprep.mubr.bf16.mxu0 0
      %5467 = vmatmul.mubr.bf16.gmra.mrb[0].mxu0 %v5291
      %v5468 = vpop.f32.mrb[0].mxu0
      %v5469 = vadd.f32 0.0, %v5468
      %v5470 = vpop.f32.mrb[0].mxu0
      %v5471 = vpop.f32.mrb[0].mxu0
      %v5472 = vadd.f32 0.0, %v5471
      %v5473 = vpop.f32.mrb[0].mxu0
      %5474 = vmatprep.mubr.bf16.mxu0 0
      %5475 = vmatmul.mubr.bf16.gmra.mrb[0].mxu0 %v5292
      %v5476 = vpop.f32.mrb[0].mxu0
      %v5477 = vadd.f32 0.0, %v5476
      %v5478 = vpop.f32.mrb[0].mxu0
      %v5479 = vpop.f32.mrb[0].mxu0
      %v5480 = vadd.f32 0.0, %v5479
      %v5481 = vpop.f32.mrb[0].mxu0
      %5482 = vmatprep.mubr.bf16.mxu0 0
      %5483 = vmatmul.mubr.bf16.gmra.mrb[0].mxu0 %v5293
      %v5484 = vpop.f32.mrb[0].mxu0
      %v5485 = vadd.f32 0.0, %v5484
      %v5486 = vpop.f32.mrb[0].mxu0
      %v5487 = vpop.f32.mrb[0].mxu0
      %v5488 = vadd.f32 0.0, %v5487
      %v5489 = vpop.f32.mrb[0].mxu0
      %5490 = vmatprep.mubr.bf16.mxu0 0
      %5491 = vmatmul.mubr.bf16.gmra.mrb[0].mxu0 %v5294
      %v5492 = vpop.f32.mrb[0].mxu0
      %v5493 = vadd.f32 0.0, %v5492
      %v5494 = vpop.f32.mrb[0].mxu0
      %v5495 = vpop.f32.mrb[0].mxu0
      %v5496 = vadd.f32 0.0, %v5495
      %v5497 = vpop.f32.mrb[0].mxu0
      %5498 = vmatprep.mubr.bf16.mxu0 0
      %5499 = vmatmul.mubr.bf16.gmra.mrb[0].mxu0 %v5295
      %v5500 = vpop.f32.mrb[0].mxu0
      %v5501 = vadd.f32 0.0, %v5500
      %v5502 = vpop.f32.mrb[0].mxu0
      %v5503 = vpop.f32.mrb[0].mxu0
      %v5504 = vadd.f32 0.0, %v5503
      %v5505 = vpop.f32.mrb[0].mxu0
      %5506 = vmatprep.mubr.bf16.mxu0 0
      %5507 = vmatmul.mubr.bf16.gmra.mrb[0].mxu0 %v5296
      %v5508 = vpop.f32.mrb[0].mxu0
      %v5509 = vadd.f32 0.0, %v5508
      %v5510 = vpop.f32.mrb[0].mxu0
      %v5511 = vpop.f32.mrb[0].mxu0
      %v5512 = vadd.f32 0.0, %v5511
      %v5513 = vpop.f32.mrb[0].mxu0
      %5514 = vmatprep.mubr.bf16.mxu0 0
      %5515 = vmatmul.mubr.bf16.gmra.mrb[0].mxu0 %v5297
      %v5516 = vpop.f32.mrb[0].mxu0
      %v5517 = vadd.f32 0.0, %v5516
      %v5518 = vpop.f32.mrb[0].mxu0
      %v5519 = vpop.f32.mrb[0].mxu0
      %v5520 = vadd.f32 0.0, %v5519
      %v5521 = vpop.f32.mrb[0].mxu0
      %5522 = vdwg.mxu0
      %v5523 = vadd.f32 %v5137, %v5397
      %v5524 = vadd.f32 %v5138, %v5400
      %v5525 = vadd.f32 %v5139, %v5405
      %v5526 = vadd.f32 %v5140, %v5408
      %v5527 = vadd.f32 %v5141, %v5413
      %v5528 = vadd.f32 %v5142, %v5416
      %v5529 = vadd.f32 %v5143, %v5421
      %v5530 = vadd.f32 %v5144, %v5424
      %v5531 = vadd.f32 %v5145, %v5429
      %v5532 = vadd.f32 %v5146, %v5432
      %v5533 = vadd.f32 %v5147, %v5437
      %v5534 = vadd.f32 %v5148, %v5440
      %v5535 = vadd.f32 %v5149, %v5445
      %v5536 = vadd.f32 %v5150, %v5448
      %v5537 = vadd.f32 %v5151, %v5453
      %v5538 = vadd.f32 %v5152, %v5456
      %v5539 = vadd.f32 %v5153, %v5461
      %v5540 = vadd.f32 %v5154, %v5464
      %v5541 = vadd.f32 %v5155, %v5469
      %v5542 = vadd.f32 %v5156, %v5472
      %v5543 = vadd.f32 %v5157, %v5477
      %v5544 = vadd.f32 %v5158, %v5480
      %v5545 = vadd.f32 %v5159, %v5485
      %v5546 = vadd.f32 %v5160, %v5488
      %v5547 = vadd.f32 %v5161, %v5493
      %v5548 = vadd.f32 %v5162, %v5496
      %v5549 = vadd.f32 %v5163, %v5501
      %v5550 = vadd.f32 %v5164, %v5504
      %v5551 = vadd.f32 %v5165, %v5509
      %v5552 = vadd.f32 %v5166, %v5512
      %v5553 = vadd.f32 %v5167, %v5517
      %v5554 = vadd.f32 %v5168, %v5520
      %s5555 = scalar_lea.vmem %s231, 768
      %5556 = vst [vmem:[%s5555] sm:$0xff] %v5523
      %5557 = vst [vmem:[%s5555 + $0x8] sm:$0xff] %v5524
      %5558 = vst [vmem:[%s5555 + $0x10] sm:$0xff] %v5525
      %5559 = vst [vmem:[%s5555 + $0x18] sm:$0xff] %v5526
      %5560 = vst [vmem:[%s5555 + $0x20] sm:$0xff] %v5527
      %5561 = vst [vmem:[%s5555 + $0x28] sm:$0xff] %v5528
      %5562 = vst [vmem:[%s5555 + $0x30] sm:$0xff] %v5529
      %5563 = vst [vmem:[%s5555 + $0x38] sm:$0xff] %v5530
      %5564 = vst [vmem:[%s5555 + $0x40] sm:$0xff] %v5531
      %5565 = vst [vmem:[%s5555 + $0x48] sm:$0xff] %v5532
      %5566 = vst [vmem:[%s5555 + $0x50] sm:$0xff] %v5533
      %5567 = vst [vmem:[%s5555 + $0x58] sm:$0xff] %v5534
      %5568 = vst [vmem:[%s5555 + $0x60] sm:$0xff] %v5535
      %5569 = vst [vmem:[%s5555 + $0x68] sm:$0xff] %v5536
      %5570 = vst [vmem:[%s5555 + $0x70] sm:$0xff] %v5537
      %5571 = vst [vmem:[%s5555 + $0x78] sm:$0xff] %v5538
      %5572 = vst [vmem:[%s5555 + $0x80] sm:$0xff] %v5539
      %5573 = vst [vmem:[%s5555 + $0x88] sm:$0xff] %v5540
      %5574 = vst [vmem:[%s5555 + $0x90] sm:$0xff] %v5541
      %5575 = vst [vmem:[%s5555 + $0x98] sm:$0xff] %v5542
      %5576 = vst [vmem:[%s5555 + $0xa0] sm:$0xff] %v5543
      %5577 = vst [vmem:[%s5555 + $0xa8] sm:$0xff] %v5544
      %5578 = vst [vmem:[%s5555 + $0xb0] sm:$0xff] %v5545
      %5579 = vst [vmem:[%s5555 + $0xb8] sm:$0xff] %v5546
      %5580 = vst [vmem:[%s5555 + $0xc0] sm:$0xff] %v5547
      %5581 = vst [vmem:[%s5555 + $0xc8] sm:$0xff] %v5548
      %5582 = vst [vmem:[%s5555 + $0xd0] sm:$0xff] %v5549
      %5583 = vst [vmem:[%s5555 + $0xd8] sm:$0xff] %v5550
      %5584 = vst [vmem:[%s5555 + $0xe0] sm:$0xff] %v5551
      %5585 = vst [vmem:[%s5555 + $0xe8] sm:$0xff] %v5552
      %5586 = vst [vmem:[%s5555 + $0xf0] sm:$0xff] %v5553
      %5587 = vst [vmem:[%s5555 + $0xf8] sm:$0xff] %v5554
      %v5588 = vadd.f32 %v5523, %v5524
      %v5589 = vadd.f32 %v5588, %v5525
      %v5590 = vadd.f32 %v5589, %v5526
      %v5591 = vadd.f32 %v5590, %v5527
      %v5592 = vadd.f32 %v5591, %v5528
      %v5593 = vadd.f32 %v5592, %v5529
      %v5594 = vadd.f32 %v5593, %v5530
      %v5595 = vadd.f32 %v5594, %v5531
      %v5596 = vadd.f32 %v5595, %v5532
      %v5597 = vadd.f32 %v5596, %v5533
      %v5598 = vadd.f32 %v5597, %v5534
      %v5599 = vadd.f32 %v5598, %v5535
      %v5600 = vadd.f32 %v5599, %v5536
      %v5601 = vadd.f32 %v5600, %v5537
      %v5602 = vadd.f32 %v5601, %v5538
      %v5603 = vadd.f32 %v5602, %v5539
      %v5604 = vadd.f32 %v5603, %v5540
      %v5605 = vadd.f32 %v5604, %v5541
      %v5606 = vadd.f32 %v5605, %v5542
      %v5607 = vadd.f32 %v5606, %v5543
      %v5608 = vadd.f32 %v5607, %v5544
      %v5609 = vadd.f32 %v5608, %v5545
      %v5610 = vadd.f32 %v5609, %v5546
      %v5611 = vadd.f32 %v5610, %v5547
      %v5612 = vadd.f32 %v5611, %v5548
      %v5613 = vadd.f32 %v5612, %v5549
      %v5614 = vadd.f32 %v5613, %v5550
      %v5615 = vadd.f32 %v5614, %v5551
      %v5616 = vadd.f32 %v5615, %v5552
      %v5617 = vadd.f32 %v5616, %v5553
      %v5618 = vadd.f32 %v5617, %v5554
      %v5619 = vrot.slane %v5618, 4
      %v5620 = vadd.f32 %v5618, %v5619
      %v5621 = vrot.slane %v5620, 2
      %v5622 = vadd.f32 %v5620, %v5621
      %v5623 = vrot.slane %v5622, 1
      %v5624 = vadd.f32 %v5622, %v5623
      %v5625 = vadd.f32 %v3301, %v5624
      %v5626 = vmul.f32 %v5523, %v5523
      %v5627 = vmul.f32 %v5524, %v5524
      %v5628 = vmul.f32 %v5525, %v5525
      %v5629 = vmul.f32 %v5526, %v5526
      %v5630 = vmul.f32 %v5527, %v5527
      %v5631 = vmul.f32 %v5528, %v5528
      %v5632 = vmul.f32 %v5529, %v5529
      %v5633 = vmul.f32 %v5530, %v5530
      %v5634 = vmul.f32 %v5531, %v5531
      %v5635 = vmul.f32 %v5532, %v5532
      %v5636 = vmul.f32 %v5533, %v5533
      %v5637 = vmul.f32 %v5534, %v5534
      %v5638 = vmul.f32 %v5535, %v5535
      %v5639 = vmul.f32 %v5536, %v5536
      %v5640 = vmul.f32 %v5537, %v5537
      %v5641 = vmul.f32 %v5538, %v5538
      %v5642 = vmul.f32 %v5539, %v5539
      %v5643 = vmul.f32 %v5540, %v5540
      %v5644 = vmul.f32 %v5541, %v5541
      %v5645 = vmul.f32 %v5542, %v5542
      %v5646 = vmul.f32 %v5543, %v5543
      %v5647 = vmul.f32 %v5544, %v5544
      %v5648 = vmul.f32 %v5545, %v5545
      %v5649 = vmul.f32 %v5546, %v5546
      %v5650 = vmul.f32 %v5547, %v5547
      %v5651 = vmul.f32 %v5548, %v5548
      %v5652 = vmul.f32 %v5549, %v5549
      %v5653 = vmul.f32 %v5550, %v5550
      %v5654 = vmul.f32 %v5551, %v5551
      %v5655 = vmul.f32 %v5552, %v5552
      %v5656 = vmul.f32 %v5553, %v5553
      %v5657 = vmul.f32 %v5554, %v5554
      %v5658 = vadd.f32 %v5626, %v5627
      %v5659 = vadd.f32 %v5658, %v5628
      %v5660 = vadd.f32 %v5659, %v5629
      %v5661 = vadd.f32 %v5660, %v5630
      %v5662 = vadd.f32 %v5661, %v5631
      %v5663 = vadd.f32 %v5662, %v5632
      %v5664 = vadd.f32 %v5663, %v5633
      %v5665 = vadd.f32 %v5664, %v5634
      %v5666 = vadd.f32 %v5665, %v5635
      %v5667 = vadd.f32 %v5666, %v5636
      %v5668 = vadd.f32 %v5667, %v5637
      %v5669 = vadd.f32 %v5668, %v5638
      %v5670 = vadd.f32 %v5669, %v5639
      %v5671 = vadd.f32 %v5670, %v5640
      %v5672 = vadd.f32 %v5671, %v5641
      %v5673 = vadd.f32 %v5672, %v5642
      %v5674 = vadd.f32 %v5673, %v5643
      %v5675 = vadd.f32 %v5674, %v5644
      %v5676 = vadd.f32 %v5675, %v5645
      %v5677 = vadd.f32 %v5676, %v5646
      %v5678 = vadd.f32 %v5677, %v5647
      %v5679 = vadd.f32 %v5678, %v5648
      %v5680 = vadd.f32 %v5679, %v5649
      %v5681 = vadd.f32 %v5680, %v5650
      %v5682 = vadd.f32 %v5681, %v5651
      %v5683 = vadd.f32 %v5682, %v5652
      %v5684 = vadd.f32 %v5683, %v5653
      %v5685 = vadd.f32 %v5684, %v5654
      %v5686 = vadd.f32 %v5685, %v5655
      %v5687 = vadd.f32 %v5686, %v5656
      %v5688 = vadd.f32 %v5687, %v5657
      %v5689 = vrot.slane %v5688, 4
      %v5690 = vadd.f32 %v5688, %v5689
      %v5691 = vrot.slane %v5690, 2
      %v5692 = vadd.f32 %v5690, %v5691
      %v5693 = vrot.slane %v5692, 1
      %v5694 = vadd.f32 %v5692, %v5693
      %v5695 = vadd.f32 %v3371, %v5694
      %5696 = vst [vmem:[%s235] sm:$0x1] %v5625
      %5697 = vst [vmem:[%s235 + $0x1] sm:$0x1] %v5695
      %p5698 = scmp.lt.s32.totalorder %s17, 1
      %s5699 = scalar_select %p5698, %s17, 1
      %s5700 = smul.addr %s5699, 128
      %s5701 = smul.addr %s5700, 8
      %s5702 = scalar_lea.vmem %s4, %s5701
      %p5703 = scmp.lt.s32.totalorder %s17, 1
      %s5704 = scalar_select %p5703, %s17, 1
      %s5705 = smul.addr %s5704, 2
      %s5706 = scalar_lea.vmem %s5, %s5705
      // Predicated region
      $region37: #{relation_module_forward.4} parent=35 // pred_check
        %p5707 = pneg %p124
      $region38: #{relation_module_forward.4} parent=35 // pred_check_branch
        %5709 = sbr.rel (%p5707) target = $region40
      $region39: #{relation_module_forward.4} parent=35 // pred_region
        _
      $region40: #{relation_module_forward.4} parent=35 // pred_fallthru
        _
      // Predicated region
      $region41: #{relation_module_forward.4} parent=35 // pred_check
        %p5710 = pneg %p150
      $region42: #{relation_module_forward.4} parent=35 // pred_check_branch
        %5712 = sbr.rel (%p5710) target = $region44
      $region43: #{relation_module_forward.4} parent=35 // pred_region
        _
      $region44: #{relation_module_forward.4} parent=35 // pred_fallthru
        _
    $region36: #{relation_module_forward.4} parent=5 // pred_fallthru
      _
    %p5713 = scmp.le.s32.totalorder 2, %s12
    // Predicated region
    $region45: #{relation_module_forward.4} parent=5 // pred_check
      %p5714 = pneg %p5713
    $region46: #{relation_module_forward.4} parent=5 // pred_check_branch
      %5716 = sbr.rel (%p5714) target = $region48
    $region47: #{relation_module_forward.4} parent=5 // pred_region
      %s5717 = ssub.s32 %s12, 2
      // Predicated region
      $region49: #{relation_module_forward.4} parent=47 // pred_check
        %p5718 = pneg %p130
      $region50: #{relation_module_forward.4} parent=47 // pred_check_branch
        %5720 = sbr.rel (%p5718) target = $region52
      $region51: #{relation_module_forward.4} parent=47 // pred_region
        %p5721 = scmp.lt.s32.totalorder %s18, 1
        %s5722 = scalar_select %p5721, %s18, 1
        %s5723 = smul.addr %s5722, 128
        %s5724 = smul.addr %s5723, 8
        %s5725 = scalar_lea.vmem %s4, %s5724
      $region52: #{relation_module_forward.4} parent=47 // pred_fallthru
        _
      // Predicated region
      $region53: #{relation_module_forward.4} parent=47 // pred_check
        %p5726 = pneg %p156
      $region54: #{relation_module_forward.4} parent=47 // pred_check_branch
        %5728 = sbr.rel (%p5726) target = $region56
      $region55: #{relation_module_forward.4} parent=47 // pred_region
        %p5729 = scmp.lt.s32.totalorder %s18, 1
        %s5730 = scalar_select %p5729, %s18, 1
        %s5731 = smul.addr %s5730, 2
        %s5732 = scalar_lea.vmem %s5, %s5731
      $region56: #{relation_module_forward.4} parent=47 // pred_fallthru
        _
    $region48: #{relation_module_forward.4} parent=5 // pred_fallthru
      _
  $region6: #{relation_module_forward.4} parent=0 // loop_footer
    %s16 = sadd.s32 1, %s12
  $region7: #{relation_module_forward.4} parent=0 // loop_footer_branch
    %11 = sbr.rel target = $region3
  $region8: #{relation_module_forward.4} parent=0 // loop_exit
    _

</llo_original>
